<compile_context>
chip_gen: v5e
topology: v5e:2x2
jax: 0.10.0
libtpu: 0.0.40
codegen_flags: <defaults>
</compile_context>

<pallas_src>
import numpy as np

import jax
import jax.numpy as jnp
from jax.experimental import pallas as pl
from jax.experimental.pallas import tpu as pltpu

EPS = 1e-5  # nn.BatchNorm2d default eps


# ----------------------- host-side constant builders --------------------------

def _gather_matrix(h_in, w_in, kh, kw, stride, pad):
    """One-hot 'im2col' operator Q: (kh*kw*h_out*w_out, h_in*w_in).

    Row (t*M_out + oh*w_out + ow), tap t = i*kw + j, is one-hot at flat input pixel
    (stride*oh + i - pad)*w_in + (stride*ow + j - pad), or all-zero when that tap
    lands in the zero-padding border.  Q @ x2d (x2d: (h_in*w_in, C)) materialises
    the conv patches entirely in VMEM with pure MXU work.
    """
    h_out = (h_in + 2 * pad - kh) // stride + 1
    w_out = (w_in + 2 * pad - kw) // stride + 1
    m_in, m_out = h_in * w_in, h_out * w_out
    q = np.zeros((kh * kw * m_out, m_in), np.float32)
    for i in range(kh):
        for j in range(kw):
            t = i * kw + j
            for oh in range(h_out):
                ih = stride * oh + i - pad
                if ih < 0 or ih >= h_in:
                    continue
                for ow in range(w_out):
                    iw = stride * ow + j - pad
                    if iw < 0 or iw >= w_in:
                        continue
                    q[t * m_out + oh * w_out + ow, ih * w_in + iw] = 1.0
    return q, (h_out, w_out)


# ------------------------------ fused encoder ----------------------------------

def build_encoder(in_channel, channel, n_conv_block, n_conv_channel, h_in, w_in,
                  batch_block=2):
    c_half = channel // 2
    q1_np, (h1, w1) = _gather_matrix(h_in, w_in, 4, 4, 2, 1)   # conv1: 4x4 s2 p1
    q2_np, (h2, w2) = _gather_matrix(h1, w1, 4, 4, 2, 1)       # conv2: 4x4 s2 p1
    q3_np, (h3, w3) = _gather_matrix(h2, w2, 3, 3, 1, 1)       # shared by all 3x3 s1 p1
    m0, m1, m2, m3 = h_in * w_in, h1 * w1, h2 * w2, h3 * w3
    B = batch_block

    def _fold(p, kh, kw, cin):
        # PyTorch (cout,cin,kh,kw) -> tap-major/channel-minor (kh*kw*cin, cout), i.e.
        # one concatenated Wcat so the whole conv is ONE matmul with K = taps*cin.
        # Eval-mode BN is folded: y = conv(x)*s + t.
        w = jnp.transpose(p["w"], (2, 3, 1, 0)).reshape(kh * kw * cin, -1)
        w = w.astype(jnp.float32)
        if "gamma" in p:
            s = p["gamma"] / jnp.sqrt(p["var"] + EPS)
            t = (p["b"] - p["mean"]) * s + p["beta"]
            w = w * s[None, :]
        else:
            t = p["b"]
        # bf16 weights (f32 MXU accumulation); shift kept in f32.
        return w.astype(jnp.bfloat16), t.reshape(1, -1).astype(jnp.float32)

    def pack_params(params):
        """Done ONCE outside the per-forward trace: weight layout + BN folding + Q mats.
        Q is exactly {0,1} so the bf16 cast is lossless."""
        w1, t1 = _fold(params["conv1"], 4, 4, in_channel)
        w2, t2 = _fold(params["conv2"], 4, 4, c_half)
        w3, t3 = _fold(params["conv3"], 3, 3, channel)
        packed = [jnp.asarray(q1_np, jnp.bfloat16), w1, t1,
                  jnp.asarray(q2_np, jnp.bfloat16), w2, t2,
                  jnp.asarray(q3_np, jnp.bfloat16), w3, t3]
        for blk in params["blocks"]:
            wc1, tc1 = _fold(blk["c1"], 3, 3, channel)
            wc2, tc2 = _fold(blk["c2"], 1, 1, n_conv_channel)
            packed += [wc1, tc1, wc2, tc2]
        return packed

    def kernel(x_ref, q1_ref, w1_ref, t1_ref, q2_ref, w2_ref, t2_ref,
               q3_ref, w3_ref, t3_ref, *rest):
        blk_refs = rest[:4 * n_conv_block]
        o_ref = rest[4 * n_conv_block]
        p1_ref, p2_ref, p3_ref = rest[4 * n_conv_block + 1:]

        def gathered_conv(q_ref, xs, w_ref, t_ref, patch_ref, relu_out):
            """xs: list of B per-image activations (m_in, cin), bf16.
            Returns (B*m_out, cout) f32.  One gather matmul per image + ONE fused
            weight matmul for the whole batch block (K = taps*cin, M = B*m_out)."""
            cin = xs[0].shape[1]
            kdim, _ = w_ref.shape
            taps = kdim // cin
            m_o = q_ref.shape[0] // taps
            q = q_ref[...]
            for b in range(B):
                # In-VMEM im2col for image b (zero padding encoded as zero Q rows).
                col = jnp.dot(q, xs[b], preferred_element_type=jnp.float32)
                col = col.astype(jnp.bfloat16)
                # Relayout tap->lane via static sub-block stores (data movement only).
                for t in range(taps):
                    patch_ref[b * m_o:(b + 1) * m_o, t * cin:(t + 1) * cin] = (
                        col[t * m_o:(t + 1) * m_o, :])
            y = jnp.dot(patch_ref[...], w_ref[...],
                        preferred_element_type=jnp.float32)
            y = y + t_ref[...]                     # conv bias / folded BN shift (f32)
            return jnp.maximum(y, 0.0) if relu_out else y

        # conv1 + BN + ReLU
        a = gathered_conv(q1_ref, [x_ref[b] for b in range(B)],
                          w1_ref, t1_ref, p1_ref, True).astype(jnp.bfloat16)
        # conv2 + BN + ReLU
        a = gathered_conv(q2_ref, [a[b * m1:(b + 1) * m1, :] for b in range(B)],
                          w2_ref, t2_ref, p2_ref, True).astype(jnp.bfloat16)
        # conv3 (no activation) -> residual stream, kept in f32
        y = gathered_conv(q3_ref, [a[b * m2:(b + 1) * m2, :] for b in range(B)],
                          w3_ref, t3_ref, p3_ref, False)
        for bi in range(n_conv_block):                          # ConvBlocks
            wc1_ref, tc1_ref, wc2_ref, tc2_ref = blk_refs[4 * bi:4 * bi + 4]
            h = jnp.maximum(y, 0.0).astype(jnp.bfloat16)        # leading ReLU
            h = gathered_conv(q3_ref, [h[b * m3:(b + 1) * m3, :] for b in range(B)],
                              wc1_ref, tc1_ref, p3_ref, True).astype(jnp.bfloat16)
            # 1x1 conv (single matmul, no gather) + residual
            y = (jnp.dot(h, wc2_ref[...], preferred_element_type=jnp.float32)
                 + tc2_ref[...] + y)
        o_ref[...] = jnp.maximum(y, 0.0)                        # final encoder ReLU

    def forward(packed, x_nchw):
        n = x_nchw.shape[0]
        assert n % B == 0, "batch must be a multiple of the batch block"
        x2d = jnp.transpose(x_nchw, (0, 2, 3, 1)).reshape(n, m0, in_channel)
        x2d = x2d.astype(jnp.bfloat16)                      # halve input DMA
        in_specs = [pl.BlockSpec((B, m0, in_channel), lambda g: (g, 0, 0))]
        for arr in packed:   # weights / Q matrices: whole array, same block every step
            in_specs.append(
                pl.BlockSpec(arr.shape, lambda g, _nd=arr.ndim: (0,) * _nd))
        out = pl.pallas_call(
            kernel,
            grid=(n // B,),                         # B images per grid step
            in_specs=in_specs,
            out_specs=pl.BlockSpec((B * m3, channel), lambda g: (g, 0)),
            out_shape=jax.ShapeDtypeStruct((n * m3, channel), jnp.float32),
            scratch_shapes=[                        # im2col patch buffers (bf16)
                pltpu.VMEM((B * m1, 16 * in_channel), jnp.bfloat16),   # conv1
                pltpu.VMEM((B * m2, 16 * c_half), jnp.bfloat16),       # conv2
                pltpu.VMEM((B * m3, 9 * channel), jnp.bfloat16),       # all 3x3 convs
            ],
            compiler_params=pltpu.CompilerParams(
                dimension_semantics=("parallel",),
                vmem_limit_bytes=32 * 1024 * 1024),
        )(x2d, *packed)
        out = out.reshape(n, h3, w3, channel)
        return jnp.transpose(out, (0, 3, 1, 2))     # NHWC -> NCHW

    return pack_params, forward


# ------------------------- deterministic params --------------------------------

def _conv_params(key, cout, cin, kh, kw, bn=True):
    k = jax.random.split(key, 6)
    p = {
        "w": 0.1 * jax.random.normal(k[0], (cout, cin, kh, kw), jnp.float32),
        "b": 0.05 * jax.random.normal(k[1], (cout,), jnp.float32),
    }
    if bn:
        p["gamma"] = 1.0 + 0.1 * jax.random.normal(k[2], (cout,), jnp.float32)
        p["beta"] = 0.1 * jax.random.normal(k[3], (cout,), jnp.float32)
        p["mean"] = 0.1 * jax.random.normal(k[4], (cout,), jnp.float32)
        p["var"] = 0.9 + 0.1 * jax.random.uniform(k[5], (cout,), jnp.float32)
    return p


def init_encoder(key, in_channel, channel, n_conv_block, n_conv_channel):
    keys = jax.random.split(key, 3 + 2 * n_conv_block)
    params = {
        "conv1": _conv_params(keys[0], channel // 2, in_channel, 4, 4, bn=True),
        "conv2": _conv_params(keys[1], channel, channel // 2, 4, 4, bn=True),
        "conv3": _conv_params(keys[2], channel, channel, 3, 3, bn=False),
        "blocks": [],
    }
    for i in range(n_conv_block):
        params["blocks"].append({
            "c1": _conv_params(keys[3 + 2 * i], n_conv_channel, channel, 3, 3, bn=True),
            "c2": _conv_params(keys[4 + 2 * i], channel, n_conv_channel, 1, 1, bn=False),
        })
    return params


# ---------------------------- pure-JAX reference -------------------------------

def _ref_conv(x, w, b, stride, pad):
    y = jax.lax.conv_general_dilated(
        x, w, (stride, stride), [(pad, pad), (pad, pad)],
        dimension_numbers=("NCHW", "OIHW", "NCHW"),
        precision=jax.lax.Precision.HIGHEST)
    return y + b[None, :, None, None]


def _ref_bn(x, p):
    s = p["gamma"] / jnp.sqrt(p["var"] + EPS)
    return ((x - p["mean"][None, :, None, None]) * s[None, :, None, None]
            + p["beta"][None, :, None, None])


def encoder_reference(params, x):
    y = jax.nn.relu(_ref_bn(_ref_conv(x, params["conv1"]["w"],
                                      params["conv1"]["b"], 2, 1), params["conv1"]))
    y = jax.nn.relu(_ref_bn(_ref_conv(y, params["conv2"]["w"],
                                      params["conv2"]["b"], 2, 1), params["conv2"]))
    y = _ref_conv(y, params["conv3"]["w"], params["conv3"]["b"], 1, 1)
    for blk in params["blocks"]:
        h = jax.nn.relu(_ref_bn(_ref_conv(jax.nn.relu(y), blk["c1"]["w"],
                                          blk["c1"]["b"], 1, 1), blk["c1"]))
        y = _ref_conv(h, blk["c2"]["w"], blk["c2"]["b"], 1, 0) + y
    return jax.nn.relu(y)


# ---------------------------------- main ---------------------------------------

if __name__ == "__main__":
    in_channel, channel, n_conv_block, n_conv_channel, stride = 4, 32, 2, 32, 4
    key = jax.random.PRNGKey(0)
    kx, kp = jax.random.split(key)
    x = jax.random.normal(kx, (2, in_channel, 16, 16), jnp.float32)
    params = init_encoder(kp, in_channel, channel, n_conv_block, n_conv_channel)

    pack_params, forward = build_encoder(in_channel, channel, n_conv_block,
                                         n_conv_channel, 16, 16, batch_block=2)
    packed = pack_params(params)             # once, outside the per-forward trace
    fwd = jax.jit(forward)
    out = jax.block_until_ready(fwd(packed, x))

    ref = encoder_reference(params, x)
    assert out.shape == (2, channel, 4, 4), out.shape
    rel_err = float(jnp.linalg.norm(out - ref) / (jnp.linalg.norm(ref) + 1e-12))
    assert rel_err < 1e-2, f"relative error too large: {rel_err}"
    print("KERNEL_OK")
</pallas_src>

<mosaic_0001>
module attributes {stable_mosaic.version = 11 : i64} {
  func.func @kernel(%arg0: i32, %arg1: memref<2x256x4xbf16, #tpu.memory_space<vmem>>, %arg2: memref<1024x256xbf16, #tpu.memory_space<vmem>>, %arg3: memref<64x16xbf16, #tpu.memory_space<vmem>>, %arg4: memref<1x16xf32, #tpu.memory_space<vmem>>, %arg5: memref<256x64xbf16, #tpu.memory_space<vmem>>, %arg6: memref<256x32xbf16, #tpu.memory_space<vmem>>, %arg7: memref<1x32xf32, #tpu.memory_space<vmem>>, %arg8: memref<144x16xbf16, #tpu.memory_space<vmem>>, %arg9: memref<288x32xbf16, #tpu.memory_space<vmem>>, %arg10: memref<1x32xf32, #tpu.memory_space<vmem>>, %arg11: memref<288x32xbf16, #tpu.memory_space<vmem>>, %arg12: memref<1x32xf32, #tpu.memory_space<vmem>>, %arg13: memref<32x32xbf16, #tpu.memory_space<vmem>>, %arg14: memref<1x32xf32, #tpu.memory_space<vmem>>, %arg15: memref<288x32xbf16, #tpu.memory_space<vmem>>, %arg16: memref<1x32xf32, #tpu.memory_space<vmem>>, %arg17: memref<32x32xbf16, #tpu.memory_space<vmem>>, %arg18: memref<1x32xf32, #tpu.memory_space<vmem>>, %arg19: memref<32x32xf32, #tpu.memory_space<vmem>>, %arg20: memref<128x64xbf16, #tpu.memory_space<vmem>>, %arg21: memref<32x256xbf16, #tpu.memory_space<vmem>>, %arg22: memref<32x288xbf16, #tpu.memory_space<vmem>>) attributes {dimension_semantics = [#tpu.dimension_semantics<parallel>], iteration_bounds = array<i64: 1>, scalar_prefetch = 0 : i64, scratch_operands = 3 : i64, tpu.core_type = #tpu.core_type<tc>, window_params = [{transform_indices = @transform_0, window_bounds = array<i64: 2, 256, 4>}, {pipeline_mode = #tpu.pipeline_mode<synchronous>, transform_indices = @transform_1, window_bounds = array<i64: 1024, 256>}, {pipeline_mode = #tpu.pipeline_mode<synchronous>, transform_indices = @transform_2, window_bounds = array<i64: 64, 16>}, {pipeline_mode = #tpu.pipeline_mode<synchronous>, transform_indices = @transform_3, window_bounds = array<i64: 1, 16>}, {pipeline_mode = #tpu.pipeline_mode<synchronous>, transform_indices = @transform_4, window_bounds = array<i64: 256, 64>}, {pipeline_mode = #tpu.pipeline_mode<synchronous>, transform_indices = @transform_5, window_bounds = array<i64: 256, 32>}, {pipeline_mode = #tpu.pipeline_mode<synchronous>, transform_indices = @transform_6, window_bounds = array<i64: 1, 32>}, {pipeline_mode = #tpu.pipeline_mode<synchronous>, transform_indices = @transform_7, window_bounds = array<i64: 144, 16>}, {pipeline_mode = #tpu.pipeline_mode<synchronous>, transform_indices = @transform_8, window_bounds = array<i64: 288, 32>}, {pipeline_mode = #tpu.pipeline_mode<synchronous>, transform_indices = @transform_9, window_bounds = array<i64: 1, 32>}, {pipeline_mode = #tpu.pipeline_mode<synchronous>, transform_indices = @transform_10, window_bounds = array<i64: 288, 32>}, {pipeline_mode = #tpu.pipeline_mode<synchronous>, transform_indices = @transform_11, window_bounds = array<i64: 1, 32>}, {pipeline_mode = #tpu.pipeline_mode<synchronous>, transform_indices = @transform_12, window_bounds = array<i64: 32, 32>}, {pipeline_mode = #tpu.pipeline_mode<synchronous>, transform_indices = @transform_13, window_bounds = array<i64: 1, 32>}, {pipeline_mode = #tpu.pipeline_mode<synchronous>, transform_indices = @transform_14, window_bounds = array<i64: 288, 32>}, {pipeline_mode = #tpu.pipeline_mode<synchronous>, transform_indices = @transform_15, window_bounds = array<i64: 1, 32>}, {pipeline_mode = #tpu.pipeline_mode<synchronous>, transform_indices = @transform_16, window_bounds = array<i64: 32, 32>}, {pipeline_mode = #tpu.pipeline_mode<synchronous>, transform_indices = @transform_17, window_bounds = array<i64: 1, 32>}, {transform_indices = @transform_18, window_bounds = array<i64: 32, 32>}]} {
    %c0 = arith.constant 0 : index
    %c0_0 = arith.constant 0 : index
    %c0_1 = arith.constant 0 : index
    %0 = vector.load %arg1[%c0, %c0_0, %c0_1] : memref<2x256x4xbf16, #tpu.memory_space<vmem>>, vector<1x256x4xbf16>
    %1 = vector.shape_cast %0 : vector<1x256x4xbf16> to vector<256x4xbf16>
    %c1 = arith.constant 1 : index
    %c0_2 = arith.constant 0 : index
    %c0_3 = arith.constant 0 : index
    %2 = vector.load %arg1[%c1, %c0_2, %c0_3] : memref<2x256x4xbf16, #tpu.memory_space<vmem>>, vector<1x256x4xbf16>
    %3 = vector.shape_cast %2 : vector<1x256x4xbf16> to vector<256x4xbf16>
    %c0_4 = arith.constant 0 : index
    %c0_5 = arith.constant 0 : index
    %4 = vector.load %arg2[%c0_4, %c0_5] : memref<1024x256xbf16, #tpu.memory_space<vmem>>, vector<1024x256xbf16>
    %cst = arith.constant dense<0.000000e+00> : vector<1024x4xf32>
    %5 = tpu.matmul %4, %1, %cst {dimension_numbers = #tpu.dot_dimension_numbers<[1], [0], [0], [1], [0, 0, 1, 1], [], []>} : vector<1024x256xbf16>, vector<256x4xbf16>, vector<1024x4xf32> -> vector<1024x4xf32>
    %6 = arith.truncf %5 : vector<1024x4xf32> to vector<1024x4xbf16>
    %7 = vector.extract_strided_slice %6 {offsets = [0, 0], sizes = [64, 4], strides = [1, 1]} : vector<1024x4xbf16> to vector<64x4xbf16>
    %c0_6 = arith.constant 0 : index
    %c0_7 = arith.constant 0 : index
    %8 = vector.load %arg20[%c0_6, %c0_7] : memref<128x64xbf16, #tpu.memory_space<vmem>>, vector<64x4xbf16>
    tpu.vector_store %arg20[%c0_6, %c0_7], %7 {strides = array<i32>} : memref<128x64xbf16, #tpu.memory_space<vmem>>, vector<64x4xbf16>,
    %9 = vector.extract_strided_slice %6 {offsets = [64, 0], sizes = [64, 4], strides = [1, 1]} : vector<1024x4xbf16> to vector<64x4xbf16>
    %c0_8 = arith.constant 0 : index
    %c4 = arith.constant 4 : index
    %10 = vector.load %arg20[%c0_8, %c4] : memref<128x64xbf16, #tpu.memory_space<vmem>>, vector<64x4xbf16>
    tpu.vector_store %arg20[%c0_8, %c4], %9 {strides = array<i32>} : memref<128x64xbf16, #tpu.memory_space<vmem>>, vector<64x4xbf16>,
    %11 = vector.extract_strided_slice %6 {offsets = [128, 0], sizes = [64, 4], strides = [1, 1]} : vector<1024x4xbf16> to vector<64x4xbf16>
    %c0_9 = arith.constant 0 : index
    %c8 = arith.constant 8 : index
    %12 = vector.load %arg20[%c0_9, %c8] : memref<128x64xbf16, #tpu.memory_space<vmem>>, vector<64x4xbf16>
    tpu.vector_store %arg20[%c0_9, %c8], %11 {strides = array<i32>} : memref<128x64xbf16, #tpu.memory_space<vmem>>, vector<64x4xbf16>,
    %13 = vector.extract_strided_slice %6 {offsets = [192, 0], sizes = [64, 4], strides = [1, 1]} : vector<1024x4xbf16> to vector<64x4xbf16>
    %c0_10 = arith.constant 0 : index
    %c12 = arith.constant 12 : index
    %14 = vector.load %arg20[%c0_10, %c12] : memref<128x64xbf16, #tpu.memory_space<vmem>>, vector<64x4xbf16>
    tpu.vector_store %arg20[%c0_10, %c12], %13 {strides = array<i32>} : memref<128x64xbf16, #tpu.memory_space<vmem>>, vector<64x4xbf16>,
    %15 = vector.extract_strided_slice %6 {offsets = [256, 0], sizes = [64, 4], strides = [1, 1]} : vector<1024x4xbf16> to vector<64x4xbf16>
    %c0_11 = arith.constant 0 : index
    %c16 = arith.constant 16 : index
    %16 = vector.load %arg20[%c0_11, %c16] : memref<128x64xbf16, #tpu.memory_space<vmem>>, vector<64x4xbf16>
    tpu.vector_store %arg20[%c0_11, %c16], %15 {strides = array<i32>} : memref<128x64xbf16, #tpu.memory_space<vmem>>, vector<64x4xbf16>,
    %17 = vector.extract_strided_slice %6 {offsets = [320, 0], sizes = [64, 4], strides = [1, 1]} : vector<1024x4xbf16> to vector<64x4xbf16>
    %c0_12 = arith.constant 0 : index
    %c20 = arith.constant 20 : index
    %18 = vector.load %arg20[%c0_12, %c20] : memref<128x64xbf16, #tpu.memory_space<vmem>>, vector<64x4xbf16>
    tpu.vector_store %arg20[%c0_12, %c20], %17 {strides = array<i32>} : memref<128x64xbf16, #tpu.memory_space<vmem>>, vector<64x4xbf16>,
    %19 = vector.extract_strided_slice %6 {offsets = [384, 0], sizes = [64, 4], strides = [1, 1]} : vector<1024x4xbf16> to vector<64x4xbf16>
    %c0_13 = arith.constant 0 : index
    %c24 = arith.constant 24 : index
    %20 = vector.load %arg20[%c0_13, %c24] : memref<128x64xbf16, #tpu.memory_space<vmem>>, vector<64x4xbf16>
    tpu.vector_store %arg20[%c0_13, %c24], %19 {strides = array<i32>} : memref<128x64xbf16, #tpu.memory_space<vmem>>, vector<64x4xbf16>,
    %21 = vector.extract_strided_slice %6 {offsets = [448, 0], sizes = [64, 4], strides = [1, 1]} : vector<1024x4xbf16> to vector<64x4xbf16>
    %c0_14 = arith.constant 0 : index
    %c28 = arith.constant 28 : index
    %22 = vector.load %arg20[%c0_14, %c28] : memref<128x64xbf16, #tpu.memory_space<vmem>>, vector<64x4xbf16>
    tpu.vector_store %arg20[%c0_14, %c28], %21 {strides = array<i32>} : memref<128x64xbf16, #tpu.memory_space<vmem>>, vector<64x4xbf16>,
    %23 = vector.extract_strided_slice %6 {offsets = [512, 0], sizes = [64, 4], strides = [1, 1]} : vector<1024x4xbf16> to vector<64x4xbf16>
    %c0_15 = arith.constant 0 : index
    %c32 = arith.constant 32 : index
    %24 = vector.load %arg20[%c0_15, %c32] : memref<128x64xbf16, #tpu.memory_space<vmem>>, vector<64x4xbf16>
    tpu.vector_store %arg20[%c0_15, %c32], %23 {strides = array<i32>} : memref<128x64xbf16, #tpu.memory_space<vmem>>, vector<64x4xbf16>,
    %25 = vector.extract_strided_slice %6 {offsets = [576, 0], sizes = [64, 4], strides = [1, 1]} : vector<1024x4xbf16> to vector<64x4xbf16>
    %c0_16 = arith.constant 0 : index
    %c36 = arith.constant 36 : index
    %26 = vector.load %arg20[%c0_16, %c36] : memref<128x64xbf16, #tpu.memory_space<vmem>>, vector<64x4xbf16>
    tpu.vector_store %arg20[%c0_16, %c36], %25 {strides = array<i32>} : memref<128x64xbf16, #tpu.memory_space<vmem>>, vector<64x4xbf16>,
    %27 = vector.extract_strided_slice %6 {offsets = [640, 0], sizes = [64, 4], strides = [1, 1]} : vector<1024x4xbf16> to vector<64x4xbf16>
    %c0_17 = arith.constant 0 : index
    %c40 = arith.constant 40 : index
    %28 = vector.load %arg20[%c0_17, %c40] : memref<128x64xbf16, #tpu.memory_space<vmem>>, vector<64x4xbf16>
    tpu.vector_store %arg20[%c0_17, %c40], %27 {strides = array<i32>} : memref<128x64xbf16, #tpu.memory_space<vmem>>, vector<64x4xbf16>,
    %29 = vector.extract_strided_slice %6 {offsets = [704, 0], sizes = [64, 4], strides = [1, 1]} : vector<1024x4xbf16> to vector<64x4xbf16>
    %c0_18 = arith.constant 0 : index
    %c44 = arith.constant 44 : index
    %30 = vector.load %arg20[%c0_18, %c44] : memref<128x64xbf16, #tpu.memory_space<vmem>>, vector<64x4xbf16>
    tpu.vector_store %arg20[%c0_18, %c44], %29 {strides = array<i32>} : memref<128x64xbf16, #tpu.memory_space<vmem>>, vector<64x4xbf16>,
    %31 = vector.extract_strided_slice %6 {offsets = [768, 0], sizes = [64, 4], strides = [1, 1]} : vector<1024x4xbf16> to vector<64x4xbf16>
    %c0_19 = arith.constant 0 : index
    %c48 = arith.constant 48 : index
    %32 = vector.load %arg20[%c0_19, %c48] : memref<128x64xbf16, #tpu.memory_space<vmem>>, vector<64x4xbf16>
    tpu.vector_store %arg20[%c0_19, %c48], %31 {strides = array<i32>} : memref<128x64xbf16, #tpu.memory_space<vmem>>, vector<64x4xbf16>,
    %33 = vector.extract_strided_slice %6 {offsets = [832, 0], sizes = [64, 4], strides = [1, 1]} : vector<1024x4xbf16> to vector<64x4xbf16>
    %c0_20 = arith.constant 0 : index
    %c52 = arith.constant 52 : index
    %34 = vector.load %arg20[%c0_20, %c52] : memref<128x64xbf16, #tpu.memory_space<vmem>>, vector<64x4xbf16>
    tpu.vector_store %arg20[%c0_20, %c52], %33 {strides = array<i32>} : memref<128x64xbf16, #tpu.memory_space<vmem>>, vector<64x4xbf16>,
    %35 = vector.extract_strided_slice %6 {offsets = [896, 0], sizes = [64, 4], strides = [1, 1]} : vector<1024x4xbf16> to vector<64x4xbf16>
    %c0_21 = arith.constant 0 : index
    %c56 = arith.constant 56 : index
    %36 = vector.load %arg20[%c0_21, %c56] : memref<128x64xbf16, #tpu.memory_space<vmem>>, vector<64x4xbf16>
    tpu.vector_store %arg20[%c0_21, %c56], %35 {strides = array<i32>} : memref<128x64xbf16, #tpu.memory_space<vmem>>, vector<64x4xbf16>,
    %37 = vector.extract_strided_slice %6 {offsets = [960, 0], sizes = [64, 4], strides = [1, 1]} : vector<1024x4xbf16> to vector<64x4xbf16>
    %c0_22 = arith.constant 0 : index
    %c60 = arith.constant 60 : index
    %38 = vector.load %arg20[%c0_22, %c60] : memref<128x64xbf16, #tpu.memory_space<vmem>>, vector<64x4xbf16>
    tpu.vector_store %arg20[%c0_22, %c60], %37 {strides = array<i32>} : memref<128x64xbf16, #tpu.memory_space<vmem>>, vector<64x4xbf16>,
    %cst_23 = arith.constant dense<0.000000e+00> : vector<1024x4xf32>
    %39 = tpu.matmul %4, %3, %cst_23 {dimension_numbers = #tpu.dot_dimension_numbers<[1], [0], [0], [1], [0, 0, 1, 1], [], []>} : vector<1024x256xbf16>, vector<256x4xbf16>, vector<1024x4xf32> -> vector<1024x4xf32>
    %40 = arith.truncf %39 : vector<1024x4xf32> to vector<1024x4xbf16>
    %41 = vector.extract_strided_slice %40 {offsets = [0, 0], sizes = [64, 4], strides = [1, 1]} : vector<1024x4xbf16> to vector<64x4xbf16>
    %c64 = arith.constant 64 : index
    %c0_24 = arith.constant 0 : index
    %42 = vector.load %arg20[%c64, %c0_24] : memref<128x64xbf16, #tpu.memory_space<vmem>>, vector<64x4xbf16>
    tpu.vector_store %arg20[%c64, %c0_24], %41 {strides = array<i32>} : memref<128x64xbf16, #tpu.memory_space<vmem>>, vector<64x4xbf16>,
    %43 = vector.extract_strided_slice %40 {offsets = [64, 0], sizes = [64, 4], strides = [1, 1]} : vector<1024x4xbf16> to vector<64x4xbf16>
    %c64_25 = arith.constant 64 : index
    %c4_26 = arith.constant 4 : index
    %44 = vector.load %arg20[%c64_25, %c4_26] : memref<128x64xbf16, #tpu.memory_space<vmem>>, vector<64x4xbf16>
    tpu.vector_store %arg20[%c64_25, %c4_26], %43 {strides = array<i32>} : memref<128x64xbf16, #tpu.memory_space<vmem>>, vector<64x4xbf16>,
    %45 = vector.extract_strided_slice %40 {offsets = [128, 0], sizes = [64, 4], strides = [1, 1]} : vector<1024x4xbf16> to vector<64x4xbf16>
    %c64_27 = arith.constant 64 : index
    %c8_28 = arith.constant 8 : index
    %46 = vector.load %arg20[%c64_27, %c8_28] : memref<128x64xbf16, #tpu.memory_space<vmem>>, vector<64x4xbf16>
    tpu.vector_store %arg20[%c64_27, %c8_28], %45 {strides = array<i32>} : memref<128x64xbf16, #tpu.memory_space<vmem>>, vector<64x4xbf16>,
    %47 = vector.extract_strided_slice %40 {offsets = [192, 0], sizes = [64, 4], strides = [1, 1]} : vector<1024x4xbf16> to vector<64x4xbf16>
    %c64_29 = arith.constant 64 : index
    %c12_30 = arith.constant 12 : index
    %48 = vector.load %arg20[%c64_29, %c12_30] : memref<128x64xbf16, #tpu.memory_space<vmem>>, vector<64x4xbf16>
    tpu.vector_store %arg20[%c64_29, %c12_30], %47 {strides = array<i32>} : memref<128x64xbf16, #tpu.memory_space<vmem>>, vector<64x4xbf16>,
    %49 = vector.extract_strided_slice %40 {offsets = [256, 0], sizes = [64, 4], strides = [1, 1]} : vector<1024x4xbf16> to vector<64x4xbf16>
    %c64_31 = arith.constant 64 : index
    %c16_32 = arith.constant 16 : index
    %50 = vector.load %arg20[%c64_31, %c16_32] : memref<128x64xbf16, #tpu.memory_space<vmem>>, vector<64x4xbf16>
    tpu.vector_store %arg20[%c64_31, %c16_32], %49 {strides = array<i32>} : memref<128x64xbf16, #tpu.memory_space<vmem>>, vector<64x4xbf16>,
    %51 = vector.extract_strided_slice %40 {offsets = [320, 0], sizes = [64, 4], strides = [1, 1]} : vector<1024x4xbf16> to vector<64x4xbf16>
    %c64_33 = arith.constant 64 : index
    %c20_34 = arith.constant 20 : index
    %52 = vector.load %arg20[%c64_33, %c20_34] : memref<128x64xbf16, #tpu.memory_space<vmem>>, vector<64x4xbf16>
    tpu.vector_store %arg20[%c64_33, %c20_34], %51 {strides = array<i32>} : memref<128x64xbf16, #tpu.memory_space<vmem>>, vector<64x4xbf16>,
    %53 = vector.extract_strided_slice %40 {offsets = [384, 0], sizes = [64, 4], strides = [1, 1]} : vector<1024x4xbf16> to vector<64x4xbf16>
    %c64_35 = arith.constant 64 : index
    %c24_36 = arith.constant 24 : index
    %54 = vector.load %arg20[%c64_35, %c24_36] : memref<128x64xbf16, #tpu.memory_space<vmem>>, vector<64x4xbf16>
    tpu.vector_store %arg20[%c64_35, %c24_36], %53 {strides = array<i32>} : memref<128x64xbf16, #tpu.memory_space<vmem>>, vector<64x4xbf16>,
    %55 = vector.extract_strided_slice %40 {offsets = [448, 0], sizes = [64, 4], strides = [1, 1]} : vector<1024x4xbf16> to vector<64x4xbf16>
    %c64_37 = arith.constant 64 : index
    %c28_38 = arith.constant 28 : index
    %56 = vector.load %arg20[%c64_37, %c28_38] : memref<128x64xbf16, #tpu.memory_space<vmem>>, vector<64x4xbf16>
    tpu.vector_store %arg20[%c64_37, %c28_38], %55 {strides = array<i32>} : memref<128x64xbf16, #tpu.memory_space<vmem>>, vector<64x4xbf16>,
    %57 = vector.extract_strided_slice %40 {offsets = [512, 0], sizes = [64, 4], strides = [1, 1]} : vector<1024x4xbf16> to vector<64x4xbf16>
    %c64_39 = arith.constant 64 : index
    %c32_40 = arith.constant 32 : index
    %58 = vector.load %arg20[%c64_39, %c32_40] : memref<128x64xbf16, #tpu.memory_space<vmem>>, vector<64x4xbf16>
    tpu.vector_store %arg20[%c64_39, %c32_40], %57 {strides = array<i32>} : memref<128x64xbf16, #tpu.memory_space<vmem>>, vector<64x4xbf16>,
    %59 = vector.extract_strided_slice %40 {offsets = [576, 0], sizes = [64, 4], strides = [1, 1]} : vector<1024x4xbf16> to vector<64x4xbf16>
    %c64_41 = arith.constant 64 : index
    %c36_42 = arith.constant 36 : index
    %60 = vector.load %arg20[%c64_41, %c36_42] : memref<128x64xbf16, #tpu.memory_space<vmem>>, vector<64x4xbf16>
    tpu.vector_store %arg20[%c64_41, %c36_42], %59 {strides = array<i32>} : memref<128x64xbf16, #tpu.memory_space<vmem>>, vector<64x4xbf16>,
    %61 = vector.extract_strided_slice %40 {offsets = [640, 0], sizes = [64, 4], strides = [1, 1]} : vector<1024x4xbf16> to vector<64x4xbf16>
    %c64_43 = arith.constant 64 : index
    %c40_44 = arith.constant 40 : index
    %62 = vector.load %arg20[%c64_43, %c40_44] : memref<128x64xbf16, #tpu.memory_space<vmem>>, vector<64x4xbf16>
    tpu.vector_store %arg20[%c64_43, %c40_44], %61 {strides = array<i32>} : memref<128x64xbf16, #tpu.memory_space<vmem>>, vector<64x4xbf16>,
    %63 = vector.extract_strided_slice %40 {offsets = [704, 0], sizes = [64, 4], strides = [1, 1]} : vector<1024x4xbf16> to vector<64x4xbf16>
    %c64_45 = arith.constant 64 : index
    %c44_46 = arith.constant 44 : index
    %64 = vector.load %arg20[%c64_45, %c44_46] : memref<128x64xbf16, #tpu.memory_space<vmem>>, vector<64x4xbf16>
    tpu.vector_store %arg20[%c64_45, %c44_46], %63 {strides = array<i32>} : memref<128x64xbf16, #tpu.memory_space<vmem>>, vector<64x4xbf16>,
    %65 = vector.extract_strided_slice %40 {offsets = [768, 0], sizes = [64, 4], strides = [1, 1]} : vector<1024x4xbf16> to vector<64x4xbf16>
    %c64_47 = arith.constant 64 : index
    %c48_48 = arith.constant 48 : index
    %66 = vector.load %arg20[%c64_47, %c48_48] : memref<128x64xbf16, #tpu.memory_space<vmem>>, vector<64x4xbf16>
    tpu.vector_store %arg20[%c64_47, %c48_48], %65 {strides = array<i32>} : memref<128x64xbf16, #tpu.memory_space<vmem>>, vector<64x4xbf16>,
    %67 = vector.extract_strided_slice %40 {offsets = [832, 0], sizes = [64, 4], strides = [1, 1]} : vector<1024x4xbf16> to vector<64x4xbf16>
    %c64_49 = arith.constant 64 : index
    %c52_50 = arith.constant 52 : index
    %68 = vector.load %arg20[%c64_49, %c52_50] : memref<128x64xbf16, #tpu.memory_space<vmem>>, vector<64x4xbf16>
    tpu.vector_store %arg20[%c64_49, %c52_50], %67 {strides = array<i32>} : memref<128x64xbf16, #tpu.memory_space<vmem>>, vector<64x4xbf16>,
    %69 = vector.extract_strided_slice %40 {offsets = [896, 0], sizes = [64, 4], strides = [1, 1]} : vector<1024x4xbf16> to vector<64x4xbf16>
    %c64_51 = arith.constant 64 : index
    %c56_52 = arith.constant 56 : index
    %70 = vector.load %arg20[%c64_51, %c56_52] : memref<128x64xbf16, #tpu.memory_space<vmem>>, vector<64x4xbf16>
    tpu.vector_store %arg20[%c64_51, %c56_52], %69 {strides = array<i32>} : memref<128x64xbf16, #tpu.memory_space<vmem>>, vector<64x4xbf16>,
    %71 = vector.extract_strided_slice %40 {offsets = [960, 0], sizes = [64, 4], strides = [1, 1]} : vector<1024x4xbf16> to vector<64x4xbf16>
    %c64_53 = arith.constant 64 : index
    %c60_54 = arith.constant 60 : index
    %72 = vector.load %arg20[%c64_53, %c60_54] : memref<128x64xbf16, #tpu.memory_space<vmem>>, vector<64x4xbf16>
    tpu.vector_store %arg20[%c64_53, %c60_54], %71 {strides = array<i32>} : memref<128x64xbf16, #tpu.memory_space<vmem>>, vector<64x4xbf16>,
    %c0_55 = arith.constant 0 : index
    %c0_56 = arith.constant 0 : index
    %73 = vector.load %arg20[%c0_55, %c0_56] : memref<128x64xbf16, #tpu.memory_space<vmem>>, vector<128x64xbf16>
    %c0_57 = arith.constant 0 : index
    %c0_58 = arith.constant 0 : index
    %74 = vector.load %arg3[%c0_57, %c0_58] : memref<64x16xbf16, #tpu.memory_space<vmem>>, vector<64x16xbf16>
    %cst_59 = arith.constant dense<0.000000e+00> : vector<128x16xf32>
    %75 = tpu.matmul %73, %74, %cst_59 {dimension_numbers = #tpu.dot_dimension_numbers<[1], [0], [0], [1], [0, 0, 1, 1], [], []>} : vector<128x64xbf16>, vector<64x16xbf16>, vector<128x16xf32> -> vector<128x16xf32>
    %c0_60 = arith.constant 0 : index
    %c0_61 = arith.constant 0 : index
    %76 = vector.load %arg4[%c0_60, %c0_61] : memref<1x16xf32, #tpu.memory_space<vmem>>, vector<1x16xf32>
    %77 = vector.broadcast %76 : vector<1x16xf32> to vector<128x16xf32>
    %78 = arith.addf %75, %77 : vector<128x16xf32>
    %cst_62 = arith.constant 0.000000e+00 : f32
    %79 = vector.broadcast %cst_62 : f32 to vector<128x16xf32>
    %80 = arith.maximumf %78, %79 : vector<128x16xf32>
    %81 = arith.truncf %80 : vector<128x16xf32> to vector<128x16xbf16>
    %82 = vector.extract_strided_slice %81 {offsets = [0, 0], sizes = [64, 16], strides = [1, 1]} : vector<128x16xbf16> to vector<64x16xbf16>
    %83 = vector.extract_strided_slice %81 {offsets = [64, 0], sizes = [64, 16], strides = [1, 1]} : vector<128x16xbf16> to vector<64x16xbf16>
    %c0_63 = arith.constant 0 : index
    %c0_64 = arith.constant 0 : index
    %84 = vector.load %arg5[%c0_63, %c0_64] : memref<256x64xbf16, #tpu.memory_space<vmem>>, vector<256x64xbf16>
    %cst_65 = arith.constant dense<0.000000e+00> : vector<256x16xf32>
    %85 = tpu.matmul %84, %82, %cst_65 {dimension_numbers = #tpu.dot_dimension_numbers<[1], [0], [0], [1], [0, 0, 1, 1], [], []>} : vector<256x64xbf16>, vector<64x16xbf16>, vector<256x16xf32> -> vector<256x16xf32>
    %86 = arith.truncf %85 : vector<256x16xf32> to vector<256x16xbf16>
    %87 = vector.extract_strided_slice %86 {offsets = [0, 0], sizes = [16, 16], strides = [1, 1]} : vector<256x16xbf16> to vector<16x16xbf16>
    %c0_66 = arith.constant 0 : index
    %c0_67 = arith.constant 0 : index
    %88 = vector.load %arg21[%c0_66, %c0_67] : memref<32x256xbf16, #tpu.memory_space<vmem>>, vector<16x16xbf16>
    tpu.vector_store %arg21[%c0_66, %c0_67], %87 {strides = array<i32>} : memref<32x256xbf16, #tpu.memory_space<vmem>>, vector<16x16xbf16>,
    %89 = vector.extract_strided_slice %86 {offsets = [16, 0], sizes = [16, 16], strides = [1, 1]} : vector<256x16xbf16> to vector<16x16xbf16>
    %c0_68 = arith.constant 0 : index
    %c16_69 = arith.constant 16 : index
    %90 = vector.load %arg21[%c0_68, %c16_69] : memref<32x256xbf16, #tpu.memory_space<vmem>>, vector<16x16xbf16>
    tpu.vector_store %arg21[%c0_68, %c16_69], %89 {strides = array<i32>} : memref<32x256xbf16, #tpu.memory_space<vmem>>, vector<16x16xbf16>,
    %91 = vector.extract_strided_slice %86 {offsets = [32, 0], sizes = [16, 16], strides = [1, 1]} : vector<256x16xbf16> to vector<16x16xbf16>
    %c0_70 = arith.constant 0 : index
    %c32_71 = arith.constant 32 : index
    %92 = vector.load %arg21[%c0_70, %c32_71] : memref<32x256xbf16, #tpu.memory_space<vmem>>, vector<16x16xbf16>
    tpu.vector_store %arg21[%c0_70, %c32_71], %91 {strides = array<i32>} : memref<32x256xbf16, #tpu.memory_space<vmem>>, vector<16x16xbf16>,
    %93 = vector.extract_strided_slice %86 {offsets = [48, 0], sizes = [16, 16], strides = [1, 1]} : vector<256x16xbf16> to vector<16x16xbf16>
    %c0_72 = arith.constant 0 : index
    %c48_73 = arith.constant 48 : index
    %94 = vector.load %arg21[%c0_72, %c48_73] : memref<32x256xbf16, #tpu.memory_space<vmem>>, vector<16x16xbf16>
    tpu.vector_store %arg21[%c0_72, %c48_73], %93 {strides = array<i32>} : memref<32x256xbf16, #tpu.memory_space<vmem>>, vector<16x16xbf16>,
    %95 = vector.extract_strided_slice %86 {offsets = [64, 0], sizes = [16, 16], strides = [1, 1]} : vector<256x16xbf16> to vector<16x16xbf16>
    %c0_74 = arith.constant 0 : index
    %c64_75 = arith.constant 64 : index
    %96 = vector.load %arg21[%c0_74, %c64_75] : memref<32x256xbf16, #tpu.memory_space<vmem>>, vector<16x16xbf16>
    tpu.vector_store %arg21[%c0_74, %c64_75], %95 {strides = array<i32>} : memref<32x256xbf16, #tpu.memory_space<vmem>>, vector<16x16xbf16>,
    %97 = vector.extract_strided_slice %86 {offsets = [80, 0], sizes = [16, 16], strides = [1, 1]} : vector<256x16xbf16> to vector<16x16xbf16>
    %c0_76 = arith.constant 0 : index
    %c80 = arith.constant 80 : index
    %98 = vector.load %arg21[%c0_76, %c80] : memref<32x256xbf16, #tpu.memory_space<vmem>>, vector<16x16xbf16>
    tpu.vector_store %arg21[%c0_76, %c80], %97 {strides = array<i32>} : memref<32x256xbf16, #tpu.memory_space<vmem>>, vector<16x16xbf16>,
    %99 = vector.extract_strided_slice %86 {offsets = [96, 0], sizes = [16, 16], strides = [1, 1]} : vector<256x16xbf16> to vector<16x16xbf16>
    %c0_77 = arith.constant 0 : index
    %c96 = arith.constant 96 : index
    %100 = vector.load %arg21[%c0_77, %c96] : memref<32x256xbf16, #tpu.memory_space<vmem>>, vector<16x16xbf16>
    tpu.vector_store %arg21[%c0_77, %c96], %99 {strides = array<i32>} : memref<32x256xbf16, #tpu.memory_space<vmem>>, vector<16x16xbf16>,
    %101 = vector.extract_strided_slice %86 {offsets = [112, 0], sizes = [16, 16], strides = [1, 1]} : vector<256x16xbf16> to vector<16x16xbf16>
    %c0_78 = arith.constant 0 : index
    %c112 = arith.constant 112 : index
    %102 = vector.load %arg21[%c0_78, %c112] : memref<32x256xbf16, #tpu.memory_space<vmem>>, vector<16x16xbf16>
    tpu.vector_store %arg21[%c0_78, %c112], %101 {strides = array<i32>} : memref<32x256xbf16, #tpu.memory_space<vmem>>, vector<16x16xbf16>,
    %103 = vector.extract_strided_slice %86 {offsets = [128, 0], sizes = [16, 16], strides = [1, 1]} : vector<256x16xbf16> to vector<16x16xbf16>
    %c0_79 = arith.constant 0 : index
    %c128 = arith.constant 128 : index
    %104 = vector.load %arg21[%c0_79, %c128] : memref<32x256xbf16, #tpu.memory_space<vmem>>, vector<16x16xbf16>
    tpu.vector_store %arg21[%c0_79, %c128], %103 {strides = array<i32>} : memref<32x256xbf16, #tpu.memory_space<vmem>>, vector<16x16xbf16>,
    %105 = vector.extract_strided_slice %86 {offsets = [144, 0], sizes = [16, 16], strides = [1, 1]} : vector<256x16xbf16> to vector<16x16xbf16>
    %c0_80 = arith.constant 0 : index
    %c144 = arith.constant 144 : index
    %106 = vector.load %arg21[%c0_80, %c144] : memref<32x256xbf16, #tpu.memory_space<vmem>>, vector<16x16xbf16>
    tpu.vector_store %arg21[%c0_80, %c144], %105 {strides = array<i32>} : memref<32x256xbf16, #tpu.memory_space<vmem>>, vector<16x16xbf16>,
    %107 = vector.extract_strided_slice %86 {offsets = [160, 0], sizes = [16, 16], strides = [1, 1]} : vector<256x16xbf16> to vector<16x16xbf16>
    %c0_81 = arith.constant 0 : index
    %c160 = arith.constant 160 : index
    %108 = vector.load %arg21[%c0_81, %c160] : memref<32x256xbf16, #tpu.memory_space<vmem>>, vector<16x16xbf16>
    tpu.vector_store %arg21[%c0_81, %c160], %107 {strides = array<i32>} : memref<32x256xbf16, #tpu.memory_space<vmem>>, vector<16x16xbf16>,
    %109 = vector.extract_strided_slice %86 {offsets = [176, 0], sizes = [16, 16], strides = [1, 1]} : vector<256x16xbf16> to vector<16x16xbf16>
    %c0_82 = arith.constant 0 : index
    %c176 = arith.constant 176 : index
    %110 = vector.load %arg21[%c0_82, %c176] : memref<32x256xbf16, #tpu.memory_space<vmem>>, vector<16x16xbf16>
    tpu.vector_store %arg21[%c0_82, %c176], %109 {strides = array<i32>} : memref<32x256xbf16, #tpu.memory_space<vmem>>, vector<16x16xbf16>,
    %111 = vector.extract_strided_slice %86 {offsets = [192, 0], sizes = [16, 16], strides = [1, 1]} : vector<256x16xbf16> to vector<16x16xbf16>
    %c0_83 = arith.constant 0 : index
    %c192 = arith.constant 192 : index
    %112 = vector.load %arg21[%c0_83, %c192] : memref<32x256xbf16, #tpu.memory_space<vmem>>, vector<16x16xbf16>
    tpu.vector_store %arg21[%c0_83, %c192], %111 {strides = array<i32>} : memref<32x256xbf16, #tpu.memory_space<vmem>>, vector<16x16xbf16>,
    %113 = vector.extract_strided_slice %86 {offsets = [208, 0], sizes = [16, 16], strides = [1, 1]} : vector<256x16xbf16> to vector<16x16xbf16>
    %c0_84 = arith.constant 0 : index
    %c208 = arith.constant 208 : index
    %114 = vector.load %arg21[%c0_84, %c208] : memref<32x256xbf16, #tpu.memory_space<vmem>>, vector<16x16xbf16>
    tpu.vector_store %arg21[%c0_84, %c208], %113 {strides = array<i32>} : memref<32x256xbf16, #tpu.memory_space<vmem>>, vector<16x16xbf16>,
    %115 = vector.extract_strided_slice %86 {offsets = [224, 0], sizes = [16, 16], strides = [1, 1]} : vector<256x16xbf16> to vector<16x16xbf16>
    %c0_85 = arith.constant 0 : index
    %c224 = arith.constant 224 : index
    %116 = vector.load %arg21[%c0_85, %c224] : memref<32x256xbf16, #tpu.memory_space<vmem>>, vector<16x16xbf16>
    tpu.vector_store %arg21[%c0_85, %c224], %115 {strides = array<i32>} : memref<32x256xbf16, #tpu.memory_space<vmem>>, vector<16x16xbf16>,
    %117 = vector.extract_strided_slice %86 {offsets = [240, 0], sizes = [16, 16], strides = [1, 1]} : vector<256x16xbf16> to vector<16x16xbf16>
    %c0_86 = arith.constant 0 : index
    %c240 = arith.constant 240 : index
    %118 = vector.load %arg21[%c0_86, %c240] : memref<32x256xbf16, #tpu.memory_space<vmem>>, vector<16x16xbf16>
    tpu.vector_store %arg21[%c0_86, %c240], %117 {strides = array<i32>} : memref<32x256xbf16, #tpu.memory_space<vmem>>, vector<16x16xbf16>,
    %cst_87 = arith.constant dense<0.000000e+00> : vector<256x16xf32>
    %119 = tpu.matmul %84, %83, %cst_87 {dimension_numbers = #tpu.dot_dimension_numbers<[1], [0], [0], [1], [0, 0, 1, 1], [], []>} : vector<256x64xbf16>, vector<64x16xbf16>, vector<256x16xf32> -> vector<256x16xf32>
    %120 = arith.truncf %119 : vector<256x16xf32> to vector<256x16xbf16>
    %121 = vector.extract_strided_slice %120 {offsets = [0, 0], sizes = [16, 16], strides = [1, 1]} : vector<256x16xbf16> to vector<16x16xbf16>
    %c16_88 = arith.constant 16 : index
    %c0_89 = arith.constant 0 : index
    %122 = vector.load %arg21[%c16_88, %c0_89] : memref<32x256xbf16, #tpu.memory_space<vmem>>, vector<16x16xbf16>
    tpu.vector_store %arg21[%c16_88, %c0_89], %121 {strides = array<i32>} : memref<32x256xbf16, #tpu.memory_space<vmem>>, vector<16x16xbf16>,
    %123 = vector.extract_strided_slice %120 {offsets = [16, 0], sizes = [16, 16], strides = [1, 1]} : vector<256x16xbf16> to vector<16x16xbf16>
    %c16_90 = arith.constant 16 : index
    %c16_91 = arith.constant 16 : index
    %124 = vector.load %arg21[%c16_90, %c16_91] : memref<32x256xbf16, #tpu.memory_space<vmem>>, vector<16x16xbf16>
    tpu.vector_store %arg21[%c16_90, %c16_91], %123 {strides = array<i32>} : memref<32x256xbf16, #tpu.memory_space<vmem>>, vector<16x16xbf16>,
    %125 = vector.extract_strided_slice %120 {offsets = [32, 0], sizes = [16, 16], strides = [1, 1]} : vector<256x16xbf16> to vector<16x16xbf16>
    %c16_92 = arith.constant 16 : index
    %c32_93 = arith.constant 32 : index
    %126 = vector.load %arg21[%c16_92, %c32_93] : memref<32x256xbf16, #tpu.memory_space<vmem>>, vector<16x16xbf16>
    tpu.vector_store %arg21[%c16_92, %c32_93], %125 {strides = array<i32>} : memref<32x256xbf16, #tpu.memory_space<vmem>>, vector<16x16xbf16>,
    %127 = vector.extract_strided_slice %120 {offsets = [48, 0], sizes = [16, 16], strides = [1, 1]} : vector<256x16xbf16> to vector<16x16xbf16>
    %c16_94 = arith.constant 16 : index
    %c48_95 = arith.constant 48 : index
    %128 = vector.load %arg21[%c16_94, %c48_95] : memref<32x256xbf16, #tpu.memory_space<vmem>>, vector<16x16xbf16>
    tpu.vector_store %arg21[%c16_94, %c48_95], %127 {strides = array<i32>} : memref<32x256xbf16, #tpu.memory_space<vmem>>, vector<16x16xbf16>,
    %129 = vector.extract_strided_slice %120 {offsets = [64, 0], sizes = [16, 16], strides = [1, 1]} : vector<256x16xbf16> to vector<16x16xbf16>
    %c16_96 = arith.constant 16 : index
    %c64_97 = arith.constant 64 : index
    %130 = vector.load %arg21[%c16_96, %c64_97] : memref<32x256xbf16, #tpu.memory_space<vmem>>, vector<16x16xbf16>
    tpu.vector_store %arg21[%c16_96, %c64_97], %129 {strides = array<i32>} : memref<32x256xbf16, #tpu.memory_space<vmem>>, vector<16x16xbf16>,
    %131 = vector.extract_strided_slice %120 {offsets = [80, 0], sizes = [16, 16], strides = [1, 1]} : vector<256x16xbf16> to vector<16x16xbf16>
    %c16_98 = arith.constant 16 : index
    %c80_99 = arith.constant 80 : index
    %132 = vector.load %arg21[%c16_98, %c80_99] : memref<32x256xbf16, #tpu.memory_space<vmem>>, vector<16x16xbf16>
    tpu.vector_store %arg21[%c16_98, %c80_99], %131 {strides = array<i32>} : memref<32x256xbf16, #tpu.memory_space<vmem>>, vector<16x16xbf16>,
    %133 = vector.extract_strided_slice %120 {offsets = [96, 0], sizes = [16, 16], strides = [1, 1]} : vector<256x16xbf16> to vector<16x16xbf16>
    %c16_100 = arith.constant 16 : index
    %c96_101 = arith.constant 96 : index
    %134 = vector.load %arg21[%c16_100, %c96_101] : memref<32x256xbf16, #tpu.memory_space<vmem>>, vector<16x16xbf16>
    tpu.vector_store %arg21[%c16_100, %c96_101], %133 {strides = array<i32>} : memref<32x256xbf16, #tpu.memory_space<vmem>>, vector<16x16xbf16>,
    %135 = vector.extract_strided_slice %120 {offsets = [112, 0], sizes = [16, 16], strides = [1, 1]} : vector<256x16xbf16> to vector<16x16xbf16>
    %c16_102 = arith.constant 16 : index
    %c112_103 = arith.constant 112 : index
    %136 = vector.load %arg21[%c16_102, %c112_103] : memref<32x256xbf16, #tpu.memory_space<vmem>>, vector<16x16xbf16>
    tpu.vector_store %arg21[%c16_102, %c112_103], %135 {strides = array<i32>} : memref<32x256xbf16, #tpu.memory_space<vmem>>, vector<16x16xbf16>,
    %137 = vector.extract_strided_slice %120 {offsets = [128, 0], sizes = [16, 16], strides = [1, 1]} : vector<256x16xbf16> to vector<16x16xbf16>
    %c16_104 = arith.constant 16 : index
    %c128_105 = arith.constant 128 : index
    %138 = vector.load %arg21[%c16_104, %c128_105] : memref<32x256xbf16, #tpu.memory_space<vmem>>, vector<16x16xbf16>
    tpu.vector_store %arg21[%c16_104, %c128_105], %137 {strides = array<i32>} : memref<32x256xbf16, #tpu.memory_space<vmem>>, vector<16x16xbf16>,
    %139 = vector.extract_strided_slice %120 {offsets = [144, 0], sizes = [16, 16], strides = [1, 1]} : vector<256x16xbf16> to vector<16x16xbf16>
    %c16_106 = arith.constant 16 : index
    %c144_107 = arith.constant 144 : index
    %140 = vector.load %arg21[%c16_106, %c144_107] : memref<32x256xbf16, #tpu.memory_space<vmem>>, vector<16x16xbf16>
    tpu.vector_store %arg21[%c16_106, %c144_107], %139 {strides = array<i32>} : memref<32x256xbf16, #tpu.memory_space<vmem>>, vector<16x16xbf16>,
    %141 = vector.extract_strided_slice %120 {offsets = [160, 0], sizes = [16, 16], strides = [1, 1]} : vector<256x16xbf16> to vector<16x16xbf16>
    %c16_108 = arith.constant 16 : index
    %c160_109 = arith.constant 160 : index
    %142 = vector.load %arg21[%c16_108, %c160_109] : memref<32x256xbf16, #tpu.memory_space<vmem>>, vector<16x16xbf16>
    tpu.vector_store %arg21[%c16_108, %c160_109], %141 {strides = array<i32>} : memref<32x256xbf16, #tpu.memory_space<vmem>>, vector<16x16xbf16>,
    %143 = vector.extract_strided_slice %120 {offsets = [176, 0], sizes = [16, 16], strides = [1, 1]} : vector<256x16xbf16> to vector<16x16xbf16>
    %c16_110 = arith.constant 16 : index
    %c176_111 = arith.constant 176 : index
    %144 = vector.load %arg21[%c16_110, %c176_111] : memref<32x256xbf16, #tpu.memory_space<vmem>>, vector<16x16xbf16>
    tpu.vector_store %arg21[%c16_110, %c176_111], %143 {strides = array<i32>} : memref<32x256xbf16, #tpu.memory_space<vmem>>, vector<16x16xbf16>,
    %145 = vector.extract_strided_slice %120 {offsets = [192, 0], sizes = [16, 16], strides = [1, 1]} : vector<256x16xbf16> to vector<16x16xbf16>
    %c16_112 = arith.constant 16 : index
    %c192_113 = arith.constant 192 : index
    %146 = vector.load %arg21[%c16_112, %c192_113] : memref<32x256xbf16, #tpu.memory_space<vmem>>, vector<16x16xbf16>
    tpu.vector_store %arg21[%c16_112, %c192_113], %145 {strides = array<i32>} : memref<32x256xbf16, #tpu.memory_space<vmem>>, vector<16x16xbf16>,
    %147 = vector.extract_strided_slice %120 {offsets = [208, 0], sizes = [16, 16], strides = [1, 1]} : vector<256x16xbf16> to vector<16x16xbf16>
    %c16_114 = arith.constant 16 : index
    %c208_115 = arith.constant 208 : index
    %148 = vector.load %arg21[%c16_114, %c208_115] : memref<32x256xbf16, #tpu.memory_space<vmem>>, vector<16x16xbf16>
    tpu.vector_store %arg21[%c16_114, %c208_115], %147 {strides = array<i32>} : memref<32x256xbf16, #tpu.memory_space<vmem>>, vector<16x16xbf16>,
    %149 = vector.extract_strided_slice %120 {offsets = [224, 0], sizes = [16, 16], strides = [1, 1]} : vector<256x16xbf16> to vector<16x16xbf16>
    %c16_116 = arith.constant 16 : index
    %c224_117 = arith.constant 224 : index
    %150 = vector.load %arg21[%c16_116, %c224_117] : memref<32x256xbf16, #tpu.memory_space<vmem>>, vector<16x16xbf16>
    tpu.vector_store %arg21[%c16_116, %c224_117], %149 {strides = array<i32>} : memref<32x256xbf16, #tpu.memory_space<vmem>>, vector<16x16xbf16>,
    %151 = vector.extract_strided_slice %120 {offsets = [240, 0], sizes = [16, 16], strides = [1, 1]} : vector<256x16xbf16> to vector<16x16xbf16>
    %c16_118 = arith.constant 16 : index
    %c240_119 = arith.constant 240 : index
    %152 = vector.load %arg21[%c16_118, %c240_119] : memref<32x256xbf16, #tpu.memory_space<vmem>>, vector<16x16xbf16>
    tpu.vector_store %arg21[%c16_118, %c240_119], %151 {strides = array<i32>} : memref<32x256xbf16, #tpu.memory_space<vmem>>, vector<16x16xbf16>,
    %c0_120 = arith.constant 0 : index
    %c0_121 = arith.constant 0 : index
    %153 = vector.load %arg21[%c0_120, %c0_121] : memref<32x256xbf16, #tpu.memory_space<vmem>>, vector<32x256xbf16>
    %c0_122 = arith.constant 0 : index
    %c0_123 = arith.constant 0 : index
    %154 = vector.load %arg6[%c0_122, %c0_123] : memref<256x32xbf16, #tpu.memory_space<vmem>>, vector<256x32xbf16>
    %cst_124 = arith.constant dense<0.000000e+00> : vector<32x32xf32>
    %155 = tpu.matmul %153, %154, %cst_124 {dimension_numbers = #tpu.dot_dimension_numbers<[1], [0], [0], [1], [0, 0, 1, 1], [], []>} : vector<32x256xbf16>, vector<256x32xbf16>, vector<32x32xf32> -> vector<32x32xf32>
    %c0_125 = arith.constant 0 : index
    %c0_126 = arith.constant 0 : index
    %156 = vector.load %arg7[%c0_125, %c0_126] : memref<1x32xf32, #tpu.memory_space<vmem>>, vector<1x32xf32>
    %157 = vector.broadcast %156 : vector<1x32xf32> to vector<32x32xf32>
    %158 = arith.addf %155, %157 : vector<32x32xf32>
    %cst_127 = arith.constant 0.000000e+00 : f32
    %159 = vector.broadcast %cst_127 : f32 to vector<32x32xf32>
    %160 = arith.maximumf %158, %159 : vector<32x32xf32>
    %161 = arith.truncf %160 : vector<32x32xf32> to vector<32x32xbf16>
    %162 = vector.extract_strided_slice %161 {offsets = [0, 0], sizes = [16, 32], strides = [1, 1]} : vector<32x32xbf16> to vector<16x32xbf16>
    %163 = vector.extract_strided_slice %161 {offsets = [16, 0], sizes = [16, 32], strides = [1, 1]} : vector<32x32xbf16> to vector<16x32xbf16>
    %c0_128 = arith.constant 0 : index
    %c0_129 = arith.constant 0 : index
    %164 = vector.load %arg8[%c0_128, %c0_129] : memref<144x16xbf16, #tpu.memory_space<vmem>>, vector<144x16xbf16>
    %cst_130 = arith.constant dense<0.000000e+00> : vector<144x32xf32>
    %165 = tpu.matmul %164, %162, %cst_130 {dimension_numbers = #tpu.dot_dimension_numbers<[1], [0], [0], [1], [0, 0, 1, 1], [], []>} : vector<144x16xbf16>, vector<16x32xbf16>, vector<144x32xf32> -> vector<144x32xf32>
    %166 = arith.truncf %165 : vector<144x32xf32> to vector<144x32xbf16>
    %167 = vector.extract_strided_slice %166 {offsets = [0, 0], sizes = [16, 32], strides = [1, 1]} : vector<144x32xbf16> to vector<16x32xbf16>
    %c0_131 = arith.constant 0 : index
    %c0_132 = arith.constant 0 : index
    %168 = vector.load %arg22[%c0_131, %c0_132] : memref<32x288xbf16, #tpu.memory_space<vmem>>, vector<16x32xbf16>
    tpu.vector_store %arg22[%c0_131, %c0_132], %167 {strides = array<i32>} : memref<32x288xbf16, #tpu.memory_space<vmem>>, vector<16x32xbf16>,
    %169 = vector.extract_strided_slice %166 {offsets = [16, 0], sizes = [16, 32], strides = [1, 1]} : vector<144x32xbf16> to vector<16x32xbf16>
    %c0_133 = arith.constant 0 : index
    %c32_134 = arith.constant 32 : index
    %170 = vector.load %arg22[%c0_133, %c32_134] : memref<32x288xbf16, #tpu.memory_space<vmem>>, vector<16x32xbf16>
    tpu.vector_store %arg22[%c0_133, %c32_134], %169 {strides = array<i32>} : memref<32x288xbf16, #tpu.memory_space<vmem>>, vector<16x32xbf16>,
    %171 = vector.extract_strided_slice %166 {offsets = [32, 0], sizes = [16, 32], strides = [1, 1]} : vector<144x32xbf16> to vector<16x32xbf16>
    %c0_135 = arith.constant 0 : index
    %c64_136 = arith.constant 64 : index
    %172 = vector.load %arg22[%c0_135, %c64_136] : memref<32x288xbf16, #tpu.memory_space<vmem>>, vector<16x32xbf16>
    tpu.vector_store %arg22[%c0_135, %c64_136], %171 {strides = array<i32>} : memref<32x288xbf16, #tpu.memory_space<vmem>>, vector<16x32xbf16>,
    %173 = vector.extract_strided_slice %166 {offsets = [48, 0], sizes = [16, 32], strides = [1, 1]} : vector<144x32xbf16> to vector<16x32xbf16>
    %c0_137 = arith.constant 0 : index
    %c96_138 = arith.constant 96 : index
    %174 = vector.load %arg22[%c0_137, %c96_138] : memref<32x288xbf16, #tpu.memory_space<vmem>>, vector<16x32xbf16>
    tpu.vector_store %arg22[%c0_137, %c96_138], %173 {strides = array<i32>} : memref<32x288xbf16, #tpu.memory_space<vmem>>, vector<16x32xbf16>,
    %175 = vector.extract_strided_slice %166 {offsets = [64, 0], sizes = [16, 32], strides = [1, 1]} : vector<144x32xbf16> to vector<16x32xbf16>
    %c0_139 = arith.constant 0 : index
    %c128_140 = arith.constant 128 : index
    %176 = vector.load %arg22[%c0_139, %c128_140] : memref<32x288xbf16, #tpu.memory_space<vmem>>, vector<16x32xbf16>
    tpu.vector_store %arg22[%c0_139, %c128_140], %175 {strides = array<i32>} : memref<32x288xbf16, #tpu.memory_space<vmem>>, vector<16x32xbf16>,
    %177 = vector.extract_strided_slice %166 {offsets = [80, 0], sizes = [16, 32], strides = [1, 1]} : vector<144x32xbf16> to vector<16x32xbf16>
    %c0_141 = arith.constant 0 : index
    %c160_142 = arith.constant 160 : index
    %178 = vector.load %arg22[%c0_141, %c160_142] : memref<32x288xbf16, #tpu.memory_space<vmem>>, vector<16x32xbf16>
    tpu.vector_store %arg22[%c0_141, %c160_142], %177 {strides = array<i32>} : memref<32x288xbf16, #tpu.memory_space<vmem>>, vector<16x32xbf16>,
    %179 = vector.extract_strided_slice %166 {offsets = [96, 0], sizes = [16, 32], strides = [1, 1]} : vector<144x32xbf16> to vector<16x32xbf16>
    %c0_143 = arith.constant 0 : index
    %c192_144 = arith.constant 192 : index
    %180 = vector.load %arg22[%c0_143, %c192_144] : memref<32x288xbf16, #tpu.memory_space<vmem>>, vector<16x32xbf16>
    tpu.vector_store %arg22[%c0_143, %c192_144], %179 {strides = array<i32>} : memref<32x288xbf16, #tpu.memory_space<vmem>>, vector<16x32xbf16>,
    %181 = vector.extract_strided_slice %166 {offsets = [112, 0], sizes = [16, 32], strides = [1, 1]} : vector<144x32xbf16> to vector<16x32xbf16>
    %c0_145 = arith.constant 0 : index
    %c224_146 = arith.constant 224 : index
    %182 = vector.load %arg22[%c0_145, %c224_146] : memref<32x288xbf16, #tpu.memory_space<vmem>>, vector<16x32xbf16>
    tpu.vector_store %arg22[%c0_145, %c224_146], %181 {strides = array<i32>} : memref<32x288xbf16, #tpu.memory_space<vmem>>, vector<16x32xbf16>,
    %183 = vector.extract_strided_slice %166 {offsets = [128, 0], sizes = [16, 32], strides = [1, 1]} : vector<144x32xbf16> to vector<16x32xbf16>
    %c0_147 = arith.constant 0 : index
    %c256 = arith.constant 256 : index
    %184 = vector.load %arg22[%c0_147, %c256] : memref<32x288xbf16, #tpu.memory_space<vmem>>, vector<16x32xbf16>
    tpu.vector_store %arg22[%c0_147, %c256], %183 {strides = array<i32>} : memref<32x288xbf16, #tpu.memory_space<vmem>>, vector<16x32xbf16>,
    %cst_148 = arith.constant dense<0.000000e+00> : vector<144x32xf32>
    %185 = tpu.matmul %164, %163, %cst_148 {dimension_numbers = #tpu.dot_dimension_numbers<[1], [0], [0], [1], [0, 0, 1, 1], [], []>} : vector<144x16xbf16>, vector<16x32xbf16>, vector<144x32xf32> -> vector<144x32xf32>
    %186 = arith.truncf %185 : vector<144x32xf32> to vector<144x32xbf16>
    %187 = vector.extract_strided_slice %186 {offsets = [0, 0], sizes = [16, 32], strides = [1, 1]} : vector<144x32xbf16> to vector<16x32xbf16>
    %c16_149 = arith.constant 16 : index
    %c0_150 = arith.constant 0 : index
    %188 = vector.load %arg22[%c16_149, %c0_150] : memref<32x288xbf16, #tpu.memory_space<vmem>>, vector<16x32xbf16>
    tpu.vector_store %arg22[%c16_149, %c0_150], %187 {strides = array<i32>} : memref<32x288xbf16, #tpu.memory_space<vmem>>, vector<16x32xbf16>,
    %189 = vector.extract_strided_slice %186 {offsets = [16, 0], sizes = [16, 32], strides = [1, 1]} : vector<144x32xbf16> to vector<16x32xbf16>
    %c16_151 = arith.constant 16 : index
    %c32_152 = arith.constant 32 : index
    %190 = vector.load %arg22[%c16_151, %c32_152] : memref<32x288xbf16, #tpu.memory_space<vmem>>, vector<16x32xbf16>
    tpu.vector_store %arg22[%c16_151, %c32_152], %189 {strides = array<i32>} : memref<32x288xbf16, #tpu.memory_space<vmem>>, vector<16x32xbf16>,
    %191 = vector.extract_strided_slice %186 {offsets = [32, 0], sizes = [16, 32], strides = [1, 1]} : vector<144x32xbf16> to vector<16x32xbf16>
    %c16_153 = arith.constant 16 : index
    %c64_154 = arith.constant 64 : index
    %192 = vector.load %arg22[%c16_153, %c64_154] : memref<32x288xbf16, #tpu.memory_space<vmem>>, vector<16x32xbf16>
    tpu.vector_store %arg22[%c16_153, %c64_154], %191 {strides = array<i32>} : memref<32x288xbf16, #tpu.memory_space<vmem>>, vector<16x32xbf16>,
    %193 = vector.extract_strided_slice %186 {offsets = [48, 0], sizes = [16, 32], strides = [1, 1]} : vector<144x32xbf16> to vector<16x32xbf16>
    %c16_155 = arith.constant 16 : index
    %c96_156 = arith.constant 96 : index
    %194 = vector.load %arg22[%c16_155, %c96_156] : memref<32x288xbf16, #tpu.memory_space<vmem>>, vector<16x32xbf16>
    tpu.vector_store %arg22[%c16_155, %c96_156], %193 {strides = array<i32>} : memref<32x288xbf16, #tpu.memory_space<vmem>>, vector<16x32xbf16>,
    %195 = vector.extract_strided_slice %186 {offsets = [64, 0], sizes = [16, 32], strides = [1, 1]} : vector<144x32xbf16> to vector<16x32xbf16>
    %c16_157 = arith.constant 16 : index
    %c128_158 = arith.constant 128 : index
    %196 = vector.load %arg22[%c16_157, %c128_158] : memref<32x288xbf16, #tpu.memory_space<vmem>>, vector<16x32xbf16>
    tpu.vector_store %arg22[%c16_157, %c128_158], %195 {strides = array<i32>} : memref<32x288xbf16, #tpu.memory_space<vmem>>, vector<16x32xbf16>,
    %197 = vector.extract_strided_slice %186 {offsets = [80, 0], sizes = [16, 32], strides = [1, 1]} : vector<144x32xbf16> to vector<16x32xbf16>
    %c16_159 = arith.constant 16 : index
    %c160_160 = arith.constant 160 : index
    %198 = vector.load %arg22[%c16_159, %c160_160] : memref<32x288xbf16, #tpu.memory_space<vmem>>, vector<16x32xbf16>
    tpu.vector_store %arg22[%c16_159, %c160_160], %197 {strides = array<i32>} : memref<32x288xbf16, #tpu.memory_space<vmem>>, vector<16x32xbf16>,
    %199 = vector.extract_strided_slice %186 {offsets = [96, 0], sizes = [16, 32], strides = [1, 1]} : vector<144x32xbf16> to vector<16x32xbf16>
    %c16_161 = arith.constant 16 : index
    %c192_162 = arith.constant 192 : index
    %200 = vector.load %arg22[%c16_161, %c192_162] : memref<32x288xbf16, #tpu.memory_space<vmem>>, vector<16x32xbf16>
    tpu.vector_store %arg22[%c16_161, %c192_162], %199 {strides = array<i32>} : memref<32x288xbf16, #tpu.memory_space<vmem>>, vector<16x32xbf16>,
    %201 = vector.extract_strided_slice %186 {offsets = [112, 0], sizes = [16, 32], strides = [1, 1]} : vector<144x32xbf16> to vector<16x32xbf16>
    %c16_163 = arith.constant 16 : index
    %c224_164 = arith.constant 224 : index
    %202 = vector.load %arg22[%c16_163, %c224_164] : memref<32x288xbf16, #tpu.memory_space<vmem>>, vector<16x32xbf16>
    tpu.vector_store %arg22[%c16_163, %c224_164], %201 {strides = array<i32>} : memref<32x288xbf16, #tpu.memory_space<vmem>>, vector<16x32xbf16>,
    %203 = vector.extract_strided_slice %186 {offsets = [128, 0], sizes = [16, 32], strides = [1, 1]} : vector<144x32xbf16> to vector<16x32xbf16>
    %c16_165 = arith.constant 16 : index
    %c256_166 = arith.constant 256 : index
    %204 = vector.load %arg22[%c16_165, %c256_166] : memref<32x288xbf16, #tpu.memory_space<vmem>>, vector<16x32xbf16>
    tpu.vector_store %arg22[%c16_165, %c256_166], %203 {strides = array<i32>} : memref<32x288xbf16, #tpu.memory_space<vmem>>, vector<16x32xbf16>,
    %c0_167 = arith.constant 0 : index
    %c0_168 = arith.constant 0 : index
    %205 = vector.load %arg22[%c0_167, %c0_168] : memref<32x288xbf16, #tpu.memory_space<vmem>>, vector<32x288xbf16>
    %c0_169 = arith.constant 0 : index
    %c0_170 = arith.constant 0 : index
    %206 = vector.load %arg9[%c0_169, %c0_170] : memref<288x32xbf16, #tpu.memory_space<vmem>>, vector<288x32xbf16>
    %cst_171 = arith.constant dense<0.000000e+00> : vector<32x32xf32>
    %207 = tpu.matmul %205, %206, %cst_171 {dimension_numbers = #tpu.dot_dimension_numbers<[1], [0], [0], [1], [0, 0, 1, 1], [], []>} : vector<32x288xbf16>, vector<288x32xbf16>, vector<32x32xf32> -> vector<32x32xf32>
    %c0_172 = arith.constant 0 : index
    %c0_173 = arith.constant 0 : index
    %208 = vector.load %arg10[%c0_172, %c0_173] : memref<1x32xf32, #tpu.memory_space<vmem>>, vector<1x32xf32>
    %209 = vector.broadcast %208 : vector<1x32xf32> to vector<32x32xf32>
    %210 = arith.addf %207, %209 : vector<32x32xf32>
    %cst_174 = arith.constant 0.000000e+00 : f32
    %211 = vector.broadcast %cst_174 : f32 to vector<32x32xf32>
    %212 = arith.maximumf %210, %211 : vector<32x32xf32>
    %213 = arith.truncf %212 : vector<32x32xf32> to vector<32x32xbf16>
    %214 = vector.extract_strided_slice %213 {offsets = [0, 0], sizes = [16, 32], strides = [1, 1]} : vector<32x32xbf16> to vector<16x32xbf16>
    %215 = vector.extract_strided_slice %213 {offsets = [16, 0], sizes = [16, 32], strides = [1, 1]} : vector<32x32xbf16> to vector<16x32xbf16>
    %c0_175 = arith.constant 0 : index
    %c0_176 = arith.constant 0 : index
    %216 = vector.load %arg8[%c0_175, %c0_176] : memref<144x16xbf16, #tpu.memory_space<vmem>>, vector<144x16xbf16>
    %cst_177 = arith.constant dense<0.000000e+00> : vector<144x32xf32>
    %217 = tpu.matmul %216, %214, %cst_177 {dimension_numbers = #tpu.dot_dimension_numbers<[1], [0], [0], [1], [0, 0, 1, 1], [], []>} : vector<144x16xbf16>, vector<16x32xbf16>, vector<144x32xf32> -> vector<144x32xf32>
    %218 = arith.truncf %217 : vector<144x32xf32> to vector<144x32xbf16>
    %219 = vector.extract_strided_slice %218 {offsets = [0, 0], sizes = [16, 32], strides = [1, 1]} : vector<144x32xbf16> to vector<16x32xbf16>
    %c0_178 = arith.constant 0 : index
    %c0_179 = arith.constant 0 : index
    %220 = vector.load %arg22[%c0_178, %c0_179] : memref<32x288xbf16, #tpu.memory_space<vmem>>, vector<16x32xbf16>
    tpu.vector_store %arg22[%c0_178, %c0_179], %219 {strides = array<i32>} : memref<32x288xbf16, #tpu.memory_space<vmem>>, vector<16x32xbf16>,
    %221 = vector.extract_strided_slice %218 {offsets = [16, 0], sizes = [16, 32], strides = [1, 1]} : vector<144x32xbf16> to vector<16x32xbf16>
    %c0_180 = arith.constant 0 : index
    %c32_181 = arith.constant 32 : index
    %222 = vector.load %arg22[%c0_180, %c32_181] : memref<32x288xbf16, #tpu.memory_space<vmem>>, vector<16x32xbf16>
    tpu.vector_store %arg22[%c0_180, %c32_181], %221 {strides = array<i32>} : memref<32x288xbf16, #tpu.memory_space<vmem>>, vector<16x32xbf16>,
    %223 = vector.extract_strided_slice %218 {offsets = [32, 0], sizes = [16, 32], strides = [1, 1]} : vector<144x32xbf16> to vector<16x32xbf16>
    %c0_182 = arith.constant 0 : index
    %c64_183 = arith.constant 64 : index
    %224 = vector.load %arg22[%c0_182, %c64_183] : memref<32x288xbf16, #tpu.memory_space<vmem>>, vector<16x32xbf16>
    tpu.vector_store %arg22[%c0_182, %c64_183], %223 {strides = array<i32>} : memref<32x288xbf16, #tpu.memory_space<vmem>>, vector<16x32xbf16>,
    %225 = vector.extract_strided_slice %218 {offsets = [48, 0], sizes = [16, 32], strides = [1, 1]} : vector<144x32xbf16> to vector<16x32xbf16>
    %c0_184 = arith.constant 0 : index
    %c96_185 = arith.constant 96 : index
    %226 = vector.load %arg22[%c0_184, %c96_185] : memref<32x288xbf16, #tpu.memory_space<vmem>>, vector<16x32xbf16>
    tpu.vector_store %arg22[%c0_184, %c96_185], %225 {strides = array<i32>} : memref<32x288xbf16, #tpu.memory_space<vmem>>, vector<16x32xbf16>,
    %227 = vector.extract_strided_slice %218 {offsets = [64, 0], sizes = [16, 32], strides = [1, 1]} : vector<144x32xbf16> to vector<16x32xbf16>
    %c0_186 = arith.constant 0 : index
    %c128_187 = arith.constant 128 : index
    %228 = vector.load %arg22[%c0_186, %c128_187] : memref<32x288xbf16, #tpu.memory_space<vmem>>, vector<16x32xbf16>
    tpu.vector_store %arg22[%c0_186, %c128_187], %227 {strides = array<i32>} : memref<32x288xbf16, #tpu.memory_space<vmem>>, vector<16x32xbf16>,
    %229 = vector.extract_strided_slice %218 {offsets = [80, 0], sizes = [16, 32], strides = [1, 1]} : vector<144x32xbf16> to vector<16x32xbf16>
    %c0_188 = arith.constant 0 : index
    %c160_189 = arith.constant 160 : index
    %230 = vector.load %arg22[%c0_188, %c160_189] : memref<32x288xbf16, #tpu.memory_space<vmem>>, vector<16x32xbf16>
    tpu.vector_store %arg22[%c0_188, %c160_189], %229 {strides = array<i32>} : memref<32x288xbf16, #tpu.memory_space<vmem>>, vector<16x32xbf16>,
    %231 = vector.extract_strided_slice %218 {offsets = [96, 0], sizes = [16, 32], strides = [1, 1]} : vector<144x32xbf16> to vector<16x32xbf16>
    %c0_190 = arith.constant 0 : index
    %c192_191 = arith.constant 192 : index
    %232 = vector.load %arg22[%c0_190, %c192_191] : memref<32x288xbf16, #tpu.memory_space<vmem>>, vector<16x32xbf16>
    tpu.vector_store %arg22[%c0_190, %c192_191], %231 {strides = array<i32>} : memref<32x288xbf16, #tpu.memory_space<vmem>>, vector<16x32xbf16>,
    %233 = vector.extract_strided_slice %218 {offsets = [112, 0], sizes = [16, 32], strides = [1, 1]} : vector<144x32xbf16> to vector<16x32xbf16>
    %c0_192 = arith.constant 0 : index
    %c224_193 = arith.constant 224 : index
    %234 = vector.load %arg22[%c0_192, %c224_193] : memref<32x288xbf16, #tpu.memory_space<vmem>>, vector<16x32xbf16>
    tpu.vector_store %arg22[%c0_192, %c224_193], %233 {strides = array<i32>} : memref<32x288xbf16, #tpu.memory_space<vmem>>, vector<16x32xbf16>,
    %235 = vector.extract_strided_slice %218 {offsets = [128, 0], sizes = [16, 32], strides = [1, 1]} : vector<144x32xbf16> to vector<16x32xbf16>
    %c0_194 = arith.constant 0 : index
    %c256_195 = arith.constant 256 : index
    %236 = vector.load %arg22[%c0_194, %c256_195] : memref<32x288xbf16, #tpu.memory_space<vmem>>, vector<16x32xbf16>
    tpu.vector_store %arg22[%c0_194, %c256_195], %235 {strides = array<i32>} : memref<32x288xbf16, #tpu.memory_space<vmem>>, vector<16x32xbf16>,
    %cst_196 = arith.constant dense<0.000000e+00> : vector<144x32xf32>
    %237 = tpu.matmul %216, %215, %cst_196 {dimension_numbers = #tpu.dot_dimension_numbers<[1], [0], [0], [1], [0, 0, 1, 1], [], []>} : vector<144x16xbf16>, vector<16x32xbf16>, vector<144x32xf32> -> vector<144x32xf32>
    %238 = arith.truncf %237 : vector<144x32xf32> to vector<144x32xbf16>
    %239 = vector.extract_strided_slice %238 {offsets = [0, 0], sizes = [16, 32], strides = [1, 1]} : vector<144x32xbf16> to vector<16x32xbf16>
    %c16_197 = arith.constant 16 : index
    %c0_198 = arith.constant 0 : index
    %240 = vector.load %arg22[%c16_197, %c0_198] : memref<32x288xbf16, #tpu.memory_space<vmem>>, vector<16x32xbf16>
    tpu.vector_store %arg22[%c16_197, %c0_198], %239 {strides = array<i32>} : memref<32x288xbf16, #tpu.memory_space<vmem>>, vector<16x32xbf16>,
    %241 = vector.extract_strided_slice %238 {offsets = [16, 0], sizes = [16, 32], strides = [1, 1]} : vector<144x32xbf16> to vector<16x32xbf16>
    %c16_199 = arith.constant 16 : index
    %c32_200 = arith.constant 32 : index
    %242 = vector.load %arg22[%c16_199, %c32_200] : memref<32x288xbf16, #tpu.memory_space<vmem>>, vector<16x32xbf16>
    tpu.vector_store %arg22[%c16_199, %c32_200], %241 {strides = array<i32>} : memref<32x288xbf16, #tpu.memory_space<vmem>>, vector<16x32xbf16>,
    %243 = vector.extract_strided_slice %238 {offsets = [32, 0], sizes = [16, 32], strides = [1, 1]} : vector<144x32xbf16> to vector<16x32xbf16>
    %c16_201 = arith.constant 16 : index
    %c64_202 = arith.constant 64 : index
    %244 = vector.load %arg22[%c16_201, %c64_202] : memref<32x288xbf16, #tpu.memory_space<vmem>>, vector<16x32xbf16>
    tpu.vector_store %arg22[%c16_201, %c64_202], %243 {strides = array<i32>} : memref<32x288xbf16, #tpu.memory_space<vmem>>, vector<16x32xbf16>,
    %245 = vector.extract_strided_slice %238 {offsets = [48, 0], sizes = [16, 32], strides = [1, 1]} : vector<144x32xbf16> to vector<16x32xbf16>
    %c16_203 = arith.constant 16 : index
    %c96_204 = arith.constant 96 : index
    %246 = vector.load %arg22[%c16_203, %c96_204] : memref<32x288xbf16, #tpu.memory_space<vmem>>, vector<16x32xbf16>
    tpu.vector_store %arg22[%c16_203, %c96_204], %245 {strides = array<i32>} : memref<32x288xbf16, #tpu.memory_space<vmem>>, vector<16x32xbf16>,
    %247 = vector.extract_strided_slice %238 {offsets = [64, 0], sizes = [16, 32], strides = [1, 1]} : vector<144x32xbf16> to vector<16x32xbf16>
    %c16_205 = arith.constant 16 : index
    %c128_206 = arith.constant 128 : index
    %248 = vector.load %arg22[%c16_205, %c128_206] : memref<32x288xbf16, #tpu.memory_space<vmem>>, vector<16x32xbf16>
    tpu.vector_store %arg22[%c16_205, %c128_206], %247 {strides = array<i32>} : memref<32x288xbf16, #tpu.memory_space<vmem>>, vector<16x32xbf16>,
    %249 = vector.extract_strided_slice %238 {offsets = [80, 0], sizes = [16, 32], strides = [1, 1]} : vector<144x32xbf16> to vector<16x32xbf16>
    %c16_207 = arith.constant 16 : index
    %c160_208 = arith.constant 160 : index
    %250 = vector.load %arg22[%c16_207, %c160_208] : memref<32x288xbf16, #tpu.memory_space<vmem>>, vector<16x32xbf16>
    tpu.vector_store %arg22[%c16_207, %c160_208], %249 {strides = array<i32>} : memref<32x288xbf16, #tpu.memory_space<vmem>>, vector<16x32xbf16>,
    %251 = vector.extract_strided_slice %238 {offsets = [96, 0], sizes = [16, 32], strides = [1, 1]} : vector<144x32xbf16> to vector<16x32xbf16>
    %c16_209 = arith.constant 16 : index
    %c192_210 = arith.constant 192 : index
    %252 = vector.load %arg22[%c16_209, %c192_210] : memref<32x288xbf16, #tpu.memory_space<vmem>>, vector<16x32xbf16>
    tpu.vector_store %arg22[%c16_209, %c192_210], %251 {strides = array<i32>} : memref<32x288xbf16, #tpu.memory_space<vmem>>, vector<16x32xbf16>,
    %253 = vector.extract_strided_slice %238 {offsets = [112, 0], sizes = [16, 32], strides = [1, 1]} : vector<144x32xbf16> to vector<16x32xbf16>
    %c16_211 = arith.constant 16 : index
    %c224_212 = arith.constant 224 : index
    %254 = vector.load %arg22[%c16_211, %c224_212] : memref<32x288xbf16, #tpu.memory_space<vmem>>, vector<16x32xbf16>
    tpu.vector_store %arg22[%c16_211, %c224_212], %253 {strides = array<i32>} : memref<32x288xbf16, #tpu.memory_space<vmem>>, vector<16x32xbf16>,
    %255 = vector.extract_strided_slice %238 {offsets = [128, 0], sizes = [16, 32], strides = [1, 1]} : vector<144x32xbf16> to vector<16x32xbf16>
    %c16_213 = arith.constant 16 : index
    %c256_214 = arith.constant 256 : index
    %256 = vector.load %arg22[%c16_213, %c256_214] : memref<32x288xbf16, #tpu.memory_space<vmem>>, vector<16x32xbf16>
    tpu.vector_store %arg22[%c16_213, %c256_214], %255 {strides = array<i32>} : memref<32x288xbf16, #tpu.memory_space<vmem>>, vector<16x32xbf16>,
    %c0_215 = arith.constant 0 : index
    %c0_216 = arith.constant 0 : index
    %257 = vector.load %arg22[%c0_215, %c0_216] : memref<32x288xbf16, #tpu.memory_space<vmem>>, vector<32x288xbf16>
    %c0_217 = arith.constant 0 : index
    %c0_218 = arith.constant 0 : index
    %258 = vector.load %arg11[%c0_217, %c0_218] : memref<288x32xbf16, #tpu.memory_space<vmem>>, vector<288x32xbf16>
    %cst_219 = arith.constant dense<0.000000e+00> : vector<32x32xf32>
    %259 = tpu.matmul %257, %258, %cst_219 {dimension_numbers = #tpu.dot_dimension_numbers<[1], [0], [0], [1], [0, 0, 1, 1], [], []>} : vector<32x288xbf16>, vector<288x32xbf16>, vector<32x32xf32> -> vector<32x32xf32>
    %c0_220 = arith.constant 0 : index
    %c0_221 = arith.constant 0 : index
    %260 = vector.load %arg12[%c0_220, %c0_221] : memref<1x32xf32, #tpu.memory_space<vmem>>, vector<1x32xf32>
    %261 = vector.broadcast %260 : vector<1x32xf32> to vector<32x32xf32>
    %262 = arith.addf %259, %261 : vector<32x32xf32>
    %cst_222 = arith.constant 0.000000e+00 : f32
    %263 = vector.broadcast %cst_222 : f32 to vector<32x32xf32>
    %264 = arith.maximumf %262, %263 : vector<32x32xf32>
    %265 = arith.truncf %264 : vector<32x32xf32> to vector<32x32xbf16>
    %c0_223 = arith.constant 0 : index
    %c0_224 = arith.constant 0 : index
    %266 = vector.load %arg13[%c0_223, %c0_224] : memref<32x32xbf16, #tpu.memory_space<vmem>>, vector<32x32xbf16>
    %cst_225 = arith.constant dense<0.000000e+00> : vector<32x32xf32>
    %267 = tpu.matmul %265, %266, %cst_225 {dimension_numbers = #tpu.dot_dimension_numbers<[1], [0], [0], [1], [0, 0, 1, 1], [], []>} : vector<32x32xbf16>, vector<32x32xbf16>, vector<32x32xf32> -> vector<32x32xf32>
    %c0_226 = arith.constant 0 : index
    %c0_227 = arith.constant 0 : index
    %268 = vector.load %arg14[%c0_226, %c0_227] : memref<1x32xf32, #tpu.memory_space<vmem>>, vector<1x32xf32>
    %269 = vector.broadcast %268 : vector<1x32xf32> to vector<32x32xf32>
    %270 = arith.addf %267, %269 : vector<32x32xf32>
    %271 = arith.addf %270, %210 : vector<32x32xf32>
    %cst_228 = arith.constant 0.000000e+00 : f32
    %272 = vector.broadcast %cst_228 : f32 to vector<32x32xf32>
    %273 = arith.maximumf %271, %272 : vector<32x32xf32>
    %274 = arith.truncf %273 : vector<32x32xf32> to vector<32x32xbf16>
    %275 = vector.extract_strided_slice %274 {offsets = [0, 0], sizes = [16, 32], strides = [1, 1]} : vector<32x32xbf16> to vector<16x32xbf16>
    %276 = vector.extract_strided_slice %274 {offsets = [16, 0], sizes = [16, 32], strides = [1, 1]} : vector<32x32xbf16> to vector<16x32xbf16>
    %c0_229 = arith.constant 0 : index
    %c0_230 = arith.constant 0 : index
    %277 = vector.load %arg8[%c0_229, %c0_230] : memref<144x16xbf16, #tpu.memory_space<vmem>>, vector<144x16xbf16>
    %cst_231 = arith.constant dense<0.000000e+00> : vector<144x32xf32>
    %278 = tpu.matmul %277, %275, %cst_231 {dimension_numbers = #tpu.dot_dimension_numbers<[1], [0], [0], [1], [0, 0, 1, 1], [], []>} : vector<144x16xbf16>, vector<16x32xbf16>, vector<144x32xf32> -> vector<144x32xf32>
    %279 = arith.truncf %278 : vector<144x32xf32> to vector<144x32xbf16>
    %280 = vector.extract_strided_slice %279 {offsets = [0, 0], sizes = [16, 32], strides = [1, 1]} : vector<144x32xbf16> to vector<16x32xbf16>
    %c0_232 = arith.constant 0 : index
    %c0_233 = arith.constant 0 : index
    %281 = vector.load %arg22[%c0_232, %c0_233] : memref<32x288xbf16, #tpu.memory_space<vmem>>, vector<16x32xbf16>
    tpu.vector_store %arg22[%c0_232, %c0_233], %280 {strides = array<i32>} : memref<32x288xbf16, #tpu.memory_space<vmem>>, vector<16x32xbf16>,
    %282 = vector.extract_strided_slice %279 {offsets = [16, 0], sizes = [16, 32], strides = [1, 1]} : vector<144x32xbf16> to vector<16x32xbf16>
    %c0_234 = arith.constant 0 : index
    %c32_235 = arith.constant 32 : index
    %283 = vector.load %arg22[%c0_234, %c32_235] : memref<32x288xbf16, #tpu.memory_space<vmem>>, vector<16x32xbf16>
    tpu.vector_store %arg22[%c0_234, %c32_235], %282 {strides = array<i32>} : memref<32x288xbf16, #tpu.memory_space<vmem>>, vector<16x32xbf16>,
    %284 = vector.extract_strided_slice %279 {offsets = [32, 0], sizes = [16, 32], strides = [1, 1]} : vector<144x32xbf16> to vector<16x32xbf16>
    %c0_236 = arith.constant 0 : index
    %c64_237 = arith.constant 64 : index
    %285 = vector.load %arg22[%c0_236, %c64_237] : memref<32x288xbf16, #tpu.memory_space<vmem>>, vector<16x32xbf16>
    tpu.vector_store %arg22[%c0_236, %c64_237], %284 {strides = array<i32>} : memref<32x288xbf16, #tpu.memory_space<vmem>>, vector<16x32xbf16>,
    %286 = vector.extract_strided_slice %279 {offsets = [48, 0], sizes = [16, 32], strides = [1, 1]} : vector<144x32xbf16> to vector<16x32xbf16>
    %c0_238 = arith.constant 0 : index
    %c96_239 = arith.constant 96 : index
    %287 = vector.load %arg22[%c0_238, %c96_239] : memref<32x288xbf16, #tpu.memory_space<vmem>>, vector<16x32xbf16>
    tpu.vector_store %arg22[%c0_238, %c96_239], %286 {strides = array<i32>} : memref<32x288xbf16, #tpu.memory_space<vmem>>, vector<16x32xbf16>,
    %288 = vector.extract_strided_slice %279 {offsets = [64, 0], sizes = [16, 32], strides = [1, 1]} : vector<144x32xbf16> to vector<16x32xbf16>
    %c0_240 = arith.constant 0 : index
    %c128_241 = arith.constant 128 : index
    %289 = vector.load %arg22[%c0_240, %c128_241] : memref<32x288xbf16, #tpu.memory_space<vmem>>, vector<16x32xbf16>
    tpu.vector_store %arg22[%c0_240, %c128_241], %288 {strides = array<i32>} : memref<32x288xbf16, #tpu.memory_space<vmem>>, vector<16x32xbf16>,
    %290 = vector.extract_strided_slice %279 {offsets = [80, 0], sizes = [16, 32], strides = [1, 1]} : vector<144x32xbf16> to vector<16x32xbf16>
    %c0_242 = arith.constant 0 : index
    %c160_243 = arith.constant 160 : index
    %291 = vector.load %arg22[%c0_242, %c160_243] : memref<32x288xbf16, #tpu.memory_space<vmem>>, vector<16x32xbf16>
    tpu.vector_store %arg22[%c0_242, %c160_243], %290 {strides = array<i32>} : memref<32x288xbf16, #tpu.memory_space<vmem>>, vector<16x32xbf16>,
    %292 = vector.extract_strided_slice %279 {offsets = [96, 0], sizes = [16, 32], strides = [1, 1]} : vector<144x32xbf16> to vector<16x32xbf16>
    %c0_244 = arith.constant 0 : index
    %c192_245 = arith.constant 192 : index
    %293 = vector.load %arg22[%c0_244, %c192_245] : memref<32x288xbf16, #tpu.memory_space<vmem>>, vector<16x32xbf16>
    tpu.vector_store %arg22[%c0_244, %c192_245], %292 {strides = array<i32>} : memref<32x288xbf16, #tpu.memory_space<vmem>>, vector<16x32xbf16>,
    %294 = vector.extract_strided_slice %279 {offsets = [112, 0], sizes = [16, 32], strides = [1, 1]} : vector<144x32xbf16> to vector<16x32xbf16>
    %c0_246 = arith.constant 0 : index
    %c224_247 = arith.constant 224 : index
    %295 = vector.load %arg22[%c0_246, %c224_247] : memref<32x288xbf16, #tpu.memory_space<vmem>>, vector<16x32xbf16>
    tpu.vector_store %arg22[%c0_246, %c224_247], %294 {strides = array<i32>} : memref<32x288xbf16, #tpu.memory_space<vmem>>, vector<16x32xbf16>,
    %296 = vector.extract_strided_slice %279 {offsets = [128, 0], sizes = [16, 32], strides = [1, 1]} : vector<144x32xbf16> to vector<16x32xbf16>
    %c0_248 = arith.constant 0 : index
    %c256_249 = arith.constant 256 : index
    %297 = vector.load %arg22[%c0_248, %c256_249] : memref<32x288xbf16, #tpu.memory_space<vmem>>, vector<16x32xbf16>
    tpu.vector_store %arg22[%c0_248, %c256_249], %296 {strides = array<i32>} : memref<32x288xbf16, #tpu.memory_space<vmem>>, vector<16x32xbf16>,
    %cst_250 = arith.constant dense<0.000000e+00> : vector<144x32xf32>
    %298 = tpu.matmul %277, %276, %cst_250 {dimension_numbers = #tpu.dot_dimension_numbers<[1], [0], [0], [1], [0, 0, 1, 1], [], []>} : vector<144x16xbf16>, vector<16x32xbf16>, vector<144x32xf32> -> vector<144x32xf32>
    %299 = arith.truncf %298 : vector<144x32xf32> to vector<144x32xbf16>
    %300 = vector.extract_strided_slice %299 {offsets = [0, 0], sizes = [16, 32], strides = [1, 1]} : vector<144x32xbf16> to vector<16x32xbf16>
    %c16_251 = arith.constant 16 : index
    %c0_252 = arith.constant 0 : index
    %301 = vector.load %arg22[%c16_251, %c0_252] : memref<32x288xbf16, #tpu.memory_space<vmem>>, vector<16x32xbf16>
    tpu.vector_store %arg22[%c16_251, %c0_252], %300 {strides = array<i32>} : memref<32x288xbf16, #tpu.memory_space<vmem>>, vector<16x32xbf16>,
    %302 = vector.extract_strided_slice %299 {offsets = [16, 0], sizes = [16, 32], strides = [1, 1]} : vector<144x32xbf16> to vector<16x32xbf16>
    %c16_253 = arith.constant 16 : index
    %c32_254 = arith.constant 32 : index
    %303 = vector.load %arg22[%c16_253, %c32_254] : memref<32x288xbf16, #tpu.memory_space<vmem>>, vector<16x32xbf16>
    tpu.vector_store %arg22[%c16_253, %c32_254], %302 {strides = array<i32>} : memref<32x288xbf16, #tpu.memory_space<vmem>>, vector<16x32xbf16>,
    %304 = vector.extract_strided_slice %299 {offsets = [32, 0], sizes = [16, 32], strides = [1, 1]} : vector<144x32xbf16> to vector<16x32xbf16>
    %c16_255 = arith.constant 16 : index
    %c64_256 = arith.constant 64 : index
    %305 = vector.load %arg22[%c16_255, %c64_256] : memref<32x288xbf16, #tpu.memory_space<vmem>>, vector<16x32xbf16>
    tpu.vector_store %arg22[%c16_255, %c64_256], %304 {strides = array<i32>} : memref<32x288xbf16, #tpu.memory_space<vmem>>, vector<16x32xbf16>,
    %306 = vector.extract_strided_slice %299 {offsets = [48, 0], sizes = [16, 32], strides = [1, 1]} : vector<144x32xbf16> to vector<16x32xbf16>
    %c16_257 = arith.constant 16 : index
    %c96_258 = arith.constant 96 : index
    %307 = vector.load %arg22[%c16_257, %c96_258] : memref<32x288xbf16, #tpu.memory_space<vmem>>, vector<16x32xbf16>
    tpu.vector_store %arg22[%c16_257, %c96_258], %306 {strides = array<i32>} : memref<32x288xbf16, #tpu.memory_space<vmem>>, vector<16x32xbf16>,
    %308 = vector.extract_strided_slice %299 {offsets = [64, 0], sizes = [16, 32], strides = [1, 1]} : vector<144x32xbf16> to vector<16x32xbf16>
    %c16_259 = arith.constant 16 : index
    %c128_260 = arith.constant 128 : index
    %309 = vector.load %arg22[%c16_259, %c128_260] : memref<32x288xbf16, #tpu.memory_space<vmem>>, vector<16x32xbf16>
    tpu.vector_store %arg22[%c16_259, %c128_260], %308 {strides = array<i32>} : memref<32x288xbf16, #tpu.memory_space<vmem>>, vector<16x32xbf16>,
    %310 = vector.extract_strided_slice %299 {offsets = [80, 0], sizes = [16, 32], strides = [1, 1]} : vector<144x32xbf16> to vector<16x32xbf16>
    %c16_261 = arith.constant 16 : index
    %c160_262 = arith.constant 160 : index
    %311 = vector.load %arg22[%c16_261, %c160_262] : memref<32x288xbf16, #tpu.memory_space<vmem>>, vector<16x32xbf16>
    tpu.vector_store %arg22[%c16_261, %c160_262], %310 {strides = array<i32>} : memref<32x288xbf16, #tpu.memory_space<vmem>>, vector<16x32xbf16>,
    %312 = vector.extract_strided_slice %299 {offsets = [96, 0], sizes = [16, 32], strides = [1, 1]} : vector<144x32xbf16> to vector<16x32xbf16>
    %c16_263 = arith.constant 16 : index
    %c192_264 = arith.constant 192 : index
    %313 = vector.load %arg22[%c16_263, %c192_264] : memref<32x288xbf16, #tpu.memory_space<vmem>>, vector<16x32xbf16>
    tpu.vector_store %arg22[%c16_263, %c192_264], %312 {strides = array<i32>} : memref<32x288xbf16, #tpu.memory_space<vmem>>, vector<16x32xbf16>,
    %314 = vector.extract_strided_slice %299 {offsets = [112, 0], sizes = [16, 32], strides = [1, 1]} : vector<144x32xbf16> to vector<16x32xbf16>
    %c16_265 = arith.constant 16 : index
    %c224_266 = arith.constant 224 : index
    %315 = vector.load %arg22[%c16_265, %c224_266] : memref<32x288xbf16, #tpu.memory_space<vmem>>, vector<16x32xbf16>
    tpu.vector_store %arg22[%c16_265, %c224_266], %314 {strides = array<i32>} : memref<32x288xbf16, #tpu.memory_space<vmem>>, vector<16x32xbf16>,
    %316 = vector.extract_strided_slice %299 {offsets = [128, 0], sizes = [16, 32], strides = [1, 1]} : vector<144x32xbf16> to vector<16x32xbf16>
    %c16_267 = arith.constant 16 : index
    %c256_268 = arith.constant 256 : index
    %317 = vector.load %arg22[%c16_267, %c256_268] : memref<32x288xbf16, #tpu.memory_space<vmem>>, vector<16x32xbf16>
    tpu.vector_store %arg22[%c16_267, %c256_268], %316 {strides = array<i32>} : memref<32x288xbf16, #tpu.memory_space<vmem>>, vector<16x32xbf16>,
    %c0_269 = arith.constant 0 : index
    %c0_270 = arith.constant 0 : index
    %318 = vector.load %arg22[%c0_269, %c0_270] : memref<32x288xbf16, #tpu.memory_space<vmem>>, vector<32x288xbf16>
    %c0_271 = arith.constant 0 : index
    %c0_272 = arith.constant 0 : index
    %319 = vector.load %arg15[%c0_271, %c0_272] : memref<288x32xbf16, #tpu.memory_space<vmem>>, vector<288x32xbf16>
    %cst_273 = arith.constant dense<0.000000e+00> : vector<32x32xf32>
    %320 = tpu.matmul %318, %319, %cst_273 {dimension_numbers = #tpu.dot_dimension_numbers<[1], [0], [0], [1], [0, 0, 1, 1], [], []>} : vector<32x288xbf16>, vector<288x32xbf16>, vector<32x32xf32> -> vector<32x32xf32>
    %c0_274 = arith.constant 0 : index
    %c0_275 = arith.constant 0 : index
    %321 = vector.load %arg16[%c0_274, %c0_275] : memref<1x32xf32, #tpu.memory_space<vmem>>, vector<1x32xf32>
    %322 = vector.broadcast %321 : vector<1x32xf32> to vector<32x32xf32>
    %323 = arith.addf %320, %322 : vector<32x32xf32>
    %cst_276 = arith.constant 0.000000e+00 : f32
    %324 = vector.broadcast %cst_276 : f32 to vector<32x32xf32>
    %325 = arith.maximumf %323, %324 : vector<32x32xf32>
    %326 = arith.truncf %325 : vector<32x32xf32> to vector<32x32xbf16>
    %c0_277 = arith.constant 0 : index
    %c0_278 = arith.constant 0 : index
    %327 = vector.load %arg17[%c0_277, %c0_278] : memref<32x32xbf16, #tpu.memory_space<vmem>>, vector<32x32xbf16>
    %cst_279 = arith.constant dense<0.000000e+00> : vector<32x32xf32>
    %328 = tpu.matmul %326, %327, %cst_279 {dimension_numbers = #tpu.dot_dimension_numbers<[1], [0], [0], [1], [0, 0, 1, 1], [], []>} : vector<32x32xbf16>, vector<32x32xbf16>, vector<32x32xf32> -> vector<32x32xf32>
    %c0_280 = arith.constant 0 : index
    %c0_281 = arith.constant 0 : index
    %329 = vector.load %arg18[%c0_280, %c0_281] : memref<1x32xf32, #tpu.memory_space<vmem>>, vector<1x32xf32>
    %330 = vector.broadcast %329 : vector<1x32xf32> to vector<32x32xf32>
    %331 = arith.addf %328, %330 : vector<32x32xf32>
    %332 = arith.addf %331, %271 : vector<32x32xf32>
    %cst_282 = arith.constant 0.000000e+00 : f32
    %333 = vector.broadcast %cst_282 : f32 to vector<32x32xf32>
    %334 = arith.maximumf %332, %333 : vector<32x32xf32>
    %c0_283 = arith.constant 0 : index
    %c0_284 = arith.constant 0 : index
    %335 = vector.load %arg19[%c0_283, %c0_284] : memref<32x32xf32, #tpu.memory_space<vmem>>, vector<32x32xf32>
    tpu.vector_store %arg19[%c0_283, %c0_284], %334 {strides = array<i32>} : memref<32x32xf32, #tpu.memory_space<vmem>>, vector<32x32xf32>,
    return
  }
  func.func @transform_0(%arg0: i32) -> (i32, i32, i32) {
    %c0_i32 = arith.constant 0 : i32
    %c0_i32_0 = arith.constant 0 : i32
    %c0_i32_1 = arith.constant 0 : i32
    return %arg0, %c0_i32, %c0_i32_0 : i32, i32, i32
  }
  func.func @transform_1(%arg0: i32) -> (i32, i32) {
    %c0_i32 = arith.constant 0 : i32
    %c0_i32_0 = arith.constant 0 : i32
    %c0_i32_1 = arith.constant 0 : i32
    return %c0_i32, %c0_i32_0 : i32, i32
  }
  func.func @transform_2(%arg0: i32) -> (i32, i32) {
    %c0_i32 = arith.constant 0 : i32
    %c0_i32_0 = arith.constant 0 : i32
    %c0_i32_1 = arith.constant 0 : i32
    return %c0_i32, %c0_i32_0 : i32, i32
  }
  func.func @transform_3(%arg0: i32) -> (i32, i32) {
    %c0_i32 = arith.constant 0 : i32
    %c0_i32_0 = arith.constant 0 : i32
    %c0_i32_1 = arith.constant 0 : i32
    return %c0_i32, %c0_i32_0 : i32, i32
  }
  func.func @transform_4(%arg0: i32) -> (i32, i32) {
    %c0_i32 = arith.constant 0 : i32
    %c0_i32_0 = arith.constant 0 : i32
    %c0_i32_1 = arith.constant 0 : i32
    return %c0_i32, %c0_i32_0 : i32, i32
  }
  func.func @transform_5(%arg0: i32) -> (i32, i32) {
    %c0_i32 = arith.constant 0 : i32
    %c0_i32_0 = arith.constant 0 : i32
    %c0_i32_1 = arith.constant 0 : i32
    return %c0_i32, %c0_i32_0 : i32, i32
  }
  func.func @transform_6(%arg0: i32) -> (i32, i32) {
    %c0_i32 = arith.constant 0 : i32
    %c0_i32_0 = arith.constant 0 : i32
    %c0_i32_1 = arith.constant 0 : i32
    return %c0_i32, %c0_i32_0 : i32, i32
  }
  func.func @transform_7(%arg0: i32) -> (i32, i32) {
    %c0_i32 = arith.constant 0 : i32
    %c0_i32_0 = arith.constant 0 : i32
    %c0_i32_1 = arith.constant 0 : i32
    return %c0_i32, %c0_i32_0 : i32, i32
  }
  func.func @transform_8(%arg0: i32) -> (i32, i32) {
    %c0_i32 = arith.constant 0 : i32
    %c0_i32_0 = arith.constant 0 : i32
    %c0_i32_1 = arith.constant 0 : i32
    return %c0_i32, %c0_i32_0 : i32, i32
  }
  func.func @transform_9(%arg0: i32) -> (i32, i32) {
    %c0_i32 = arith.constant 0 : i32
    %c0_i32_0 = arith.constant 0 : i32
    %c0_i32_1 = arith.constant 0 : i32
    return %c0_i32, %c0_i32_0 : i32, i32
  }
  func.func @transform_10(%arg0: i32) -> (i32, i32) {
    %c0_i32 = arith.constant 0 : i32
    %c0_i32_0 = arith.constant 0 : i32
    %c0_i32_1 = arith.constant 0 : i32
    return %c0_i32, %c0_i32_0 : i32, i32
  }
  func.func @transform_11(%arg0: i32) -> (i32, i32) {
    %c0_i32 = arith.constant 0 : i32
    %c0_i32_0 = arith.constant 0 : i32
    %c0_i32_1 = arith.constant 0 : i32
    return %c0_i32, %c0_i32_0 : i32, i32
  }
  func.func @transform_12(%arg0: i32) -> (i32, i32) {
    %c0_i32 = arith.constant 0 : i32
    %c0_i32_0 = arith.constant 0 : i32
    %c0_i32_1 = arith.constant 0 : i32
    return %c0_i32, %c0_i32_0 : i32, i32
  }
  func.func @transform_13(%arg0: i32) -> (i32, i32) {
    %c0_i32 = arith.constant 0 : i32
    %c0_i32_0 = arith.constant 0 : i32
    %c0_i32_1 = arith.constant 0 : i32
    return %c0_i32, %c0_i32_0 : i32, i32
  }
  func.func @transform_14(%arg0: i32) -> (i32, i32) {
    %c0_i32 = arith.constant 0 : i32
    %c0_i32_0 = arith.constant 0 : i32
    %c0_i32_1 = arith.constant 0 : i32
    return %c0_i32, %c0_i32_0 : i32, i32
  }
  func.func @transform_15(%arg0: i32) -> (i32, i32) {
    %c0_i32 = arith.constant 0 : i32
    %c0_i32_0 = arith.constant 0 : i32
    %c0_i32_1 = arith.constant 0 : i32
    return %c0_i32, %c0_i32_0 : i32, i32
  }
  func.func @transform_16(%arg0: i32) -> (i32, i32) {
    %c0_i32 = arith.constant 0 : i32
    %c0_i32_0 = arith.constant 0 : i32
    %c0_i32_1 = arith.constant 0 : i32
    return %c0_i32, %c0_i32_0 : i32, i32
  }
  func.func @transform_17(%arg0: i32) -> (i32, i32) {
    %c0_i32 = arith.constant 0 : i32
    %c0_i32_0 = arith.constant 0 : i32
    %c0_i32_1 = arith.constant 0 : i32
    return %c0_i32, %c0_i32_0 : i32, i32
  }
  func.func @transform_18(%arg0: i32) -> (i32, i32) {
    %c0_i32 = arith.constant 0 : i32
    %c0_i32_0 = arith.constant 0 : i32
    return %arg0, %c0_i32 : i32, i32
  }
}

</mosaic_0001>

<llo_original>
// kernel: forward.1
$region0: #{forward.1}
  #allocation0 [shape = 'u32[]', space=smem, size = 0x4, offset = 0x4, fixed_abs, tag = 'smem constant byte address 0x4 - core index']
  #allocation1 [shape = 'u32[72,128]{1,0:T(1,128)}', space=vmem, size = 0x9000, scoped, tag = 'internal scratch']
  #allocation2 [shape = 'bf16[128,64]{1,0:T(8,128)(2,1)}', space=vmem, size = 0x8000, scoped, tag = 'scratch operand']
  #allocation3 [shape = 'bf16[32,256]{1,0:T(8,128)(2,1)}', space=vmem, size = 0x4000, scoped, tag = 'scratch operand']
  #allocation4 [shape = 'bf16[32,288]{1,0:T(8,128)(2,1)}', space=vmem, size = 0x6000, scoped, tag = 'scratch operand']
  %s0 = inlined_call_operand.vmem [shape: bf16[2,256,4], index: 0, kind: input, shape index: {}]
  %s1 = inlined_call_operand.hbm [shape: bf16[1024,256], index: 1, kind: input, shape index: {}]
  %s2 = inlined_call_operand.vmem [shape: bf16[64,16], index: 2, kind: input, shape index: {}]
  %s3 = inlined_call_operand.vmem [shape: f32[1,16], index: 3, kind: input, shape index: {}]
  %s4 = inlined_call_operand.vmem [shape: bf16[256,64], index: 4, kind: input, shape index: {}]
  %s5 = inlined_call_operand.vmem [shape: bf16[256,32], index: 5, kind: input, shape index: {}]
  %s6 = inlined_call_operand.vmem [shape: f32[1,32], index: 6, kind: input, shape index: {}]
  %s7 = inlined_call_operand.vmem [shape: bf16[144,16], index: 7, kind: input, shape index: {}]
  %s8 = inlined_call_operand.vmem [shape: bf16[288,32], index: 8, kind: input, shape index: {}]
  %s9 = inlined_call_operand.vmem [shape: f32[1,32], index: 9, kind: input, shape index: {}]
  %s10 = inlined_call_operand.vmem [shape: bf16[288,32], index: 10, kind: input, shape index: {}]
  %s11 = inlined_call_operand.vmem [shape: f32[1,32], index: 11, kind: input, shape index: {}]
  %s12 = inlined_call_operand.vmem [shape: bf16[32,32], index: 12, kind: input, shape index: {}]
  %s13 = inlined_call_operand.vmem [shape: f32[1,32], index: 13, kind: input, shape index: {}]
  %s14 = inlined_call_operand.vmem [shape: bf16[288,32], index: 14, kind: input, shape index: {}]
  %s15 = inlined_call_operand.vmem [shape: f32[1,32], index: 15, kind: input, shape index: {}]
  %s16 = inlined_call_operand.vmem [shape: bf16[32,32], index: 16, kind: input, shape index: {}]
  %s17 = inlined_call_operand.vmem [shape: f32[1,32], index: 17, kind: input, shape index: {}]
  %s18 = inlined_call_operand.hbm [shape: f32[32,32], index: 18, kind: output, shape index: {}]
  %s19 = sld [smem:[#allocation0]]
  $region86: #{forward.1} parent=0
    _
  %s21 = ssub.s32 1, %s19
  %s22 = scalar_select 0, %s21, %s19
  $region1: #{forward.1} parent=0
    #allocation5 [shape = 'u8[524288]{0}', space=vmem, size = 0x80000, scoped, tag = 'input window, operand 1, single buffered']
    #allocation6 [shape = 's32[1]{0}', space=sflag, size = 0x4, scoped, tag = 'scoped memory for forward.1']
    #allocation7 [shape = 's32[1]{0}', space=sflag, size = 0x4, scoped, tag = 'scoped memory for forward.1']
    #allocation8 [shape = 'u8[16384]{0}', space=vmem, size = 0x4000, scoped, tag = 'output window, operand 0, single buffered']
    %23 = vsyncpa [#allocation6], 0
    %24 = vsyncpa [#allocation7], 0
    // Predicated region
    $region2: #{forward.1} parent=1 // pred_check
      _
    $region3: #{forward.1} parent=1 // pred_check_branch
      %26 = sbr.rel (0) target = $region5
    $region4: #{forward.1} parent=1 // pred_region
      _
    $region5: #{forward.1} parent=1 // pred_fallthru
      _
    // Predicated region
    $region6: #{forward.1} parent=1 // pred_check
      _
    $region7: #{forward.1} parent=1 // pred_check_branch
      %28 = sbr.rel (0) target = $region9
    $region8: #{forward.1} parent=1 // pred_region
      %30 = vsyncadd [#allocation6], 0
      %s31 = sshll.u32 %s1, 4
      %s32 = int_to_ptr.hbm [resolvable:$true] %s31
      %s33 = sshll.u32 [#allocation5], 4
      %s34 = int_to_ptr.vmem [resolvable:$true] %s33
      %39 = dma.hbm_to_vmem [thread:$0]  %s32, 16384, %s34, [#allocation6], 128, 128, 8
    $region9: #{forward.1} parent=1 // pred_fallthru
      _
    // Predicated region
    $region10: #{forward.1} parent=1 // pred_check
      _
    $region11: #{forward.1} parent=1 // pred_check_branch
      %41 = sbr.rel (0) target = $region13
    $region12: #{forward.1} parent=1 // pred_region
      _
    $region13: #{forward.1} parent=1 // pred_fallthru
      _
    // Predicated region
    $region14: #{forward.1} parent=1 // pred_check
      _
    $region15: #{forward.1} parent=1 // pred_check_branch
      %43 = sbr.rel (0) target = $region17
    $region16: #{forward.1} parent=1 // pred_region
      _
    $region17: #{forward.1} parent=1 // pred_fallthru
      _
    // Predicated region
    $region18: #{forward.1} parent=1 // pred_check
      _
    $region19: #{forward.1} parent=1 // pred_check_branch
      %45 = sbr.rel (0) target = $region21
    $region20: #{forward.1} parent=1 // pred_region
      _
    $region21: #{forward.1} parent=1 // pred_fallthru
      _
    // Predicated region
    $region22: #{forward.1} parent=1 // pred_check
      _
    $region23: #{forward.1} parent=1 // pred_check_branch
      %47 = sbr.rel (0) target = $region25
    $region24: #{forward.1} parent=1 // pred_region
      _
    $region25: #{forward.1} parent=1 // pred_fallthru
      _
    // Predicated region
    $region26: #{forward.1} parent=1 // pred_check
      _
    $region27: #{forward.1} parent=1 // pred_check_branch
      %49 = sbr.rel (0) target = $region29
    $region28: #{forward.1} parent=1 // pred_region
      _
    $region29: #{forward.1} parent=1 // pred_fallthru
      _
    // Predicated region
    $region30: #{forward.1} parent=1 // pred_check
      _
    $region31: #{forward.1} parent=1 // pred_check_branch
      %51 = sbr.rel (0) target = $region33
    $region32: #{forward.1} parent=1 // pred_region
      _
    $region33: #{forward.1} parent=1 // pred_fallthru
      _
    // Predicated region
    $region34: #{forward.1} parent=1 // pred_check
      _
    $region35: #{forward.1} parent=1 // pred_check_branch
      %53 = sbr.rel (0) target = $region37
    $region36: #{forward.1} parent=1 // pred_region
      _
    $region37: #{forward.1} parent=1 // pred_fallthru
      _
    // Predicated region
    $region38: #{forward.1} parent=1 // pred_check
      _
    $region39: #{forward.1} parent=1 // pred_check_branch
      %55 = sbr.rel (0) target = $region41
    $region40: #{forward.1} parent=1 // pred_region
      _
    $region41: #{forward.1} parent=1 // pred_fallthru
      _
    // Predicated region
    $region42: #{forward.1} parent=1 // pred_check
      _
    $region43: #{forward.1} parent=1 // pred_check_branch
      %57 = sbr.rel (0) target = $region45
    $region44: #{forward.1} parent=1 // pred_region
      _
    $region45: #{forward.1} parent=1 // pred_fallthru
      _
    // Predicated region
    $region46: #{forward.1} parent=1 // pred_check
      _
    $region47: #{forward.1} parent=1 // pred_check_branch
      %59 = sbr.rel (0) target = $region49
    $region48: #{forward.1} parent=1 // pred_region
      _
    $region49: #{forward.1} parent=1 // pred_fallthru
      _
    // Predicated region
    $region50: #{forward.1} parent=1 // pred_check
      _
    $region51: #{forward.1} parent=1 // pred_check_branch
      %61 = sbr.rel (0) target = $region53
    $region52: #{forward.1} parent=1 // pred_region
      _
    $region53: #{forward.1} parent=1 // pred_fallthru
      _
    // Predicated region
    $region54: #{forward.1} parent=1 // pred_check
      _
    $region55: #{forward.1} parent=1 // pred_check_branch
      %63 = sbr.rel (0) target = $region57
    $region56: #{forward.1} parent=1 // pred_region
      _
    $region57: #{forward.1} parent=1 // pred_fallthru
      _
    // Predicated region
    $region58: #{forward.1} parent=1 // pred_check
      _
    $region59: #{forward.1} parent=1 // pred_check_branch
      %65 = sbr.rel (0) target = $region61
    $region60: #{forward.1} parent=1 // pred_region
      _
    $region61: #{forward.1} parent=1 // pred_fallthru
      _
    // Predicated region
    $region62: #{forward.1} parent=1 // pred_check
      _
    $region63: #{forward.1} parent=1 // pred_check_branch
      %67 = sbr.rel (0) target = $region65
    $region64: #{forward.1} parent=1 // pred_region
      _
    $region65: #{forward.1} parent=1 // pred_fallthru
      _
    // Predicated region
    $region66: #{forward.1} parent=1 // pred_check
      _
    $region67: #{forward.1} parent=1 // pred_check_branch
      %69 = sbr.rel (0) target = $region69
    $region68: #{forward.1} parent=1 // pred_region
      _
    $region69: #{forward.1} parent=1 // pred_fallthru
      _
    // Predicated region
    $region70: #{forward.1} parent=1 // pred_check
      _
    $region71: #{forward.1} parent=1 // pred_check_branch
      %71 = sbr.rel (0) target = $region73
    $region72: #{forward.1} parent=1 // pred_region
      _
    $region73: #{forward.1} parent=1 // pred_fallthru
      _
    // Predicated region
    $region74: #{forward.1} parent=1 // pred_check
      _
    $region75: #{forward.1} parent=1 // pred_check_branch
      %73 = sbr.rel (0) target = $region77
    $region76: #{forward.1} parent=1 // pred_region
      %75 = dma.done [#allocation6], 16384
    $region77: #{forward.1} parent=1 // pred_fallthru
      _
    %v77 = vld [vmem:[%s0] sm:$0xf]
    %v78 = vld [vmem:[%s0 + $0x4] sm:$0xf]
    %v79 = vld [vmem:[%s0 + $0x8] sm:$0xf]
    %v80 = vld [vmem:[%s0 + $0xc] sm:$0xf]
    %v81 = vld [vmem:[%s0 + $0x10] sm:$0xf]
    %v82 = vld [vmem:[%s0 + $0x14] sm:$0xf]
    %v83 = vld [vmem:[%s0 + $0x18] sm:$0xf]
    %v84 = vld [vmem:[%s0 + $0x1c] sm:$0xf]
    %v85 = vld [vmem:[%s0 + $0x20] sm:$0xf]
    %v86 = vld [vmem:[%s0 + $0x24] sm:$0xf]
    %v87 = vld [vmem:[%s0 + $0x28] sm:$0xf]
    %v88 = vld [vmem:[%s0 + $0x2c] sm:$0xf]
    %v89 = vld [vmem:[%s0 + $0x30] sm:$0xf]
    %v90 = vld [vmem:[%s0 + $0x34] sm:$0xf]
    %v91 = vld [vmem:[%s0 + $0x38] sm:$0xf]
    %v92 = vld [vmem:[%s0 + $0x3c] sm:$0xf]
    %v93 = vld [vmem:[%s0 + $0x40] sm:$0xf]
    %v94 = vld [vmem:[%s0 + $0x44] sm:$0xf]
    %v95 = vld [vmem:[%s0 + $0x48] sm:$0xf]
    %v96 = vld [vmem:[%s0 + $0x4c] sm:$0xf]
    %v97 = vld [vmem:[%s0 + $0x50] sm:$0xf]
    %v98 = vld [vmem:[%s0 + $0x54] sm:$0xf]
    %v99 = vld [vmem:[%s0 + $0x58] sm:$0xf]
    %v100 = vld [vmem:[%s0 + $0x5c] sm:$0xf]
    %v101 = vld [vmem:[%s0 + $0x60] sm:$0xf]
    %v102 = vld [vmem:[%s0 + $0x64] sm:$0xf]
    %v103 = vld [vmem:[%s0 + $0x68] sm:$0xf]
    %v104 = vld [vmem:[%s0 + $0x6c] sm:$0xf]
    %v105 = vld [vmem:[%s0 + $0x70] sm:$0xf]
    %v106 = vld [vmem:[%s0 + $0x74] sm:$0xf]
    %v107 = vld [vmem:[%s0 + $0x78] sm:$0xf]
    %v108 = vld [vmem:[%s0 + $0x7c] sm:$0xf]
    %s109 = scalar_lea.vmem %s0, 128
    %v110 = vld [vmem:[%s109] sm:$0xf]
    %v111 = vld [vmem:[%s109 + $0x4] sm:$0xf]
    %v112 = vld [vmem:[%s109 + $0x8] sm:$0xf]
    %v113 = vld [vmem:[%s109 + $0xc] sm:$0xf]
    %v114 = vld [vmem:[%s109 + $0x10] sm:$0xf]
    %v115 = vld [vmem:[%s109 + $0x14] sm:$0xf]
    %v116 = vld [vmem:[%s109 + $0x18] sm:$0xf]
    %v117 = vld [vmem:[%s109 + $0x1c] sm:$0xf]
    %v118 = vld [vmem:[%s109 + $0x20] sm:$0xf]
    %v119 = vld [vmem:[%s109 + $0x24] sm:$0xf]
    %v120 = vld [vmem:[%s109 + $0x28] sm:$0xf]
    %v121 = vld [vmem:[%s109 + $0x2c] sm:$0xf]
    %v122 = vld [vmem:[%s109 + $0x30] sm:$0xf]
    %v123 = vld [vmem:[%s109 + $0x34] sm:$0xf]
    %v124 = vld [vmem:[%s109 + $0x38] sm:$0xf]
    %v125 = vld [vmem:[%s109 + $0x3c] sm:$0xf]
    %v126 = vld [vmem:[%s109 + $0x40] sm:$0xf]
    %v127 = vld [vmem:[%s109 + $0x44] sm:$0xf]
    %v128 = vld [vmem:[%s109 + $0x48] sm:$0xf]
    %v129 = vld [vmem:[%s109 + $0x4c] sm:$0xf]
    %v130 = vld [vmem:[%s109 + $0x50] sm:$0xf]
    %v131 = vld [vmem:[%s109 + $0x54] sm:$0xf]
    %v132 = vld [vmem:[%s109 + $0x58] sm:$0xf]
    %v133 = vld [vmem:[%s109 + $0x5c] sm:$0xf]
    %v134 = vld [vmem:[%s109 + $0x60] sm:$0xf]
    %v135 = vld [vmem:[%s109 + $0x64] sm:$0xf]
    %v136 = vld [vmem:[%s109 + $0x68] sm:$0xf]
    %v137 = vld [vmem:[%s109 + $0x6c] sm:$0xf]
    %v138 = vld [vmem:[%s109 + $0x70] sm:$0xf]
    %v139 = vld [vmem:[%s109 + $0x74] sm:$0xf]
    %v140 = vld [vmem:[%s109 + $0x78] sm:$0xf]
    %v141 = vld [vmem:[%s109 + $0x7c] sm:$0xf]
    %v142 = vld [vmem:[#allocation5] sm:$0xff]
    %v143 = vld [vmem:[#allocation5 + $0x8] sm:$0xff]
    %v144 = vld [vmem:[#allocation5 + $0x10] sm:$0xff]
    %v145 = vld [vmem:[#allocation5 + $0x18] sm:$0xff]
    %v146 = vld [vmem:[#allocation5 + $0x20] sm:$0xff]
    %v147 = vld [vmem:[#allocation5 + $0x28] sm:$0xff]
    %v148 = vld [vmem:[#allocation5 + $0x30] sm:$0xff]
    %v149 = vld [vmem:[#allocation5 + $0x38] sm:$0xff]
    %v150 = vld [vmem:[#allocation5 + $0x40] sm:$0xff]
    %v151 = vld [vmem:[#allocation5 + $0x48] sm:$0xff]
    %v152 = vld [vmem:[#allocation5 + $0x50] sm:$0xff]
    %v153 = vld [vmem:[#allocation5 + $0x58] sm:$0xff]
    %v154 = vld [vmem:[#allocation5 + $0x60] sm:$0xff]
    %v155 = vld [vmem:[#allocation5 + $0x68] sm:$0xff]
    %v156 = vld [vmem:[#allocation5 + $0x70] sm:$0xff]
    %v157 = vld [vmem:[#allocation5 + $0x78] sm:$0xff]
    %v158 = vld [vmem:[#allocation5 + $0x80] sm:$0xff]
    %v159 = vld [vmem:[#allocation5 + $0x88] sm:$0xff]
    %v160 = vld [vmem:[#allocation5 + $0x90] sm:$0xff]
    %v161 = vld [vmem:[#allocation5 + $0x98] sm:$0xff]
    %v162 = vld [vmem:[#allocation5 + $0xa0] sm:$0xff]
    %v163 = vld [vmem:[#allocation5 + $0xa8] sm:$0xff]
    %v164 = vld [vmem:[#allocation5 + $0xb0] sm:$0xff]
    %v165 = vld [vmem:[#allocation5 + $0xb8] sm:$0xff]
    %v166 = vld [vmem:[#allocation5 + $0xc0] sm:$0xff]
    %v167 = vld [vmem:[#allocation5 + $0xc8] sm:$0xff]
    %v168 = vld [vmem:[#allocation5 + $0xd0] sm:$0xff]
    %v169 = vld [vmem:[#allocation5 + $0xd8] sm:$0xff]
    %v170 = vld [vmem:[#allocation5 + $0xe0] sm:$0xff]
    %v171 = vld [vmem:[#allocation5 + $0xe8] sm:$0xff]
    %v172 = vld [vmem:[#allocation5 + $0xf0] sm:$0xff]
    %v173 = vld [vmem:[#allocation5 + $0xf8] sm:$0xff]
    %v174 = vld [vmem:[#allocation5 + $0x100] sm:$0xff]
    %v175 = vld [vmem:[#allocation5 + $0x108] sm:$0xff]
    %v176 = vld [vmem:[#allocation5 + $0x110] sm:$0xff]
    %v177 = vld [vmem:[#allocation5 + $0x118] sm:$0xff]
    %v178 = vld [vmem:[#allocation5 + $0x120] sm:$0xff]
    %v179 = vld [vmem:[#allocation5 + $0x128] sm:$0xff]
    %v180 = vld [vmem:[#allocation5 + $0x130] sm:$0xff]
    %v181 = vld [vmem:[#allocation5 + $0x138] sm:$0xff]
    %v182 = vld [vmem:[#allocation5 + $0x140] sm:$0xff]
    %v183 = vld [vmem:[#allocation5 + $0x148] sm:$0xff]
    %v184 = vld [vmem:[#allocation5 + $0x150] sm:$0xff]
    %v185 = vld [vmem:[#allocation5 + $0x158] sm:$0xff]
    %v186 = vld [vmem:[#allocation5 + $0x160] sm:$0xff]
    %v187 = vld [vmem:[#allocation5 + $0x168] sm:$0xff]
    %v188 = vld [vmem:[#allocation5 + $0x170] sm:$0xff]
    %v189 = vld [vmem:[#allocation5 + $0x178] sm:$0xff]
    %v190 = vld [vmem:[#allocation5 + $0x180] sm:$0xff]
    %v191 = vld [vmem:[#allocation5 + $0x188] sm:$0xff]
    %v192 = vld [vmem:[#allocation5 + $0x190] sm:$0xff]
    %v193 = vld [vmem:[#allocation5 + $0x198] sm:$0xff]
    %v194 = vld [vmem:[#allocation5 + $0x1a0] sm:$0xff]
    %v195 = vld [vmem:[#allocation5 + $0x1a8] sm:$0xff]
    %v196 = vld [vmem:[#allocation5 + $0x1b0] sm:$0xff]
    %v197 = vld [vmem:[#allocation5 + $0x1b8] sm:$0xff]
    %v198 = vld [vmem:[#allocation5 + $0x1c0] sm:$0xff]
    %v199 = vld [vmem:[#allocation5 + $0x1c8] sm:$0xff]
    %v200 = vld [vmem:[#allocation5 + $0x1d0] sm:$0xff]
    %v201 = vld [vmem:[#allocation5 + $0x1d8] sm:$0xff]
    %v202 = vld [vmem:[#allocation5 + $0x1e0] sm:$0xff]
    %v203 = vld [vmem:[#allocation5 + $0x1e8] sm:$0xff]
    %v204 = vld [vmem:[#allocation5 + $0x1f0] sm:$0xff]
    %v205 = vld [vmem:[#allocation5 + $0x1f8] sm:$0xff]
    %v206 = vld [vmem:[#allocation5 + $0x200] sm:$0xff]
    %v207 = vld [vmem:[#allocation5 + $0x208] sm:$0xff]
    %v208 = vld [vmem:[#allocation5 + $0x210] sm:$0xff]
    %v209 = vld [vmem:[#allocation5 + $0x218] sm:$0xff]
    %v210 = vld [vmem:[#allocation5 + $0x220] sm:$0xff]
    %v211 = vld [vmem:[#allocation5 + $0x228] sm:$0xff]
    %v212 = vld [vmem:[#allocation5 + $0x230] sm:$0xff]
    %v213 = vld [vmem:[#allocation5 + $0x238] sm:$0xff]
    %v214 = vld [vmem:[#allocation5 + $0x240] sm:$0xff]
    %v215 = vld [vmem:[#allocation5 + $0x248] sm:$0xff]
    %v216 = vld [vmem:[#allocation5 + $0x250] sm:$0xff]
    %v217 = vld [vmem:[#allocation5 + $0x258] sm:$0xff]
    %v218 = vld [vmem:[#allocation5 + $0x260] sm:$0xff]
    %v219 = vld [vmem:[#allocation5 + $0x268] sm:$0xff]
    %v220 = vld [vmem:[#allocation5 + $0x270] sm:$0xff]
    %v221 = vld [vmem:[#allocation5 + $0x278] sm:$0xff]
    %v222 = vld [vmem:[#allocation5 + $0x280] sm:$0xff]
    %v223 = vld [vmem:[#allocation5 + $0x288] sm:$0xff]
    %v224 = vld [vmem:[#allocation5 + $0x290] sm:$0xff]
    %v225 = vld [vmem:[#allocation5 + $0x298] sm:$0xff]
    %v226 = vld [vmem:[#allocation5 + $0x2a0] sm:$0xff]
    %v227 = vld [vmem:[#allocation5 + $0x2a8] sm:$0xff]
    %v228 = vld [vmem:[#allocation5 + $0x2b0] sm:$0xff]
    %v229 = vld [vmem:[#allocation5 + $0x2b8] sm:$0xff]
    %v230 = vld [vmem:[#allocation5 + $0x2c0] sm:$0xff]
    %v231 = vld [vmem:[#allocation5 + $0x2c8] sm:$0xff]
    %v232 = vld [vmem:[#allocation5 + $0x2d0] sm:$0xff]
    %v233 = vld [vmem:[#allocation5 + $0x2d8] sm:$0xff]
    %v234 = vld [vmem:[#allocation5 + $0x2e0] sm:$0xff]
    %v235 = vld [vmem:[#allocation5 + $0x2e8] sm:$0xff]
    %v236 = vld [vmem:[#allocation5 + $0x2f0] sm:$0xff]
    %v237 = vld [vmem:[#allocation5 + $0x2f8] sm:$0xff]
    %v238 = vld [vmem:[#allocation5 + $0x300] sm:$0xff]
    %v239 = vld [vmem:[#allocation5 + $0x308] sm:$0xff]
    %v240 = vld [vmem:[#allocation5 + $0x310] sm:$0xff]
    %v241 = vld [vmem:[#allocation5 + $0x318] sm:$0xff]
    %v242 = vld [vmem:[#allocation5 + $0x320] sm:$0xff]
    %v243 = vld [vmem:[#allocation5 + $0x328] sm:$0xff]
    %v244 = vld [vmem:[#allocation5 + $0x330] sm:$0xff]
    %v245 = vld [vmem:[#allocation5 + $0x338] sm:$0xff]
    %v246 = vld [vmem:[#allocation5 + $0x340] sm:$0xff]
    %v247 = vld [vmem:[#allocation5 + $0x348] sm:$0xff]
    %v248 = vld [vmem:[#allocation5 + $0x350] sm:$0xff]
    %v249 = vld [vmem:[#allocation5 + $0x358] sm:$0xff]
    %v250 = vld [vmem:[#allocation5 + $0x360] sm:$0xff]
    %v251 = vld [vmem:[#allocation5 + $0x368] sm:$0xff]
    %v252 = vld [vmem:[#allocation5 + $0x370] sm:$0xff]
    %v253 = vld [vmem:[#allocation5 + $0x378] sm:$0xff]
    %v254 = vld [vmem:[#allocation5 + $0x380] sm:$0xff]
    %v255 = vld [vmem:[#allocation5 + $0x388] sm:$0xff]
    %v256 = vld [vmem:[#allocation5 + $0x390] sm:$0xff]
    %v257 = vld [vmem:[#allocation5 + $0x398] sm:$0xff]
    %v258 = vld [vmem:[#allocation5 + $0x3a0] sm:$0xff]
    %v259 = vld [vmem:[#allocation5 + $0x3a8] sm:$0xff]
    %v260 = vld [vmem:[#allocation5 + $0x3b0] sm:$0xff]
    %v261 = vld [vmem:[#allocation5 + $0x3b8] sm:$0xff]
    %v262 = vld [vmem:[#allocation5 + $0x3c0] sm:$0xff]
    %v263 = vld [vmem:[#allocation5 + $0x3c8] sm:$0xff]
    %v264 = vld [vmem:[#allocation5 + $0x3d0] sm:$0xff]
    %v265 = vld [vmem:[#allocation5 + $0x3d8] sm:$0xff]
    %v266 = vld [vmem:[#allocation5 + $0x3e0] sm:$0xff]
    %v267 = vld [vmem:[#allocation5 + $0x3e8] sm:$0xff]
    %v268 = vld [vmem:[#allocation5 + $0x3f0] sm:$0xff]
    %v269 = vld [vmem:[#allocation5 + $0x3f8] sm:$0xff]
    %v398 = vunpack.c.l.b16 %v142
    %v399 = vunpack.c.h.b16 %v142
    %v400 = vunpack.c.l.b16 %v143
    %v401 = vunpack.c.h.b16 %v143
    %v402 = vunpack.c.l.b16 %v144
    %v403 = vunpack.c.h.b16 %v144
    %v404 = vunpack.c.l.b16 %v145
    %v405 = vunpack.c.h.b16 %v145
    %v406 = vunpack.c.l.b16 %v146
    %v407 = vunpack.c.h.b16 %v146
    %v408 = vunpack.c.l.b16 %v147
    %v409 = vunpack.c.h.b16 %v147
    %v410 = vunpack.c.l.b16 %v148
    %v411 = vunpack.c.h.b16 %v148
    %v412 = vunpack.c.l.b16 %v149
    %v413 = vunpack.c.h.b16 %v149
    %v414 = vunpack.c.l.b16 %v150
    %v415 = vunpack.c.h.b16 %v150
    %v416 = vunpack.c.l.b16 %v151
    %v417 = vunpack.c.h.b16 %v151
    %v418 = vunpack.c.l.b16 %v152
    %v419 = vunpack.c.h.b16 %v152
    %v420 = vunpack.c.l.b16 %v153
    %v421 = vunpack.c.h.b16 %v153
    %v422 = vunpack.c.l.b16 %v154
    %v423 = vunpack.c.h.b16 %v154
    %v424 = vunpack.c.l.b16 %v155
    %v425 = vunpack.c.h.b16 %v155
    %v426 = vunpack.c.l.b16 %v156
    %v427 = vunpack.c.h.b16 %v156
    %v428 = vunpack.c.l.b16 %v157
    %v429 = vunpack.c.h.b16 %v157
    %v430 = vunpack.c.l.b16 %v158
    %v431 = vunpack.c.h.b16 %v158
    %v432 = vunpack.c.l.b16 %v159
    %v433 = vunpack.c.h.b16 %v159
    %v434 = vunpack.c.l.b16 %v160
    %v435 = vunpack.c.h.b16 %v160
    %v436 = vunpack.c.l.b16 %v161
    %v437 = vunpack.c.h.b16 %v161
    %v438 = vunpack.c.l.b16 %v162
    %v439 = vunpack.c.h.b16 %v162
    %v440 = vunpack.c.l.b16 %v163
    %v441 = vunpack.c.h.b16 %v163
    %v442 = vunpack.c.l.b16 %v164
    %v443 = vunpack.c.h.b16 %v164
    %v444 = vunpack.c.l.b16 %v165
    %v445 = vunpack.c.h.b16 %v165
    %v446 = vunpack.c.l.b16 %v166
    %v447 = vunpack.c.h.b16 %v166
    %v448 = vunpack.c.l.b16 %v167
    %v449 = vunpack.c.h.b16 %v167
    %v450 = vunpack.c.l.b16 %v168
    %v451 = vunpack.c.h.b16 %v168
    %v452 = vunpack.c.l.b16 %v169
    %v453 = vunpack.c.h.b16 %v169
    %v454 = vunpack.c.l.b16 %v170
    %v455 = vunpack.c.h.b16 %v170
    %v456 = vunpack.c.l.b16 %v171
    %v457 = vunpack.c.h.b16 %v171
    %v458 = vunpack.c.l.b16 %v172
    %v459 = vunpack.c.h.b16 %v172
    %v460 = vunpack.c.l.b16 %v173
    %v461 = vunpack.c.h.b16 %v173
    %v462 = vunpack.c.l.b16 %v174
    %v463 = vunpack.c.h.b16 %v174
    %v464 = vunpack.c.l.b16 %v175
    %v465 = vunpack.c.h.b16 %v175
    %v466 = vunpack.c.l.b16 %v176
    %v467 = vunpack.c.h.b16 %v176
    %v468 = vunpack.c.l.b16 %v177
    %v469 = vunpack.c.h.b16 %v177
    %v470 = vunpack.c.l.b16 %v178
    %v471 = vunpack.c.h.b16 %v178
    %v472 = vunpack.c.l.b16 %v179
    %v473 = vunpack.c.h.b16 %v179
    %v474 = vunpack.c.l.b16 %v180
    %v475 = vunpack.c.h.b16 %v180
    %v476 = vunpack.c.l.b16 %v181
    %v477 = vunpack.c.h.b16 %v181
    %v478 = vunpack.c.l.b16 %v182
    %v479 = vunpack.c.h.b16 %v182
    %v480 = vunpack.c.l.b16 %v183
    %v481 = vunpack.c.h.b16 %v183
    %v482 = vunpack.c.l.b16 %v184
    %v483 = vunpack.c.h.b16 %v184
    %v484 = vunpack.c.l.b16 %v185
    %v485 = vunpack.c.h.b16 %v185
    %v486 = vunpack.c.l.b16 %v186
    %v487 = vunpack.c.h.b16 %v186
    %v488 = vunpack.c.l.b16 %v187
    %v489 = vunpack.c.h.b16 %v187
    %v490 = vunpack.c.l.b16 %v188
    %v491 = vunpack.c.h.b16 %v188
    %v492 = vunpack.c.l.b16 %v189
    %v493 = vunpack.c.h.b16 %v189
    %v494 = vunpack.c.l.b16 %v190
    %v495 = vunpack.c.h.b16 %v190
    %v496 = vunpack.c.l.b16 %v191
    %v497 = vunpack.c.h.b16 %v191
    %v498 = vunpack.c.l.b16 %v192
    %v499 = vunpack.c.h.b16 %v192
    %v500 = vunpack.c.l.b16 %v193
    %v501 = vunpack.c.h.b16 %v193
    %v502 = vunpack.c.l.b16 %v194
    %v503 = vunpack.c.h.b16 %v194
    %v504 = vunpack.c.l.b16 %v195
    %v505 = vunpack.c.h.b16 %v195
    %v506 = vunpack.c.l.b16 %v196
    %v507 = vunpack.c.h.b16 %v196
    %v508 = vunpack.c.l.b16 %v197
    %v509 = vunpack.c.h.b16 %v197
    %v510 = vunpack.c.l.b16 %v198
    %v511 = vunpack.c.h.b16 %v198
    %v512 = vunpack.c.l.b16 %v199
    %v513 = vunpack.c.h.b16 %v199
    %v514 = vunpack.c.l.b16 %v200
    %v515 = vunpack.c.h.b16 %v200
    %v516 = vunpack.c.l.b16 %v201
    %v517 = vunpack.c.h.b16 %v201
    %v518 = vunpack.c.l.b16 %v202
    %v519 = vunpack.c.h.b16 %v202
    %v520 = vunpack.c.l.b16 %v203
    %v521 = vunpack.c.h.b16 %v203
    %v522 = vunpack.c.l.b16 %v204
    %v523 = vunpack.c.h.b16 %v204
    %v524 = vunpack.c.l.b16 %v205
    %v525 = vunpack.c.h.b16 %v205
    %v526 = vunpack.c.l.b16 %v206
    %v527 = vunpack.c.h.b16 %v206
    %v528 = vunpack.c.l.b16 %v207
    %v529 = vunpack.c.h.b16 %v207
    %v530 = vunpack.c.l.b16 %v208
    %v531 = vunpack.c.h.b16 %v208
    %v532 = vunpack.c.l.b16 %v209
    %v533 = vunpack.c.h.b16 %v209
    %v534 = vunpack.c.l.b16 %v210
    %v535 = vunpack.c.h.b16 %v210
    %v536 = vunpack.c.l.b16 %v211
    %v537 = vunpack.c.h.b16 %v211
    %v538 = vunpack.c.l.b16 %v212
    %v539 = vunpack.c.h.b16 %v212
    %v540 = vunpack.c.l.b16 %v213
    %v541 = vunpack.c.h.b16 %v213
    %v542 = vunpack.c.l.b16 %v214
    %v543 = vunpack.c.h.b16 %v214
    %v544 = vunpack.c.l.b16 %v215
    %v545 = vunpack.c.h.b16 %v215
    %v546 = vunpack.c.l.b16 %v216
    %v547 = vunpack.c.h.b16 %v216
    %v548 = vunpack.c.l.b16 %v217
    %v549 = vunpack.c.h.b16 %v217
    %v550 = vunpack.c.l.b16 %v218
    %v551 = vunpack.c.h.b16 %v218
    %v552 = vunpack.c.l.b16 %v219
    %v553 = vunpack.c.h.b16 %v219
    %v554 = vunpack.c.l.b16 %v220
    %v555 = vunpack.c.h.b16 %v220
    %v556 = vunpack.c.l.b16 %v221
    %v557 = vunpack.c.h.b16 %v221
    %v558 = vunpack.c.l.b16 %v222
    %v559 = vunpack.c.h.b16 %v222
    %v560 = vunpack.c.l.b16 %v223
    %v561 = vunpack.c.h.b16 %v223
    %v562 = vunpack.c.l.b16 %v224
    %v563 = vunpack.c.h.b16 %v224
    %v564 = vunpack.c.l.b16 %v225
    %v565 = vunpack.c.h.b16 %v225
    %v566 = vunpack.c.l.b16 %v226
    %v567 = vunpack.c.h.b16 %v226
    %v568 = vunpack.c.l.b16 %v227
    %v569 = vunpack.c.h.b16 %v227
    %v570 = vunpack.c.l.b16 %v228
    %v571 = vunpack.c.h.b16 %v228
    %v572 = vunpack.c.l.b16 %v229
    %v573 = vunpack.c.h.b16 %v229
    %v574 = vunpack.c.l.b16 %v230
    %v575 = vunpack.c.h.b16 %v230
    %v576 = vunpack.c.l.b16 %v231
    %v577 = vunpack.c.h.b16 %v231
    %v578 = vunpack.c.l.b16 %v232
    %v579 = vunpack.c.h.b16 %v232
    %v580 = vunpack.c.l.b16 %v233
    %v581 = vunpack.c.h.b16 %v233
    %v582 = vunpack.c.l.b16 %v234
    %v583 = vunpack.c.h.b16 %v234
    %v584 = vunpack.c.l.b16 %v235
    %v585 = vunpack.c.h.b16 %v235
    %v586 = vunpack.c.l.b16 %v236
    %v587 = vunpack.c.h.b16 %v236
    %v588 = vunpack.c.l.b16 %v237
    %v589 = vunpack.c.h.b16 %v237
    %v590 = vunpack.c.l.b16 %v238
    %v591 = vunpack.c.h.b16 %v238
    %v592 = vunpack.c.l.b16 %v239
    %v593 = vunpack.c.h.b16 %v239
    %v594 = vunpack.c.l.b16 %v240
    %v595 = vunpack.c.h.b16 %v240
    %v596 = vunpack.c.l.b16 %v241
    %v597 = vunpack.c.h.b16 %v241
    %v598 = vunpack.c.l.b16 %v242
    %v599 = vunpack.c.h.b16 %v242
    %v600 = vunpack.c.l.b16 %v243
    %v601 = vunpack.c.h.b16 %v243
    %v602 = vunpack.c.l.b16 %v244
    %v603 = vunpack.c.h.b16 %v244
    %v604 = vunpack.c.l.b16 %v245
    %v605 = vunpack.c.h.b16 %v245
    %v606 = vunpack.c.l.b16 %v246
    %v607 = vunpack.c.h.b16 %v246
    %v608 = vunpack.c.l.b16 %v247
    %v609 = vunpack.c.h.b16 %v247
    %v610 = vunpack.c.l.b16 %v248
    %v611 = vunpack.c.h.b16 %v248
    %v612 = vunpack.c.l.b16 %v249
    %v613 = vunpack.c.h.b16 %v249
    %v614 = vunpack.c.l.b16 %v250
    %v615 = vunpack.c.h.b16 %v250
    %v616 = vunpack.c.l.b16 %v251
    %v617 = vunpack.c.h.b16 %v251
    %v618 = vunpack.c.l.b16 %v252
    %v619 = vunpack.c.h.b16 %v252
    %v620 = vunpack.c.l.b16 %v253
    %v621 = vunpack.c.h.b16 %v253
    %v622 = vunpack.c.l.b16 %v254
    %v623 = vunpack.c.h.b16 %v254
    %v624 = vunpack.c.l.b16 %v255
    %v625 = vunpack.c.h.b16 %v255
    %v626 = vunpack.c.l.b16 %v256
    %v627 = vunpack.c.h.b16 %v256
    %v628 = vunpack.c.l.b16 %v257
    %v629 = vunpack.c.h.b16 %v257
    %v630 = vunpack.c.l.b16 %v258
    %v631 = vunpack.c.h.b16 %v258
    %v632 = vunpack.c.l.b16 %v259
    %v633 = vunpack.c.h.b16 %v259
    %v634 = vunpack.c.l.b16 %v260
    %v635 = vunpack.c.h.b16 %v260
    %v636 = vunpack.c.l.b16 %v261
    %v637 = vunpack.c.h.b16 %v261
    %v638 = vunpack.c.l.b16 %v262
    %v639 = vunpack.c.h.b16 %v262
    %v640 = vunpack.c.l.b16 %v263
    %v641 = vunpack.c.h.b16 %v263
    %v642 = vunpack.c.l.b16 %v264
    %v643 = vunpack.c.h.b16 %v264
    %v644 = vunpack.c.l.b16 %v265
    %v645 = vunpack.c.h.b16 %v265
    %v646 = vunpack.c.l.b16 %v266
    %v647 = vunpack.c.h.b16 %v266
    %v648 = vunpack.c.l.b16 %v267
    %v649 = vunpack.c.h.b16 %v267
    %v650 = vunpack.c.l.b16 %v268
    %v651 = vunpack.c.h.b16 %v268
    %v652 = vunpack.c.l.b16 %v269
    %v653 = vunpack.c.h.b16 %v269
    %v654 = vpack.c.b16 %v400, %v398
    %v655 = vpack.c.b16 %v401, %v399
    %v656 = vpack.c.b16 %v404, %v402
    %v657 = vpack.c.b16 %v405, %v403
    %v658 = vpack.c.b16 %v408, %v406
    %v659 = vpack.c.b16 %v409, %v407
    %v660 = vpack.c.b16 %v412, %v410
    %v661 = vpack.c.b16 %v413, %v411
    %v662 = vpack.c.b16 %v416, %v414
    %v663 = vpack.c.b16 %v417, %v415
    %v664 = vpack.c.b16 %v420, %v418
    %v665 = vpack.c.b16 %v421, %v419
    %v666 = vpack.c.b16 %v424, %v422
    %v667 = vpack.c.b16 %v425, %v423
    %v668 = vpack.c.b16 %v428, %v426
    %v669 = vpack.c.b16 %v429, %v427
    %v670 = vpack.c.b16 %v432, %v430
    %v671 = vpack.c.b16 %v433, %v431
    %v672 = vpack.c.b16 %v436, %v434
    %v673 = vpack.c.b16 %v437, %v435
    %v674 = vpack.c.b16 %v440, %v438
    %v675 = vpack.c.b16 %v441, %v439
    %v676 = vpack.c.b16 %v444, %v442
    %v677 = vpack.c.b16 %v445, %v443
    %v678 = vpack.c.b16 %v448, %v446
    %v679 = vpack.c.b16 %v449, %v447
    %v680 = vpack.c.b16 %v452, %v450
    %v681 = vpack.c.b16 %v453, %v451
    %v682 = vpack.c.b16 %v456, %v454
    %v683 = vpack.c.b16 %v457, %v455
    %v684 = vpack.c.b16 %v460, %v458
    %v685 = vpack.c.b16 %v461, %v459
    %v686 = vpack.c.b16 %v464, %v462
    %v687 = vpack.c.b16 %v465, %v463
    %v688 = vpack.c.b16 %v468, %v466
    %v689 = vpack.c.b16 %v469, %v467
    %v690 = vpack.c.b16 %v472, %v470
    %v691 = vpack.c.b16 %v473, %v471
    %v692 = vpack.c.b16 %v476, %v474
    %v693 = vpack.c.b16 %v477, %v475
    %v694 = vpack.c.b16 %v480, %v478
    %v695 = vpack.c.b16 %v481, %v479
    %v696 = vpack.c.b16 %v484, %v482
    %v697 = vpack.c.b16 %v485, %v483
    %v698 = vpack.c.b16 %v488, %v486
    %v699 = vpack.c.b16 %v489, %v487
    %v700 = vpack.c.b16 %v492, %v490
    %v701 = vpack.c.b16 %v493, %v491
    %v702 = vpack.c.b16 %v496, %v494
    %v703 = vpack.c.b16 %v497, %v495
    %v704 = vpack.c.b16 %v500, %v498
    %v705 = vpack.c.b16 %v501, %v499
    %v706 = vpack.c.b16 %v504, %v502
    %v707 = vpack.c.b16 %v505, %v503
    %v708 = vpack.c.b16 %v508, %v506
    %v709 = vpack.c.b16 %v509, %v507
    %v710 = vpack.c.b16 %v512, %v510
    %v711 = vpack.c.b16 %v513, %v511
    %v712 = vpack.c.b16 %v516, %v514
    %v713 = vpack.c.b16 %v517, %v515
    %v714 = vpack.c.b16 %v520, %v518
    %v715 = vpack.c.b16 %v521, %v519
    %v716 = vpack.c.b16 %v524, %v522
    %v717 = vpack.c.b16 %v525, %v523
    %v718 = vpack.c.b16 %v528, %v526
    %v719 = vpack.c.b16 %v529, %v527
    %v720 = vpack.c.b16 %v532, %v530
    %v721 = vpack.c.b16 %v533, %v531
    %v722 = vpack.c.b16 %v536, %v534
    %v723 = vpack.c.b16 %v537, %v535
    %v724 = vpack.c.b16 %v540, %v538
    %v725 = vpack.c.b16 %v541, %v539
    %v726 = vpack.c.b16 %v544, %v542
    %v727 = vpack.c.b16 %v545, %v543
    %v728 = vpack.c.b16 %v548, %v546
    %v729 = vpack.c.b16 %v549, %v547
    %v730 = vpack.c.b16 %v552, %v550
    %v731 = vpack.c.b16 %v553, %v551
    %v732 = vpack.c.b16 %v556, %v554
    %v733 = vpack.c.b16 %v557, %v555
    %v734 = vpack.c.b16 %v560, %v558
    %v735 = vpack.c.b16 %v561, %v559
    %v736 = vpack.c.b16 %v564, %v562
    %v737 = vpack.c.b16 %v565, %v563
    %v738 = vpack.c.b16 %v568, %v566
    %v739 = vpack.c.b16 %v569, %v567
    %v740 = vpack.c.b16 %v572, %v570
    %v741 = vpack.c.b16 %v573, %v571
    %v742 = vpack.c.b16 %v576, %v574
    %v743 = vpack.c.b16 %v577, %v575
    %v744 = vpack.c.b16 %v580, %v578
    %v745 = vpack.c.b16 %v581, %v579
    %v746 = vpack.c.b16 %v584, %v582
    %v747 = vpack.c.b16 %v585, %v583
    %v748 = vpack.c.b16 %v588, %v586
    %v749 = vpack.c.b16 %v589, %v587
    %v750 = vpack.c.b16 %v592, %v590
    %v751 = vpack.c.b16 %v593, %v591
    %v752 = vpack.c.b16 %v596, %v594
    %v753 = vpack.c.b16 %v597, %v595
    %v754 = vpack.c.b16 %v600, %v598
    %v755 = vpack.c.b16 %v601, %v599
    %v756 = vpack.c.b16 %v604, %v602
    %v757 = vpack.c.b16 %v605, %v603
    %v758 = vpack.c.b16 %v608, %v606
    %v759 = vpack.c.b16 %v609, %v607
    %v760 = vpack.c.b16 %v612, %v610
    %v761 = vpack.c.b16 %v613, %v611
    %v762 = vpack.c.b16 %v616, %v614
    %v763 = vpack.c.b16 %v617, %v615
    %v764 = vpack.c.b16 %v620, %v618
    %v765 = vpack.c.b16 %v621, %v619
    %v766 = vpack.c.b16 %v624, %v622
    %v767 = vpack.c.b16 %v625, %v623
    %v768 = vpack.c.b16 %v628, %v626
    %v769 = vpack.c.b16 %v629, %v627
    %v770 = vpack.c.b16 %v632, %v630
    %v771 = vpack.c.b16 %v633, %v631
    %v772 = vpack.c.b16 %v636, %v634
    %v773 = vpack.c.b16 %v637, %v635
    %v774 = vpack.c.b16 %v640, %v638
    %v775 = vpack.c.b16 %v641, %v639
    %v776 = vpack.c.b16 %v644, %v642
    %v777 = vpack.c.b16 %v645, %v643
    %v778 = vpack.c.b16 %v648, %v646
    %v779 = vpack.c.b16 %v649, %v647
    %v780 = vpack.c.b16 %v652, %v650
    %v781 = vpack.c.b16 %v653, %v651
    %v942 = vunpack.c.l.b16 %v77
    %v943 = vunpack.c.l.b16 %v78
    %v944 = vunpack.c.l.b16 %v79
    %v945 = vunpack.c.l.b16 %v80
    %v946 = vunpack.c.l.b16 %v81
    %v947 = vunpack.c.l.b16 %v82
    %v948 = vunpack.c.l.b16 %v83
    %v949 = vunpack.c.l.b16 %v84
    %v950 = vunpack.c.l.b16 %v85
    %v951 = vunpack.c.l.b16 %v86
    %v952 = vunpack.c.l.b16 %v87
    %v953 = vunpack.c.l.b16 %v88
    %v954 = vunpack.c.l.b16 %v89
    %v955 = vunpack.c.l.b16 %v90
    %v956 = vunpack.c.l.b16 %v91
    %v957 = vunpack.c.l.b16 %v92
    %v958 = vunpack.c.l.b16 %v93
    %v959 = vunpack.c.l.b16 %v94
    %v960 = vunpack.c.l.b16 %v95
    %v961 = vunpack.c.l.b16 %v96
    %v962 = vunpack.c.l.b16 %v97
    %v963 = vunpack.c.l.b16 %v98
    %v964 = vunpack.c.l.b16 %v99
    %v965 = vunpack.c.l.b16 %v100
    %v966 = vunpack.c.l.b16 %v101
    %v967 = vunpack.c.l.b16 %v102
    %v968 = vunpack.c.l.b16 %v103
    %v969 = vunpack.c.l.b16 %v104
    %v970 = vunpack.c.l.b16 %v105
    %v971 = vunpack.c.l.b16 %v106
    %v972 = vunpack.c.l.b16 %v107
    %v973 = vunpack.c.l.b16 %v108
    %v974 = vpack.c.b16 %v943, %v942
    %v975 = vpack.c.b16 %v945, %v944
    %v976 = vpack.c.b16 %v947, %v946
    %v977 = vpack.c.b16 %v949, %v948
    %v978 = vpack.c.b16 %v951, %v950
    %v979 = vpack.c.b16 %v953, %v952
    %v980 = vpack.c.b16 %v955, %v954
    %v981 = vpack.c.b16 %v957, %v956
    %v982 = vpack.c.b16 %v959, %v958
    %v983 = vpack.c.b16 %v961, %v960
    %v984 = vpack.c.b16 %v963, %v962
    %v985 = vpack.c.b16 %v965, %v964
    %v986 = vpack.c.b16 %v967, %v966
    %v987 = vpack.c.b16 %v969, %v968
    %v988 = vpack.c.b16 %v971, %v970
    %v989 = vpack.c.b16 %v973, %v972
    %1006 = vmatpush.bf16.msra.mxu0 %v981
    %1007 = vmatpush.bf16.msra.mxu0 %v980
    %1008 = vmatpush.bf16.msra.mxu0 %v979
    %1009 = vmatpush.bf16.msra.mxu0 %v978
    %1010 = vmatpush.bf16.msra.mxu0 %v977
    %1011 = vmatpush.bf16.msra.mxu0 %v976
    %1012 = vmatpush.bf16.msra.mxu0 %v975
    %1013 = vmatpush.bf16.msra.mxu0 %v974
    %1014 = vmatmul.bf16.gmra.mxu0 %v654
    %v1015 = vpop.f32.mrf.mxu0
    %v1016 = vadd.f32 0.0, %v1015
    %v1017 = vpop.f32.mrf.mxu0
    %v1018 = vadd.f32 0.0, %v1017
    %1019 = vmatmul.bf16.gmra.mxu0 %v656
    %v1020 = vpop.f32.mrf.mxu0
    %v1021 = vadd.f32 0.0, %v1020
    %v1022 = vpop.f32.mrf.mxu0
    %v1023 = vadd.f32 0.0, %v1022
    %1024 = vmatmul.bf16.gmra.mxu0 %v658
    %v1025 = vpop.f32.mrf.mxu0
    %v1026 = vadd.f32 0.0, %v1025
    %v1027 = vpop.f32.mrf.mxu0
    %v1028 = vadd.f32 0.0, %v1027
    %1029 = vmatmul.bf16.gmra.mxu0 %v660
    %v1030 = vpop.f32.mrf.mxu0
    %v1031 = vadd.f32 0.0, %v1030
    %v1032 = vpop.f32.mrf.mxu0
    %v1033 = vadd.f32 0.0, %v1032
    %1034 = vmatmul.bf16.gmra.mxu0 %v662
    %v1035 = vpop.f32.mrf.mxu0
    %v1036 = vadd.f32 0.0, %v1035
    %v1037 = vpop.f32.mrf.mxu0
    %v1038 = vadd.f32 0.0, %v1037
    %1039 = vmatmul.bf16.gmra.mxu0 %v664
    %v1040 = vpop.f32.mrf.mxu0
    %v1041 = vadd.f32 0.0, %v1040
    %v1042 = vpop.f32.mrf.mxu0
    %v1043 = vadd.f32 0.0, %v1042
    %1044 = vmatmul.bf16.gmra.mxu0 %v666
    %v1045 = vpop.f32.mrf.mxu0
    %v1046 = vadd.f32 0.0, %v1045
    %v1047 = vpop.f32.mrf.mxu0
    %v1048 = vadd.f32 0.0, %v1047
    %1049 = vmatmul.bf16.gmra.mxu0 %v668
    %v1050 = vpop.f32.mrf.mxu0
    %v1051 = vadd.f32 0.0, %v1050
    %v1052 = vpop.f32.mrf.mxu0
    %v1053 = vadd.f32 0.0, %v1052
    %1054 = vmatmul.bf16.gmra.mxu0 %v670
    %v1055 = vpop.f32.mrf.mxu0
    %v1056 = vadd.f32 0.0, %v1055
    %v1057 = vpop.f32.mrf.mxu0
    %v1058 = vadd.f32 0.0, %v1057
    %1059 = vmatmul.bf16.gmra.mxu0 %v672
    %v1060 = vpop.f32.mrf.mxu0
    %v1061 = vadd.f32 0.0, %v1060
    %v1062 = vpop.f32.mrf.mxu0
    %v1063 = vadd.f32 0.0, %v1062
    %1064 = vmatmul.bf16.gmra.mxu0 %v674
    %v1065 = vpop.f32.mrf.mxu0
    %v1066 = vadd.f32 0.0, %v1065
    %v1067 = vpop.f32.mrf.mxu0
    %v1068 = vadd.f32 0.0, %v1067
    %1069 = vmatmul.bf16.gmra.mxu0 %v676
    %v1070 = vpop.f32.mrf.mxu0
    %v1071 = vadd.f32 0.0, %v1070
    %v1072 = vpop.f32.mrf.mxu0
    %v1073 = vadd.f32 0.0, %v1072
    %1074 = vmatmul.bf16.gmra.mxu0 %v678
    %v1075 = vpop.f32.mrf.mxu0
    %v1076 = vadd.f32 0.0, %v1075
    %v1077 = vpop.f32.mrf.mxu0
    %v1078 = vadd.f32 0.0, %v1077
    %1079 = vmatmul.bf16.gmra.mxu0 %v680
    %v1080 = vpop.f32.mrf.mxu0
    %v1081 = vadd.f32 0.0, %v1080
    %v1082 = vpop.f32.mrf.mxu0
    %v1083 = vadd.f32 0.0, %v1082
    %1084 = vmatmul.bf16.gmra.mxu0 %v682
    %v1085 = vpop.f32.mrf.mxu0
    %v1086 = vadd.f32 0.0, %v1085
    %v1087 = vpop.f32.mrf.mxu0
    %v1088 = vadd.f32 0.0, %v1087
    %1089 = vmatmul.bf16.gmra.mxu0 %v684
    %v1090 = vpop.f32.mrf.mxu0
    %v1091 = vadd.f32 0.0, %v1090
    %v1092 = vpop.f32.mrf.mxu0
    %v1093 = vadd.f32 0.0, %v1092
    %1094 = vmatmul.bf16.gmra.mxu0 %v686
    %v1095 = vpop.f32.mrf.mxu0
    %v1096 = vadd.f32 0.0, %v1095
    %v1097 = vpop.f32.mrf.mxu0
    %v1098 = vadd.f32 0.0, %v1097
    %1099 = vmatmul.bf16.gmra.mxu0 %v688
    %v1100 = vpop.f32.mrf.mxu0
    %v1101 = vadd.f32 0.0, %v1100
    %v1102 = vpop.f32.mrf.mxu0
    %v1103 = vadd.f32 0.0, %v1102
    %1104 = vmatmul.bf16.gmra.mxu0 %v690
    %v1105 = vpop.f32.mrf.mxu0
    %v1106 = vadd.f32 0.0, %v1105
    %v1107 = vpop.f32.mrf.mxu0
    %v1108 = vadd.f32 0.0, %v1107
    %1109 = vmatmul.bf16.gmra.mxu0 %v692
    %v1110 = vpop.f32.mrf.mxu0
    %v1111 = vadd.f32 0.0, %v1110
    %v1112 = vpop.f32.mrf.mxu0
    %v1113 = vadd.f32 0.0, %v1112
    %1114 = vmatmul.bf16.gmra.mxu0 %v694
    %v1115 = vpop.f32.mrf.mxu0
    %v1116 = vadd.f32 0.0, %v1115
    %v1117 = vpop.f32.mrf.mxu0
    %v1118 = vadd.f32 0.0, %v1117
    %1119 = vmatmul.bf16.gmra.mxu0 %v696
    %v1120 = vpop.f32.mrf.mxu0
    %v1121 = vadd.f32 0.0, %v1120
    %v1122 = vpop.f32.mrf.mxu0
    %v1123 = vadd.f32 0.0, %v1122
    %1124 = vmatmul.bf16.gmra.mxu0 %v698
    %v1125 = vpop.f32.mrf.mxu0
    %v1126 = vadd.f32 0.0, %v1125
    %v1127 = vpop.f32.mrf.mxu0
    %v1128 = vadd.f32 0.0, %v1127
    %1129 = vmatmul.bf16.gmra.mxu0 %v700
    %v1130 = vpop.f32.mrf.mxu0
    %v1131 = vadd.f32 0.0, %v1130
    %v1132 = vpop.f32.mrf.mxu0
    %v1133 = vadd.f32 0.0, %v1132
    %1134 = vmatmul.bf16.gmra.mxu0 %v702
    %v1135 = vpop.f32.mrf.mxu0
    %v1136 = vadd.f32 0.0, %v1135
    %v1137 = vpop.f32.mrf.mxu0
    %v1138 = vadd.f32 0.0, %v1137
    %1139 = vmatmul.bf16.gmra.mxu0 %v704
    %v1140 = vpop.f32.mrf.mxu0
    %v1141 = vadd.f32 0.0, %v1140
    %v1142 = vpop.f32.mrf.mxu0
    %v1143 = vadd.f32 0.0, %v1142
    %1144 = vmatmul.bf16.gmra.mxu0 %v706
    %v1145 = vpop.f32.mrf.mxu0
    %v1146 = vadd.f32 0.0, %v1145
    %v1147 = vpop.f32.mrf.mxu0
    %v1148 = vadd.f32 0.0, %v1147
    %1149 = vmatmul.bf16.gmra.mxu0 %v708
    %v1150 = vpop.f32.mrf.mxu0
    %v1151 = vadd.f32 0.0, %v1150
    %v1152 = vpop.f32.mrf.mxu0
    %v1153 = vadd.f32 0.0, %v1152
    %1154 = vmatmul.bf16.gmra.mxu0 %v710
    %v1155 = vpop.f32.mrf.mxu0
    %v1156 = vadd.f32 0.0, %v1155
    %v1157 = vpop.f32.mrf.mxu0
    %v1158 = vadd.f32 0.0, %v1157
    %1159 = vmatmul.bf16.gmra.mxu0 %v712
    %v1160 = vpop.f32.mrf.mxu0
    %v1161 = vadd.f32 0.0, %v1160
    %v1162 = vpop.f32.mrf.mxu0
    %v1163 = vadd.f32 0.0, %v1162
    %1164 = vmatmul.bf16.gmra.mxu0 %v714
    %v1165 = vpop.f32.mrf.mxu0
    %v1166 = vadd.f32 0.0, %v1165
    %v1167 = vpop.f32.mrf.mxu0
    %v1168 = vadd.f32 0.0, %v1167
    %1169 = vmatmul.bf16.gmra.mxu0 %v716
    %v1170 = vpop.f32.mrf.mxu0
    %v1171 = vadd.f32 0.0, %v1170
    %v1172 = vpop.f32.mrf.mxu0
    %v1173 = vadd.f32 0.0, %v1172
    %1174 = vmatmul.bf16.gmra.mxu0 %v718
    %v1175 = vpop.f32.mrf.mxu0
    %v1176 = vadd.f32 0.0, %v1175
    %v1177 = vpop.f32.mrf.mxu0
    %v1178 = vadd.f32 0.0, %v1177
    %1179 = vmatmul.bf16.gmra.mxu0 %v720
    %v1180 = vpop.f32.mrf.mxu0
    %v1181 = vadd.f32 0.0, %v1180
    %v1182 = vpop.f32.mrf.mxu0
    %v1183 = vadd.f32 0.0, %v1182
    %1184 = vmatmul.bf16.gmra.mxu0 %v722
    %v1185 = vpop.f32.mrf.mxu0
    %v1186 = vadd.f32 0.0, %v1185
    %v1187 = vpop.f32.mrf.mxu0
    %v1188 = vadd.f32 0.0, %v1187
    %1189 = vmatmul.bf16.gmra.mxu0 %v724
    %v1190 = vpop.f32.mrf.mxu0
    %v1191 = vadd.f32 0.0, %v1190
    %v1192 = vpop.f32.mrf.mxu0
    %v1193 = vadd.f32 0.0, %v1192
    %1194 = vmatmul.bf16.gmra.mxu0 %v726
    %v1195 = vpop.f32.mrf.mxu0
    %v1196 = vadd.f32 0.0, %v1195
    %v1197 = vpop.f32.mrf.mxu0
    %v1198 = vadd.f32 0.0, %v1197
    %1199 = vmatmul.bf16.gmra.mxu0 %v728
    %v1200 = vpop.f32.mrf.mxu0
    %v1201 = vadd.f32 0.0, %v1200
    %v1202 = vpop.f32.mrf.mxu0
    %v1203 = vadd.f32 0.0, %v1202
    %1204 = vmatmul.bf16.gmra.mxu0 %v730
    %v1205 = vpop.f32.mrf.mxu0
    %v1206 = vadd.f32 0.0, %v1205
    %v1207 = vpop.f32.mrf.mxu0
    %v1208 = vadd.f32 0.0, %v1207
    %1209 = vmatmul.bf16.gmra.mxu0 %v732
    %v1210 = vpop.f32.mrf.mxu0
    %v1211 = vadd.f32 0.0, %v1210
    %v1212 = vpop.f32.mrf.mxu0
    %v1213 = vadd.f32 0.0, %v1212
    %1214 = vmatmul.bf16.gmra.mxu0 %v734
    %v1215 = vpop.f32.mrf.mxu0
    %v1216 = vadd.f32 0.0, %v1215
    %v1217 = vpop.f32.mrf.mxu0
    %v1218 = vadd.f32 0.0, %v1217
    %1219 = vmatmul.bf16.gmra.mxu0 %v736
    %v1220 = vpop.f32.mrf.mxu0
    %v1221 = vadd.f32 0.0, %v1220
    %v1222 = vpop.f32.mrf.mxu0
    %v1223 = vadd.f32 0.0, %v1222
    %1224 = vmatmul.bf16.gmra.mxu0 %v738
    %v1225 = vpop.f32.mrf.mxu0
    %v1226 = vadd.f32 0.0, %v1225
    %v1227 = vpop.f32.mrf.mxu0
    %v1228 = vadd.f32 0.0, %v1227
    %1229 = vmatmul.bf16.gmra.mxu0 %v740
    %v1230 = vpop.f32.mrf.mxu0
    %v1231 = vadd.f32 0.0, %v1230
    %v1232 = vpop.f32.mrf.mxu0
    %v1233 = vadd.f32 0.0, %v1232
    %1234 = vmatmul.bf16.gmra.mxu0 %v742
    %v1235 = vpop.f32.mrf.mxu0
    %v1236 = vadd.f32 0.0, %v1235
    %v1237 = vpop.f32.mrf.mxu0
    %v1238 = vadd.f32 0.0, %v1237
    %1239 = vmatmul.bf16.gmra.mxu0 %v744
    %v1240 = vpop.f32.mrf.mxu0
    %v1241 = vadd.f32 0.0, %v1240
    %v1242 = vpop.f32.mrf.mxu0
    %v1243 = vadd.f32 0.0, %v1242
    %1244 = vmatmul.bf16.gmra.mxu0 %v746
    %v1245 = vpop.f32.mrf.mxu0
    %v1246 = vadd.f32 0.0, %v1245
    %v1247 = vpop.f32.mrf.mxu0
    %v1248 = vadd.f32 0.0, %v1247
    %1249 = vmatmul.bf16.gmra.mxu0 %v748
    %v1250 = vpop.f32.mrf.mxu0
    %v1251 = vadd.f32 0.0, %v1250
    %v1252 = vpop.f32.mrf.mxu0
    %v1253 = vadd.f32 0.0, %v1252
    %1254 = vmatmul.bf16.gmra.mxu0 %v750
    %v1255 = vpop.f32.mrf.mxu0
    %v1256 = vadd.f32 0.0, %v1255
    %v1257 = vpop.f32.mrf.mxu0
    %v1258 = vadd.f32 0.0, %v1257
    %1259 = vmatmul.bf16.gmra.mxu0 %v752
    %v1260 = vpop.f32.mrf.mxu0
    %v1261 = vadd.f32 0.0, %v1260
    %v1262 = vpop.f32.mrf.mxu0
    %v1263 = vadd.f32 0.0, %v1262
    %1264 = vmatmul.bf16.gmra.mxu0 %v754
    %v1265 = vpop.f32.mrf.mxu0
    %v1266 = vadd.f32 0.0, %v1265
    %v1267 = vpop.f32.mrf.mxu0
    %v1268 = vadd.f32 0.0, %v1267
    %1269 = vmatmul.bf16.gmra.mxu0 %v756
    %v1270 = vpop.f32.mrf.mxu0
    %v1271 = vadd.f32 0.0, %v1270
    %v1272 = vpop.f32.mrf.mxu0
    %v1273 = vadd.f32 0.0, %v1272
    %1274 = vmatmul.bf16.gmra.mxu0 %v758
    %v1275 = vpop.f32.mrf.mxu0
    %v1276 = vadd.f32 0.0, %v1275
    %v1277 = vpop.f32.mrf.mxu0
    %v1278 = vadd.f32 0.0, %v1277
    %1279 = vmatmul.bf16.gmra.mxu0 %v760
    %v1280 = vpop.f32.mrf.mxu0
    %v1281 = vadd.f32 0.0, %v1280
    %v1282 = vpop.f32.mrf.mxu0
    %v1283 = vadd.f32 0.0, %v1282
    %1284 = vmatmul.bf16.gmra.mxu0 %v762
    %v1285 = vpop.f32.mrf.mxu0
    %v1286 = vadd.f32 0.0, %v1285
    %v1287 = vpop.f32.mrf.mxu0
    %v1288 = vadd.f32 0.0, %v1287
    %1289 = vmatmul.bf16.gmra.mxu0 %v764
    %v1290 = vpop.f32.mrf.mxu0
    %v1291 = vadd.f32 0.0, %v1290
    %v1292 = vpop.f32.mrf.mxu0
    %v1293 = vadd.f32 0.0, %v1292
    %1294 = vmatmul.bf16.gmra.mxu0 %v766
    %v1295 = vpop.f32.mrf.mxu0
    %v1296 = vadd.f32 0.0, %v1295
    %v1297 = vpop.f32.mrf.mxu0
    %v1298 = vadd.f32 0.0, %v1297
    %1299 = vmatmul.bf16.gmra.mxu0 %v768
    %v1300 = vpop.f32.mrf.mxu0
    %v1301 = vadd.f32 0.0, %v1300
    %v1302 = vpop.f32.mrf.mxu0
    %v1303 = vadd.f32 0.0, %v1302
    %1304 = vmatmul.bf16.gmra.mxu0 %v770
    %v1305 = vpop.f32.mrf.mxu0
    %v1306 = vadd.f32 0.0, %v1305
    %v1307 = vpop.f32.mrf.mxu0
    %v1308 = vadd.f32 0.0, %v1307
    %1309 = vmatmul.bf16.gmra.mxu0 %v772
    %v1310 = vpop.f32.mrf.mxu0
    %v1311 = vadd.f32 0.0, %v1310
    %v1312 = vpop.f32.mrf.mxu0
    %v1313 = vadd.f32 0.0, %v1312
    %1314 = vmatmul.bf16.gmra.mxu0 %v774
    %v1315 = vpop.f32.mrf.mxu0
    %v1316 = vadd.f32 0.0, %v1315
    %v1317 = vpop.f32.mrf.mxu0
    %v1318 = vadd.f32 0.0, %v1317
    %1319 = vmatmul.bf16.gmra.mxu0 %v776
    %v1320 = vpop.f32.mrf.mxu0
    %v1321 = vadd.f32 0.0, %v1320
    %v1322 = vpop.f32.mrf.mxu0
    %v1323 = vadd.f32 0.0, %v1322
    %1324 = vmatmul.bf16.gmra.mxu0 %v778
    %v1325 = vpop.f32.mrf.mxu0
    %v1326 = vadd.f32 0.0, %v1325
    %v1327 = vpop.f32.mrf.mxu0
    %v1328 = vadd.f32 0.0, %v1327
    %1329 = vmatmul.bf16.gmra.mxu0 %v780
    %v1330 = vpop.f32.mrf.mxu0
    %v1331 = vadd.f32 0.0, %v1330
    %v1332 = vpop.f32.mrf.mxu0
    %v1333 = vadd.f32 0.0, %v1332
    %1334 = vdwg.mxu0
    %1335 = vmatpush.bf16.msra.mxu0 %v989
    %1336 = vmatpush.bf16.msra.mxu0 %v988
    %1337 = vmatpush.bf16.msra.mxu0 %v987
    %1338 = vmatpush.bf16.msra.mxu0 %v986
    %1339 = vmatpush.bf16.msra.mxu0 %v985
    %1340 = vmatpush.bf16.msra.mxu0 %v984
    %1341 = vmatpush.bf16.msra.mxu0 %v983
    %1342 = vmatpush.bf16.msra.mxu0 %v982
    %1343 = vmatmul.bf16.gmra.mxu0 %v655
    %v1344 = vpop.f32.mrf.mxu0
    %v1345 = vadd.f32 %v1016, %v1344
    %v1346 = vpop.f32.mrf.mxu0
    %v1347 = vadd.f32 %v1018, %v1346
    %1348 = vmatmul.bf16.gmra.mxu0 %v657
    %v1349 = vpop.f32.mrf.mxu0
    %v1350 = vadd.f32 %v1021, %v1349
    %v1351 = vpop.f32.mrf.mxu0
    %v1352 = vadd.f32 %v1023, %v1351
    %1353 = vmatmul.bf16.gmra.mxu0 %v659
    %v1354 = vpop.f32.mrf.mxu0
    %v1355 = vadd.f32 %v1026, %v1354
    %v1356 = vpop.f32.mrf.mxu0
    %v1357 = vadd.f32 %v1028, %v1356
    %1358 = vmatmul.bf16.gmra.mxu0 %v661
    %v1359 = vpop.f32.mrf.mxu0
    %v1360 = vadd.f32 %v1031, %v1359
    %v1361 = vpop.f32.mrf.mxu0
    %v1362 = vadd.f32 %v1033, %v1361
    %1363 = vmatmul.bf16.gmra.mxu0 %v663
    %v1364 = vpop.f32.mrf.mxu0
    %v1365 = vadd.f32 %v1036, %v1364
    %v1366 = vpop.f32.mrf.mxu0
    %v1367 = vadd.f32 %v1038, %v1366
    %1368 = vmatmul.bf16.gmra.mxu0 %v665
    %v1369 = vpop.f32.mrf.mxu0
    %v1370 = vadd.f32 %v1041, %v1369
    %v1371 = vpop.f32.mrf.mxu0
    %v1372 = vadd.f32 %v1043, %v1371
    %1373 = vmatmul.bf16.gmra.mxu0 %v667
    %v1374 = vpop.f32.mrf.mxu0
    %v1375 = vadd.f32 %v1046, %v1374
    %v1376 = vpop.f32.mrf.mxu0
    %v1377 = vadd.f32 %v1048, %v1376
    %1378 = vmatmul.bf16.gmra.mxu0 %v669
    %v1379 = vpop.f32.mrf.mxu0
    %v1380 = vadd.f32 %v1051, %v1379
    %v1381 = vpop.f32.mrf.mxu0
    %v1382 = vadd.f32 %v1053, %v1381
    %1383 = vmatmul.bf16.gmra.mxu0 %v671
    %v1384 = vpop.f32.mrf.mxu0
    %v1385 = vadd.f32 %v1056, %v1384
    %v1386 = vpop.f32.mrf.mxu0
    %v1387 = vadd.f32 %v1058, %v1386
    %1388 = vmatmul.bf16.gmra.mxu0 %v673
    %v1389 = vpop.f32.mrf.mxu0
    %v1390 = vadd.f32 %v1061, %v1389
    %v1391 = vpop.f32.mrf.mxu0
    %v1392 = vadd.f32 %v1063, %v1391
    %1393 = vmatmul.bf16.gmra.mxu0 %v675
    %v1394 = vpop.f32.mrf.mxu0
    %v1395 = vadd.f32 %v1066, %v1394
    %v1396 = vpop.f32.mrf.mxu0
    %v1397 = vadd.f32 %v1068, %v1396
    %1398 = vmatmul.bf16.gmra.mxu0 %v677
    %v1399 = vpop.f32.mrf.mxu0
    %v1400 = vadd.f32 %v1071, %v1399
    %v1401 = vpop.f32.mrf.mxu0
    %v1402 = vadd.f32 %v1073, %v1401
    %1403 = vmatmul.bf16.gmra.mxu0 %v679
    %v1404 = vpop.f32.mrf.mxu0
    %v1405 = vadd.f32 %v1076, %v1404
    %v1406 = vpop.f32.mrf.mxu0
    %v1407 = vadd.f32 %v1078, %v1406
    %1408 = vmatmul.bf16.gmra.mxu0 %v681
    %v1409 = vpop.f32.mrf.mxu0
    %v1410 = vadd.f32 %v1081, %v1409
    %v1411 = vpop.f32.mrf.mxu0
    %v1412 = vadd.f32 %v1083, %v1411
    %1413 = vmatmul.bf16.gmra.mxu0 %v683
    %v1414 = vpop.f32.mrf.mxu0
    %v1415 = vadd.f32 %v1086, %v1414
    %v1416 = vpop.f32.mrf.mxu0
    %v1417 = vadd.f32 %v1088, %v1416
    %1418 = vmatmul.bf16.gmra.mxu0 %v685
    %v1419 = vpop.f32.mrf.mxu0
    %v1420 = vadd.f32 %v1091, %v1419
    %v1421 = vpop.f32.mrf.mxu0
    %v1422 = vadd.f32 %v1093, %v1421
    %1423 = vmatmul.bf16.gmra.mxu0 %v687
    %v1424 = vpop.f32.mrf.mxu0
    %v1425 = vadd.f32 %v1096, %v1424
    %v1426 = vpop.f32.mrf.mxu0
    %v1427 = vadd.f32 %v1098, %v1426
    %1428 = vmatmul.bf16.gmra.mxu0 %v689
    %v1429 = vpop.f32.mrf.mxu0
    %v1430 = vadd.f32 %v1101, %v1429
    %v1431 = vpop.f32.mrf.mxu0
    %v1432 = vadd.f32 %v1103, %v1431
    %1433 = vmatmul.bf16.gmra.mxu0 %v691
    %v1434 = vpop.f32.mrf.mxu0
    %v1435 = vadd.f32 %v1106, %v1434
    %v1436 = vpop.f32.mrf.mxu0
    %v1437 = vadd.f32 %v1108, %v1436
    %1438 = vmatmul.bf16.gmra.mxu0 %v693
    %v1439 = vpop.f32.mrf.mxu0
    %v1440 = vadd.f32 %v1111, %v1439
    %v1441 = vpop.f32.mrf.mxu0
    %v1442 = vadd.f32 %v1113, %v1441
    %1443 = vmatmul.bf16.gmra.mxu0 %v695
    %v1444 = vpop.f32.mrf.mxu0
    %v1445 = vadd.f32 %v1116, %v1444
    %v1446 = vpop.f32.mrf.mxu0
    %v1447 = vadd.f32 %v1118, %v1446
    %1448 = vmatmul.bf16.gmra.mxu0 %v697
    %v1449 = vpop.f32.mrf.mxu0
    %v1450 = vadd.f32 %v1121, %v1449
    %v1451 = vpop.f32.mrf.mxu0
    %v1452 = vadd.f32 %v1123, %v1451
    %1453 = vmatmul.bf16.gmra.mxu0 %v699
    %v1454 = vpop.f32.mrf.mxu0
    %v1455 = vadd.f32 %v1126, %v1454
    %v1456 = vpop.f32.mrf.mxu0
    %v1457 = vadd.f32 %v1128, %v1456
    %1458 = vmatmul.bf16.gmra.mxu0 %v701
    %v1459 = vpop.f32.mrf.mxu0
    %v1460 = vadd.f32 %v1131, %v1459
    %v1461 = vpop.f32.mrf.mxu0
    %v1462 = vadd.f32 %v1133, %v1461
    %1463 = vmatmul.bf16.gmra.mxu0 %v703
    %v1464 = vpop.f32.mrf.mxu0
    %v1465 = vadd.f32 %v1136, %v1464
    %v1466 = vpop.f32.mrf.mxu0
    %v1467 = vadd.f32 %v1138, %v1466
    %1468 = vmatmul.bf16.gmra.mxu0 %v705
    %v1469 = vpop.f32.mrf.mxu0
    %v1470 = vadd.f32 %v1141, %v1469
    %v1471 = vpop.f32.mrf.mxu0
    %v1472 = vadd.f32 %v1143, %v1471
    %1473 = vmatmul.bf16.gmra.mxu0 %v707
    %v1474 = vpop.f32.mrf.mxu0
    %v1475 = vadd.f32 %v1146, %v1474
    %v1476 = vpop.f32.mrf.mxu0
    %v1477 = vadd.f32 %v1148, %v1476
    %1478 = vmatmul.bf16.gmra.mxu0 %v709
    %v1479 = vpop.f32.mrf.mxu0
    %v1480 = vadd.f32 %v1151, %v1479
    %v1481 = vpop.f32.mrf.mxu0
    %v1482 = vadd.f32 %v1153, %v1481
    %1483 = vmatmul.bf16.gmra.mxu0 %v711
    %v1484 = vpop.f32.mrf.mxu0
    %v1485 = vadd.f32 %v1156, %v1484
    %v1486 = vpop.f32.mrf.mxu0
    %v1487 = vadd.f32 %v1158, %v1486
    %1488 = vmatmul.bf16.gmra.mxu0 %v713
    %v1489 = vpop.f32.mrf.mxu0
    %v1490 = vadd.f32 %v1161, %v1489
    %v1491 = vpop.f32.mrf.mxu0
    %v1492 = vadd.f32 %v1163, %v1491
    %1493 = vmatmul.bf16.gmra.mxu0 %v715
    %v1494 = vpop.f32.mrf.mxu0
    %v1495 = vadd.f32 %v1166, %v1494
    %v1496 = vpop.f32.mrf.mxu0
    %v1497 = vadd.f32 %v1168, %v1496
    %1498 = vmatmul.bf16.gmra.mxu0 %v717
    %v1499 = vpop.f32.mrf.mxu0
    %v1500 = vadd.f32 %v1171, %v1499
    %v1501 = vpop.f32.mrf.mxu0
    %v1502 = vadd.f32 %v1173, %v1501
    %1503 = vmatmul.bf16.gmra.mxu0 %v719
    %v1504 = vpop.f32.mrf.mxu0
    %v1505 = vadd.f32 %v1176, %v1504
    %v1506 = vpop.f32.mrf.mxu0
    %v1507 = vadd.f32 %v1178, %v1506
    %1508 = vmatmul.bf16.gmra.mxu0 %v721
    %v1509 = vpop.f32.mrf.mxu0
    %v1510 = vadd.f32 %v1181, %v1509
    %v1511 = vpop.f32.mrf.mxu0
    %v1512 = vadd.f32 %v1183, %v1511
    %1513 = vmatmul.bf16.gmra.mxu0 %v723
    %v1514 = vpop.f32.mrf.mxu0
    %v1515 = vadd.f32 %v1186, %v1514
    %v1516 = vpop.f32.mrf.mxu0
    %v1517 = vadd.f32 %v1188, %v1516
    %1518 = vmatmul.bf16.gmra.mxu0 %v725
    %v1519 = vpop.f32.mrf.mxu0
    %v1520 = vadd.f32 %v1191, %v1519
    %v1521 = vpop.f32.mrf.mxu0
    %v1522 = vadd.f32 %v1193, %v1521
    %1523 = vmatmul.bf16.gmra.mxu0 %v727
    %v1524 = vpop.f32.mrf.mxu0
    %v1525 = vadd.f32 %v1196, %v1524
    %v1526 = vpop.f32.mrf.mxu0
    %v1527 = vadd.f32 %v1198, %v1526
    %1528 = vmatmul.bf16.gmra.mxu0 %v729
    %v1529 = vpop.f32.mrf.mxu0
    %v1530 = vadd.f32 %v1201, %v1529
    %v1531 = vpop.f32.mrf.mxu0
    %v1532 = vadd.f32 %v1203, %v1531
    %1533 = vmatmul.bf16.gmra.mxu0 %v731
    %v1534 = vpop.f32.mrf.mxu0
    %v1535 = vadd.f32 %v1206, %v1534
    %v1536 = vpop.f32.mrf.mxu0
    %v1537 = vadd.f32 %v1208, %v1536
    %1538 = vmatmul.bf16.gmra.mxu0 %v733
    %v1539 = vpop.f32.mrf.mxu0
    %v1540 = vadd.f32 %v1211, %v1539
    %v1541 = vpop.f32.mrf.mxu0
    %v1542 = vadd.f32 %v1213, %v1541
    %1543 = vmatmul.bf16.gmra.mxu0 %v735
    %v1544 = vpop.f32.mrf.mxu0
    %v1545 = vadd.f32 %v1216, %v1544
    %v1546 = vpop.f32.mrf.mxu0
    %v1547 = vadd.f32 %v1218, %v1546
    %1548 = vmatmul.bf16.gmra.mxu0 %v737
    %v1549 = vpop.f32.mrf.mxu0
    %v1550 = vadd.f32 %v1221, %v1549
    %v1551 = vpop.f32.mrf.mxu0
    %v1552 = vadd.f32 %v1223, %v1551
    %1553 = vmatmul.bf16.gmra.mxu0 %v739
    %v1554 = vpop.f32.mrf.mxu0
    %v1555 = vadd.f32 %v1226, %v1554
    %v1556 = vpop.f32.mrf.mxu0
    %v1557 = vadd.f32 %v1228, %v1556
    %1558 = vmatmul.bf16.gmra.mxu0 %v741
    %v1559 = vpop.f32.mrf.mxu0
    %v1560 = vadd.f32 %v1231, %v1559
    %v1561 = vpop.f32.mrf.mxu0
    %v1562 = vadd.f32 %v1233, %v1561
    %1563 = vmatmul.bf16.gmra.mxu0 %v743
    %v1564 = vpop.f32.mrf.mxu0
    %v1565 = vadd.f32 %v1236, %v1564
    %v1566 = vpop.f32.mrf.mxu0
    %v1567 = vadd.f32 %v1238, %v1566
    %1568 = vmatmul.bf16.gmra.mxu0 %v745
    %v1569 = vpop.f32.mrf.mxu0
    %v1570 = vadd.f32 %v1241, %v1569
    %v1571 = vpop.f32.mrf.mxu0
    %v1572 = vadd.f32 %v1243, %v1571
    %1573 = vmatmul.bf16.gmra.mxu0 %v747
    %v1574 = vpop.f32.mrf.mxu0
    %v1575 = vadd.f32 %v1246, %v1574
    %v1576 = vpop.f32.mrf.mxu0
    %v1577 = vadd.f32 %v1248, %v1576
    %1578 = vmatmul.bf16.gmra.mxu0 %v749
    %v1579 = vpop.f32.mrf.mxu0
    %v1580 = vadd.f32 %v1251, %v1579
    %v1581 = vpop.f32.mrf.mxu0
    %v1582 = vadd.f32 %v1253, %v1581
    %1583 = vmatmul.bf16.gmra.mxu0 %v751
    %v1584 = vpop.f32.mrf.mxu0
    %v1585 = vadd.f32 %v1256, %v1584
    %v1586 = vpop.f32.mrf.mxu0
    %v1587 = vadd.f32 %v1258, %v1586
    %1588 = vmatmul.bf16.gmra.mxu0 %v753
    %v1589 = vpop.f32.mrf.mxu0
    %v1590 = vadd.f32 %v1261, %v1589
    %v1591 = vpop.f32.mrf.mxu0
    %v1592 = vadd.f32 %v1263, %v1591
    %1593 = vmatmul.bf16.gmra.mxu0 %v755
    %v1594 = vpop.f32.mrf.mxu0
    %v1595 = vadd.f32 %v1266, %v1594
    %v1596 = vpop.f32.mrf.mxu0
    %v1597 = vadd.f32 %v1268, %v1596
    %1598 = vmatmul.bf16.gmra.mxu0 %v757
    %v1599 = vpop.f32.mrf.mxu0
    %v1600 = vadd.f32 %v1271, %v1599
    %v1601 = vpop.f32.mrf.mxu0
    %v1602 = vadd.f32 %v1273, %v1601
    %1603 = vmatmul.bf16.gmra.mxu0 %v759
    %v1604 = vpop.f32.mrf.mxu0
    %v1605 = vadd.f32 %v1276, %v1604
    %v1606 = vpop.f32.mrf.mxu0
    %v1607 = vadd.f32 %v1278, %v1606
    %1608 = vmatmul.bf16.gmra.mxu0 %v761
    %v1609 = vpop.f32.mrf.mxu0
    %v1610 = vadd.f32 %v1281, %v1609
    %v1611 = vpop.f32.mrf.mxu0
    %v1612 = vadd.f32 %v1283, %v1611
    %1613 = vmatmul.bf16.gmra.mxu0 %v763
    %v1614 = vpop.f32.mrf.mxu0
    %v1615 = vadd.f32 %v1286, %v1614
    %v1616 = vpop.f32.mrf.mxu0
    %v1617 = vadd.f32 %v1288, %v1616
    %1618 = vmatmul.bf16.gmra.mxu0 %v765
    %v1619 = vpop.f32.mrf.mxu0
    %v1620 = vadd.f32 %v1291, %v1619
    %v1621 = vpop.f32.mrf.mxu0
    %v1622 = vadd.f32 %v1293, %v1621
    %1623 = vmatmul.bf16.gmra.mxu0 %v767
    %v1624 = vpop.f32.mrf.mxu0
    %v1625 = vadd.f32 %v1296, %v1624
    %v1626 = vpop.f32.mrf.mxu0
    %v1627 = vadd.f32 %v1298, %v1626
    %1628 = vmatmul.bf16.gmra.mxu0 %v769
    %v1629 = vpop.f32.mrf.mxu0
    %v1630 = vadd.f32 %v1301, %v1629
    %v1631 = vpop.f32.mrf.mxu0
    %v1632 = vadd.f32 %v1303, %v1631
    %1633 = vmatmul.bf16.gmra.mxu0 %v771
    %v1634 = vpop.f32.mrf.mxu0
    %v1635 = vadd.f32 %v1306, %v1634
    %v1636 = vpop.f32.mrf.mxu0
    %v1637 = vadd.f32 %v1308, %v1636
    %1638 = vmatmul.bf16.gmra.mxu0 %v773
    %v1639 = vpop.f32.mrf.mxu0
    %v1640 = vadd.f32 %v1311, %v1639
    %v1641 = vpop.f32.mrf.mxu0
    %v1642 = vadd.f32 %v1313, %v1641
    %1643 = vmatmul.bf16.gmra.mxu0 %v775
    %v1644 = vpop.f32.mrf.mxu0
    %v1645 = vadd.f32 %v1316, %v1644
    %v1646 = vpop.f32.mrf.mxu0
    %v1647 = vadd.f32 %v1318, %v1646
    %1648 = vmatmul.bf16.gmra.mxu0 %v777
    %v1649 = vpop.f32.mrf.mxu0
    %v1650 = vadd.f32 %v1321, %v1649
    %v1651 = vpop.f32.mrf.mxu0
    %v1652 = vadd.f32 %v1323, %v1651
    %1653 = vmatmul.bf16.gmra.mxu0 %v779
    %v1654 = vpop.f32.mrf.mxu0
    %v1655 = vadd.f32 %v1326, %v1654
    %v1656 = vpop.f32.mrf.mxu0
    %v1657 = vadd.f32 %v1328, %v1656
    %1658 = vmatmul.bf16.gmra.mxu0 %v781
    %v1659 = vpop.f32.mrf.mxu0
    %v1660 = vadd.f32 %v1331, %v1659
    %v1661 = vpop.f32.mrf.mxu0
    %v1662 = vadd.f32 %v1333, %v1661
    %1663 = vdwg.mxu0
    %v1664 = vpack.c.bf16 %v1345, %v1345
    %v1665 = vpack.c.bf16 %v1347, %v1347
    %v1666 = vpack.c.bf16 %v1350, %v1350
    %v1667 = vpack.c.bf16 %v1352, %v1352
    %v1668 = vpack.c.bf16 %v1355, %v1355
    %v1669 = vpack.c.bf16 %v1357, %v1357
    %v1670 = vpack.c.bf16 %v1360, %v1360
    %v1671 = vpack.c.bf16 %v1362, %v1362
    %v1672 = vpack.c.bf16 %v1365, %v1365
    %v1673 = vpack.c.bf16 %v1367, %v1367
    %v1674 = vpack.c.bf16 %v1370, %v1370
    %v1675 = vpack.c.bf16 %v1372, %v1372
    %v1676 = vpack.c.bf16 %v1375, %v1375
    %v1677 = vpack.c.bf16 %v1377, %v1377
    %v1678 = vpack.c.bf16 %v1380, %v1380
    %v1679 = vpack.c.bf16 %v1382, %v1382
    %v1680 = vpack.c.bf16 %v1385, %v1385
    %v1681 = vpack.c.bf16 %v1387, %v1387
    %v1682 = vpack.c.bf16 %v1390, %v1390
    %v1683 = vpack.c.bf16 %v1392, %v1392
    %v1684 = vpack.c.bf16 %v1395, %v1395
    %v1685 = vpack.c.bf16 %v1397, %v1397
    %v1686 = vpack.c.bf16 %v1400, %v1400
    %v1687 = vpack.c.bf16 %v1402, %v1402
    %v1688 = vpack.c.bf16 %v1405, %v1405
    %v1689 = vpack.c.bf16 %v1407, %v1407
    %v1690 = vpack.c.bf16 %v1410, %v1410
    %v1691 = vpack.c.bf16 %v1412, %v1412
    %v1692 = vpack.c.bf16 %v1415, %v1415
    %v1693 = vpack.c.bf16 %v1417, %v1417
    %v1694 = vpack.c.bf16 %v1420, %v1420
    %v1695 = vpack.c.bf16 %v1422, %v1422
    %v1696 = vpack.c.bf16 %v1425, %v1425
    %v1697 = vpack.c.bf16 %v1427, %v1427
    %v1698 = vpack.c.bf16 %v1430, %v1430
    %v1699 = vpack.c.bf16 %v1432, %v1432
    %v1700 = vpack.c.bf16 %v1435, %v1435
    %v1701 = vpack.c.bf16 %v1437, %v1437
    %v1702 = vpack.c.bf16 %v1440, %v1440
    %v1703 = vpack.c.bf16 %v1442, %v1442
    %v1704 = vpack.c.bf16 %v1445, %v1445
    %v1705 = vpack.c.bf16 %v1447, %v1447
    %v1706 = vpack.c.bf16 %v1450, %v1450
    %v1707 = vpack.c.bf16 %v1452, %v1452
    %v1708 = vpack.c.bf16 %v1455, %v1455
    %v1709 = vpack.c.bf16 %v1457, %v1457
    %v1710 = vpack.c.bf16 %v1460, %v1460
    %v1711 = vpack.c.bf16 %v1462, %v1462
    %v1712 = vpack.c.bf16 %v1465, %v1465
    %v1713 = vpack.c.bf16 %v1467, %v1467
    %v1714 = vpack.c.bf16 %v1470, %v1470
    %v1715 = vpack.c.bf16 %v1472, %v1472
    %v1716 = vpack.c.bf16 %v1475, %v1475
    %v1717 = vpack.c.bf16 %v1477, %v1477
    %v1718 = vpack.c.bf16 %v1480, %v1480
    %v1719 = vpack.c.bf16 %v1482, %v1482
    %v1720 = vpack.c.bf16 %v1485, %v1485
    %v1721 = vpack.c.bf16 %v1487, %v1487
    %v1722 = vpack.c.bf16 %v1490, %v1490
    %v1723 = vpack.c.bf16 %v1492, %v1492
    %v1724 = vpack.c.bf16 %v1495, %v1495
    %v1725 = vpack.c.bf16 %v1497, %v1497
    %v1726 = vpack.c.bf16 %v1500, %v1500
    %v1727 = vpack.c.bf16 %v1502, %v1502
    %v1728 = vpack.c.bf16 %v1505, %v1505
    %v1729 = vpack.c.bf16 %v1507, %v1507
    %v1730 = vpack.c.bf16 %v1510, %v1510
    %v1731 = vpack.c.bf16 %v1512, %v1512
    %v1732 = vpack.c.bf16 %v1515, %v1515
    %v1733 = vpack.c.bf16 %v1517, %v1517
    %v1734 = vpack.c.bf16 %v1520, %v1520
    %v1735 = vpack.c.bf16 %v1522, %v1522
    %v1736 = vpack.c.bf16 %v1525, %v1525
    %v1737 = vpack.c.bf16 %v1527, %v1527
    %v1738 = vpack.c.bf16 %v1530, %v1530
    %v1739 = vpack.c.bf16 %v1532, %v1532
    %v1740 = vpack.c.bf16 %v1535, %v1535
    %v1741 = vpack.c.bf16 %v1537, %v1537
    %v1742 = vpack.c.bf16 %v1540, %v1540
    %v1743 = vpack.c.bf16 %v1542, %v1542
    %v1744 = vpack.c.bf16 %v1545, %v1545
    %v1745 = vpack.c.bf16 %v1547, %v1547
    %v1746 = vpack.c.bf16 %v1550, %v1550
    %v1747 = vpack.c.bf16 %v1552, %v1552
    %v1748 = vpack.c.bf16 %v1555, %v1555
    %v1749 = vpack.c.bf16 %v1557, %v1557
    %v1750 = vpack.c.bf16 %v1560, %v1560
    %v1751 = vpack.c.bf16 %v1562, %v1562
    %v1752 = vpack.c.bf16 %v1565, %v1565
    %v1753 = vpack.c.bf16 %v1567, %v1567
    %v1754 = vpack.c.bf16 %v1570, %v1570
    %v1755 = vpack.c.bf16 %v1572, %v1572
    %v1756 = vpack.c.bf16 %v1575, %v1575
    %v1757 = vpack.c.bf16 %v1577, %v1577
    %v1758 = vpack.c.bf16 %v1580, %v1580
    %v1759 = vpack.c.bf16 %v1582, %v1582
    %v1760 = vpack.c.bf16 %v1585, %v1585
    %v1761 = vpack.c.bf16 %v1587, %v1587
    %v1762 = vpack.c.bf16 %v1590, %v1590
    %v1763 = vpack.c.bf16 %v1592, %v1592
    %v1764 = vpack.c.bf16 %v1595, %v1595
    %v1765 = vpack.c.bf16 %v1597, %v1597
    %v1766 = vpack.c.bf16 %v1600, %v1600
    %v1767 = vpack.c.bf16 %v1602, %v1602
    %v1768 = vpack.c.bf16 %v1605, %v1605
    %v1769 = vpack.c.bf16 %v1607, %v1607
    %v1770 = vpack.c.bf16 %v1610, %v1610
    %v1771 = vpack.c.bf16 %v1612, %v1612
    %v1772 = vpack.c.bf16 %v1615, %v1615
    %v1773 = vpack.c.bf16 %v1617, %v1617
    %v1774 = vpack.c.bf16 %v1620, %v1620
    %v1775 = vpack.c.bf16 %v1622, %v1622
    %v1776 = vpack.c.bf16 %v1625, %v1625
    %v1777 = vpack.c.bf16 %v1627, %v1627
    %v1778 = vpack.c.bf16 %v1630, %v1630
    %v1779 = vpack.c.bf16 %v1632, %v1632
    %v1780 = vpack.c.bf16 %v1635, %v1635
    %v1781 = vpack.c.bf16 %v1637, %v1637
    %v1782 = vpack.c.bf16 %v1640, %v1640
    %v1783 = vpack.c.bf16 %v1642, %v1642
    %v1784 = vpack.c.bf16 %v1645, %v1645
    %v1785 = vpack.c.bf16 %v1647, %v1647
    %v1786 = vpack.c.bf16 %v1650, %v1650
    %v1787 = vpack.c.bf16 %v1652, %v1652
    %v1788 = vpack.c.bf16 %v1655, %v1655
    %v1789 = vpack.c.bf16 %v1657, %v1657
    %v1790 = vpack.c.bf16 %v1660, %v1660
    %v1791 = vpack.c.bf16 %v1662, %v1662
    %vm1792 = vcmask 27648
    %1793 = vst.msk [vmem:[#allocation2] sm:$0xf] %vm1792, %v1664
    %1794 = vst.msk [vmem:[#allocation2 + $0x4] sm:$0xf] %vm1792, %v1665
    %1795 = vst.msk [vmem:[#allocation2 + $0x8] sm:$0xf] %vm1792, %v1666
    %1796 = vst.msk [vmem:[#allocation2 + $0xc] sm:$0xf] %vm1792, %v1667
    %1797 = vst.msk [vmem:[#allocation2 + $0x10] sm:$0xf] %vm1792, %v1668
    %1798 = vst.msk [vmem:[#allocation2 + $0x14] sm:$0xf] %vm1792, %v1669
    %1799 = vst.msk [vmem:[#allocation2 + $0x18] sm:$0xf] %vm1792, %v1670
    %1800 = vst.msk [vmem:[#allocation2 + $0x1c] sm:$0xf] %vm1792, %v1671
    %1809 = vrot.lane.b32.xlu0 %v1672, 4
    %v1810 = vpop.permute.xlu0 %1809
    %1811 = vrot.lane.b32.xlu0 %v1673, 4
    %v1812 = vpop.permute.xlu0 %1811
    %1813 = vrot.lane.b32.xlu0 %v1674, 4
    %v1814 = vpop.permute.xlu0 %1813
    %1815 = vrot.lane.b32.xlu0 %v1675, 4
    %v1816 = vpop.permute.xlu0 %1815
    %1817 = vrot.lane.b32.xlu0 %v1676, 4
    %v1818 = vpop.permute.xlu0 %1817
    %1819 = vrot.lane.b32.xlu0 %v1677, 4
    %v1820 = vpop.permute.xlu0 %1819
    %1821 = vrot.lane.b32.xlu0 %v1678, 4
    %v1822 = vpop.permute.xlu0 %1821
    %1823 = vrot.lane.b32.xlu0 %v1679, 4
    %v1824 = vpop.permute.xlu0 %1823
    %vm1833 = vcmask 60448
    %1834 = vst.msk [vmem:[#allocation2] sm:$0xf] %vm1833, %v1810
    %1835 = vst.msk [vmem:[#allocation2 + $0x4] sm:$0xf] %vm1833, %v1812
    %1836 = vst.msk [vmem:[#allocation2 + $0x8] sm:$0xf] %vm1833, %v1814
    %1837 = vst.msk [vmem:[#allocation2 + $0xc] sm:$0xf] %vm1833, %v1816
    %1838 = vst.msk [vmem:[#allocation2 + $0x10] sm:$0xf] %vm1833, %v1818
    %1839 = vst.msk [vmem:[#allocation2 + $0x14] sm:$0xf] %vm1833, %v1820
    %1840 = vst.msk [vmem:[#allocation2 + $0x18] sm:$0xf] %vm1833, %v1822
    %1841 = vst.msk [vmem:[#allocation2 + $0x1c] sm:$0xf] %vm1833, %v1824
    %1850 = vrot.lane.b32.xlu0 %v1680, 8
    %v1851 = vpop.permute.xlu0 %1850
    %1852 = vrot.lane.b32.xlu0 %v1681, 8
    %v1853 = vpop.permute.xlu0 %1852
    %1854 = vrot.lane.b32.xlu0 %v1682, 8
    %v1855 = vpop.permute.xlu0 %1854
    %1856 = vrot.lane.b32.xlu0 %v1683, 8
    %v1857 = vpop.permute.xlu0 %1856
    %1858 = vrot.lane.b32.xlu0 %v1684, 8
    %v1859 = vpop.permute.xlu0 %1858
    %1860 = vrot.lane.b32.xlu0 %v1685, 8
    %v1861 = vpop.permute.xlu0 %1860
    %1862 = vrot.lane.b32.xlu0 %v1686, 8
    %v1863 = vpop.permute.xlu0 %1862
    %1864 = vrot.lane.b32.xlu0 %v1687, 8
    %v1865 = vpop.permute.xlu0 %1864
    %vm1874 = vcmask 93248
    %1875 = vst.msk [vmem:[#allocation2] sm:$0xf] %vm1874, %v1851
    %1876 = vst.msk [vmem:[#allocation2 + $0x4] sm:$0xf] %vm1874, %v1853
    %1877 = vst.msk [vmem:[#allocation2 + $0x8] sm:$0xf] %vm1874, %v1855
    %1878 = vst.msk [vmem:[#allocation2 + $0xc] sm:$0xf] %vm1874, %v1857
    %1879 = vst.msk [vmem:[#allocation2 + $0x10] sm:$0xf] %vm1874, %v1859
    %1880 = vst.msk [vmem:[#allocation2 + $0x14] sm:$0xf] %vm1874, %v1861
    %1881 = vst.msk [vmem:[#allocation2 + $0x18] sm:$0xf] %vm1874, %v1863
    %1882 = vst.msk [vmem:[#allocation2 + $0x1c] sm:$0xf] %vm1874, %v1865
    %1891 = vrot.lane.b32.xlu0 %v1688, 12
    %v1892 = vpop.permute.xlu0 %1891
    %1893 = vrot.lane.b32.xlu0 %v1689, 12
    %v1894 = vpop.permute.xlu0 %1893
    %1895 = vrot.lane.b32.xlu0 %v1690, 12
    %v1896 = vpop.permute.xlu0 %1895
    %1897 = vrot.lane.b32.xlu0 %v1691, 12
    %v1898 = vpop.permute.xlu0 %1897
    %1899 = vrot.lane.b32.xlu0 %v1692, 12
    %v1900 = vpop.permute.xlu0 %1899
    %1901 = vrot.lane.b32.xlu0 %v1693, 12
    %v1902 = vpop.permute.xlu0 %1901
    %1903 = vrot.lane.b32.xlu0 %v1694, 12
    %v1904 = vpop.permute.xlu0 %1903
    %1905 = vrot.lane.b32.xlu0 %v1695, 12
    %v1906 = vpop.permute.xlu0 %1905
    %vm1915 = vcmask 126048
    %1916 = vst.msk [vmem:[#allocation2] sm:$0xf] %vm1915, %v1892
    %1917 = vst.msk [vmem:[#allocation2 + $0x4] sm:$0xf] %vm1915, %v1894
    %1918 = vst.msk [vmem:[#allocation2 + $0x8] sm:$0xf] %vm1915, %v1896
    %1919 = vst.msk [vmem:[#allocation2 + $0xc] sm:$0xf] %vm1915, %v1898
    %1920 = vst.msk [vmem:[#allocation2 + $0x10] sm:$0xf] %vm1915, %v1900
    %1921 = vst.msk [vmem:[#allocation2 + $0x14] sm:$0xf] %vm1915, %v1902
    %1922 = vst.msk [vmem:[#allocation2 + $0x18] sm:$0xf] %vm1915, %v1904
    %1923 = vst.msk [vmem:[#allocation2 + $0x1c] sm:$0xf] %vm1915, %v1906
    %1932 = vrot.lane.b32.xlu0 %v1696, 16
    %v1933 = vpop.permute.xlu0 %1932
    %1934 = vrot.lane.b32.xlu0 %v1697, 16
    %v1935 = vpop.permute.xlu0 %1934
    %1936 = vrot.lane.b32.xlu0 %v1698, 16
    %v1937 = vpop.permute.xlu0 %1936
    %1938 = vrot.lane.b32.xlu0 %v1699, 16
    %v1939 = vpop.permute.xlu0 %1938
    %1940 = vrot.lane.b32.xlu0 %v1700, 16
    %v1941 = vpop.permute.xlu0 %1940
    %1942 = vrot.lane.b32.xlu0 %v1701, 16
    %v1943 = vpop.permute.xlu0 %1942
    %1944 = vrot.lane.b32.xlu0 %v1702, 16
    %v1945 = vpop.permute.xlu0 %1944
    %1946 = vrot.lane.b32.xlu0 %v1703, 16
    %v1947 = vpop.permute.xlu0 %1946
    %vm1956 = vcmask 158848
    %1957 = vst.msk [vmem:[#allocation2] sm:$0xf] %vm1956, %v1933
    %1958 = vst.msk [vmem:[#allocation2 + $0x4] sm:$0xf] %vm1956, %v1935
    %1959 = vst.msk [vmem:[#allocation2 + $0x8] sm:$0xf] %vm1956, %v1937
    %1960 = vst.msk [vmem:[#allocation2 + $0xc] sm:$0xf] %vm1956, %v1939
    %1961 = vst.msk [vmem:[#allocation2 + $0x10] sm:$0xf] %vm1956, %v1941
    %1962 = vst.msk [vmem:[#allocation2 + $0x14] sm:$0xf] %vm1956, %v1943
    %1963 = vst.msk [vmem:[#allocation2 + $0x18] sm:$0xf] %vm1956, %v1945
    %1964 = vst.msk [vmem:[#allocation2 + $0x1c] sm:$0xf] %vm1956, %v1947
    %1973 = vrot.lane.b32.xlu0 %v1704, 20
    %v1974 = vpop.permute.xlu0 %1973
    %1975 = vrot.lane.b32.xlu0 %v1705, 20
    %v1976 = vpop.permute.xlu0 %1975
    %1977 = vrot.lane.b32.xlu0 %v1706, 20
    %v1978 = vpop.permute.xlu0 %1977
    %1979 = vrot.lane.b32.xlu0 %v1707, 20
    %v1980 = vpop.permute.xlu0 %1979
    %1981 = vrot.lane.b32.xlu0 %v1708, 20
    %v1982 = vpop.permute.xlu0 %1981
    %1983 = vrot.lane.b32.xlu0 %v1709, 20
    %v1984 = vpop.permute.xlu0 %1983
    %1985 = vrot.lane.b32.xlu0 %v1710, 20
    %v1986 = vpop.permute.xlu0 %1985
    %1987 = vrot.lane.b32.xlu0 %v1711, 20
    %v1988 = vpop.permute.xlu0 %1987
    %vm1997 = vcmask 191648
    %1998 = vst.msk [vmem:[#allocation2] sm:$0xf] %vm1997, %v1974
    %1999 = vst.msk [vmem:[#allocation2 + $0x4] sm:$0xf] %vm1997, %v1976
    %2000 = vst.msk [vmem:[#allocation2 + $0x8] sm:$0xf] %vm1997, %v1978
    %2001 = vst.msk [vmem:[#allocation2 + $0xc] sm:$0xf] %vm1997, %v1980
    %2002 = vst.msk [vmem:[#allocation2 + $0x10] sm:$0xf] %vm1997, %v1982
    %2003 = vst.msk [vmem:[#allocation2 + $0x14] sm:$0xf] %vm1997, %v1984
    %2004 = vst.msk [vmem:[#allocation2 + $0x18] sm:$0xf] %vm1997, %v1986
    %2005 = vst.msk [vmem:[#allocation2 + $0x1c] sm:$0xf] %vm1997, %v1988
    %2014 = vrot.lane.b32.xlu0 %v1712, 24
    %v2015 = vpop.permute.xlu0 %2014
    %2016 = vrot.lane.b32.xlu0 %v1713, 24
    %v2017 = vpop.permute.xlu0 %2016
    %2018 = vrot.lane.b32.xlu0 %v1714, 24
    %v2019 = vpop.permute.xlu0 %2018
    %2020 = vrot.lane.b32.xlu0 %v1715, 24
    %v2021 = vpop.permute.xlu0 %2020
    %2022 = vrot.lane.b32.xlu0 %v1716, 24
    %v2023 = vpop.permute.xlu0 %2022
    %2024 = vrot.lane.b32.xlu0 %v1717, 24
    %v2025 = vpop.permute.xlu0 %2024
    %2026 = vrot.lane.b32.xlu0 %v1718, 24
    %v2027 = vpop.permute.xlu0 %2026
    %2028 = vrot.lane.b32.xlu0 %v1719, 24
    %v2029 = vpop.permute.xlu0 %2028
    %vm2038 = vcmask 224448
    %2039 = vst.msk [vmem:[#allocation2] sm:$0xf] %vm2038, %v2015
    %2040 = vst.msk [vmem:[#allocation2 + $0x4] sm:$0xf] %vm2038, %v2017
    %2041 = vst.msk [vmem:[#allocation2 + $0x8] sm:$0xf] %vm2038, %v2019
    %2042 = vst.msk [vmem:[#allocation2 + $0xc] sm:$0xf] %vm2038, %v2021
    %2043 = vst.msk [vmem:[#allocation2 + $0x10] sm:$0xf] %vm2038, %v2023
    %2044 = vst.msk [vmem:[#allocation2 + $0x14] sm:$0xf] %vm2038, %v2025
    %2045 = vst.msk [vmem:[#allocation2 + $0x18] sm:$0xf] %vm2038, %v2027
    %2046 = vst.msk [vmem:[#allocation2 + $0x1c] sm:$0xf] %vm2038, %v2029
    %2055 = vrot.lane.b32.xlu0 %v1720, 28
    %v2056 = vpop.permute.xlu0 %2055
    %2057 = vrot.lane.b32.xlu0 %v1721, 28
    %v2058 = vpop.permute.xlu0 %2057
    %2059 = vrot.lane.b32.xlu0 %v1722, 28
    %v2060 = vpop.permute.xlu0 %2059
    %2061 = vrot.lane.b32.xlu0 %v1723, 28
    %v2062 = vpop.permute.xlu0 %2061
    %2063 = vrot.lane.b32.xlu0 %v1724, 28
    %v2064 = vpop.permute.xlu0 %2063
    %2065 = vrot.lane.b32.xlu0 %v1725, 28
    %v2066 = vpop.permute.xlu0 %2065
    %2067 = vrot.lane.b32.xlu0 %v1726, 28
    %v2068 = vpop.permute.xlu0 %2067
    %2069 = vrot.lane.b32.xlu0 %v1727, 28
    %v2070 = vpop.permute.xlu0 %2069
    %vm2079 = vcmask 257248
    %2080 = vst.msk [vmem:[#allocation2] sm:$0xf] %vm2079, %v2056
    %2081 = vst.msk [vmem:[#allocation2 + $0x4] sm:$0xf] %vm2079, %v2058
    %2082 = vst.msk [vmem:[#allocation2 + $0x8] sm:$0xf] %vm2079, %v2060
    %2083 = vst.msk [vmem:[#allocation2 + $0xc] sm:$0xf] %vm2079, %v2062
    %2084 = vst.msk [vmem:[#allocation2 + $0x10] sm:$0xf] %vm2079, %v2064
    %2085 = vst.msk [vmem:[#allocation2 + $0x14] sm:$0xf] %vm2079, %v2066
    %2086 = vst.msk [vmem:[#allocation2 + $0x18] sm:$0xf] %vm2079, %v2068
    %2087 = vst.msk [vmem:[#allocation2 + $0x1c] sm:$0xf] %vm2079, %v2070
    %2096 = vrot.lane.b32.xlu0 %v1728, 32
    %v2097 = vpop.permute.xlu0 %2096
    %2098 = vrot.lane.b32.xlu0 %v1729, 32
    %v2099 = vpop.permute.xlu0 %2098
    %2100 = vrot.lane.b32.xlu0 %v1730, 32
    %v2101 = vpop.permute.xlu0 %2100
    %2102 = vrot.lane.b32.xlu0 %v1731, 32
    %v2103 = vpop.permute.xlu0 %2102
    %2104 = vrot.lane.b32.xlu0 %v1732, 32
    %v2105 = vpop.permute.xlu0 %2104
    %2106 = vrot.lane.b32.xlu0 %v1733, 32
    %v2107 = vpop.permute.xlu0 %2106
    %2108 = vrot.lane.b32.xlu0 %v1734, 32
    %v2109 = vpop.permute.xlu0 %2108
    %2110 = vrot.lane.b32.xlu0 %v1735, 32
    %v2111 = vpop.permute.xlu0 %2110
    %vm2120 = vcmask 290048
    %2121 = vst.msk [vmem:[#allocation2] sm:$0xf] %vm2120, %v2097
    %2122 = vst.msk [vmem:[#allocation2 + $0x4] sm:$0xf] %vm2120, %v2099
    %2123 = vst.msk [vmem:[#allocation2 + $0x8] sm:$0xf] %vm2120, %v2101
    %2124 = vst.msk [vmem:[#allocation2 + $0xc] sm:$0xf] %vm2120, %v2103
    %2125 = vst.msk [vmem:[#allocation2 + $0x10] sm:$0xf] %vm2120, %v2105
    %2126 = vst.msk [vmem:[#allocation2 + $0x14] sm:$0xf] %vm2120, %v2107
    %2127 = vst.msk [vmem:[#allocation2 + $0x18] sm:$0xf] %vm2120, %v2109
    %2128 = vst.msk [vmem:[#allocation2 + $0x1c] sm:$0xf] %vm2120, %v2111
    %2137 = vrot.lane.b32.xlu0 %v1736, 36
    %v2138 = vpop.permute.xlu0 %2137
    %2139 = vrot.lane.b32.xlu0 %v1737, 36
    %v2140 = vpop.permute.xlu0 %2139
    %2141 = vrot.lane.b32.xlu0 %v1738, 36
    %v2142 = vpop.permute.xlu0 %2141
    %2143 = vrot.lane.b32.xlu0 %v1739, 36
    %v2144 = vpop.permute.xlu0 %2143
    %2145 = vrot.lane.b32.xlu0 %v1740, 36
    %v2146 = vpop.permute.xlu0 %2145
    %2147 = vrot.lane.b32.xlu0 %v1741, 36
    %v2148 = vpop.permute.xlu0 %2147
    %2149 = vrot.lane.b32.xlu0 %v1742, 36
    %v2150 = vpop.permute.xlu0 %2149
    %2151 = vrot.lane.b32.xlu0 %v1743, 36
    %v2152 = vpop.permute.xlu0 %2151
    %vm2161 = vcmask 322848
    %2162 = vst.msk [vmem:[#allocation2] sm:$0xf] %vm2161, %v2138
    %2163 = vst.msk [vmem:[#allocation2 + $0x4] sm:$0xf] %vm2161, %v2140
    %2164 = vst.msk [vmem:[#allocation2 + $0x8] sm:$0xf] %vm2161, %v2142
    %2165 = vst.msk [vmem:[#allocation2 + $0xc] sm:$0xf] %vm2161, %v2144
    %2166 = vst.msk [vmem:[#allocation2 + $0x10] sm:$0xf] %vm2161, %v2146
    %2167 = vst.msk [vmem:[#allocation2 + $0x14] sm:$0xf] %vm2161, %v2148
    %2168 = vst.msk [vmem:[#allocation2 + $0x18] sm:$0xf] %vm2161, %v2150
    %2169 = vst.msk [vmem:[#allocation2 + $0x1c] sm:$0xf] %vm2161, %v2152
    %2178 = vrot.lane.b32.xlu0 %v1744, 40
    %v2179 = vpop.permute.xlu0 %2178
    %2180 = vrot.lane.b32.xlu0 %v1745, 40
    %v2181 = vpop.permute.xlu0 %2180
    %2182 = vrot.lane.b32.xlu0 %v1746, 40
    %v2183 = vpop.permute.xlu0 %2182
    %2184 = vrot.lane.b32.xlu0 %v1747, 40
    %v2185 = vpop.permute.xlu0 %2184
    %2186 = vrot.lane.b32.xlu0 %v1748, 40
    %v2187 = vpop.permute.xlu0 %2186
    %2188 = vrot.lane.b32.xlu0 %v1749, 40
    %v2189 = vpop.permute.xlu0 %2188
    %2190 = vrot.lane.b32.xlu0 %v1750, 40
    %v2191 = vpop.permute.xlu0 %2190
    %2192 = vrot.lane.b32.xlu0 %v1751, 40
    %v2193 = vpop.permute.xlu0 %2192
    %vm2202 = vcmask 355648
    %2203 = vst.msk [vmem:[#allocation2] sm:$0xf] %vm2202, %v2179
    %2204 = vst.msk [vmem:[#allocation2 + $0x4] sm:$0xf] %vm2202, %v2181
    %2205 = vst.msk [vmem:[#allocation2 + $0x8] sm:$0xf] %vm2202, %v2183
    %2206 = vst.msk [vmem:[#allocation2 + $0xc] sm:$0xf] %vm2202, %v2185
    %2207 = vst.msk [vmem:[#allocation2 + $0x10] sm:$0xf] %vm2202, %v2187
    %2208 = vst.msk [vmem:[#allocation2 + $0x14] sm:$0xf] %vm2202, %v2189
    %2209 = vst.msk [vmem:[#allocation2 + $0x18] sm:$0xf] %vm2202, %v2191
    %2210 = vst.msk [vmem:[#allocation2 + $0x1c] sm:$0xf] %vm2202, %v2193
    %2219 = vrot.lane.b32.xlu0 %v1752, 44
    %v2220 = vpop.permute.xlu0 %2219
    %2221 = vrot.lane.b32.xlu0 %v1753, 44
    %v2222 = vpop.permute.xlu0 %2221
    %2223 = vrot.lane.b32.xlu0 %v1754, 44
    %v2224 = vpop.permute.xlu0 %2223
    %2225 = vrot.lane.b32.xlu0 %v1755, 44
    %v2226 = vpop.permute.xlu0 %2225
    %2227 = vrot.lane.b32.xlu0 %v1756, 44
    %v2228 = vpop.permute.xlu0 %2227
    %2229 = vrot.lane.b32.xlu0 %v1757, 44
    %v2230 = vpop.permute.xlu0 %2229
    %2231 = vrot.lane.b32.xlu0 %v1758, 44
    %v2232 = vpop.permute.xlu0 %2231
    %2233 = vrot.lane.b32.xlu0 %v1759, 44
    %v2234 = vpop.permute.xlu0 %2233
    %vm2243 = vcmask 388448
    %2244 = vst.msk [vmem:[#allocation2] sm:$0xf] %vm2243, %v2220
    %2245 = vst.msk [vmem:[#allocation2 + $0x4] sm:$0xf] %vm2243, %v2222
    %2246 = vst.msk [vmem:[#allocation2 + $0x8] sm:$0xf] %vm2243, %v2224
    %2247 = vst.msk [vmem:[#allocation2 + $0xc] sm:$0xf] %vm2243, %v2226
    %2248 = vst.msk [vmem:[#allocation2 + $0x10] sm:$0xf] %vm2243, %v2228
    %2249 = vst.msk [vmem:[#allocation2 + $0x14] sm:$0xf] %vm2243, %v2230
    %2250 = vst.msk [vmem:[#allocation2 + $0x18] sm:$0xf] %vm2243, %v2232
    %2251 = vst.msk [vmem:[#allocation2 + $0x1c] sm:$0xf] %vm2243, %v2234
    %2260 = vrot.lane.b32.xlu0 %v1760, 48
    %v2261 = vpop.permute.xlu0 %2260
    %2262 = vrot.lane.b32.xlu0 %v1761, 48
    %v2263 = vpop.permute.xlu0 %2262
    %2264 = vrot.lane.b32.xlu0 %v1762, 48
    %v2265 = vpop.permute.xlu0 %2264
    %2266 = vrot.lane.b32.xlu0 %v1763, 48
    %v2267 = vpop.permute.xlu0 %2266
    %2268 = vrot.lane.b32.xlu0 %v1764, 48
    %v2269 = vpop.permute.xlu0 %2268
    %2270 = vrot.lane.b32.xlu0 %v1765, 48
    %v2271 = vpop.permute.xlu0 %2270
    %2272 = vrot.lane.b32.xlu0 %v1766, 48
    %v2273 = vpop.permute.xlu0 %2272
    %2274 = vrot.lane.b32.xlu0 %v1767, 48
    %v2275 = vpop.permute.xlu0 %2274
    %vm2284 = vcmask 421248
    %2285 = vst.msk [vmem:[#allocation2] sm:$0xf] %vm2284, %v2261
    %2286 = vst.msk [vmem:[#allocation2 + $0x4] sm:$0xf] %vm2284, %v2263
    %2287 = vst.msk [vmem:[#allocation2 + $0x8] sm:$0xf] %vm2284, %v2265
    %2288 = vst.msk [vmem:[#allocation2 + $0xc] sm:$0xf] %vm2284, %v2267
    %2289 = vst.msk [vmem:[#allocation2 + $0x10] sm:$0xf] %vm2284, %v2269
    %2290 = vst.msk [vmem:[#allocation2 + $0x14] sm:$0xf] %vm2284, %v2271
    %2291 = vst.msk [vmem:[#allocation2 + $0x18] sm:$0xf] %vm2284, %v2273
    %2292 = vst.msk [vmem:[#allocation2 + $0x1c] sm:$0xf] %vm2284, %v2275
    %2301 = vrot.lane.b32.xlu0 %v1768, 52
    %v2302 = vpop.permute.xlu0 %2301
    %2303 = vrot.lane.b32.xlu0 %v1769, 52
    %v2304 = vpop.permute.xlu0 %2303
    %2305 = vrot.lane.b32.xlu0 %v1770, 52
    %v2306 = vpop.permute.xlu0 %2305
    %2307 = vrot.lane.b32.xlu0 %v1771, 52
    %v2308 = vpop.permute.xlu0 %2307
    %2309 = vrot.lane.b32.xlu0 %v1772, 52
    %v2310 = vpop.permute.xlu0 %2309
    %2311 = vrot.lane.b32.xlu0 %v1773, 52
    %v2312 = vpop.permute.xlu0 %2311
    %2313 = vrot.lane.b32.xlu0 %v1774, 52
    %v2314 = vpop.permute.xlu0 %2313
    %2315 = vrot.lane.b32.xlu0 %v1775, 52
    %v2316 = vpop.permute.xlu0 %2315
    %vm2325 = vcmask 454048
    %2326 = vst.msk [vmem:[#allocation2] sm:$0xf] %vm2325, %v2302
    %2327 = vst.msk [vmem:[#allocation2 + $0x4] sm:$0xf] %vm2325, %v2304
    %2328 = vst.msk [vmem:[#allocation2 + $0x8] sm:$0xf] %vm2325, %v2306
    %2329 = vst.msk [vmem:[#allocation2 + $0xc] sm:$0xf] %vm2325, %v2308
    %2330 = vst.msk [vmem:[#allocation2 + $0x10] sm:$0xf] %vm2325, %v2310
    %2331 = vst.msk [vmem:[#allocation2 + $0x14] sm:$0xf] %vm2325, %v2312
    %2332 = vst.msk [vmem:[#allocation2 + $0x18] sm:$0xf] %vm2325, %v2314
    %2333 = vst.msk [vmem:[#allocation2 + $0x1c] sm:$0xf] %vm2325, %v2316
    %2342 = vrot.lane.b32.xlu0 %v1776, 56
    %v2343 = vpop.permute.xlu0 %2342
    %2344 = vrot.lane.b32.xlu0 %v1777, 56
    %v2345 = vpop.permute.xlu0 %2344
    %2346 = vrot.lane.b32.xlu0 %v1778, 56
    %v2347 = vpop.permute.xlu0 %2346
    %2348 = vrot.lane.b32.xlu0 %v1779, 56
    %v2349 = vpop.permute.xlu0 %2348
    %2350 = vrot.lane.b32.xlu0 %v1780, 56
    %v2351 = vpop.permute.xlu0 %2350
    %2352 = vrot.lane.b32.xlu0 %v1781, 56
    %v2353 = vpop.permute.xlu0 %2352
    %2354 = vrot.lane.b32.xlu0 %v1782, 56
    %v2355 = vpop.permute.xlu0 %2354
    %2356 = vrot.lane.b32.xlu0 %v1783, 56
    %v2357 = vpop.permute.xlu0 %2356
    %vm2366 = vcmask 486848
    %2367 = vst.msk [vmem:[#allocation2] sm:$0xf] %vm2366, %v2343
    %2368 = vst.msk [vmem:[#allocation2 + $0x4] sm:$0xf] %vm2366, %v2345
    %2369 = vst.msk [vmem:[#allocation2 + $0x8] sm:$0xf] %vm2366, %v2347
    %2370 = vst.msk [vmem:[#allocation2 + $0xc] sm:$0xf] %vm2366, %v2349
    %2371 = vst.msk [vmem:[#allocation2 + $0x10] sm:$0xf] %vm2366, %v2351
    %2372 = vst.msk [vmem:[#allocation2 + $0x14] sm:$0xf] %vm2366, %v2353
    %2373 = vst.msk [vmem:[#allocation2 + $0x18] sm:$0xf] %vm2366, %v2355
    %2374 = vst.msk [vmem:[#allocation2 + $0x1c] sm:$0xf] %vm2366, %v2357
    %2383 = vrot.lane.b32.xlu0 %v1784, 60
    %v2384 = vpop.permute.xlu0 %2383
    %2385 = vrot.lane.b32.xlu0 %v1785, 60
    %v2386 = vpop.permute.xlu0 %2385
    %2387 = vrot.lane.b32.xlu0 %v1786, 60
    %v2388 = vpop.permute.xlu0 %2387
    %2389 = vrot.lane.b32.xlu0 %v1787, 60
    %v2390 = vpop.permute.xlu0 %2389
    %2391 = vrot.lane.b32.xlu0 %v1788, 60
    %v2392 = vpop.permute.xlu0 %2391
    %2393 = vrot.lane.b32.xlu0 %v1789, 60
    %v2394 = vpop.permute.xlu0 %2393
    %2395 = vrot.lane.b32.xlu0 %v1790, 60
    %v2396 = vpop.permute.xlu0 %2395
    %2397 = vrot.lane.b32.xlu0 %v1791, 60
    %v2398 = vpop.permute.xlu0 %2397
    %vm2407 = vcmask 519648
    %2408 = vst.msk [vmem:[#allocation2] sm:$0xf] %vm2407, %v2384
    %2409 = vst.msk [vmem:[#allocation2 + $0x4] sm:$0xf] %vm2407, %v2386
    %2410 = vst.msk [vmem:[#allocation2 + $0x8] sm:$0xf] %vm2407, %v2388
    %2411 = vst.msk [vmem:[#allocation2 + $0xc] sm:$0xf] %vm2407, %v2390
    %2412 = vst.msk [vmem:[#allocation2 + $0x10] sm:$0xf] %vm2407, %v2392
    %2413 = vst.msk [vmem:[#allocation2 + $0x14] sm:$0xf] %vm2407, %v2394
    %2414 = vst.msk [vmem:[#allocation2 + $0x18] sm:$0xf] %vm2407, %v2396
    %2415 = vst.msk [vmem:[#allocation2 + $0x1c] sm:$0xf] %vm2407, %v2398
    %v2448 = vunpack.c.l.b16 %v110
    %v2449 = vunpack.c.l.b16 %v111
    %v2450 = vunpack.c.l.b16 %v112
    %v2451 = vunpack.c.l.b16 %v113
    %v2452 = vunpack.c.l.b16 %v114
    %v2453 = vunpack.c.l.b16 %v115
    %v2454 = vunpack.c.l.b16 %v116
    %v2455 = vunpack.c.l.b16 %v117
    %v2456 = vunpack.c.l.b16 %v118
    %v2457 = vunpack.c.l.b16 %v119
    %v2458 = vunpack.c.l.b16 %v120
    %v2459 = vunpack.c.l.b16 %v121
    %v2460 = vunpack.c.l.b16 %v122
    %v2461 = vunpack.c.l.b16 %v123
    %v2462 = vunpack.c.l.b16 %v124
    %v2463 = vunpack.c.l.b16 %v125
    %v2464 = vunpack.c.l.b16 %v126
    %v2465 = vunpack.c.l.b16 %v127
    %v2466 = vunpack.c.l.b16 %v128
    %v2467 = vunpack.c.l.b16 %v129
    %v2468 = vunpack.c.l.b16 %v130
    %v2469 = vunpack.c.l.b16 %v131
    %v2470 = vunpack.c.l.b16 %v132
    %v2471 = vunpack.c.l.b16 %v133
    %v2472 = vunpack.c.l.b16 %v134
    %v2473 = vunpack.c.l.b16 %v135
    %v2474 = vunpack.c.l.b16 %v136
    %v2475 = vunpack.c.l.b16 %v137
    %v2476 = vunpack.c.l.b16 %v138
    %v2477 = vunpack.c.l.b16 %v139
    %v2478 = vunpack.c.l.b16 %v140
    %v2479 = vunpack.c.l.b16 %v141
    %v2480 = vpack.c.b16 %v2449, %v2448
    %v2481 = vpack.c.b16 %v2451, %v2450
    %v2482 = vpack.c.b16 %v2453, %v2452
    %v2483 = vpack.c.b16 %v2455, %v2454
    %v2484 = vpack.c.b16 %v2457, %v2456
    %v2485 = vpack.c.b16 %v2459, %v2458
    %v2486 = vpack.c.b16 %v2461, %v2460
    %v2487 = vpack.c.b16 %v2463, %v2462
    %v2488 = vpack.c.b16 %v2465, %v2464
    %v2489 = vpack.c.b16 %v2467, %v2466
    %v2490 = vpack.c.b16 %v2469, %v2468
    %v2491 = vpack.c.b16 %v2471, %v2470
    %v2492 = vpack.c.b16 %v2473, %v2472
    %v2493 = vpack.c.b16 %v2475, %v2474
    %v2494 = vpack.c.b16 %v2477, %v2476
    %v2495 = vpack.c.b16 %v2479, %v2478
    %2512 = vmatpush.bf16.msra.mxu0 %v2487
    %2513 = vmatpush.bf16.msra.mxu0 %v2486
    %2514 = vmatpush.bf16.msra.mxu0 %v2485
    %2515 = vmatpush.bf16.msra.mxu0 %v2484
    %2516 = vmatpush.bf16.msra.mxu0 %v2483
    %2517 = vmatpush.bf16.msra.mxu0 %v2482
    %2518 = vmatpush.bf16.msra.mxu0 %v2481
    %2519 = vmatpush.bf16.msra.mxu0 %v2480
    %2520 = vmatmul.bf16.gmra.mxu0 %v654
    %v2521 = vpop.f32.mrf.mxu0
    %v2522 = vadd.f32 0.0, %v2521
    %v2523 = vpop.f32.mrf.mxu0
    %v2524 = vadd.f32 0.0, %v2523
    %2525 = vmatmul.bf16.gmra.mxu0 %v656
    %v2526 = vpop.f32.mrf.mxu0
    %v2527 = vadd.f32 0.0, %v2526
    %v2528 = vpop.f32.mrf.mxu0
    %v2529 = vadd.f32 0.0, %v2528
    %2530 = vmatmul.bf16.gmra.mxu0 %v658
    %v2531 = vpop.f32.mrf.mxu0
    %v2532 = vadd.f32 0.0, %v2531
    %v2533 = vpop.f32.mrf.mxu0
    %v2534 = vadd.f32 0.0, %v2533
    %2535 = vmatmul.bf16.gmra.mxu0 %v660
    %v2536 = vpop.f32.mrf.mxu0
    %v2537 = vadd.f32 0.0, %v2536
    %v2538 = vpop.f32.mrf.mxu0
    %v2539 = vadd.f32 0.0, %v2538
    %2540 = vmatmul.bf16.gmra.mxu0 %v662
    %v2541 = vpop.f32.mrf.mxu0
    %v2542 = vadd.f32 0.0, %v2541
    %v2543 = vpop.f32.mrf.mxu0
    %v2544 = vadd.f32 0.0, %v2543
    %2545 = vmatmul.bf16.gmra.mxu0 %v664
    %v2546 = vpop.f32.mrf.mxu0
    %v2547 = vadd.f32 0.0, %v2546
    %v2548 = vpop.f32.mrf.mxu0
    %v2549 = vadd.f32 0.0, %v2548
    %2550 = vmatmul.bf16.gmra.mxu0 %v666
    %v2551 = vpop.f32.mrf.mxu0
    %v2552 = vadd.f32 0.0, %v2551
    %v2553 = vpop.f32.mrf.mxu0
    %v2554 = vadd.f32 0.0, %v2553
    %2555 = vmatmul.bf16.gmra.mxu0 %v668
    %v2556 = vpop.f32.mrf.mxu0
    %v2557 = vadd.f32 0.0, %v2556
    %v2558 = vpop.f32.mrf.mxu0
    %v2559 = vadd.f32 0.0, %v2558
    %2560 = vmatmul.bf16.gmra.mxu0 %v670
    %v2561 = vpop.f32.mrf.mxu0
    %v2562 = vadd.f32 0.0, %v2561
    %v2563 = vpop.f32.mrf.mxu0
    %v2564 = vadd.f32 0.0, %v2563
    %2565 = vmatmul.bf16.gmra.mxu0 %v672
    %v2566 = vpop.f32.mrf.mxu0
    %v2567 = vadd.f32 0.0, %v2566
    %v2568 = vpop.f32.mrf.mxu0
    %v2569 = vadd.f32 0.0, %v2568
    %2570 = vmatmul.bf16.gmra.mxu0 %v674
    %v2571 = vpop.f32.mrf.mxu0
    %v2572 = vadd.f32 0.0, %v2571
    %v2573 = vpop.f32.mrf.mxu0
    %v2574 = vadd.f32 0.0, %v2573
    %2575 = vmatmul.bf16.gmra.mxu0 %v676
    %v2576 = vpop.f32.mrf.mxu0
    %v2577 = vadd.f32 0.0, %v2576
    %v2578 = vpop.f32.mrf.mxu0
    %v2579 = vadd.f32 0.0, %v2578
    %2580 = vmatmul.bf16.gmra.mxu0 %v678
    %v2581 = vpop.f32.mrf.mxu0
    %v2582 = vadd.f32 0.0, %v2581
    %v2583 = vpop.f32.mrf.mxu0
    %v2584 = vadd.f32 0.0, %v2583
    %2585 = vmatmul.bf16.gmra.mxu0 %v680
    %v2586 = vpop.f32.mrf.mxu0
    %v2587 = vadd.f32 0.0, %v2586
    %v2588 = vpop.f32.mrf.mxu0
    %v2589 = vadd.f32 0.0, %v2588
    %2590 = vmatmul.bf16.gmra.mxu0 %v682
    %v2591 = vpop.f32.mrf.mxu0
    %v2592 = vadd.f32 0.0, %v2591
    %v2593 = vpop.f32.mrf.mxu0
    %v2594 = vadd.f32 0.0, %v2593
    %2595 = vmatmul.bf16.gmra.mxu0 %v684
    %v2596 = vpop.f32.mrf.mxu0
    %v2597 = vadd.f32 0.0, %v2596
    %v2598 = vpop.f32.mrf.mxu0
    %v2599 = vadd.f32 0.0, %v2598
    %2600 = vmatmul.bf16.gmra.mxu0 %v686
    %v2601 = vpop.f32.mrf.mxu0
    %v2602 = vadd.f32 0.0, %v2601
    %v2603 = vpop.f32.mrf.mxu0
    %v2604 = vadd.f32 0.0, %v2603
    %2605 = vmatmul.bf16.gmra.mxu0 %v688
    %v2606 = vpop.f32.mrf.mxu0
    %v2607 = vadd.f32 0.0, %v2606
    %v2608 = vpop.f32.mrf.mxu0
    %v2609 = vadd.f32 0.0, %v2608
    %2610 = vmatmul.bf16.gmra.mxu0 %v690
    %v2611 = vpop.f32.mrf.mxu0
    %v2612 = vadd.f32 0.0, %v2611
    %v2613 = vpop.f32.mrf.mxu0
    %v2614 = vadd.f32 0.0, %v2613
    %2615 = vmatmul.bf16.gmra.mxu0 %v692
    %v2616 = vpop.f32.mrf.mxu0
    %v2617 = vadd.f32 0.0, %v2616
    %v2618 = vpop.f32.mrf.mxu0
    %v2619 = vadd.f32 0.0, %v2618
    %2620 = vmatmul.bf16.gmra.mxu0 %v694
    %v2621 = vpop.f32.mrf.mxu0
    %v2622 = vadd.f32 0.0, %v2621
    %v2623 = vpop.f32.mrf.mxu0
    %v2624 = vadd.f32 0.0, %v2623
    %2625 = vmatmul.bf16.gmra.mxu0 %v696
    %v2626 = vpop.f32.mrf.mxu0
    %v2627 = vadd.f32 0.0, %v2626
    %v2628 = vpop.f32.mrf.mxu0
    %v2629 = vadd.f32 0.0, %v2628
    %2630 = vmatmul.bf16.gmra.mxu0 %v698
    %v2631 = vpop.f32.mrf.mxu0
    %v2632 = vadd.f32 0.0, %v2631
    %v2633 = vpop.f32.mrf.mxu0
    %v2634 = vadd.f32 0.0, %v2633
    %2635 = vmatmul.bf16.gmra.mxu0 %v700
    %v2636 = vpop.f32.mrf.mxu0
    %v2637 = vadd.f32 0.0, %v2636
    %v2638 = vpop.f32.mrf.mxu0
    %v2639 = vadd.f32 0.0, %v2638
    %2640 = vmatmul.bf16.gmra.mxu0 %v702
    %v2641 = vpop.f32.mrf.mxu0
    %v2642 = vadd.f32 0.0, %v2641
    %v2643 = vpop.f32.mrf.mxu0
    %v2644 = vadd.f32 0.0, %v2643
    %2645 = vmatmul.bf16.gmra.mxu0 %v704
    %v2646 = vpop.f32.mrf.mxu0
    %v2647 = vadd.f32 0.0, %v2646
    %v2648 = vpop.f32.mrf.mxu0
    %v2649 = vadd.f32 0.0, %v2648
    %2650 = vmatmul.bf16.gmra.mxu0 %v706
    %v2651 = vpop.f32.mrf.mxu0
    %v2652 = vadd.f32 0.0, %v2651
    %v2653 = vpop.f32.mrf.mxu0
    %v2654 = vadd.f32 0.0, %v2653
    %2655 = vmatmul.bf16.gmra.mxu0 %v708
    %v2656 = vpop.f32.mrf.mxu0
    %v2657 = vadd.f32 0.0, %v2656
    %v2658 = vpop.f32.mrf.mxu0
    %v2659 = vadd.f32 0.0, %v2658
    %2660 = vmatmul.bf16.gmra.mxu0 %v710
    %v2661 = vpop.f32.mrf.mxu0
    %v2662 = vadd.f32 0.0, %v2661
    %v2663 = vpop.f32.mrf.mxu0
    %v2664 = vadd.f32 0.0, %v2663
    %2665 = vmatmul.bf16.gmra.mxu0 %v712
    %v2666 = vpop.f32.mrf.mxu0
    %v2667 = vadd.f32 0.0, %v2666
    %v2668 = vpop.f32.mrf.mxu0
    %v2669 = vadd.f32 0.0, %v2668
    %2670 = vmatmul.bf16.gmra.mxu0 %v714
    %v2671 = vpop.f32.mrf.mxu0
    %v2672 = vadd.f32 0.0, %v2671
    %v2673 = vpop.f32.mrf.mxu0
    %v2674 = vadd.f32 0.0, %v2673
    %2675 = vmatmul.bf16.gmra.mxu0 %v716
    %v2676 = vpop.f32.mrf.mxu0
    %v2677 = vadd.f32 0.0, %v2676
    %v2678 = vpop.f32.mrf.mxu0
    %v2679 = vadd.f32 0.0, %v2678
    %2680 = vmatmul.bf16.gmra.mxu0 %v718
    %v2681 = vpop.f32.mrf.mxu0
    %v2682 = vadd.f32 0.0, %v2681
    %v2683 = vpop.f32.mrf.mxu0
    %v2684 = vadd.f32 0.0, %v2683
    %2685 = vmatmul.bf16.gmra.mxu0 %v720
    %v2686 = vpop.f32.mrf.mxu0
    %v2687 = vadd.f32 0.0, %v2686
    %v2688 = vpop.f32.mrf.mxu0
    %v2689 = vadd.f32 0.0, %v2688
    %2690 = vmatmul.bf16.gmra.mxu0 %v722
    %v2691 = vpop.f32.mrf.mxu0
    %v2692 = vadd.f32 0.0, %v2691
    %v2693 = vpop.f32.mrf.mxu0
    %v2694 = vadd.f32 0.0, %v2693
    %2695 = vmatmul.bf16.gmra.mxu0 %v724
    %v2696 = vpop.f32.mrf.mxu0
    %v2697 = vadd.f32 0.0, %v2696
    %v2698 = vpop.f32.mrf.mxu0
    %v2699 = vadd.f32 0.0, %v2698
    %2700 = vmatmul.bf16.gmra.mxu0 %v726
    %v2701 = vpop.f32.mrf.mxu0
    %v2702 = vadd.f32 0.0, %v2701
    %v2703 = vpop.f32.mrf.mxu0
    %v2704 = vadd.f32 0.0, %v2703
    %2705 = vmatmul.bf16.gmra.mxu0 %v728
    %v2706 = vpop.f32.mrf.mxu0
    %v2707 = vadd.f32 0.0, %v2706
    %v2708 = vpop.f32.mrf.mxu0
    %v2709 = vadd.f32 0.0, %v2708
    %2710 = vmatmul.bf16.gmra.mxu0 %v730
    %v2711 = vpop.f32.mrf.mxu0
    %v2712 = vadd.f32 0.0, %v2711
    %v2713 = vpop.f32.mrf.mxu0
    %v2714 = vadd.f32 0.0, %v2713
    %2715 = vmatmul.bf16.gmra.mxu0 %v732
    %v2716 = vpop.f32.mrf.mxu0
    %v2717 = vadd.f32 0.0, %v2716
    %v2718 = vpop.f32.mrf.mxu0
    %v2719 = vadd.f32 0.0, %v2718
    %2720 = vmatmul.bf16.gmra.mxu0 %v734
    %v2721 = vpop.f32.mrf.mxu0
    %v2722 = vadd.f32 0.0, %v2721
    %v2723 = vpop.f32.mrf.mxu0
    %v2724 = vadd.f32 0.0, %v2723
    %2725 = vmatmul.bf16.gmra.mxu0 %v736
    %v2726 = vpop.f32.mrf.mxu0
    %v2727 = vadd.f32 0.0, %v2726
    %v2728 = vpop.f32.mrf.mxu0
    %v2729 = vadd.f32 0.0, %v2728
    %2730 = vmatmul.bf16.gmra.mxu0 %v738
    %v2731 = vpop.f32.mrf.mxu0
    %v2732 = vadd.f32 0.0, %v2731
    %v2733 = vpop.f32.mrf.mxu0
    %v2734 = vadd.f32 0.0, %v2733
    %2735 = vmatmul.bf16.gmra.mxu0 %v740
    %v2736 = vpop.f32.mrf.mxu0
    %v2737 = vadd.f32 0.0, %v2736
    %v2738 = vpop.f32.mrf.mxu0
    %v2739 = vadd.f32 0.0, %v2738
    %2740 = vmatmul.bf16.gmra.mxu0 %v742
    %v2741 = vpop.f32.mrf.mxu0
    %v2742 = vadd.f32 0.0, %v2741
    %v2743 = vpop.f32.mrf.mxu0
    %v2744 = vadd.f32 0.0, %v2743
    %2745 = vmatmul.bf16.gmra.mxu0 %v744
    %v2746 = vpop.f32.mrf.mxu0
    %v2747 = vadd.f32 0.0, %v2746
    %v2748 = vpop.f32.mrf.mxu0
    %v2749 = vadd.f32 0.0, %v2748
    %2750 = vmatmul.bf16.gmra.mxu0 %v746
    %v2751 = vpop.f32.mrf.mxu0
    %v2752 = vadd.f32 0.0, %v2751
    %v2753 = vpop.f32.mrf.mxu0
    %v2754 = vadd.f32 0.0, %v2753
    %2755 = vmatmul.bf16.gmra.mxu0 %v748
    %v2756 = vpop.f32.mrf.mxu0
    %v2757 = vadd.f32 0.0, %v2756
    %v2758 = vpop.f32.mrf.mxu0
    %v2759 = vadd.f32 0.0, %v2758
    %2760 = vmatmul.bf16.gmra.mxu0 %v750
    %v2761 = vpop.f32.mrf.mxu0
    %v2762 = vadd.f32 0.0, %v2761
    %v2763 = vpop.f32.mrf.mxu0
    %v2764 = vadd.f32 0.0, %v2763
    %2765 = vmatmul.bf16.gmra.mxu0 %v752
    %v2766 = vpop.f32.mrf.mxu0
    %v2767 = vadd.f32 0.0, %v2766
    %v2768 = vpop.f32.mrf.mxu0
    %v2769 = vadd.f32 0.0, %v2768
    %2770 = vmatmul.bf16.gmra.mxu0 %v754
    %v2771 = vpop.f32.mrf.mxu0
    %v2772 = vadd.f32 0.0, %v2771
    %v2773 = vpop.f32.mrf.mxu0
    %v2774 = vadd.f32 0.0, %v2773
    %2775 = vmatmul.bf16.gmra.mxu0 %v756
    %v2776 = vpop.f32.mrf.mxu0
    %v2777 = vadd.f32 0.0, %v2776
    %v2778 = vpop.f32.mrf.mxu0
    %v2779 = vadd.f32 0.0, %v2778
    %2780 = vmatmul.bf16.gmra.mxu0 %v758
    %v2781 = vpop.f32.mrf.mxu0
    %v2782 = vadd.f32 0.0, %v2781
    %v2783 = vpop.f32.mrf.mxu0
    %v2784 = vadd.f32 0.0, %v2783
    %2785 = vmatmul.bf16.gmra.mxu0 %v760
    %v2786 = vpop.f32.mrf.mxu0
    %v2787 = vadd.f32 0.0, %v2786
    %v2788 = vpop.f32.mrf.mxu0
    %v2789 = vadd.f32 0.0, %v2788
    %2790 = vmatmul.bf16.gmra.mxu0 %v762
    %v2791 = vpop.f32.mrf.mxu0
    %v2792 = vadd.f32 0.0, %v2791
    %v2793 = vpop.f32.mrf.mxu0
    %v2794 = vadd.f32 0.0, %v2793
    %2795 = vmatmul.bf16.gmra.mxu0 %v764
    %v2796 = vpop.f32.mrf.mxu0
    %v2797 = vadd.f32 0.0, %v2796
    %v2798 = vpop.f32.mrf.mxu0
    %v2799 = vadd.f32 0.0, %v2798
    %2800 = vmatmul.bf16.gmra.mxu0 %v766
    %v2801 = vpop.f32.mrf.mxu0
    %v2802 = vadd.f32 0.0, %v2801
    %v2803 = vpop.f32.mrf.mxu0
    %v2804 = vadd.f32 0.0, %v2803
    %2805 = vmatmul.bf16.gmra.mxu0 %v768
    %v2806 = vpop.f32.mrf.mxu0
    %v2807 = vadd.f32 0.0, %v2806
    %v2808 = vpop.f32.mrf.mxu0
    %v2809 = vadd.f32 0.0, %v2808
    %2810 = vmatmul.bf16.gmra.mxu0 %v770
    %v2811 = vpop.f32.mrf.mxu0
    %v2812 = vadd.f32 0.0, %v2811
    %v2813 = vpop.f32.mrf.mxu0
    %v2814 = vadd.f32 0.0, %v2813
    %2815 = vmatmul.bf16.gmra.mxu0 %v772
    %v2816 = vpop.f32.mrf.mxu0
    %v2817 = vadd.f32 0.0, %v2816
    %v2818 = vpop.f32.mrf.mxu0
    %v2819 = vadd.f32 0.0, %v2818
    %2820 = vmatmul.bf16.gmra.mxu0 %v774
    %v2821 = vpop.f32.mrf.mxu0
    %v2822 = vadd.f32 0.0, %v2821
    %v2823 = vpop.f32.mrf.mxu0
    %v2824 = vadd.f32 0.0, %v2823
    %2825 = vmatmul.bf16.gmra.mxu0 %v776
    %v2826 = vpop.f32.mrf.mxu0
    %v2827 = vadd.f32 0.0, %v2826
    %v2828 = vpop.f32.mrf.mxu0
    %v2829 = vadd.f32 0.0, %v2828
    %2830 = vmatmul.bf16.gmra.mxu0 %v778
    %v2831 = vpop.f32.mrf.mxu0
    %v2832 = vadd.f32 0.0, %v2831
    %v2833 = vpop.f32.mrf.mxu0
    %v2834 = vadd.f32 0.0, %v2833
    %2835 = vmatmul.bf16.gmra.mxu0 %v780
    %v2836 = vpop.f32.mrf.mxu0
    %v2837 = vadd.f32 0.0, %v2836
    %v2838 = vpop.f32.mrf.mxu0
    %v2839 = vadd.f32 0.0, %v2838
    %2840 = vdwg.mxu0
    %2841 = vmatpush.bf16.msra.mxu0 %v2495
    %2842 = vmatpush.bf16.msra.mxu0 %v2494
    %2843 = vmatpush.bf16.msra.mxu0 %v2493
    %2844 = vmatpush.bf16.msra.mxu0 %v2492
    %2845 = vmatpush.bf16.msra.mxu0 %v2491
    %2846 = vmatpush.bf16.msra.mxu0 %v2490
    %2847 = vmatpush.bf16.msra.mxu0 %v2489
    %2848 = vmatpush.bf16.msra.mxu0 %v2488
    %2849 = vmatmul.bf16.gmra.mxu0 %v655
    %v2850 = vpop.f32.mrf.mxu0
    %v2851 = vadd.f32 %v2522, %v2850
    %v2852 = vpop.f32.mrf.mxu0
    %v2853 = vadd.f32 %v2524, %v2852
    %2854 = vmatmul.bf16.gmra.mxu0 %v657
    %v2855 = vpop.f32.mrf.mxu0
    %v2856 = vadd.f32 %v2527, %v2855
    %v2857 = vpop.f32.mrf.mxu0
    %v2858 = vadd.f32 %v2529, %v2857
    %2859 = vmatmul.bf16.gmra.mxu0 %v659
    %v2860 = vpop.f32.mrf.mxu0
    %v2861 = vadd.f32 %v2532, %v2860
    %v2862 = vpop.f32.mrf.mxu0
    %v2863 = vadd.f32 %v2534, %v2862
    %2864 = vmatmul.bf16.gmra.mxu0 %v661
    %v2865 = vpop.f32.mrf.mxu0
    %v2866 = vadd.f32 %v2537, %v2865
    %v2867 = vpop.f32.mrf.mxu0
    %v2868 = vadd.f32 %v2539, %v2867
    %2869 = vmatmul.bf16.gmra.mxu0 %v663
    %v2870 = vpop.f32.mrf.mxu0
    %v2871 = vadd.f32 %v2542, %v2870
    %v2872 = vpop.f32.mrf.mxu0
    %v2873 = vadd.f32 %v2544, %v2872
    %2874 = vmatmul.bf16.gmra.mxu0 %v665
    %v2875 = vpop.f32.mrf.mxu0
    %v2876 = vadd.f32 %v2547, %v2875
    %v2877 = vpop.f32.mrf.mxu0
    %v2878 = vadd.f32 %v2549, %v2877
    %2879 = vmatmul.bf16.gmra.mxu0 %v667
    %v2880 = vpop.f32.mrf.mxu0
    %v2881 = vadd.f32 %v2552, %v2880
    %v2882 = vpop.f32.mrf.mxu0
    %v2883 = vadd.f32 %v2554, %v2882
    %2884 = vmatmul.bf16.gmra.mxu0 %v669
    %v2885 = vpop.f32.mrf.mxu0
    %v2886 = vadd.f32 %v2557, %v2885
    %v2887 = vpop.f32.mrf.mxu0
    %v2888 = vadd.f32 %v2559, %v2887
    %2889 = vmatmul.bf16.gmra.mxu0 %v671
    %v2890 = vpop.f32.mrf.mxu0
    %v2891 = vadd.f32 %v2562, %v2890
    %v2892 = vpop.f32.mrf.mxu0
    %v2893 = vadd.f32 %v2564, %v2892
    %2894 = vmatmul.bf16.gmra.mxu0 %v673
    %v2895 = vpop.f32.mrf.mxu0
    %v2896 = vadd.f32 %v2567, %v2895
    %v2897 = vpop.f32.mrf.mxu0
    %v2898 = vadd.f32 %v2569, %v2897
    %2899 = vmatmul.bf16.gmra.mxu0 %v675
    %v2900 = vpop.f32.mrf.mxu0
    %v2901 = vadd.f32 %v2572, %v2900
    %v2902 = vpop.f32.mrf.mxu0
    %v2903 = vadd.f32 %v2574, %v2902
    %2904 = vmatmul.bf16.gmra.mxu0 %v677
    %v2905 = vpop.f32.mrf.mxu0
    %v2906 = vadd.f32 %v2577, %v2905
    %v2907 = vpop.f32.mrf.mxu0
    %v2908 = vadd.f32 %v2579, %v2907
    %2909 = vmatmul.bf16.gmra.mxu0 %v679
    %v2910 = vpop.f32.mrf.mxu0
    %v2911 = vadd.f32 %v2582, %v2910
    %v2912 = vpop.f32.mrf.mxu0
    %v2913 = vadd.f32 %v2584, %v2912
    %2914 = vmatmul.bf16.gmra.mxu0 %v681
    %v2915 = vpop.f32.mrf.mxu0
    %v2916 = vadd.f32 %v2587, %v2915
    %v2917 = vpop.f32.mrf.mxu0
    %v2918 = vadd.f32 %v2589, %v2917
    %2919 = vmatmul.bf16.gmra.mxu0 %v683
    %v2920 = vpop.f32.mrf.mxu0
    %v2921 = vadd.f32 %v2592, %v2920
    %v2922 = vpop.f32.mrf.mxu0
    %v2923 = vadd.f32 %v2594, %v2922
    %2924 = vmatmul.bf16.gmra.mxu0 %v685
    %v2925 = vpop.f32.mrf.mxu0
    %v2926 = vadd.f32 %v2597, %v2925
    %v2927 = vpop.f32.mrf.mxu0
    %v2928 = vadd.f32 %v2599, %v2927
    %2929 = vmatmul.bf16.gmra.mxu0 %v687
    %v2930 = vpop.f32.mrf.mxu0
    %v2931 = vadd.f32 %v2602, %v2930
    %v2932 = vpop.f32.mrf.mxu0
    %v2933 = vadd.f32 %v2604, %v2932
    %2934 = vmatmul.bf16.gmra.mxu0 %v689
    %v2935 = vpop.f32.mrf.mxu0
    %v2936 = vadd.f32 %v2607, %v2935
    %v2937 = vpop.f32.mrf.mxu0
    %v2938 = vadd.f32 %v2609, %v2937
    %2939 = vmatmul.bf16.gmra.mxu0 %v691
    %v2940 = vpop.f32.mrf.mxu0
    %v2941 = vadd.f32 %v2612, %v2940
    %v2942 = vpop.f32.mrf.mxu0
    %v2943 = vadd.f32 %v2614, %v2942
    %2944 = vmatmul.bf16.gmra.mxu0 %v693
    %v2945 = vpop.f32.mrf.mxu0
    %v2946 = vadd.f32 %v2617, %v2945
    %v2947 = vpop.f32.mrf.mxu0
    %v2948 = vadd.f32 %v2619, %v2947
    %2949 = vmatmul.bf16.gmra.mxu0 %v695
    %v2950 = vpop.f32.mrf.mxu0
    %v2951 = vadd.f32 %v2622, %v2950
    %v2952 = vpop.f32.mrf.mxu0
    %v2953 = vadd.f32 %v2624, %v2952
    %2954 = vmatmul.bf16.gmra.mxu0 %v697
    %v2955 = vpop.f32.mrf.mxu0
    %v2956 = vadd.f32 %v2627, %v2955
    %v2957 = vpop.f32.mrf.mxu0
    %v2958 = vadd.f32 %v2629, %v2957
    %2959 = vmatmul.bf16.gmra.mxu0 %v699
    %v2960 = vpop.f32.mrf.mxu0
    %v2961 = vadd.f32 %v2632, %v2960
    %v2962 = vpop.f32.mrf.mxu0
    %v2963 = vadd.f32 %v2634, %v2962
    %2964 = vmatmul.bf16.gmra.mxu0 %v701
    %v2965 = vpop.f32.mrf.mxu0
    %v2966 = vadd.f32 %v2637, %v2965
    %v2967 = vpop.f32.mrf.mxu0
    %v2968 = vadd.f32 %v2639, %v2967
    %2969 = vmatmul.bf16.gmra.mxu0 %v703
    %v2970 = vpop.f32.mrf.mxu0
    %v2971 = vadd.f32 %v2642, %v2970
    %v2972 = vpop.f32.mrf.mxu0
    %v2973 = vadd.f32 %v2644, %v2972
    %2974 = vmatmul.bf16.gmra.mxu0 %v705
    %v2975 = vpop.f32.mrf.mxu0
    %v2976 = vadd.f32 %v2647, %v2975
    %v2977 = vpop.f32.mrf.mxu0
    %v2978 = vadd.f32 %v2649, %v2977
    %2979 = vmatmul.bf16.gmra.mxu0 %v707
    %v2980 = vpop.f32.mrf.mxu0
    %v2981 = vadd.f32 %v2652, %v2980
    %v2982 = vpop.f32.mrf.mxu0
    %v2983 = vadd.f32 %v2654, %v2982
    %2984 = vmatmul.bf16.gmra.mxu0 %v709
    %v2985 = vpop.f32.mrf.mxu0
    %v2986 = vadd.f32 %v2657, %v2985
    %v2987 = vpop.f32.mrf.mxu0
    %v2988 = vadd.f32 %v2659, %v2987
    %2989 = vmatmul.bf16.gmra.mxu0 %v711
    %v2990 = vpop.f32.mrf.mxu0
    %v2991 = vadd.f32 %v2662, %v2990
    %v2992 = vpop.f32.mrf.mxu0
    %v2993 = vadd.f32 %v2664, %v2992
    %2994 = vmatmul.bf16.gmra.mxu0 %v713
    %v2995 = vpop.f32.mrf.mxu0
    %v2996 = vadd.f32 %v2667, %v2995
    %v2997 = vpop.f32.mrf.mxu0
    %v2998 = vadd.f32 %v2669, %v2997
    %2999 = vmatmul.bf16.gmra.mxu0 %v715
    %v3000 = vpop.f32.mrf.mxu0
    %v3001 = vadd.f32 %v2672, %v3000
    %v3002 = vpop.f32.mrf.mxu0
    %v3003 = vadd.f32 %v2674, %v3002
    %3004 = vmatmul.bf16.gmra.mxu0 %v717
    %v3005 = vpop.f32.mrf.mxu0
    %v3006 = vadd.f32 %v2677, %v3005
    %v3007 = vpop.f32.mrf.mxu0
    %v3008 = vadd.f32 %v2679, %v3007
    %3009 = vmatmul.bf16.gmra.mxu0 %v719
    %v3010 = vpop.f32.mrf.mxu0
    %v3011 = vadd.f32 %v2682, %v3010
    %v3012 = vpop.f32.mrf.mxu0
    %v3013 = vadd.f32 %v2684, %v3012
    %3014 = vmatmul.bf16.gmra.mxu0 %v721
    %v3015 = vpop.f32.mrf.mxu0
    %v3016 = vadd.f32 %v2687, %v3015
    %v3017 = vpop.f32.mrf.mxu0
    %v3018 = vadd.f32 %v2689, %v3017
    %3019 = vmatmul.bf16.gmra.mxu0 %v723
    %v3020 = vpop.f32.mrf.mxu0
    %v3021 = vadd.f32 %v2692, %v3020
    %v3022 = vpop.f32.mrf.mxu0
    %v3023 = vadd.f32 %v2694, %v3022
    %3024 = vmatmul.bf16.gmra.mxu0 %v725
    %v3025 = vpop.f32.mrf.mxu0
    %v3026 = vadd.f32 %v2697, %v3025
    %v3027 = vpop.f32.mrf.mxu0
    %v3028 = vadd.f32 %v2699, %v3027
    %3029 = vmatmul.bf16.gmra.mxu0 %v727
    %v3030 = vpop.f32.mrf.mxu0
    %v3031 = vadd.f32 %v2702, %v3030
    %v3032 = vpop.f32.mrf.mxu0
    %v3033 = vadd.f32 %v2704, %v3032
    %3034 = vmatmul.bf16.gmra.mxu0 %v729
    %v3035 = vpop.f32.mrf.mxu0
    %v3036 = vadd.f32 %v2707, %v3035
    %v3037 = vpop.f32.mrf.mxu0
    %v3038 = vadd.f32 %v2709, %v3037
    %3039 = vmatmul.bf16.gmra.mxu0 %v731
    %v3040 = vpop.f32.mrf.mxu0
    %v3041 = vadd.f32 %v2712, %v3040
    %v3042 = vpop.f32.mrf.mxu0
    %v3043 = vadd.f32 %v2714, %v3042
    %3044 = vmatmul.bf16.gmra.mxu0 %v733
    %v3045 = vpop.f32.mrf.mxu0
    %v3046 = vadd.f32 %v2717, %v3045
    %v3047 = vpop.f32.mrf.mxu0
    %v3048 = vadd.f32 %v2719, %v3047
    %3049 = vmatmul.bf16.gmra.mxu0 %v735
    %v3050 = vpop.f32.mrf.mxu0
    %v3051 = vadd.f32 %v2722, %v3050
    %v3052 = vpop.f32.mrf.mxu0
    %v3053 = vadd.f32 %v2724, %v3052
    %3054 = vmatmul.bf16.gmra.mxu0 %v737
    %v3055 = vpop.f32.mrf.mxu0
    %v3056 = vadd.f32 %v2727, %v3055
    %v3057 = vpop.f32.mrf.mxu0
    %v3058 = vadd.f32 %v2729, %v3057
    %3059 = vmatmul.bf16.gmra.mxu0 %v739
    %v3060 = vpop.f32.mrf.mxu0
    %v3061 = vadd.f32 %v2732, %v3060
    %v3062 = vpop.f32.mrf.mxu0
    %v3063 = vadd.f32 %v2734, %v3062
    %3064 = vmatmul.bf16.gmra.mxu0 %v741
    %v3065 = vpop.f32.mrf.mxu0
    %v3066 = vadd.f32 %v2737, %v3065
    %v3067 = vpop.f32.mrf.mxu0
    %v3068 = vadd.f32 %v2739, %v3067
    %3069 = vmatmul.bf16.gmra.mxu0 %v743
    %v3070 = vpop.f32.mrf.mxu0
    %v3071 = vadd.f32 %v2742, %v3070
    %v3072 = vpop.f32.mrf.mxu0
    %v3073 = vadd.f32 %v2744, %v3072
    %3074 = vmatmul.bf16.gmra.mxu0 %v745
    %v3075 = vpop.f32.mrf.mxu0
    %v3076 = vadd.f32 %v2747, %v3075
    %v3077 = vpop.f32.mrf.mxu0
    %v3078 = vadd.f32 %v2749, %v3077
    %3079 = vmatmul.bf16.gmra.mxu0 %v747
    %v3080 = vpop.f32.mrf.mxu0
    %v3081 = vadd.f32 %v2752, %v3080
    %v3082 = vpop.f32.mrf.mxu0
    %v3083 = vadd.f32 %v2754, %v3082
    %3084 = vmatmul.bf16.gmra.mxu0 %v749
    %v3085 = vpop.f32.mrf.mxu0
    %v3086 = vadd.f32 %v2757, %v3085
    %v3087 = vpop.f32.mrf.mxu0
    %v3088 = vadd.f32 %v2759, %v3087
    %3089 = vmatmul.bf16.gmra.mxu0 %v751
    %v3090 = vpop.f32.mrf.mxu0
    %v3091 = vadd.f32 %v2762, %v3090
    %v3092 = vpop.f32.mrf.mxu0
    %v3093 = vadd.f32 %v2764, %v3092
    %3094 = vmatmul.bf16.gmra.mxu0 %v753
    %v3095 = vpop.f32.mrf.mxu0
    %v3096 = vadd.f32 %v2767, %v3095
    %v3097 = vpop.f32.mrf.mxu0
    %v3098 = vadd.f32 %v2769, %v3097
    %3099 = vmatmul.bf16.gmra.mxu0 %v755
    %v3100 = vpop.f32.mrf.mxu0
    %v3101 = vadd.f32 %v2772, %v3100
    %v3102 = vpop.f32.mrf.mxu0
    %v3103 = vadd.f32 %v2774, %v3102
    %3104 = vmatmul.bf16.gmra.mxu0 %v757
    %v3105 = vpop.f32.mrf.mxu0
    %v3106 = vadd.f32 %v2777, %v3105
    %v3107 = vpop.f32.mrf.mxu0
    %v3108 = vadd.f32 %v2779, %v3107
    %3109 = vmatmul.bf16.gmra.mxu0 %v759
    %v3110 = vpop.f32.mrf.mxu0
    %v3111 = vadd.f32 %v2782, %v3110
    %v3112 = vpop.f32.mrf.mxu0
    %v3113 = vadd.f32 %v2784, %v3112
    %3114 = vmatmul.bf16.gmra.mxu0 %v761
    %v3115 = vpop.f32.mrf.mxu0
    %v3116 = vadd.f32 %v2787, %v3115
    %v3117 = vpop.f32.mrf.mxu0
    %v3118 = vadd.f32 %v2789, %v3117
    %3119 = vmatmul.bf16.gmra.mxu0 %v763
    %v3120 = vpop.f32.mrf.mxu0
    %v3121 = vadd.f32 %v2792, %v3120
    %v3122 = vpop.f32.mrf.mxu0
    %v3123 = vadd.f32 %v2794, %v3122
    %3124 = vmatmul.bf16.gmra.mxu0 %v765
    %v3125 = vpop.f32.mrf.mxu0
    %v3126 = vadd.f32 %v2797, %v3125
    %v3127 = vpop.f32.mrf.mxu0
    %v3128 = vadd.f32 %v2799, %v3127
    %3129 = vmatmul.bf16.gmra.mxu0 %v767
    %v3130 = vpop.f32.mrf.mxu0
    %v3131 = vadd.f32 %v2802, %v3130
    %v3132 = vpop.f32.mrf.mxu0
    %v3133 = vadd.f32 %v2804, %v3132
    %3134 = vmatmul.bf16.gmra.mxu0 %v769
    %v3135 = vpop.f32.mrf.mxu0
    %v3136 = vadd.f32 %v2807, %v3135
    %v3137 = vpop.f32.mrf.mxu0
    %v3138 = vadd.f32 %v2809, %v3137
    %3139 = vmatmul.bf16.gmra.mxu0 %v771
    %v3140 = vpop.f32.mrf.mxu0
    %v3141 = vadd.f32 %v2812, %v3140
    %v3142 = vpop.f32.mrf.mxu0
    %v3143 = vadd.f32 %v2814, %v3142
    %3144 = vmatmul.bf16.gmra.mxu0 %v773
    %v3145 = vpop.f32.mrf.mxu0
    %v3146 = vadd.f32 %v2817, %v3145
    %v3147 = vpop.f32.mrf.mxu0
    %v3148 = vadd.f32 %v2819, %v3147
    %3149 = vmatmul.bf16.gmra.mxu0 %v775
    %v3150 = vpop.f32.mrf.mxu0
    %v3151 = vadd.f32 %v2822, %v3150
    %v3152 = vpop.f32.mrf.mxu0
    %v3153 = vadd.f32 %v2824, %v3152
    %3154 = vmatmul.bf16.gmra.mxu0 %v777
    %v3155 = vpop.f32.mrf.mxu0
    %v3156 = vadd.f32 %v2827, %v3155
    %v3157 = vpop.f32.mrf.mxu0
    %v3158 = vadd.f32 %v2829, %v3157
    %3159 = vmatmul.bf16.gmra.mxu0 %v779
    %v3160 = vpop.f32.mrf.mxu0
    %v3161 = vadd.f32 %v2832, %v3160
    %v3162 = vpop.f32.mrf.mxu0
    %v3163 = vadd.f32 %v2834, %v3162
    %3164 = vmatmul.bf16.gmra.mxu0 %v781
    %v3165 = vpop.f32.mrf.mxu0
    %v3166 = vadd.f32 %v2837, %v3165
    %v3167 = vpop.f32.mrf.mxu0
    %v3168 = vadd.f32 %v2839, %v3167
    %3169 = vdwg.mxu0
    %v3170 = vpack.c.bf16 %v2851, %v2851
    %v3171 = vpack.c.bf16 %v2853, %v2853
    %v3172 = vpack.c.bf16 %v2856, %v2856
    %v3173 = vpack.c.bf16 %v2858, %v2858
    %v3174 = vpack.c.bf16 %v2861, %v2861
    %v3175 = vpack.c.bf16 %v2863, %v2863
    %v3176 = vpack.c.bf16 %v2866, %v2866
    %v3177 = vpack.c.bf16 %v2868, %v2868
    %v3178 = vpack.c.bf16 %v2871, %v2871
    %v3179 = vpack.c.bf16 %v2873, %v2873
    %v3180 = vpack.c.bf16 %v2876, %v2876
    %v3181 = vpack.c.bf16 %v2878, %v2878
    %v3182 = vpack.c.bf16 %v2881, %v2881
    %v3183 = vpack.c.bf16 %v2883, %v2883
    %v3184 = vpack.c.bf16 %v2886, %v2886
    %v3185 = vpack.c.bf16 %v2888, %v2888
    %v3186 = vpack.c.bf16 %v2891, %v2891
    %v3187 = vpack.c.bf16 %v2893, %v2893
    %v3188 = vpack.c.bf16 %v2896, %v2896
    %v3189 = vpack.c.bf16 %v2898, %v2898
    %v3190 = vpack.c.bf16 %v2901, %v2901
    %v3191 = vpack.c.bf16 %v2903, %v2903
    %v3192 = vpack.c.bf16 %v2906, %v2906
    %v3193 = vpack.c.bf16 %v2908, %v2908
    %v3194 = vpack.c.bf16 %v2911, %v2911
    %v3195 = vpack.c.bf16 %v2913, %v2913
    %v3196 = vpack.c.bf16 %v2916, %v2916
    %v3197 = vpack.c.bf16 %v2918, %v2918
    %v3198 = vpack.c.bf16 %v2921, %v2921
    %v3199 = vpack.c.bf16 %v2923, %v2923
    %v3200 = vpack.c.bf16 %v2926, %v2926
    %v3201 = vpack.c.bf16 %v2928, %v2928
    %v3202 = vpack.c.bf16 %v2931, %v2931
    %v3203 = vpack.c.bf16 %v2933, %v2933
    %v3204 = vpack.c.bf16 %v2936, %v2936
    %v3205 = vpack.c.bf16 %v2938, %v2938
    %v3206 = vpack.c.bf16 %v2941, %v2941
    %v3207 = vpack.c.bf16 %v2943, %v2943
    %v3208 = vpack.c.bf16 %v2946, %v2946
    %v3209 = vpack.c.bf16 %v2948, %v2948
    %v3210 = vpack.c.bf16 %v2951, %v2951
    %v3211 = vpack.c.bf16 %v2953, %v2953
    %v3212 = vpack.c.bf16 %v2956, %v2956
    %v3213 = vpack.c.bf16 %v2958, %v2958
    %v3214 = vpack.c.bf16 %v2961, %v2961
    %v3215 = vpack.c.bf16 %v2963, %v2963
    %v3216 = vpack.c.bf16 %v2966, %v2966
    %v3217 = vpack.c.bf16 %v2968, %v2968
    %v3218 = vpack.c.bf16 %v2971, %v2971
    %v3219 = vpack.c.bf16 %v2973, %v2973
    %v3220 = vpack.c.bf16 %v2976, %v2976
    %v3221 = vpack.c.bf16 %v2978, %v2978
    %v3222 = vpack.c.bf16 %v2981, %v2981
    %v3223 = vpack.c.bf16 %v2983, %v2983
    %v3224 = vpack.c.bf16 %v2986, %v2986
    %v3225 = vpack.c.bf16 %v2988, %v2988
    %v3226 = vpack.c.bf16 %v2991, %v2991
    %v3227 = vpack.c.bf16 %v2993, %v2993
    %v3228 = vpack.c.bf16 %v2996, %v2996
    %v3229 = vpack.c.bf16 %v2998, %v2998
    %v3230 = vpack.c.bf16 %v3001, %v3001
    %v3231 = vpack.c.bf16 %v3003, %v3003
    %v3232 = vpack.c.bf16 %v3006, %v3006
    %v3233 = vpack.c.bf16 %v3008, %v3008
    %v3234 = vpack.c.bf16 %v3011, %v3011
    %v3235 = vpack.c.bf16 %v3013, %v3013
    %v3236 = vpack.c.bf16 %v3016, %v3016
    %v3237 = vpack.c.bf16 %v3018, %v3018
    %v3238 = vpack.c.bf16 %v3021, %v3021
    %v3239 = vpack.c.bf16 %v3023, %v3023
    %v3240 = vpack.c.bf16 %v3026, %v3026
    %v3241 = vpack.c.bf16 %v3028, %v3028
    %v3242 = vpack.c.bf16 %v3031, %v3031
    %v3243 = vpack.c.bf16 %v3033, %v3033
    %v3244 = vpack.c.bf16 %v3036, %v3036
    %v3245 = vpack.c.bf16 %v3038, %v3038
    %v3246 = vpack.c.bf16 %v3041, %v3041
    %v3247 = vpack.c.bf16 %v3043, %v3043
    %v3248 = vpack.c.bf16 %v3046, %v3046
    %v3249 = vpack.c.bf16 %v3048, %v3048
    %v3250 = vpack.c.bf16 %v3051, %v3051
    %v3251 = vpack.c.bf16 %v3053, %v3053
    %v3252 = vpack.c.bf16 %v3056, %v3056
    %v3253 = vpack.c.bf16 %v3058, %v3058
    %v3254 = vpack.c.bf16 %v3061, %v3061
    %v3255 = vpack.c.bf16 %v3063, %v3063
    %v3256 = vpack.c.bf16 %v3066, %v3066
    %v3257 = vpack.c.bf16 %v3068, %v3068
    %v3258 = vpack.c.bf16 %v3071, %v3071
    %v3259 = vpack.c.bf16 %v3073, %v3073
    %v3260 = vpack.c.bf16 %v3076, %v3076
    %v3261 = vpack.c.bf16 %v3078, %v3078
    %v3262 = vpack.c.bf16 %v3081, %v3081
    %v3263 = vpack.c.bf16 %v3083, %v3083
    %v3264 = vpack.c.bf16 %v3086, %v3086
    %v3265 = vpack.c.bf16 %v3088, %v3088
    %v3266 = vpack.c.bf16 %v3091, %v3091
    %v3267 = vpack.c.bf16 %v3093, %v3093
    %v3268 = vpack.c.bf16 %v3096, %v3096
    %v3269 = vpack.c.bf16 %v3098, %v3098
    %v3270 = vpack.c.bf16 %v3101, %v3101
    %v3271 = vpack.c.bf16 %v3103, %v3103
    %v3272 = vpack.c.bf16 %v3106, %v3106
    %v3273 = vpack.c.bf16 %v3108, %v3108
    %v3274 = vpack.c.bf16 %v3111, %v3111
    %v3275 = vpack.c.bf16 %v3113, %v3113
    %v3276 = vpack.c.bf16 %v3116, %v3116
    %v3277 = vpack.c.bf16 %v3118, %v3118
    %v3278 = vpack.c.bf16 %v3121, %v3121
    %v3279 = vpack.c.bf16 %v3123, %v3123
    %v3280 = vpack.c.bf16 %v3126, %v3126
    %v3281 = vpack.c.bf16 %v3128, %v3128
    %v3282 = vpack.c.bf16 %v3131, %v3131
    %v3283 = vpack.c.bf16 %v3133, %v3133
    %v3284 = vpack.c.bf16 %v3136, %v3136
    %v3285 = vpack.c.bf16 %v3138, %v3138
    %v3286 = vpack.c.bf16 %v3141, %v3141
    %v3287 = vpack.c.bf16 %v3143, %v3143
    %v3288 = vpack.c.bf16 %v3146, %v3146
    %v3289 = vpack.c.bf16 %v3148, %v3148
    %v3290 = vpack.c.bf16 %v3151, %v3151
    %v3291 = vpack.c.bf16 %v3153, %v3153
    %v3292 = vpack.c.bf16 %v3156, %v3156
    %v3293 = vpack.c.bf16 %v3158, %v3158
    %v3294 = vpack.c.bf16 %v3161, %v3161
    %v3295 = vpack.c.bf16 %v3163, %v3163
    %v3296 = vpack.c.bf16 %v3166, %v3166
    %v3297 = vpack.c.bf16 %v3168, %v3168
    %3298 = vst.msk [vmem:[#allocation2 + $0x20] sm:$0xf] %vm1792, %v3170
    %3299 = vst.msk [vmem:[#allocation2 + $0x24] sm:$0xf] %vm1792, %v3171
    %3300 = vst.msk [vmem:[#allocation2 + $0x28] sm:$0xf] %vm1792, %v3172
    %3301 = vst.msk [vmem:[#allocation2 + $0x2c] sm:$0xf] %vm1792, %v3173
    %3302 = vst.msk [vmem:[#allocation2 + $0x30] sm:$0xf] %vm1792, %v3174
    %3303 = vst.msk [vmem:[#allocation2 + $0x34] sm:$0xf] %vm1792, %v3175
    %3304 = vst.msk [vmem:[#allocation2 + $0x38] sm:$0xf] %vm1792, %v3176
    %3305 = vst.msk [vmem:[#allocation2 + $0x3c] sm:$0xf] %vm1792, %v3177
    %3314 = vrot.lane.b32.xlu0 %v3178, 4
    %v3315 = vpop.permute.xlu0 %3314
    %3316 = vrot.lane.b32.xlu0 %v3179, 4
    %v3317 = vpop.permute.xlu0 %3316
    %3318 = vrot.lane.b32.xlu0 %v3180, 4
    %v3319 = vpop.permute.xlu0 %3318
    %3320 = vrot.lane.b32.xlu0 %v3181, 4
    %v3321 = vpop.permute.xlu0 %3320
    %3322 = vrot.lane.b32.xlu0 %v3182, 4
    %v3323 = vpop.permute.xlu0 %3322
    %3324 = vrot.lane.b32.xlu0 %v3183, 4
    %v3325 = vpop.permute.xlu0 %3324
    %3326 = vrot.lane.b32.xlu0 %v3184, 4
    %v3327 = vpop.permute.xlu0 %3326
    %3328 = vrot.lane.b32.xlu0 %v3185, 4
    %v3329 = vpop.permute.xlu0 %3328
    %3338 = vst.msk [vmem:[#allocation2 + $0x20] sm:$0xf] %vm1833, %v3315
    %3339 = vst.msk [vmem:[#allocation2 + $0x24] sm:$0xf] %vm1833, %v3317
    %3340 = vst.msk [vmem:[#allocation2 + $0x28] sm:$0xf] %vm1833, %v3319
    %3341 = vst.msk [vmem:[#allocation2 + $0x2c] sm:$0xf] %vm1833, %v3321
    %3342 = vst.msk [vmem:[#allocation2 + $0x30] sm:$0xf] %vm1833, %v3323
    %3343 = vst.msk [vmem:[#allocation2 + $0x34] sm:$0xf] %vm1833, %v3325
    %3344 = vst.msk [vmem:[#allocation2 + $0x38] sm:$0xf] %vm1833, %v3327
    %3345 = vst.msk [vmem:[#allocation2 + $0x3c] sm:$0xf] %vm1833, %v3329
    %3354 = vrot.lane.b32.xlu0 %v3186, 8
    %v3355 = vpop.permute.xlu0 %3354
    %3356 = vrot.lane.b32.xlu0 %v3187, 8
    %v3357 = vpop.permute.xlu0 %3356
    %3358 = vrot.lane.b32.xlu0 %v3188, 8
    %v3359 = vpop.permute.xlu0 %3358
    %3360 = vrot.lane.b32.xlu0 %v3189, 8
    %v3361 = vpop.permute.xlu0 %3360
    %3362 = vrot.lane.b32.xlu0 %v3190, 8
    %v3363 = vpop.permute.xlu0 %3362
    %3364 = vrot.lane.b32.xlu0 %v3191, 8
    %v3365 = vpop.permute.xlu0 %3364
    %3366 = vrot.lane.b32.xlu0 %v3192, 8
    %v3367 = vpop.permute.xlu0 %3366
    %3368 = vrot.lane.b32.xlu0 %v3193, 8
    %v3369 = vpop.permute.xlu0 %3368
    %3378 = vst.msk [vmem:[#allocation2 + $0x20] sm:$0xf] %vm1874, %v3355
    %3379 = vst.msk [vmem:[#allocation2 + $0x24] sm:$0xf] %vm1874, %v3357
    %3380 = vst.msk [vmem:[#allocation2 + $0x28] sm:$0xf] %vm1874, %v3359
    %3381 = vst.msk [vmem:[#allocation2 + $0x2c] sm:$0xf] %vm1874, %v3361
    %3382 = vst.msk [vmem:[#allocation2 + $0x30] sm:$0xf] %vm1874, %v3363
    %3383 = vst.msk [vmem:[#allocation2 + $0x34] sm:$0xf] %vm1874, %v3365
    %3384 = vst.msk [vmem:[#allocation2 + $0x38] sm:$0xf] %vm1874, %v3367
    %3385 = vst.msk [vmem:[#allocation2 + $0x3c] sm:$0xf] %vm1874, %v3369
    %3394 = vrot.lane.b32.xlu0 %v3194, 12
    %v3395 = vpop.permute.xlu0 %3394
    %3396 = vrot.lane.b32.xlu0 %v3195, 12
    %v3397 = vpop.permute.xlu0 %3396
    %3398 = vrot.lane.b32.xlu0 %v3196, 12
    %v3399 = vpop.permute.xlu0 %3398
    %3400 = vrot.lane.b32.xlu0 %v3197, 12
    %v3401 = vpop.permute.xlu0 %3400
    %3402 = vrot.lane.b32.xlu0 %v3198, 12
    %v3403 = vpop.permute.xlu0 %3402
    %3404 = vrot.lane.b32.xlu0 %v3199, 12
    %v3405 = vpop.permute.xlu0 %3404
    %3406 = vrot.lane.b32.xlu0 %v3200, 12
    %v3407 = vpop.permute.xlu0 %3406
    %3408 = vrot.lane.b32.xlu0 %v3201, 12
    %v3409 = vpop.permute.xlu0 %3408
    %3418 = vst.msk [vmem:[#allocation2 + $0x20] sm:$0xf] %vm1915, %v3395
    %3419 = vst.msk [vmem:[#allocation2 + $0x24] sm:$0xf] %vm1915, %v3397
    %3420 = vst.msk [vmem:[#allocation2 + $0x28] sm:$0xf] %vm1915, %v3399
    %3421 = vst.msk [vmem:[#allocation2 + $0x2c] sm:$0xf] %vm1915, %v3401
    %3422 = vst.msk [vmem:[#allocation2 + $0x30] sm:$0xf] %vm1915, %v3403
    %3423 = vst.msk [vmem:[#allocation2 + $0x34] sm:$0xf] %vm1915, %v3405
    %3424 = vst.msk [vmem:[#allocation2 + $0x38] sm:$0xf] %vm1915, %v3407
    %3425 = vst.msk [vmem:[#allocation2 + $0x3c] sm:$0xf] %vm1915, %v3409
    %3434 = vrot.lane.b32.xlu0 %v3202, 16
    %v3435 = vpop.permute.xlu0 %3434
    %3436 = vrot.lane.b32.xlu0 %v3203, 16
    %v3437 = vpop.permute.xlu0 %3436
    %3438 = vrot.lane.b32.xlu0 %v3204, 16
    %v3439 = vpop.permute.xlu0 %3438
    %3440 = vrot.lane.b32.xlu0 %v3205, 16
    %v3441 = vpop.permute.xlu0 %3440
    %3442 = vrot.lane.b32.xlu0 %v3206, 16
    %v3443 = vpop.permute.xlu0 %3442
    %3444 = vrot.lane.b32.xlu0 %v3207, 16
    %v3445 = vpop.permute.xlu0 %3444
    %3446 = vrot.lane.b32.xlu0 %v3208, 16
    %v3447 = vpop.permute.xlu0 %3446
    %3448 = vrot.lane.b32.xlu0 %v3209, 16
    %v3449 = vpop.permute.xlu0 %3448
    %3458 = vst.msk [vmem:[#allocation2 + $0x20] sm:$0xf] %vm1956, %v3435
    %3459 = vst.msk [vmem:[#allocation2 + $0x24] sm:$0xf] %vm1956, %v3437
    %3460 = vst.msk [vmem:[#allocation2 + $0x28] sm:$0xf] %vm1956, %v3439
    %3461 = vst.msk [vmem:[#allocation2 + $0x2c] sm:$0xf] %vm1956, %v3441
    %3462 = vst.msk [vmem:[#allocation2 + $0x30] sm:$0xf] %vm1956, %v3443
    %3463 = vst.msk [vmem:[#allocation2 + $0x34] sm:$0xf] %vm1956, %v3445
    %3464 = vst.msk [vmem:[#allocation2 + $0x38] sm:$0xf] %vm1956, %v3447
    %3465 = vst.msk [vmem:[#allocation2 + $0x3c] sm:$0xf] %vm1956, %v3449
    %3474 = vrot.lane.b32.xlu0 %v3210, 20
    %v3475 = vpop.permute.xlu0 %3474
    %3476 = vrot.lane.b32.xlu0 %v3211, 20
    %v3477 = vpop.permute.xlu0 %3476
    %3478 = vrot.lane.b32.xlu0 %v3212, 20
    %v3479 = vpop.permute.xlu0 %3478
    %3480 = vrot.lane.b32.xlu0 %v3213, 20
    %v3481 = vpop.permute.xlu0 %3480
    %3482 = vrot.lane.b32.xlu0 %v3214, 20
    %v3483 = vpop.permute.xlu0 %3482
    %3484 = vrot.lane.b32.xlu0 %v3215, 20
    %v3485 = vpop.permute.xlu0 %3484
    %3486 = vrot.lane.b32.xlu0 %v3216, 20
    %v3487 = vpop.permute.xlu0 %3486
    %3488 = vrot.lane.b32.xlu0 %v3217, 20
    %v3489 = vpop.permute.xlu0 %3488
    %3498 = vst.msk [vmem:[#allocation2 + $0x20] sm:$0xf] %vm1997, %v3475
    %3499 = vst.msk [vmem:[#allocation2 + $0x24] sm:$0xf] %vm1997, %v3477
    %3500 = vst.msk [vmem:[#allocation2 + $0x28] sm:$0xf] %vm1997, %v3479
    %3501 = vst.msk [vmem:[#allocation2 + $0x2c] sm:$0xf] %vm1997, %v3481
    %3502 = vst.msk [vmem:[#allocation2 + $0x30] sm:$0xf] %vm1997, %v3483
    %3503 = vst.msk [vmem:[#allocation2 + $0x34] sm:$0xf] %vm1997, %v3485
    %3504 = vst.msk [vmem:[#allocation2 + $0x38] sm:$0xf] %vm1997, %v3487
    %3505 = vst.msk [vmem:[#allocation2 + $0x3c] sm:$0xf] %vm1997, %v3489
    %3514 = vrot.lane.b32.xlu0 %v3218, 24
    %v3515 = vpop.permute.xlu0 %3514
    %3516 = vrot.lane.b32.xlu0 %v3219, 24
    %v3517 = vpop.permute.xlu0 %3516
    %3518 = vrot.lane.b32.xlu0 %v3220, 24
    %v3519 = vpop.permute.xlu0 %3518
    %3520 = vrot.lane.b32.xlu0 %v3221, 24
    %v3521 = vpop.permute.xlu0 %3520
    %3522 = vrot.lane.b32.xlu0 %v3222, 24
    %v3523 = vpop.permute.xlu0 %3522
    %3524 = vrot.lane.b32.xlu0 %v3223, 24
    %v3525 = vpop.permute.xlu0 %3524
    %3526 = vrot.lane.b32.xlu0 %v3224, 24
    %v3527 = vpop.permute.xlu0 %3526
    %3528 = vrot.lane.b32.xlu0 %v3225, 24
    %v3529 = vpop.permute.xlu0 %3528
    %3538 = vst.msk [vmem:[#allocation2 + $0x20] sm:$0xf] %vm2038, %v3515
    %3539 = vst.msk [vmem:[#allocation2 + $0x24] sm:$0xf] %vm2038, %v3517
    %3540 = vst.msk [vmem:[#allocation2 + $0x28] sm:$0xf] %vm2038, %v3519
    %3541 = vst.msk [vmem:[#allocation2 + $0x2c] sm:$0xf] %vm2038, %v3521
    %3542 = vst.msk [vmem:[#allocation2 + $0x30] sm:$0xf] %vm2038, %v3523
    %3543 = vst.msk [vmem:[#allocation2 + $0x34] sm:$0xf] %vm2038, %v3525
    %3544 = vst.msk [vmem:[#allocation2 + $0x38] sm:$0xf] %vm2038, %v3527
    %3545 = vst.msk [vmem:[#allocation2 + $0x3c] sm:$0xf] %vm2038, %v3529
    %3554 = vrot.lane.b32.xlu0 %v3226, 28
    %v3555 = vpop.permute.xlu0 %3554
    %3556 = vrot.lane.b32.xlu0 %v3227, 28
    %v3557 = vpop.permute.xlu0 %3556
    %3558 = vrot.lane.b32.xlu0 %v3228, 28
    %v3559 = vpop.permute.xlu0 %3558
    %3560 = vrot.lane.b32.xlu0 %v3229, 28
    %v3561 = vpop.permute.xlu0 %3560
    %3562 = vrot.lane.b32.xlu0 %v3230, 28
    %v3563 = vpop.permute.xlu0 %3562
    %3564 = vrot.lane.b32.xlu0 %v3231, 28
    %v3565 = vpop.permute.xlu0 %3564
    %3566 = vrot.lane.b32.xlu0 %v3232, 28
    %v3567 = vpop.permute.xlu0 %3566
    %3568 = vrot.lane.b32.xlu0 %v3233, 28
    %v3569 = vpop.permute.xlu0 %3568
    %3578 = vst.msk [vmem:[#allocation2 + $0x20] sm:$0xf] %vm2079, %v3555
    %3579 = vst.msk [vmem:[#allocation2 + $0x24] sm:$0xf] %vm2079, %v3557
    %3580 = vst.msk [vmem:[#allocation2 + $0x28] sm:$0xf] %vm2079, %v3559
    %3581 = vst.msk [vmem:[#allocation2 + $0x2c] sm:$0xf] %vm2079, %v3561
    %3582 = vst.msk [vmem:[#allocation2 + $0x30] sm:$0xf] %vm2079, %v3563
    %3583 = vst.msk [vmem:[#allocation2 + $0x34] sm:$0xf] %vm2079, %v3565
    %3584 = vst.msk [vmem:[#allocation2 + $0x38] sm:$0xf] %vm2079, %v3567
    %3585 = vst.msk [vmem:[#allocation2 + $0x3c] sm:$0xf] %vm2079, %v3569
    %3594 = vrot.lane.b32.xlu0 %v3234, 32
    %v3595 = vpop.permute.xlu0 %3594
    %3596 = vrot.lane.b32.xlu0 %v3235, 32
    %v3597 = vpop.permute.xlu0 %3596
    %3598 = vrot.lane.b32.xlu0 %v3236, 32
    %v3599 = vpop.permute.xlu0 %3598
    %3600 = vrot.lane.b32.xlu0 %v3237, 32
    %v3601 = vpop.permute.xlu0 %3600
    %3602 = vrot.lane.b32.xlu0 %v3238, 32
    %v3603 = vpop.permute.xlu0 %3602
    %3604 = vrot.lane.b32.xlu0 %v3239, 32
    %v3605 = vpop.permute.xlu0 %3604
    %3606 = vrot.lane.b32.xlu0 %v3240, 32
    %v3607 = vpop.permute.xlu0 %3606
    %3608 = vrot.lane.b32.xlu0 %v3241, 32
    %v3609 = vpop.permute.xlu0 %3608
    %3618 = vst.msk [vmem:[#allocation2 + $0x20] sm:$0xf] %vm2120, %v3595
    %3619 = vst.msk [vmem:[#allocation2 + $0x24] sm:$0xf] %vm2120, %v3597
    %3620 = vst.msk [vmem:[#allocation2 + $0x28] sm:$0xf] %vm2120, %v3599
    %3621 = vst.msk [vmem:[#allocation2 + $0x2c] sm:$0xf] %vm2120, %v3601
    %3622 = vst.msk [vmem:[#allocation2 + $0x30] sm:$0xf] %vm2120, %v3603
    %3623 = vst.msk [vmem:[#allocation2 + $0x34] sm:$0xf] %vm2120, %v3605
    %3624 = vst.msk [vmem:[#allocation2 + $0x38] sm:$0xf] %vm2120, %v3607
    %3625 = vst.msk [vmem:[#allocation2 + $0x3c] sm:$0xf] %vm2120, %v3609
    %3634 = vrot.lane.b32.xlu0 %v3242, 36
    %v3635 = vpop.permute.xlu0 %3634
    %3636 = vrot.lane.b32.xlu0 %v3243, 36
    %v3637 = vpop.permute.xlu0 %3636
    %3638 = vrot.lane.b32.xlu0 %v3244, 36
    %v3639 = vpop.permute.xlu0 %3638
    %3640 = vrot.lane.b32.xlu0 %v3245, 36
    %v3641 = vpop.permute.xlu0 %3640
    %3642 = vrot.lane.b32.xlu0 %v3246, 36
    %v3643 = vpop.permute.xlu0 %3642
    %3644 = vrot.lane.b32.xlu0 %v3247, 36
    %v3645 = vpop.permute.xlu0 %3644
    %3646 = vrot.lane.b32.xlu0 %v3248, 36
    %v3647 = vpop.permute.xlu0 %3646
    %3648 = vrot.lane.b32.xlu0 %v3249, 36
    %v3649 = vpop.permute.xlu0 %3648
    %3658 = vst.msk [vmem:[#allocation2 + $0x20] sm:$0xf] %vm2161, %v3635
    %3659 = vst.msk [vmem:[#allocation2 + $0x24] sm:$0xf] %vm2161, %v3637
    %3660 = vst.msk [vmem:[#allocation2 + $0x28] sm:$0xf] %vm2161, %v3639
    %3661 = vst.msk [vmem:[#allocation2 + $0x2c] sm:$0xf] %vm2161, %v3641
    %3662 = vst.msk [vmem:[#allocation2 + $0x30] sm:$0xf] %vm2161, %v3643
    %3663 = vst.msk [vmem:[#allocation2 + $0x34] sm:$0xf] %vm2161, %v3645
    %3664 = vst.msk [vmem:[#allocation2 + $0x38] sm:$0xf] %vm2161, %v3647
    %3665 = vst.msk [vmem:[#allocation2 + $0x3c] sm:$0xf] %vm2161, %v3649
    %3674 = vrot.lane.b32.xlu0 %v3250, 40
    %v3675 = vpop.permute.xlu0 %3674
    %3676 = vrot.lane.b32.xlu0 %v3251, 40
    %v3677 = vpop.permute.xlu0 %3676
    %3678 = vrot.lane.b32.xlu0 %v3252, 40
    %v3679 = vpop.permute.xlu0 %3678
    %3680 = vrot.lane.b32.xlu0 %v3253, 40
    %v3681 = vpop.permute.xlu0 %3680
    %3682 = vrot.lane.b32.xlu0 %v3254, 40
    %v3683 = vpop.permute.xlu0 %3682
    %3684 = vrot.lane.b32.xlu0 %v3255, 40
    %v3685 = vpop.permute.xlu0 %3684
    %3686 = vrot.lane.b32.xlu0 %v3256, 40
    %v3687 = vpop.permute.xlu0 %3686
    %3688 = vrot.lane.b32.xlu0 %v3257, 40
    %v3689 = vpop.permute.xlu0 %3688
    %3698 = vst.msk [vmem:[#allocation2 + $0x20] sm:$0xf] %vm2202, %v3675
    %3699 = vst.msk [vmem:[#allocation2 + $0x24] sm:$0xf] %vm2202, %v3677
    %3700 = vst.msk [vmem:[#allocation2 + $0x28] sm:$0xf] %vm2202, %v3679
    %3701 = vst.msk [vmem:[#allocation2 + $0x2c] sm:$0xf] %vm2202, %v3681
    %3702 = vst.msk [vmem:[#allocation2 + $0x30] sm:$0xf] %vm2202, %v3683
    %3703 = vst.msk [vmem:[#allocation2 + $0x34] sm:$0xf] %vm2202, %v3685
    %3704 = vst.msk [vmem:[#allocation2 + $0x38] sm:$0xf] %vm2202, %v3687
    %3705 = vst.msk [vmem:[#allocation2 + $0x3c] sm:$0xf] %vm2202, %v3689
    %3714 = vrot.lane.b32.xlu0 %v3258, 44
    %v3715 = vpop.permute.xlu0 %3714
    %3716 = vrot.lane.b32.xlu0 %v3259, 44
    %v3717 = vpop.permute.xlu0 %3716
    %3718 = vrot.lane.b32.xlu0 %v3260, 44
    %v3719 = vpop.permute.xlu0 %3718
    %3720 = vrot.lane.b32.xlu0 %v3261, 44
    %v3721 = vpop.permute.xlu0 %3720
    %3722 = vrot.lane.b32.xlu0 %v3262, 44
    %v3723 = vpop.permute.xlu0 %3722
    %3724 = vrot.lane.b32.xlu0 %v3263, 44
    %v3725 = vpop.permute.xlu0 %3724
    %3726 = vrot.lane.b32.xlu0 %v3264, 44
    %v3727 = vpop.permute.xlu0 %3726
    %3728 = vrot.lane.b32.xlu0 %v3265, 44
    %v3729 = vpop.permute.xlu0 %3728
    %3738 = vst.msk [vmem:[#allocation2 + $0x20] sm:$0xf] %vm2243, %v3715
    %3739 = vst.msk [vmem:[#allocation2 + $0x24] sm:$0xf] %vm2243, %v3717
    %3740 = vst.msk [vmem:[#allocation2 + $0x28] sm:$0xf] %vm2243, %v3719
    %3741 = vst.msk [vmem:[#allocation2 + $0x2c] sm:$0xf] %vm2243, %v3721
    %3742 = vst.msk [vmem:[#allocation2 + $0x30] sm:$0xf] %vm2243, %v3723
    %3743 = vst.msk [vmem:[#allocation2 + $0x34] sm:$0xf] %vm2243, %v3725
    %3744 = vst.msk [vmem:[#allocation2 + $0x38] sm:$0xf] %vm2243, %v3727
    %3745 = vst.msk [vmem:[#allocation2 + $0x3c] sm:$0xf] %vm2243, %v3729
    %3754 = vrot.lane.b32.xlu0 %v3266, 48
    %v3755 = vpop.permute.xlu0 %3754
    %3756 = vrot.lane.b32.xlu0 %v3267, 48
    %v3757 = vpop.permute.xlu0 %3756
    %3758 = vrot.lane.b32.xlu0 %v3268, 48
    %v3759 = vpop.permute.xlu0 %3758
    %3760 = vrot.lane.b32.xlu0 %v3269, 48
    %v3761 = vpop.permute.xlu0 %3760
    %3762 = vrot.lane.b32.xlu0 %v3270, 48
    %v3763 = vpop.permute.xlu0 %3762
    %3764 = vrot.lane.b32.xlu0 %v3271, 48
    %v3765 = vpop.permute.xlu0 %3764
    %3766 = vrot.lane.b32.xlu0 %v3272, 48
    %v3767 = vpop.permute.xlu0 %3766
    %3768 = vrot.lane.b32.xlu0 %v3273, 48
    %v3769 = vpop.permute.xlu0 %3768
    %3778 = vst.msk [vmem:[#allocation2 + $0x20] sm:$0xf] %vm2284, %v3755
    %3779 = vst.msk [vmem:[#allocation2 + $0x24] sm:$0xf] %vm2284, %v3757
    %3780 = vst.msk [vmem:[#allocation2 + $0x28] sm:$0xf] %vm2284, %v3759
    %3781 = vst.msk [vmem:[#allocation2 + $0x2c] sm:$0xf] %vm2284, %v3761
    %3782 = vst.msk [vmem:[#allocation2 + $0x30] sm:$0xf] %vm2284, %v3763
    %3783 = vst.msk [vmem:[#allocation2 + $0x34] sm:$0xf] %vm2284, %v3765
    %3784 = vst.msk [vmem:[#allocation2 + $0x38] sm:$0xf] %vm2284, %v3767
    %3785 = vst.msk [vmem:[#allocation2 + $0x3c] sm:$0xf] %vm2284, %v3769
    %3794 = vrot.lane.b32.xlu0 %v3274, 52
    %v3795 = vpop.permute.xlu0 %3794
    %3796 = vrot.lane.b32.xlu0 %v3275, 52
    %v3797 = vpop.permute.xlu0 %3796
    %3798 = vrot.lane.b32.xlu0 %v3276, 52
    %v3799 = vpop.permute.xlu0 %3798
    %3800 = vrot.lane.b32.xlu0 %v3277, 52
    %v3801 = vpop.permute.xlu0 %3800
    %3802 = vrot.lane.b32.xlu0 %v3278, 52
    %v3803 = vpop.permute.xlu0 %3802
    %3804 = vrot.lane.b32.xlu0 %v3279, 52
    %v3805 = vpop.permute.xlu0 %3804
    %3806 = vrot.lane.b32.xlu0 %v3280, 52
    %v3807 = vpop.permute.xlu0 %3806
    %3808 = vrot.lane.b32.xlu0 %v3281, 52
    %v3809 = vpop.permute.xlu0 %3808
    %3818 = vst.msk [vmem:[#allocation2 + $0x20] sm:$0xf] %vm2325, %v3795
    %3819 = vst.msk [vmem:[#allocation2 + $0x24] sm:$0xf] %vm2325, %v3797
    %3820 = vst.msk [vmem:[#allocation2 + $0x28] sm:$0xf] %vm2325, %v3799
    %3821 = vst.msk [vmem:[#allocation2 + $0x2c] sm:$0xf] %vm2325, %v3801
    %3822 = vst.msk [vmem:[#allocation2 + $0x30] sm:$0xf] %vm2325, %v3803
    %3823 = vst.msk [vmem:[#allocation2 + $0x34] sm:$0xf] %vm2325, %v3805
    %3824 = vst.msk [vmem:[#allocation2 + $0x38] sm:$0xf] %vm2325, %v3807
    %3825 = vst.msk [vmem:[#allocation2 + $0x3c] sm:$0xf] %vm2325, %v3809
    %3834 = vrot.lane.b32.xlu0 %v3282, 56
    %v3835 = vpop.permute.xlu0 %3834
    %3836 = vrot.lane.b32.xlu0 %v3283, 56
    %v3837 = vpop.permute.xlu0 %3836
    %3838 = vrot.lane.b32.xlu0 %v3284, 56
    %v3839 = vpop.permute.xlu0 %3838
    %3840 = vrot.lane.b32.xlu0 %v3285, 56
    %v3841 = vpop.permute.xlu0 %3840
    %3842 = vrot.lane.b32.xlu0 %v3286, 56
    %v3843 = vpop.permute.xlu0 %3842
    %3844 = vrot.lane.b32.xlu0 %v3287, 56
    %v3845 = vpop.permute.xlu0 %3844
    %3846 = vrot.lane.b32.xlu0 %v3288, 56
    %v3847 = vpop.permute.xlu0 %3846
    %3848 = vrot.lane.b32.xlu0 %v3289, 56
    %v3849 = vpop.permute.xlu0 %3848
    %3858 = vst.msk [vmem:[#allocation2 + $0x20] sm:$0xf] %vm2366, %v3835
    %3859 = vst.msk [vmem:[#allocation2 + $0x24] sm:$0xf] %vm2366, %v3837
    %3860 = vst.msk [vmem:[#allocation2 + $0x28] sm:$0xf] %vm2366, %v3839
    %3861 = vst.msk [vmem:[#allocation2 + $0x2c] sm:$0xf] %vm2366, %v3841
    %3862 = vst.msk [vmem:[#allocation2 + $0x30] sm:$0xf] %vm2366, %v3843
    %3863 = vst.msk [vmem:[#allocation2 + $0x34] sm:$0xf] %vm2366, %v3845
    %3864 = vst.msk [vmem:[#allocation2 + $0x38] sm:$0xf] %vm2366, %v3847
    %3865 = vst.msk [vmem:[#allocation2 + $0x3c] sm:$0xf] %vm2366, %v3849
    %3874 = vrot.lane.b32.xlu0 %v3290, 60
    %v3875 = vpop.permute.xlu0 %3874
    %3876 = vrot.lane.b32.xlu0 %v3291, 60
    %v3877 = vpop.permute.xlu0 %3876
    %3878 = vrot.lane.b32.xlu0 %v3292, 60
    %v3879 = vpop.permute.xlu0 %3878
    %3880 = vrot.lane.b32.xlu0 %v3293, 60
    %v3881 = vpop.permute.xlu0 %3880
    %3882 = vrot.lane.b32.xlu0 %v3294, 60
    %v3883 = vpop.permute.xlu0 %3882
    %3884 = vrot.lane.b32.xlu0 %v3295, 60
    %v3885 = vpop.permute.xlu0 %3884
    %3886 = vrot.lane.b32.xlu0 %v3296, 60
    %v3887 = vpop.permute.xlu0 %3886
    %3888 = vrot.lane.b32.xlu0 %v3297, 60
    %v3889 = vpop.permute.xlu0 %3888
    %3898 = vst.msk [vmem:[#allocation2 + $0x20] sm:$0xf] %vm2407, %v3875
    %3899 = vst.msk [vmem:[#allocation2 + $0x24] sm:$0xf] %vm2407, %v3877
    %3900 = vst.msk [vmem:[#allocation2 + $0x28] sm:$0xf] %vm2407, %v3879
    %3901 = vst.msk [vmem:[#allocation2 + $0x2c] sm:$0xf] %vm2407, %v3881
    %3902 = vst.msk [vmem:[#allocation2 + $0x30] sm:$0xf] %vm2407, %v3883
    %3903 = vst.msk [vmem:[#allocation2 + $0x34] sm:$0xf] %vm2407, %v3885
    %3904 = vst.msk [vmem:[#allocation2 + $0x38] sm:$0xf] %vm2407, %v3887
    %3905 = vst.msk [vmem:[#allocation2 + $0x3c] sm:$0xf] %vm2407, %v3889
    %v3906 = vld [vmem:[#allocation2] sm:$0xf]
    %v3907 = vld [vmem:[#allocation2 + $0x4] sm:$0xf]
    %v3908 = vld [vmem:[#allocation2 + $0x8] sm:$0xf]
    %v3909 = vld [vmem:[#allocation2 + $0xc] sm:$0xf]
    %v3910 = vld [vmem:[#allocation2 + $0x10] sm:$0xf]
    %v3911 = vld [vmem:[#allocation2 + $0x14] sm:$0xf]
    %v3912 = vld [vmem:[#allocation2 + $0x18] sm:$0xf]
    %v3913 = vld [vmem:[#allocation2 + $0x1c] sm:$0xf]
    %v3914 = vld [vmem:[#allocation2 + $0x20] sm:$0xf]
    %v3915 = vld [vmem:[#allocation2 + $0x24] sm:$0xf]
    %v3916 = vld [vmem:[#allocation2 + $0x28] sm:$0xf]
    %v3917 = vld [vmem:[#allocation2 + $0x2c] sm:$0xf]
    %v3918 = vld [vmem:[#allocation2 + $0x30] sm:$0xf]
    %v3919 = vld [vmem:[#allocation2 + $0x34] sm:$0xf]
    %v3920 = vld [vmem:[#allocation2 + $0x38] sm:$0xf]
    %v3921 = vld [vmem:[#allocation2 + $0x3c] sm:$0xf]
    %v3922 = vld [vmem:[%s2] sm:$0xf]
    %v3923 = vld [vmem:[%s2 + $0x4] sm:$0xf]
    %v3924 = vld [vmem:[%s2 + $0x8] sm:$0xf]
    %v3925 = vld [vmem:[%s2 + $0xc] sm:$0xf]
    %v3926 = vld [vmem:[%s2 + $0x10] sm:$0xf]
    %v3927 = vld [vmem:[%s2 + $0x14] sm:$0xf]
    %v3928 = vld [vmem:[%s2 + $0x18] sm:$0xf]
    %v3929 = vld [vmem:[%s2 + $0x1c] sm:$0xf]
    %v3930 = vld [vmem:[%s3] sm:$0x1]
    %v3932 = vperm.slane %v3930, 0
    %v3950 = vunpack.c.l.b16 %v3906
    %v3951 = vunpack.c.l.b16 %v3907
    %v3952 = vunpack.c.l.b16 %v3908
    %v3953 = vunpack.c.l.b16 %v3909
    %v3954 = vunpack.c.l.b16 %v3910
    %v3955 = vunpack.c.l.b16 %v3911
    %v3956 = vunpack.c.l.b16 %v3912
    %v3957 = vunpack.c.l.b16 %v3913
    %v3958 = vunpack.c.l.b16 %v3914
    %v3959 = vunpack.c.l.b16 %v3915
    %v3960 = vunpack.c.l.b16 %v3916
    %v3961 = vunpack.c.l.b16 %v3917
    %v3962 = vunpack.c.l.b16 %v3918
    %v3963 = vunpack.c.l.b16 %v3919
    %v3964 = vunpack.c.l.b16 %v3920
    %v3965 = vunpack.c.l.b16 %v3921
    %v3966 = vpack.c.b16 %v3951, %v3950
    %v3967 = vpack.c.b16 %v3953, %v3952
    %v3968 = vpack.c.b16 %v3955, %v3954
    %v3969 = vpack.c.b16 %v3957, %v3956
    %v3970 = vpack.c.b16 %v3959, %v3958
    %v3971 = vpack.c.b16 %v3961, %v3960
    %v3972 = vpack.c.b16 %v3963, %v3962
    %v3973 = vpack.c.b16 %v3965, %v3964
    %v3982 = vunpack.c.l.b16 %v3922
    %v3983 = vunpack.c.l.b16 %v3923
    %v3984 = vunpack.c.l.b16 %v3924
    %v3985 = vunpack.c.l.b16 %v3925
    %v3986 = vunpack.c.l.b16 %v3926
    %v3987 = vunpack.c.l.b16 %v3927
    %v3988 = vunpack.c.l.b16 %v3928
    %v3989 = vunpack.c.l.b16 %v3929
    %v3990 = vpack.c.b16 %v3983, %v3982
    %v3991 = vpack.c.b16 %v3985, %v3984
    %v3992 = vpack.c.b16 %v3987, %v3986
    %v3993 = vpack.c.b16 %v3989, %v3988
    %vm3998 = vcmask 523264
    %v4000 = vsel %vm3998, %v3966, 0
    %v4003 = vsel %vm3998, %v3967, 0
    %v4006 = vsel %vm3998, %v3968, 0
    %v4009 = vsel %vm3998, %v3969, 0
    %v4012 = vsel %vm3998, %v3970, 0
    %v4015 = vsel %vm3998, %v3971, 0
    %v4018 = vsel %vm3998, %v3972, 0
    %v4021 = vsel %vm3998, %v3973, 0
    %4023 = vmatpush.bf16.msra.mxu0 0
    %4024 = vmatpush.bf16.msra.mxu0 0
    %4025 = vmatpush.bf16.msra.mxu0 0
    %4026 = vmatpush.bf16.msra.mxu0 0
    %4027 = vmatpush.bf16.msra.mxu0 %v3993
    %4028 = vmatpush.bf16.msra.mxu0 %v3992
    %4029 = vmatpush.bf16.msra.mxu0 %v3991
    %4030 = vmatpush.bf16.msra.mxu0 %v3990
    %4031 = vmatmul.bf16.gmra.mxu0 %v4000
    %v4032 = vpop.f32.mrf.mxu0
    %v4033 = vadd.f32 %v3932, %v4032
    %v4034 = vpop.f32.mrf.mxu0
    %v4035 = vadd.f32 %v3932, %v4034
    %4036 = vmatmul.bf16.gmra.mxu0 %v4003
    %v4037 = vpop.f32.mrf.mxu0
    %v4038 = vadd.f32 %v3932, %v4037
    %v4039 = vpop.f32.mrf.mxu0
    %v4040 = vadd.f32 %v3932, %v4039
    %4041 = vmatmul.bf16.gmra.mxu0 %v4006
    %v4042 = vpop.f32.mrf.mxu0
    %v4043 = vadd.f32 %v3932, %v4042
    %v4044 = vpop.f32.mrf.mxu0
    %v4045 = vadd.f32 %v3932, %v4044
    %4046 = vmatmul.bf16.gmra.mxu0 %v4009
    %v4047 = vpop.f32.mrf.mxu0
    %v4048 = vadd.f32 %v3932, %v4047
    %v4049 = vpop.f32.mrf.mxu0
    %v4050 = vadd.f32 %v3932, %v4049
    %4051 = vmatmul.bf16.gmra.mxu0 %v4012
    %v4052 = vpop.f32.mrf.mxu0
    %v4053 = vadd.f32 %v3932, %v4052
    %v4054 = vpop.f32.mrf.mxu0
    %v4055 = vadd.f32 %v3932, %v4054
    %4056 = vmatmul.bf16.gmra.mxu0 %v4015
    %v4057 = vpop.f32.mrf.mxu0
    %v4058 = vadd.f32 %v3932, %v4057
    %v4059 = vpop.f32.mrf.mxu0
    %v4060 = vadd.f32 %v3932, %v4059
    %4061 = vmatmul.bf16.gmra.mxu0 %v4018
    %v4062 = vpop.f32.mrf.mxu0
    %v4063 = vadd.f32 %v3932, %v4062
    %v4064 = vpop.f32.mrf.mxu0
    %v4065 = vadd.f32 %v3932, %v4064
    %4066 = vmatmul.bf16.gmra.mxu0 %v4021
    %v4067 = vpop.f32.mrf.mxu0
    %v4068 = vadd.f32 %v3932, %v4067
    %v4069 = vpop.f32.mrf.mxu0
    %v4070 = vadd.f32 %v3932, %v4069
    %4071 = vdwg.mxu0
    %v4072 = vmax.f32 %v4033, 0.0
    %v4073 = vmax.f32 %v4035, 0.0
    %v4074 = vmax.f32 %v4038, 0.0
    %v4075 = vmax.f32 %v4040, 0.0
    %v4076 = vmax.f32 %v4043, 0.0
    %v4077 = vmax.f32 %v4045, 0.0
    %v4078 = vmax.f32 %v4048, 0.0
    %v4079 = vmax.f32 %v4050, 0.0
    %v4080 = vmax.f32 %v4053, 0.0
    %v4081 = vmax.f32 %v4055, 0.0
    %v4082 = vmax.f32 %v4058, 0.0
    %v4083 = vmax.f32 %v4060, 0.0
    %v4084 = vmax.f32 %v4063, 0.0
    %v4085 = vmax.f32 %v4065, 0.0
    %v4086 = vmax.f32 %v4068, 0.0
    %v4087 = vmax.f32 %v4070, 0.0
    %v4088 = vpack.c.bf16 %v4072, %v4072
    %v4089 = vpack.c.bf16 %v4073, %v4073
    %v4090 = vpack.c.bf16 %v4074, %v4074
    %v4091 = vpack.c.bf16 %v4075, %v4075
    %v4092 = vpack.c.bf16 %v4076, %v4076
    %v4093 = vpack.c.bf16 %v4077, %v4077
    %v4094 = vpack.c.bf16 %v4078, %v4078
    %v4095 = vpack.c.bf16 %v4079, %v4079
    %v4096 = vpack.c.bf16 %v4080, %v4080
    %v4097 = vpack.c.bf16 %v4081, %v4081
    %v4098 = vpack.c.bf16 %v4082, %v4082
    %v4099 = vpack.c.bf16 %v4083, %v4083
    %v4100 = vpack.c.bf16 %v4084, %v4084
    %v4101 = vpack.c.bf16 %v4085, %v4085
    %v4102 = vpack.c.bf16 %v4086, %v4086
    %v4103 = vpack.c.bf16 %v4087, %v4087
    %v4104 = vld [vmem:[%s4] sm:$0xf]
    %v4105 = vld [vmem:[%s4 + $0x4] sm:$0xf]
    %v4106 = vld [vmem:[%s4 + $0x8] sm:$0xf]
    %v4107 = vld [vmem:[%s4 + $0xc] sm:$0xf]
    %v4108 = vld [vmem:[%s4 + $0x10] sm:$0xf]
    %v4109 = vld [vmem:[%s4 + $0x14] sm:$0xf]
    %v4110 = vld [vmem:[%s4 + $0x18] sm:$0xf]
    %v4111 = vld [vmem:[%s4 + $0x1c] sm:$0xf]
    %v4112 = vld [vmem:[%s4 + $0x20] sm:$0xf]
    %v4113 = vld [vmem:[%s4 + $0x24] sm:$0xf]
    %v4114 = vld [vmem:[%s4 + $0x28] sm:$0xf]
    %v4115 = vld [vmem:[%s4 + $0x2c] sm:$0xf]
    %v4116 = vld [vmem:[%s4 + $0x30] sm:$0xf]
    %v4117 = vld [vmem:[%s4 + $0x34] sm:$0xf]
    %v4118 = vld [vmem:[%s4 + $0x38] sm:$0xf]
    %v4119 = vld [vmem:[%s4 + $0x3c] sm:$0xf]
    %v4120 = vld [vmem:[%s4 + $0x40] sm:$0xf]
    %v4121 = vld [vmem:[%s4 + $0x44] sm:$0xf]
    %v4122 = vld [vmem:[%s4 + $0x48] sm:$0xf]
    %v4123 = vld [vmem:[%s4 + $0x4c] sm:$0xf]
    %v4124 = vld [vmem:[%s4 + $0x50] sm:$0xf]
    %v4125 = vld [vmem:[%s4 + $0x54] sm:$0xf]
    %v4126 = vld [vmem:[%s4 + $0x58] sm:$0xf]
    %v4127 = vld [vmem:[%s4 + $0x5c] sm:$0xf]
    %v4128 = vld [vmem:[%s4 + $0x60] sm:$0xf]
    %v4129 = vld [vmem:[%s4 + $0x64] sm:$0xf]
    %v4130 = vld [vmem:[%s4 + $0x68] sm:$0xf]
    %v4131 = vld [vmem:[%s4 + $0x6c] sm:$0xf]
    %v4132 = vld [vmem:[%s4 + $0x70] sm:$0xf]
    %v4133 = vld [vmem:[%s4 + $0x74] sm:$0xf]
    %v4134 = vld [vmem:[%s4 + $0x78] sm:$0xf]
    %v4135 = vld [vmem:[%s4 + $0x7c] sm:$0xf]
    %v4168 = vunpack.c.l.b16 %v4104
    %v4169 = vunpack.c.l.b16 %v4105
    %v4170 = vunpack.c.l.b16 %v4106
    %v4171 = vunpack.c.l.b16 %v4107
    %v4172 = vunpack.c.l.b16 %v4108
    %v4173 = vunpack.c.l.b16 %v4109
    %v4174 = vunpack.c.l.b16 %v4110
    %v4175 = vunpack.c.l.b16 %v4111
    %v4176 = vunpack.c.l.b16 %v4112
    %v4177 = vunpack.c.l.b16 %v4113
    %v4178 = vunpack.c.l.b16 %v4114
    %v4179 = vunpack.c.l.b16 %v4115
    %v4180 = vunpack.c.l.b16 %v4116
    %v4181 = vunpack.c.l.b16 %v4117
    %v4182 = vunpack.c.l.b16 %v4118
    %v4183 = vunpack.c.l.b16 %v4119
    %v4184 = vunpack.c.l.b16 %v4120
    %v4185 = vunpack.c.l.b16 %v4121
    %v4186 = vunpack.c.l.b16 %v4122
    %v4187 = vunpack.c.l.b16 %v4123
    %v4188 = vunpack.c.l.b16 %v4124
    %v4189 = vunpack.c.l.b16 %v4125
    %v4190 = vunpack.c.l.b16 %v4126
    %v4191 = vunpack.c.l.b16 %v4127
    %v4192 = vunpack.c.l.b16 %v4128
    %v4193 = vunpack.c.l.b16 %v4129
    %v4194 = vunpack.c.l.b16 %v4130
    %v4195 = vunpack.c.l.b16 %v4131
    %v4196 = vunpack.c.l.b16 %v4132
    %v4197 = vunpack.c.l.b16 %v4133
    %v4198 = vunpack.c.l.b16 %v4134
    %v4199 = vunpack.c.l.b16 %v4135
    %v4200 = vpack.c.b16 %v4169, %v4168
    %v4201 = vpack.c.b16 %v4171, %v4170
    %v4202 = vpack.c.b16 %v4173, %v4172
    %v4203 = vpack.c.b16 %v4175, %v4174
    %v4204 = vpack.c.b16 %v4177, %v4176
    %v4205 = vpack.c.b16 %v4179, %v4178
    %v4206 = vpack.c.b16 %v4181, %v4180
    %v4207 = vpack.c.b16 %v4183, %v4182
    %v4208 = vpack.c.b16 %v4185, %v4184
    %v4209 = vpack.c.b16 %v4187, %v4186
    %v4210 = vpack.c.b16 %v4189, %v4188
    %v4211 = vpack.c.b16 %v4191, %v4190
    %v4212 = vpack.c.b16 %v4193, %v4192
    %v4213 = vpack.c.b16 %v4195, %v4194
    %v4214 = vpack.c.b16 %v4197, %v4196
    %v4215 = vpack.c.b16 %v4199, %v4198
    %v4224 = vunpack.c.l.b16 %v4088
    %v4225 = vunpack.c.l.b16 %v4089
    %v4226 = vunpack.c.l.b16 %v4090
    %v4227 = vunpack.c.l.b16 %v4091
    %v4228 = vunpack.c.l.b16 %v4092
    %v4229 = vunpack.c.l.b16 %v4093
    %v4230 = vunpack.c.l.b16 %v4094
    %v4231 = vunpack.c.l.b16 %v4095
    %v4232 = vpack.c.b16 %v4225, %v4224
    %v4233 = vpack.c.b16 %v4227, %v4226
    %v4234 = vpack.c.b16 %v4229, %v4228
    %v4235 = vpack.c.b16 %v4231, %v4230
    %v4241 = vsel %vm3998, %v4200, 0
    %v4244 = vsel %vm3998, %v4201, 0
    %v4247 = vsel %vm3998, %v4202, 0
    %v4250 = vsel %vm3998, %v4203, 0
    %v4253 = vsel %vm3998, %v4204, 0
    %v4256 = vsel %vm3998, %v4205, 0
    %v4259 = vsel %vm3998, %v4206, 0
    %v4262 = vsel %vm3998, %v4207, 0
    %v4265 = vsel %vm3998, %v4208, 0
    %v4268 = vsel %vm3998, %v4209, 0
    %v4271 = vsel %vm3998, %v4210, 0
    %v4274 = vsel %vm3998, %v4211, 0
    %v4277 = vsel %vm3998, %v4212, 0
    %v4280 = vsel %vm3998, %v4213, 0
    %v4283 = vsel %vm3998, %v4214, 0
    %v4286 = vsel %vm3998, %v4215, 0
    %4288 = vmatpush.bf16.msra.mxu0 0
    %4289 = vmatpush.bf16.msra.mxu0 0
    %4290 = vmatpush.bf16.msra.mxu0 0
    %4291 = vmatpush.bf16.msra.mxu0 0
    %4292 = vmatpush.bf16.msra.mxu0 %v4235
    %4293 = vmatpush.bf16.msra.mxu0 %v4234
    %4294 = vmatpush.bf16.msra.mxu0 %v4233
    %4295 = vmatpush.bf16.msra.mxu0 %v4232
    %4296 = vmatmul.bf16.gmra.mxu0 %v4241
    %v4297 = vpop.f32.mrf.mxu0
    %v4298 = vadd.f32 0.0, %v4297
    %v4299 = vpop.f32.mrf.mxu0
    %v4300 = vadd.f32 0.0, %v4299
    %4301 = vmatmul.bf16.gmra.mxu0 %v4244
    %v4302 = vpop.f32.mrf.mxu0
    %v4303 = vadd.f32 0.0, %v4302
    %v4304 = vpop.f32.mrf.mxu0
    %v4305 = vadd.f32 0.0, %v4304
    %4306 = vmatmul.bf16.gmra.mxu0 %v4247
    %v4307 = vpop.f32.mrf.mxu0
    %v4308 = vadd.f32 0.0, %v4307
    %v4309 = vpop.f32.mrf.mxu0
    %v4310 = vadd.f32 0.0, %v4309
    %4311 = vmatmul.bf16.gmra.mxu0 %v4250
    %v4312 = vpop.f32.mrf.mxu0
    %v4313 = vadd.f32 0.0, %v4312
    %v4314 = vpop.f32.mrf.mxu0
    %v4315 = vadd.f32 0.0, %v4314
    %4316 = vmatmul.bf16.gmra.mxu0 %v4253
    %v4317 = vpop.f32.mrf.mxu0
    %v4318 = vadd.f32 0.0, %v4317
    %v4319 = vpop.f32.mrf.mxu0
    %v4320 = vadd.f32 0.0, %v4319
    %4321 = vmatmul.bf16.gmra.mxu0 %v4256
    %v4322 = vpop.f32.mrf.mxu0
    %v4323 = vadd.f32 0.0, %v4322
    %v4324 = vpop.f32.mrf.mxu0
    %v4325 = vadd.f32 0.0, %v4324
    %4326 = vmatmul.bf16.gmra.mxu0 %v4259
    %v4327 = vpop.f32.mrf.mxu0
    %v4328 = vadd.f32 0.0, %v4327
    %v4329 = vpop.f32.mrf.mxu0
    %v4330 = vadd.f32 0.0, %v4329
    %4331 = vmatmul.bf16.gmra.mxu0 %v4262
    %v4332 = vpop.f32.mrf.mxu0
    %v4333 = vadd.f32 0.0, %v4332
    %v4334 = vpop.f32.mrf.mxu0
    %v4335 = vadd.f32 0.0, %v4334
    %4336 = vmatmul.bf16.gmra.mxu0 %v4265
    %v4337 = vpop.f32.mrf.mxu0
    %v4338 = vadd.f32 0.0, %v4337
    %v4339 = vpop.f32.mrf.mxu0
    %v4340 = vadd.f32 0.0, %v4339
    %4341 = vmatmul.bf16.gmra.mxu0 %v4268
    %v4342 = vpop.f32.mrf.mxu0
    %v4343 = vadd.f32 0.0, %v4342
    %v4344 = vpop.f32.mrf.mxu0
    %v4345 = vadd.f32 0.0, %v4344
    %4346 = vmatmul.bf16.gmra.mxu0 %v4271
    %v4347 = vpop.f32.mrf.mxu0
    %v4348 = vadd.f32 0.0, %v4347
    %v4349 = vpop.f32.mrf.mxu0
    %v4350 = vadd.f32 0.0, %v4349
    %4351 = vmatmul.bf16.gmra.mxu0 %v4274
    %v4352 = vpop.f32.mrf.mxu0
    %v4353 = vadd.f32 0.0, %v4352
    %v4354 = vpop.f32.mrf.mxu0
    %v4355 = vadd.f32 0.0, %v4354
    %4356 = vmatmul.bf16.gmra.mxu0 %v4277
    %v4357 = vpop.f32.mrf.mxu0
    %v4358 = vadd.f32 0.0, %v4357
    %v4359 = vpop.f32.mrf.mxu0
    %v4360 = vadd.f32 0.0, %v4359
    %4361 = vmatmul.bf16.gmra.mxu0 %v4280
    %v4362 = vpop.f32.mrf.mxu0
    %v4363 = vadd.f32 0.0, %v4362
    %v4364 = vpop.f32.mrf.mxu0
    %v4365 = vadd.f32 0.0, %v4364
    %4366 = vmatmul.bf16.gmra.mxu0 %v4283
    %v4367 = vpop.f32.mrf.mxu0
    %v4368 = vadd.f32 0.0, %v4367
    %v4369 = vpop.f32.mrf.mxu0
    %v4370 = vadd.f32 0.0, %v4369
    %4371 = vmatmul.bf16.gmra.mxu0 %v4286
    %v4372 = vpop.f32.mrf.mxu0
    %v4373 = vadd.f32 0.0, %v4372
    %v4374 = vpop.f32.mrf.mxu0
    %v4375 = vadd.f32 0.0, %v4374
    %4376 = vdwg.mxu0
    %v4377 = vpack.c.bf16 %v4298, %v4298
    %v4378 = vpack.c.bf16 %v4300, %v4300
    %v4379 = vpack.c.bf16 %v4303, %v4303
    %v4380 = vpack.c.bf16 %v4305, %v4305
    %v4381 = vpack.c.bf16 %v4308, %v4308
    %v4382 = vpack.c.bf16 %v4310, %v4310
    %v4383 = vpack.c.bf16 %v4313, %v4313
    %v4384 = vpack.c.bf16 %v4315, %v4315
    %v4385 = vpack.c.bf16 %v4318, %v4318
    %v4386 = vpack.c.bf16 %v4320, %v4320
    %v4387 = vpack.c.bf16 %v4323, %v4323
    %v4388 = vpack.c.bf16 %v4325, %v4325
    %v4389 = vpack.c.bf16 %v4328, %v4328
    %v4390 = vpack.c.bf16 %v4330, %v4330
    %v4391 = vpack.c.bf16 %v4333, %v4333
    %v4392 = vpack.c.bf16 %v4335, %v4335
    %v4393 = vpack.c.bf16 %v4338, %v4338
    %v4394 = vpack.c.bf16 %v4340, %v4340
    %v4395 = vpack.c.bf16 %v4343, %v4343
    %v4396 = vpack.c.bf16 %v4345, %v4345
    %v4397 = vpack.c.bf16 %v4348, %v4348
    %v4398 = vpack.c.bf16 %v4350, %v4350
    %v4399 = vpack.c.bf16 %v4353, %v4353
    %v4400 = vpack.c.bf16 %v4355, %v4355
    %v4401 = vpack.c.bf16 %v4358, %v4358
    %v4402 = vpack.c.bf16 %v4360, %v4360
    %v4403 = vpack.c.bf16 %v4363, %v4363
    %v4404 = vpack.c.bf16 %v4365, %v4365
    %v4405 = vpack.c.bf16 %v4368, %v4368
    %v4406 = vpack.c.bf16 %v4370, %v4370
    %v4407 = vpack.c.bf16 %v4373, %v4373
    %v4408 = vpack.c.bf16 %v4375, %v4375
    %vm4409 = vcmask 125952
    %4410 = vst.msk [vmem:[#allocation3] sm:$0xf] %vm4409, %v4377
    %4411 = vst.msk [vmem:[#allocation3 + $0x8] sm:$0xf] %vm4409, %v4378
    %4414 = vrot.lane.b32.xlu0 %v4379, 16
    %v4415 = vpop.permute.xlu0 %4414
    %4416 = vrot.lane.b32.xlu0 %v4380, 16
    %v4417 = vpop.permute.xlu0 %4416
    %vm4420 = vcmask 257152
    %4421 = vst.msk [vmem:[#allocation3] sm:$0xf] %vm4420, %v4415
    %4422 = vst.msk [vmem:[#allocation3 + $0x8] sm:$0xf] %vm4420, %v4417
    %4425 = vrot.lane.b32.xlu0 %v4381, 32
    %v4426 = vpop.permute.xlu0 %4425
    %4427 = vrot.lane.b32.xlu0 %v4382, 32
    %v4428 = vpop.permute.xlu0 %4427
    %vm4431 = vcmask 388352
    %4432 = vst.msk [vmem:[#allocation3] sm:$0xf] %vm4431, %v4426
    %4433 = vst.msk [vmem:[#allocation3 + $0x8] sm:$0xf] %vm4431, %v4428
    %4436 = vrot.lane.b32.xlu0 %v4383, 48
    %v4437 = vpop.permute.xlu0 %4436
    %4438 = vrot.lane.b32.xlu0 %v4384, 48
    %v4439 = vpop.permute.xlu0 %4438
    %vm4442 = vcmask 519552
    %4443 = vst.msk [vmem:[#allocation3] sm:$0xf] %vm4442, %v4437
    %4444 = vst.msk [vmem:[#allocation3 + $0x8] sm:$0xf] %vm4442, %v4439
    %4447 = vrot.lane.b32.xlu0 %v4385, 64
    %v4448 = vpop.permute.xlu0 %4447
    %4449 = vrot.lane.b32.xlu0 %v4386, 64
    %v4450 = vpop.permute.xlu0 %4449
    %vm4453 = vcmask 650752
    %4454 = vst.msk [vmem:[#allocation3] sm:$0xf] %vm4453, %v4448
    %4455 = vst.msk [vmem:[#allocation3 + $0x8] sm:$0xf] %vm4453, %v4450
    %4458 = vrot.lane.b32.xlu0 %v4387, 80
    %v4459 = vpop.permute.xlu0 %4458
    %4460 = vrot.lane.b32.xlu0 %v4388, 80
    %v4461 = vpop.permute.xlu0 %4460
    %vm4464 = vcmask 781952
    %4465 = vst.msk [vmem:[#allocation3] sm:$0xf] %vm4464, %v4459
    %4466 = vst.msk [vmem:[#allocation3 + $0x8] sm:$0xf] %vm4464, %v4461
    %4469 = vrot.lane.b32.xlu0 %v4389, 96
    %v4470 = vpop.permute.xlu0 %4469
    %4471 = vrot.lane.b32.xlu0 %v4390, 96
    %v4472 = vpop.permute.xlu0 %4471
    %vm4475 = vcmask 913152
    %4476 = vst.msk [vmem:[#allocation3] sm:$0xf] %vm4475, %v4470
    %4477 = vst.msk [vmem:[#allocation3 + $0x8] sm:$0xf] %vm4475, %v4472
    %4480 = vrot.lane.b32.xlu0 %v4391, 112
    %v4481 = vpop.permute.xlu0 %4480
    %4482 = vrot.lane.b32.xlu0 %v4392, 112
    %v4483 = vpop.permute.xlu0 %4482
    %vm4486 = vcmask 1044352
    %4487 = vst.msk [vmem:[#allocation3] sm:$0xf] %vm4486, %v4481
    %4488 = vst.msk [vmem:[#allocation3 + $0x8] sm:$0xf] %vm4486, %v4483
    %4489 = vst.msk [vmem:[#allocation3 + $0x4] sm:$0xf] %vm4409, %v4393
    %4490 = vst.msk [vmem:[#allocation3 + $0xc] sm:$0xf] %vm4409, %v4394
    %4493 = vrot.lane.b32.xlu0 %v4395, 16
    %v4494 = vpop.permute.xlu0 %4493
    %4495 = vrot.lane.b32.xlu0 %v4396, 16
    %v4496 = vpop.permute.xlu0 %4495
    %4499 = vst.msk [vmem:[#allocation3 + $0x4] sm:$0xf] %vm4420, %v4494
    %4500 = vst.msk [vmem:[#allocation3 + $0xc] sm:$0xf] %vm4420, %v4496
    %4503 = vrot.lane.b32.xlu0 %v4397, 32
    %v4504 = vpop.permute.xlu0 %4503
    %4505 = vrot.lane.b32.xlu0 %v4398, 32
    %v4506 = vpop.permute.xlu0 %4505
    %4509 = vst.msk [vmem:[#allocation3 + $0x4] sm:$0xf] %vm4431, %v4504
    %4510 = vst.msk [vmem:[#allocation3 + $0xc] sm:$0xf] %vm4431, %v4506
    %4513 = vrot.lane.b32.xlu0 %v4399, 48
    %v4514 = vpop.permute.xlu0 %4513
    %4515 = vrot.lane.b32.xlu0 %v4400, 48
    %v4516 = vpop.permute.xlu0 %4515
    %4519 = vst.msk [vmem:[#allocation3 + $0x4] sm:$0xf] %vm4442, %v4514
    %4520 = vst.msk [vmem:[#allocation3 + $0xc] sm:$0xf] %vm4442, %v4516
    %4523 = vrot.lane.b32.xlu0 %v4401, 64
    %v4524 = vpop.permute.xlu0 %4523
    %4525 = vrot.lane.b32.xlu0 %v4402, 64
    %v4526 = vpop.permute.xlu0 %4525
    %4529 = vst.msk [vmem:[#allocation3 + $0x4] sm:$0xf] %vm4453, %v4524
    %4530 = vst.msk [vmem:[#allocation3 + $0xc] sm:$0xf] %vm4453, %v4526
    %4533 = vrot.lane.b32.xlu0 %v4403, 80
    %v4534 = vpop.permute.xlu0 %4533
    %4535 = vrot.lane.b32.xlu0 %v4404, 80
    %v4536 = vpop.permute.xlu0 %4535
    %4539 = vst.msk [vmem:[#allocation3 + $0x4] sm:$0xf] %vm4464, %v4534
    %4540 = vst.msk [vmem:[#allocation3 + $0xc] sm:$0xf] %vm4464, %v4536
    %4543 = vrot.lane.b32.xlu0 %v4405, 96
    %v4544 = vpop.permute.xlu0 %4543
    %4545 = vrot.lane.b32.xlu0 %v4406, 96
    %v4546 = vpop.permute.xlu0 %4545
    %4549 = vst.msk [vmem:[#allocation3 + $0x4] sm:$0xf] %vm4475, %v4544
    %4550 = vst.msk [vmem:[#allocation3 + $0xc] sm:$0xf] %vm4475, %v4546
    %4553 = vrot.lane.b32.xlu0 %v4407, 112
    %v4554 = vpop.permute.xlu0 %4553
    %4555 = vrot.lane.b32.xlu0 %v4408, 112
    %v4556 = vpop.permute.xlu0 %4555
    %4559 = vst.msk [vmem:[#allocation3 + $0x4] sm:$0xf] %vm4486, %v4554
    %4560 = vst.msk [vmem:[#allocation3 + $0xc] sm:$0xf] %vm4486, %v4556
    %v4569 = vunpack.c.l.b16 %v4096
    %v4570 = vunpack.c.l.b16 %v4097
    %v4571 = vunpack.c.l.b16 %v4098
    %v4572 = vunpack.c.l.b16 %v4099
    %v4573 = vunpack.c.l.b16 %v4100
    %v4574 = vunpack.c.l.b16 %v4101
    %v4575 = vunpack.c.l.b16 %v4102
    %v4576 = vunpack.c.l.b16 %v4103
    %v4577 = vpack.c.b16 %v4570, %v4569
    %v4578 = vpack.c.b16 %v4572, %v4571
    %v4579 = vpack.c.b16 %v4574, %v4573
    %v4580 = vpack.c.b16 %v4576, %v4575
    %4585 = vmatpush.bf16.msra.mxu0 0
    %4586 = vmatpush.bf16.msra.mxu0 0
    %4587 = vmatpush.bf16.msra.mxu0 0
    %4588 = vmatpush.bf16.msra.mxu0 0
    %4589 = vmatpush.bf16.msra.mxu0 %v4580
    %4590 = vmatpush.bf16.msra.mxu0 %v4579
    %4591 = vmatpush.bf16.msra.mxu0 %v4578
    %4592 = vmatpush.bf16.msra.mxu0 %v4577
    %4593 = vmatmul.bf16.gmra.mxu0 %v4241
    %v4594 = vpop.f32.mrf.mxu0
    %v4595 = vadd.f32 0.0, %v4594
    %v4596 = vpop.f32.mrf.mxu0
    %v4597 = vadd.f32 0.0, %v4596
    %4598 = vmatmul.bf16.gmra.mxu0 %v4244
    %v4599 = vpop.f32.mrf.mxu0
    %v4600 = vadd.f32 0.0, %v4599
    %v4601 = vpop.f32.mrf.mxu0
    %v4602 = vadd.f32 0.0, %v4601
    %4603 = vmatmul.bf16.gmra.mxu0 %v4247
    %v4604 = vpop.f32.mrf.mxu0
    %v4605 = vadd.f32 0.0, %v4604
    %v4606 = vpop.f32.mrf.mxu0
    %v4607 = vadd.f32 0.0, %v4606
    %4608 = vmatmul.bf16.gmra.mxu0 %v4250
    %v4609 = vpop.f32.mrf.mxu0
    %v4610 = vadd.f32 0.0, %v4609
    %v4611 = vpop.f32.mrf.mxu0
    %v4612 = vadd.f32 0.0, %v4611
    %4613 = vmatmul.bf16.gmra.mxu0 %v4253
    %v4614 = vpop.f32.mrf.mxu0
    %v4615 = vadd.f32 0.0, %v4614
    %v4616 = vpop.f32.mrf.mxu0
    %v4617 = vadd.f32 0.0, %v4616
    %4618 = vmatmul.bf16.gmra.mxu0 %v4256
    %v4619 = vpop.f32.mrf.mxu0
    %v4620 = vadd.f32 0.0, %v4619
    %v4621 = vpop.f32.mrf.mxu0
    %v4622 = vadd.f32 0.0, %v4621
    %4623 = vmatmul.bf16.gmra.mxu0 %v4259
    %v4624 = vpop.f32.mrf.mxu0
    %v4625 = vadd.f32 0.0, %v4624
    %v4626 = vpop.f32.mrf.mxu0
    %v4627 = vadd.f32 0.0, %v4626
    %4628 = vmatmul.bf16.gmra.mxu0 %v4262
    %v4629 = vpop.f32.mrf.mxu0
    %v4630 = vadd.f32 0.0, %v4629
    %v4631 = vpop.f32.mrf.mxu0
    %v4632 = vadd.f32 0.0, %v4631
    %4633 = vmatmul.bf16.gmra.mxu0 %v4265
    %v4634 = vpop.f32.mrf.mxu0
    %v4635 = vadd.f32 0.0, %v4634
    %v4636 = vpop.f32.mrf.mxu0
    %v4637 = vadd.f32 0.0, %v4636
    %4638 = vmatmul.bf16.gmra.mxu0 %v4268
    %v4639 = vpop.f32.mrf.mxu0
    %v4640 = vadd.f32 0.0, %v4639
    %v4641 = vpop.f32.mrf.mxu0
    %v4642 = vadd.f32 0.0, %v4641
    %4643 = vmatmul.bf16.gmra.mxu0 %v4271
    %v4644 = vpop.f32.mrf.mxu0
    %v4645 = vadd.f32 0.0, %v4644
    %v4646 = vpop.f32.mrf.mxu0
    %v4647 = vadd.f32 0.0, %v4646
    %4648 = vmatmul.bf16.gmra.mxu0 %v4274
    %v4649 = vpop.f32.mrf.mxu0
    %v4650 = vadd.f32 0.0, %v4649
    %v4651 = vpop.f32.mrf.mxu0
    %v4652 = vadd.f32 0.0, %v4651
    %4653 = vmatmul.bf16.gmra.mxu0 %v4277
    %v4654 = vpop.f32.mrf.mxu0
    %v4655 = vadd.f32 0.0, %v4654
    %v4656 = vpop.f32.mrf.mxu0
    %v4657 = vadd.f32 0.0, %v4656
    %4658 = vmatmul.bf16.gmra.mxu0 %v4280
    %v4659 = vpop.f32.mrf.mxu0
    %v4660 = vadd.f32 0.0, %v4659
    %v4661 = vpop.f32.mrf.mxu0
    %v4662 = vadd.f32 0.0, %v4661
    %4663 = vmatmul.bf16.gmra.mxu0 %v4283
    %v4664 = vpop.f32.mrf.mxu0
    %v4665 = vadd.f32 0.0, %v4664
    %v4666 = vpop.f32.mrf.mxu0
    %v4667 = vadd.f32 0.0, %v4666
    %4668 = vmatmul.bf16.gmra.mxu0 %v4286
    %v4669 = vpop.f32.mrf.mxu0
    %v4670 = vadd.f32 0.0, %v4669
    %v4671 = vpop.f32.mrf.mxu0
    %v4672 = vadd.f32 0.0, %v4671
    %4673 = vdwg.mxu0
    %v4674 = vpack.c.bf16 %v4595, %v4595
    %v4675 = vpack.c.bf16 %v4597, %v4597
    %v4676 = vpack.c.bf16 %v4600, %v4600
    %v4677 = vpack.c.bf16 %v4602, %v4602
    %v4678 = vpack.c.bf16 %v4605, %v4605
    %v4679 = vpack.c.bf16 %v4607, %v4607
    %v4680 = vpack.c.bf16 %v4610, %v4610
    %v4681 = vpack.c.bf16 %v4612, %v4612
    %v4682 = vpack.c.bf16 %v4615, %v4615
    %v4683 = vpack.c.bf16 %v4617, %v4617
    %v4684 = vpack.c.bf16 %v4620, %v4620
    %v4685 = vpack.c.bf16 %v4622, %v4622
    %v4686 = vpack.c.bf16 %v4625, %v4625
    %v4687 = vpack.c.bf16 %v4627, %v4627
    %v4688 = vpack.c.bf16 %v4630, %v4630
    %v4689 = vpack.c.bf16 %v4632, %v4632
    %v4690 = vpack.c.bf16 %v4635, %v4635
    %v4691 = vpack.c.bf16 %v4637, %v4637
    %v4692 = vpack.c.bf16 %v4640, %v4640
    %v4693 = vpack.c.bf16 %v4642, %v4642
    %v4694 = vpack.c.bf16 %v4645, %v4645
    %v4695 = vpack.c.bf16 %v4647, %v4647
    %v4696 = vpack.c.bf16 %v4650, %v4650
    %v4697 = vpack.c.bf16 %v4652, %v4652
    %v4698 = vpack.c.bf16 %v4655, %v4655
    %v4699 = vpack.c.bf16 %v4657, %v4657
    %v4700 = vpack.c.bf16 %v4660, %v4660
    %v4701 = vpack.c.bf16 %v4662, %v4662
    %v4702 = vpack.c.bf16 %v4665, %v4665
    %v4703 = vpack.c.bf16 %v4667, %v4667
    %v4704 = vpack.c.bf16 %v4670, %v4670
    %v4705 = vpack.c.bf16 %v4672, %v4672
    %4706 = vst.msk [vmem:[#allocation3 + $0x10] sm:$0xf] %vm4409, %v4674
    %4707 = vst.msk [vmem:[#allocation3 + $0x18] sm:$0xf] %vm4409, %v4675
    %4710 = vrot.lane.b32.xlu0 %v4676, 16
    %v4711 = vpop.permute.xlu0 %4710
    %4712 = vrot.lane.b32.xlu0 %v4677, 16
    %v4713 = vpop.permute.xlu0 %4712
    %4716 = vst.msk [vmem:[#allocation3 + $0x10] sm:$0xf] %vm4420, %v4711
    %4717 = vst.msk [vmem:[#allocation3 + $0x18] sm:$0xf] %vm4420, %v4713
    %4720 = vrot.lane.b32.xlu0 %v4678, 32
    %v4721 = vpop.permute.xlu0 %4720
    %4722 = vrot.lane.b32.xlu0 %v4679, 32
    %v4723 = vpop.permute.xlu0 %4722
    %4726 = vst.msk [vmem:[#allocation3 + $0x10] sm:$0xf] %vm4431, %v4721
    %4727 = vst.msk [vmem:[#allocation3 + $0x18] sm:$0xf] %vm4431, %v4723
    %4730 = vrot.lane.b32.xlu0 %v4680, 48
    %v4731 = vpop.permute.xlu0 %4730
    %4732 = vrot.lane.b32.xlu0 %v4681, 48
    %v4733 = vpop.permute.xlu0 %4732
    %4736 = vst.msk [vmem:[#allocation3 + $0x10] sm:$0xf] %vm4442, %v4731
    %4737 = vst.msk [vmem:[#allocation3 + $0x18] sm:$0xf] %vm4442, %v4733
    %4740 = vrot.lane.b32.xlu0 %v4682, 64
    %v4741 = vpop.permute.xlu0 %4740
    %4742 = vrot.lane.b32.xlu0 %v4683, 64
    %v4743 = vpop.permute.xlu0 %4742
    %4746 = vst.msk [vmem:[#allocation3 + $0x10] sm:$0xf] %vm4453, %v4741
    %4747 = vst.msk [vmem:[#allocation3 + $0x18] sm:$0xf] %vm4453, %v4743
    %4750 = vrot.lane.b32.xlu0 %v4684, 80
    %v4751 = vpop.permute.xlu0 %4750
    %4752 = vrot.lane.b32.xlu0 %v4685, 80
    %v4753 = vpop.permute.xlu0 %4752
    %4756 = vst.msk [vmem:[#allocation3 + $0x10] sm:$0xf] %vm4464, %v4751
    %4757 = vst.msk [vmem:[#allocation3 + $0x18] sm:$0xf] %vm4464, %v4753
    %4760 = vrot.lane.b32.xlu0 %v4686, 96
    %v4761 = vpop.permute.xlu0 %4760
    %4762 = vrot.lane.b32.xlu0 %v4687, 96
    %v4763 = vpop.permute.xlu0 %4762
    %4766 = vst.msk [vmem:[#allocation3 + $0x10] sm:$0xf] %vm4475, %v4761
    %4767 = vst.msk [vmem:[#allocation3 + $0x18] sm:$0xf] %vm4475, %v4763
    %4770 = vrot.lane.b32.xlu0 %v4688, 112
    %v4771 = vpop.permute.xlu0 %4770
    %4772 = vrot.lane.b32.xlu0 %v4689, 112
    %v4773 = vpop.permute.xlu0 %4772
    %4776 = vst.msk [vmem:[#allocation3 + $0x10] sm:$0xf] %vm4486, %v4771
    %4777 = vst.msk [vmem:[#allocation3 + $0x18] sm:$0xf] %vm4486, %v4773
    %4778 = vst.msk [vmem:[#allocation3 + $0x14] sm:$0xf] %vm4409, %v4690
    %4779 = vst.msk [vmem:[#allocation3 + $0x1c] sm:$0xf] %vm4409, %v4691
    %4782 = vrot.lane.b32.xlu0 %v4692, 16
    %v4783 = vpop.permute.xlu0 %4782
    %4784 = vrot.lane.b32.xlu0 %v4693, 16
    %v4785 = vpop.permute.xlu0 %4784
    %4788 = vst.msk [vmem:[#allocation3 + $0x14] sm:$0xf] %vm4420, %v4783
    %4789 = vst.msk [vmem:[#allocation3 + $0x1c] sm:$0xf] %vm4420, %v4785
    %4792 = vrot.lane.b32.xlu0 %v4694, 32
    %v4793 = vpop.permute.xlu0 %4792
    %4794 = vrot.lane.b32.xlu0 %v4695, 32
    %v4795 = vpop.permute.xlu0 %4794
    %4798 = vst.msk [vmem:[#allocation3 + $0x14] sm:$0xf] %vm4431, %v4793
    %4799 = vst.msk [vmem:[#allocation3 + $0x1c] sm:$0xf] %vm4431, %v4795
    %4802 = vrot.lane.b32.xlu0 %v4696, 48
    %v4803 = vpop.permute.xlu0 %4802
    %4804 = vrot.lane.b32.xlu0 %v4697, 48
    %v4805 = vpop.permute.xlu0 %4804
    %4808 = vst.msk [vmem:[#allocation3 + $0x14] sm:$0xf] %vm4442, %v4803
    %4809 = vst.msk [vmem:[#allocation3 + $0x1c] sm:$0xf] %vm4442, %v4805
    %4812 = vrot.lane.b32.xlu0 %v4698, 64
    %v4813 = vpop.permute.xlu0 %4812
    %4814 = vrot.lane.b32.xlu0 %v4699, 64
    %v4815 = vpop.permute.xlu0 %4814
    %4818 = vst.msk [vmem:[#allocation3 + $0x14] sm:$0xf] %vm4453, %v4813
    %4819 = vst.msk [vmem:[#allocation3 + $0x1c] sm:$0xf] %vm4453, %v4815
    %4822 = vrot.lane.b32.xlu0 %v4700, 80
    %v4823 = vpop.permute.xlu0 %4822
    %4824 = vrot.lane.b32.xlu0 %v4701, 80
    %v4825 = vpop.permute.xlu0 %4824
    %4828 = vst.msk [vmem:[#allocation3 + $0x14] sm:$0xf] %vm4464, %v4823
    %4829 = vst.msk [vmem:[#allocation3 + $0x1c] sm:$0xf] %vm4464, %v4825
    %4832 = vrot.lane.b32.xlu0 %v4702, 96
    %v4833 = vpop.permute.xlu0 %4832
    %4834 = vrot.lane.b32.xlu0 %v4703, 96
    %v4835 = vpop.permute.xlu0 %4834
    %4838 = vst.msk [vmem:[#allocation3 + $0x14] sm:$0xf] %vm4475, %v4833
    %4839 = vst.msk [vmem:[#allocation3 + $0x1c] sm:$0xf] %vm4475, %v4835
    %4842 = vrot.lane.b32.xlu0 %v4704, 112
    %v4843 = vpop.permute.xlu0 %4842
    %4844 = vrot.lane.b32.xlu0 %v4705, 112
    %v4845 = vpop.permute.xlu0 %4844
    %4848 = vst.msk [vmem:[#allocation3 + $0x14] sm:$0xf] %vm4486, %v4843
    %4849 = vst.msk [vmem:[#allocation3 + $0x1c] sm:$0xf] %vm4486, %v4845
    %v4850 = vld [vmem:[#allocation3] sm:$0xff]
    %v4851 = vld [vmem:[#allocation3 + $0x8] sm:$0xff]
    %v4852 = vld [vmem:[#allocation3 + $0x10] sm:$0xff]
    %v4853 = vld [vmem:[#allocation3 + $0x18] sm:$0xff]
    %v4854 = vld [vmem:[%s5] sm:$0xf]
    %v4855 = vld [vmem:[%s5 + $0x4] sm:$0xf]
    %v4856 = vld [vmem:[%s5 + $0x8] sm:$0xf]
    %v4857 = vld [vmem:[%s5 + $0xc] sm:$0xf]
    %v4858 = vld [vmem:[%s5 + $0x10] sm:$0xf]
    %v4859 = vld [vmem:[%s5 + $0x14] sm:$0xf]
    %v4860 = vld [vmem:[%s5 + $0x18] sm:$0xf]
    %v4861 = vld [vmem:[%s5 + $0x1c] sm:$0xf]
    %v4862 = vld [vmem:[%s5 + $0x20] sm:$0xf]
    %v4863 = vld [vmem:[%s5 + $0x24] sm:$0xf]
    %v4864 = vld [vmem:[%s5 + $0x28] sm:$0xf]
    %v4865 = vld [vmem:[%s5 + $0x2c] sm:$0xf]
    %v4866 = vld [vmem:[%s5 + $0x30] sm:$0xf]
    %v4867 = vld [vmem:[%s5 + $0x34] sm:$0xf]
    %v4868 = vld [vmem:[%s5 + $0x38] sm:$0xf]
    %v4869 = vld [vmem:[%s5 + $0x3c] sm:$0xf]
    %v4870 = vld [vmem:[%s5 + $0x40] sm:$0xf]
    %v4871 = vld [vmem:[%s5 + $0x44] sm:$0xf]
    %v4872 = vld [vmem:[%s5 + $0x48] sm:$0xf]
    %v4873 = vld [vmem:[%s5 + $0x4c] sm:$0xf]
    %v4874 = vld [vmem:[%s5 + $0x50] sm:$0xf]
    %v4875 = vld [vmem:[%s5 + $0x54] sm:$0xf]
    %v4876 = vld [vmem:[%s5 + $0x58] sm:$0xf]
    %v4877 = vld [vmem:[%s5 + $0x5c] sm:$0xf]
    %v4878 = vld [vmem:[%s5 + $0x60] sm:$0xf]
    %v4879 = vld [vmem:[%s5 + $0x64] sm:$0xf]
    %v4880 = vld [vmem:[%s5 + $0x68] sm:$0xf]
    %v4881 = vld [vmem:[%s5 + $0x6c] sm:$0xf]
    %v4882 = vld [vmem:[%s5 + $0x70] sm:$0xf]
    %v4883 = vld [vmem:[%s5 + $0x74] sm:$0xf]
    %v4884 = vld [vmem:[%s5 + $0x78] sm:$0xf]
    %v4885 = vld [vmem:[%s5 + $0x7c] sm:$0xf]
    %v4886 = vld [vmem:[%s6] sm:$0x1]
    %v4888 = vperm.slane %v4886, 0
    %v4894 = vunpack.c.l.b16 %v4850
    %v4895 = vunpack.c.h.b16 %v4850
    %v4896 = vunpack.c.l.b16 %v4851
    %v4897 = vunpack.c.h.b16 %v4851
    %v4898 = vunpack.c.l.b16 %v4852
    %v4899 = vunpack.c.h.b16 %v4852
    %v4900 = vunpack.c.l.b16 %v4853
    %v4901 = vunpack.c.h.b16 %v4853
    %v4902 = vpack.c.b16 %v4896, %v4894
    %v4903 = vpack.c.b16 %v4897, %v4895
    %v4904 = vpack.c.b16 %v4900, %v4898
    %v4905 = vpack.c.b16 %v4901, %v4899
    %v4942 = vunpack.c.l.b16 %v4854
    %v4943 = vunpack.c.l.b16 %v4855
    %v4944 = vunpack.c.l.b16 %v4856
    %v4945 = vunpack.c.l.b16 %v4857
    %v4946 = vunpack.c.l.b16 %v4858
    %v4947 = vunpack.c.l.b16 %v4859
    %v4948 = vunpack.c.l.b16 %v4860
    %v4949 = vunpack.c.l.b16 %v4861
    %v4950 = vunpack.c.l.b16 %v4862
    %v4951 = vunpack.c.l.b16 %v4863
    %v4952 = vunpack.c.l.b16 %v4864
    %v4953 = vunpack.c.l.b16 %v4865
    %v4954 = vunpack.c.l.b16 %v4866
    %v4955 = vunpack.c.l.b16 %v4867
    %v4956 = vunpack.c.l.b16 %v4868
    %v4957 = vunpack.c.l.b16 %v4869
    %v4958 = vunpack.c.l.b16 %v4870
    %v4959 = vunpack.c.l.b16 %v4871
    %v4960 = vunpack.c.l.b16 %v4872
    %v4961 = vunpack.c.l.b16 %v4873
    %v4962 = vunpack.c.l.b16 %v4874
    %v4963 = vunpack.c.l.b16 %v4875
    %v4964 = vunpack.c.l.b16 %v4876
    %v4965 = vunpack.c.l.b16 %v4877
    %v4966 = vunpack.c.l.b16 %v4878
    %v4967 = vunpack.c.l.b16 %v4879
    %v4968 = vunpack.c.l.b16 %v4880
    %v4969 = vunpack.c.l.b16 %v4881
    %v4970 = vunpack.c.l.b16 %v4882
    %v4971 = vunpack.c.l.b16 %v4883
    %v4972 = vunpack.c.l.b16 %v4884
    %v4973 = vunpack.c.l.b16 %v4885
    %v4974 = vpack.c.b16 %v4943, %v4942
    %v4975 = vpack.c.b16 %v4945, %v4944
    %v4976 = vpack.c.b16 %v4947, %v4946
    %v4977 = vpack.c.b16 %v4949, %v4948
    %v4978 = vpack.c.b16 %v4951, %v4950
    %v4979 = vpack.c.b16 %v4953, %v4952
    %v4980 = vpack.c.b16 %v4955, %v4954
    %v4981 = vpack.c.b16 %v4957, %v4956
    %v4982 = vpack.c.b16 %v4959, %v4958
    %v4983 = vpack.c.b16 %v4961, %v4960
    %v4984 = vpack.c.b16 %v4963, %v4962
    %v4985 = vpack.c.b16 %v4965, %v4964
    %v4986 = vpack.c.b16 %v4967, %v4966
    %v4987 = vpack.c.b16 %v4969, %v4968
    %v4988 = vpack.c.b16 %v4971, %v4970
    %v4989 = vpack.c.b16 %v4973, %v4972
    %5006 = vmatpush.bf16.msra.mxu0 %v4981
    %5007 = vmatpush.bf16.msra.mxu0 %v4980
    %5008 = vmatpush.bf16.msra.mxu0 %v4979
    %5009 = vmatpush.bf16.msra.mxu0 %v4978
    %5010 = vmatpush.bf16.msra.mxu0 %v4977
    %5011 = vmatpush.bf16.msra.mxu0 %v4976
    %5012 = vmatpush.bf16.msra.mxu0 %v4975
    %5013 = vmatpush.bf16.msra.mxu0 %v4974
    %5014 = vmatmul.bf16.gmra.mxu0 %v4902
    %v5015 = vpop.f32.mrf.mxu0
    %v5016 = vadd.f32 %v4888, %v5015
    %v5017 = vpop.f32.mrf.mxu0
    %v5018 = vadd.f32 %v4888, %v5017
    %5019 = vmatmul.bf16.gmra.mxu0 %v4904
    %v5020 = vpop.f32.mrf.mxu0
    %v5021 = vadd.f32 %v4888, %v5020
    %v5022 = vpop.f32.mrf.mxu0
    %v5023 = vadd.f32 %v4888, %v5022
    %5024 = vdwg.mxu0
    %5025 = vmatpush.bf16.msra.mxu0 %v4989
    %5026 = vmatpush.bf16.msra.mxu0 %v4988
    %5027 = vmatpush.bf16.msra.mxu0 %v4987
    %5028 = vmatpush.bf16.msra.mxu0 %v4986
    %5029 = vmatpush.bf16.msra.mxu0 %v4985
    %5030 = vmatpush.bf16.msra.mxu0 %v4984
    %5031 = vmatpush.bf16.msra.mxu0 %v4983
    %5032 = vmatpush.bf16.msra.mxu0 %v4982
    %5033 = vmatmul.bf16.gmra.mxu0 %v4903
    %v5034 = vpop.f32.mrf.mxu0
    %v5035 = vadd.f32 %v5016, %v5034
    %v5036 = vpop.f32.mrf.mxu0
    %v5037 = vadd.f32 %v5018, %v5036
    %5038 = vmatmul.bf16.gmra.mxu0 %v4905
    %v5039 = vpop.f32.mrf.mxu0
    %v5040 = vadd.f32 %v5021, %v5039
    %v5041 = vpop.f32.mrf.mxu0
    %v5042 = vadd.f32 %v5023, %v5041
    %5043 = vdwg.mxu0
    %v5044 = vmax.f32 %v5035, 0.0
    %v5045 = vmax.f32 %v5037, 0.0
    %v5046 = vmax.f32 %v5040, 0.0
    %v5047 = vmax.f32 %v5042, 0.0
    %v5048 = vpack.c.bf16 %v5044, %v5044
    %v5049 = vpack.c.bf16 %v5045, %v5045
    %v5050 = vpack.c.bf16 %v5046, %v5046
    %v5051 = vpack.c.bf16 %v5047, %v5047
    %v5052 = vld [vmem:[%s7] sm:$0xf]
    %v5053 = vld [vmem:[%s7 + $0x4] sm:$0xf]
    %v5054 = vld [vmem:[%s7 + $0x8] sm:$0xf]
    %v5055 = vld [vmem:[%s7 + $0xc] sm:$0xf]
    %v5056 = vld [vmem:[%s7 + $0x10] sm:$0xf]
    %v5057 = vld [vmem:[%s7 + $0x14] sm:$0xf]
    %v5058 = vld [vmem:[%s7 + $0x18] sm:$0xf]
    %v5059 = vld [vmem:[%s7 + $0x1c] sm:$0xf]
    %v5060 = vld [vmem:[%s7 + $0x20] sm:$0xf]
    %v5061 = vld [vmem:[%s7 + $0x24] sm:$0xf]
    %v5062 = vld [vmem:[%s7 + $0x28] sm:$0xf]
    %v5063 = vld [vmem:[%s7 + $0x2c] sm:$0xf]
    %v5064 = vld [vmem:[%s7 + $0x30] sm:$0xf]
    %v5065 = vld [vmem:[%s7 + $0x34] sm:$0xf]
    %v5066 = vld [vmem:[%s7 + $0x38] sm:$0xf]
    %v5067 = vld [vmem:[%s7 + $0x3c] sm:$0xf]
    %v5068 = vld [vmem:[%s7 + $0x40] sm:$0xf]
    %v5069 = vld [vmem:[%s7 + $0x44] sm:$0xf]
    %v5088 = vunpack.c.l.b16 %v5052
    %v5089 = vunpack.c.l.b16 %v5053
    %v5090 = vunpack.c.l.b16 %v5054
    %v5091 = vunpack.c.l.b16 %v5055
    %v5092 = vunpack.c.l.b16 %v5056
    %v5093 = vunpack.c.l.b16 %v5057
    %v5094 = vunpack.c.l.b16 %v5058
    %v5095 = vunpack.c.l.b16 %v5059
    %v5096 = vunpack.c.l.b16 %v5060
    %v5097 = vunpack.c.l.b16 %v5061
    %v5098 = vunpack.c.l.b16 %v5062
    %v5099 = vunpack.c.l.b16 %v5063
    %v5100 = vunpack.c.l.b16 %v5064
    %v5101 = vunpack.c.l.b16 %v5065
    %v5102 = vunpack.c.l.b16 %v5066
    %v5103 = vunpack.c.l.b16 %v5067
    %v5104 = vunpack.c.l.b16 %v5068
    %v5105 = vunpack.c.l.b16 %v5069
    %v5106 = vpack.c.b16 %v5089, %v5088
    %v5107 = vpack.c.b16 %v5091, %v5090
    %v5108 = vpack.c.b16 %v5093, %v5092
    %v5109 = vpack.c.b16 %v5095, %v5094
    %v5110 = vpack.c.b16 %v5097, %v5096
    %v5111 = vpack.c.b16 %v5099, %v5098
    %v5112 = vpack.c.b16 %v5101, %v5100
    %v5113 = vpack.c.b16 %v5103, %v5102
    %v5114 = vpack.c.b16 %v5105, %v5104
    %v5117 = vunpack.c.l.b16 %v5048
    %v5118 = vunpack.c.l.b16 %v5049
    %v5119 = vpack.c.b16 %v5118, %v5117
    %vm5121 = vcmask 130048
    %v5123 = vsel %vm5121, %v5106, 0
    %v5126 = vsel %vm5121, %v5107, 0
    %v5129 = vsel %vm5121, %v5108, 0
    %v5132 = vsel %vm5121, %v5109, 0
    %v5135 = vsel %vm5121, %v5110, 0
    %v5138 = vsel %vm5121, %v5111, 0
    %v5141 = vsel %vm5121, %v5112, 0
    %v5144 = vsel %vm5121, %v5113, 0
    %v5147 = vsel %vm5121, %v5114, 0
    %5149 = vmatpush.bf16.msra.mxu0 0
    %5150 = vmatpush.bf16.msra.mxu0 0
    %5151 = vmatpush.bf16.msra.mxu0 0
    %5152 = vmatpush.bf16.msra.mxu0 0
    %5153 = vmatpush.bf16.msra.mxu0 0
    %5154 = vmatpush.bf16.msra.mxu0 0
    %5155 = vmatpush.bf16.msra.mxu0 0
    %5156 = vmatpush.bf16.msra.mxu0 %v5119
    %5157 = vmatmul.bf16.gmra.mxu0 %v5123
    %v5158 = vpop.f32.mrf.mxu0
    %v5159 = vadd.f32 0.0, %v5158
    %v5160 = vpop.f32.mrf.mxu0
    %v5161 = vadd.f32 0.0, %v5160
    %5162 = vmatmul.bf16.gmra.mxu0 %v5126
    %v5163 = vpop.f32.mrf.mxu0
    %v5164 = vadd.f32 0.0, %v5163
    %v5165 = vpop.f32.mrf.mxu0
    %v5166 = vadd.f32 0.0, %v5165
    %5167 = vmatmul.bf16.gmra.mxu0 %v5129
    %v5168 = vpop.f32.mrf.mxu0
    %v5169 = vadd.f32 0.0, %v5168
    %v5170 = vpop.f32.mrf.mxu0
    %v5171 = vadd.f32 0.0, %v5170
    %5172 = vmatmul.bf16.gmra.mxu0 %v5132
    %v5173 = vpop.f32.mrf.mxu0
    %v5174 = vadd.f32 0.0, %v5173
    %v5175 = vpop.f32.mrf.mxu0
    %v5176 = vadd.f32 0.0, %v5175
    %5177 = vmatmul.bf16.gmra.mxu0 %v5135
    %v5178 = vpop.f32.mrf.mxu0
    %v5179 = vadd.f32 0.0, %v5178
    %v5180 = vpop.f32.mrf.mxu0
    %v5181 = vadd.f32 0.0, %v5180
    %5182 = vmatmul.bf16.gmra.mxu0 %v5138
    %v5183 = vpop.f32.mrf.mxu0
    %v5184 = vadd.f32 0.0, %v5183
    %v5185 = vpop.f32.mrf.mxu0
    %v5186 = vadd.f32 0.0, %v5185
    %5187 = vmatmul.bf16.gmra.mxu0 %v5141
    %v5188 = vpop.f32.mrf.mxu0
    %v5189 = vadd.f32 0.0, %v5188
    %v5190 = vpop.f32.mrf.mxu0
    %v5191 = vadd.f32 0.0, %v5190
    %5192 = vmatmul.bf16.gmra.mxu0 %v5144
    %v5193 = vpop.f32.mrf.mxu0
    %v5194 = vadd.f32 0.0, %v5193
    %v5195 = vpop.f32.mrf.mxu0
    %v5196 = vadd.f32 0.0, %v5195
    %5197 = vmatmul.bf16.gmra.mxu0 %v5147
    %v5198 = vpop.f32.mrf.mxu0
    %v5199 = vadd.f32 0.0, %v5198
    %v5200 = vpop.f32.mrf.mxu0
    %v5201 = vadd.f32 0.0, %v5200
    %5202 = vdwg.mxu0
    %v5203 = vpack.c.bf16 %v5159, %v5159
    %v5204 = vpack.c.bf16 %v5161, %v5161
    %v5205 = vpack.c.bf16 %v5164, %v5164
    %v5206 = vpack.c.bf16 %v5166, %v5166
    %v5207 = vpack.c.bf16 %v5169, %v5169
    %v5208 = vpack.c.bf16 %v5171, %v5171
    %v5209 = vpack.c.bf16 %v5174, %v5174
    %v5210 = vpack.c.bf16 %v5176, %v5176
    %v5211 = vpack.c.bf16 %v5179, %v5179
    %v5212 = vpack.c.bf16 %v5181, %v5181
    %v5213 = vpack.c.bf16 %v5184, %v5184
    %v5214 = vpack.c.bf16 %v5186, %v5186
    %v5215 = vpack.c.bf16 %v5189, %v5189
    %v5216 = vpack.c.bf16 %v5191, %v5191
    %v5217 = vpack.c.bf16 %v5194, %v5194
    %v5218 = vpack.c.bf16 %v5196, %v5196
    %v5219 = vpack.c.bf16 %v5199, %v5199
    %v5220 = vpack.c.bf16 %v5201, %v5201
    %vm5221 = vcmask 257024
    %5222 = vst.msk [vmem:[#allocation4] sm:$0xf] %vm5221, %v5203
    %5223 = vst.msk [vmem:[#allocation4 + $0xc] sm:$0xf] %vm5221, %v5204
    %5226 = vrot.lane.b32.xlu0 %v5205, 32
    %v5227 = vpop.permute.xlu0 %5226
    %5228 = vrot.lane.b32.xlu0 %v5206, 32
    %v5229 = vpop.permute.xlu0 %5228
    %vm5232 = vcmask 519424
    %5233 = vst.msk [vmem:[#allocation4] sm:$0xf] %vm5232, %v5227
    %5234 = vst.msk [vmem:[#allocation4 + $0xc] sm:$0xf] %vm5232, %v5229
    %5237 = vrot.lane.b32.xlu0 %v5207, 64
    %v5238 = vpop.permute.xlu0 %5237
    %5239 = vrot.lane.b32.xlu0 %v5208, 64
    %v5240 = vpop.permute.xlu0 %5239
    %vm5243 = vcmask 781824
    %5244 = vst.msk [vmem:[#allocation4] sm:$0xf] %vm5243, %v5238
    %5245 = vst.msk [vmem:[#allocation4 + $0xc] sm:$0xf] %vm5243, %v5240
    %5248 = vrot.lane.b32.xlu0 %v5209, 96
    %v5249 = vpop.permute.xlu0 %5248
    %5250 = vrot.lane.b32.xlu0 %v5210, 96
    %v5251 = vpop.permute.xlu0 %5250
    %vm5254 = vcmask 1044224
    %5255 = vst.msk [vmem:[#allocation4] sm:$0xf] %vm5254, %v5249
    %5256 = vst.msk [vmem:[#allocation4 + $0xc] sm:$0xf] %vm5254, %v5251
    %5257 = vst.msk [vmem:[#allocation4 + $0x4] sm:$0xf] %vm5221, %v5211
    %5258 = vst.msk [vmem:[#allocation4 + $0x10] sm:$0xf] %vm5221, %v5212
    %5261 = vrot.lane.b32.xlu0 %v5213, 32
    %v5262 = vpop.permute.xlu0 %5261
    %5263 = vrot.lane.b32.xlu0 %v5214, 32
    %v5264 = vpop.permute.xlu0 %5263
    %5267 = vst.msk [vmem:[#allocation4 + $0x4] sm:$0xf] %vm5232, %v5262
    %5268 = vst.msk [vmem:[#allocation4 + $0x10] sm:$0xf] %vm5232, %v5264
    %5271 = vrot.lane.b32.xlu0 %v5215, 64
    %v5272 = vpop.permute.xlu0 %5271
    %5273 = vrot.lane.b32.xlu0 %v5216, 64
    %v5274 = vpop.permute.xlu0 %5273
    %5277 = vst.msk [vmem:[#allocation4 + $0x4] sm:$0xf] %vm5243, %v5272
    %5278 = vst.msk [vmem:[#allocation4 + $0x10] sm:$0xf] %vm5243, %v5274
    %5281 = vrot.lane.b32.xlu0 %v5217, 96
    %v5282 = vpop.permute.xlu0 %5281
    %5283 = vrot.lane.b32.xlu0 %v5218, 96
    %v5284 = vpop.permute.xlu0 %5283
    %5287 = vst.msk [vmem:[#allocation4 + $0x4] sm:$0xf] %vm5254, %v5282
    %5288 = vst.msk [vmem:[#allocation4 + $0x10] sm:$0xf] %vm5254, %v5284
    %5289 = vst.msk [vmem:[#allocation4 + $0x8] sm:$0xf] %vm5221, %v5219
    %5290 = vst.msk [vmem:[#allocation4 + $0x14] sm:$0xf] %vm5221, %v5220
    %v5293 = vunpack.c.l.b16 %v5050
    %v5294 = vunpack.c.l.b16 %v5051
    %v5295 = vpack.c.b16 %v5294, %v5293
    %5297 = vmatpush.bf16.msra.mxu0 0
    %5298 = vmatpush.bf16.msra.mxu0 0
    %5299 = vmatpush.bf16.msra.mxu0 0
    %5300 = vmatpush.bf16.msra.mxu0 0
    %5301 = vmatpush.bf16.msra.mxu0 0
    %5302 = vmatpush.bf16.msra.mxu0 0
    %5303 = vmatpush.bf16.msra.mxu0 0
    %5304 = vmatpush.bf16.msra.mxu0 %v5295
    %5305 = vmatmul.bf16.gmra.mxu0 %v5123
    %v5306 = vpop.f32.mrf.mxu0
    %v5307 = vadd.f32 0.0, %v5306
    %v5308 = vpop.f32.mrf.mxu0
    %v5309 = vadd.f32 0.0, %v5308
    %5310 = vmatmul.bf16.gmra.mxu0 %v5126
    %v5311 = vpop.f32.mrf.mxu0
    %v5312 = vadd.f32 0.0, %v5311
    %v5313 = vpop.f32.mrf.mxu0
    %v5314 = vadd.f32 0.0, %v5313
    %5315 = vmatmul.bf16.gmra.mxu0 %v5129
    %v5316 = vpop.f32.mrf.mxu0
    %v5317 = vadd.f32 0.0, %v5316
    %v5318 = vpop.f32.mrf.mxu0
    %v5319 = vadd.f32 0.0, %v5318
    %5320 = vmatmul.bf16.gmra.mxu0 %v5132
    %v5321 = vpop.f32.mrf.mxu0
    %v5322 = vadd.f32 0.0, %v5321
    %v5323 = vpop.f32.mrf.mxu0
    %v5324 = vadd.f32 0.0, %v5323
    %5325 = vmatmul.bf16.gmra.mxu0 %v5135
    %v5326 = vpop.f32.mrf.mxu0
    %v5327 = vadd.f32 0.0, %v5326
    %v5328 = vpop.f32.mrf.mxu0
    %v5329 = vadd.f32 0.0, %v5328
    %5330 = vmatmul.bf16.gmra.mxu0 %v5138
    %v5331 = vpop.f32.mrf.mxu0
    %v5332 = vadd.f32 0.0, %v5331
    %v5333 = vpop.f32.mrf.mxu0
    %v5334 = vadd.f32 0.0, %v5333
    %5335 = vmatmul.bf16.gmra.mxu0 %v5141
    %v5336 = vpop.f32.mrf.mxu0
    %v5337 = vadd.f32 0.0, %v5336
    %v5338 = vpop.f32.mrf.mxu0
    %v5339 = vadd.f32 0.0, %v5338
    %5340 = vmatmul.bf16.gmra.mxu0 %v5144
    %v5341 = vpop.f32.mrf.mxu0
    %v5342 = vadd.f32 0.0, %v5341
    %v5343 = vpop.f32.mrf.mxu0
    %v5344 = vadd.f32 0.0, %v5343
    %5345 = vmatmul.bf16.gmra.mxu0 %v5147
    %v5346 = vpop.f32.mrf.mxu0
    %v5347 = vadd.f32 0.0, %v5346
    %v5348 = vpop.f32.mrf.mxu0
    %v5349 = vadd.f32 0.0, %v5348
    %5350 = vdwg.mxu0
    %v5351 = vpack.c.bf16 %v5307, %v5307
    %v5352 = vpack.c.bf16 %v5309, %v5309
    %v5353 = vpack.c.bf16 %v5312, %v5312
    %v5354 = vpack.c.bf16 %v5314, %v5314
    %v5355 = vpack.c.bf16 %v5317, %v5317
    %v5356 = vpack.c.bf16 %v5319, %v5319
    %v5357 = vpack.c.bf16 %v5322, %v5322
    %v5358 = vpack.c.bf16 %v5324, %v5324
    %v5359 = vpack.c.bf16 %v5327, %v5327
    %v5360 = vpack.c.bf16 %v5329, %v5329
    %v5361 = vpack.c.bf16 %v5332, %v5332
    %v5362 = vpack.c.bf16 %v5334, %v5334
    %v5363 = vpack.c.bf16 %v5337, %v5337
    %v5364 = vpack.c.bf16 %v5339, %v5339
    %v5365 = vpack.c.bf16 %v5342, %v5342
    %v5366 = vpack.c.bf16 %v5344, %v5344
    %v5367 = vpack.c.bf16 %v5347, %v5347
    %v5368 = vpack.c.bf16 %v5349, %v5349
    %5369 = vst.msk [vmem:[#allocation4 + $0x18] sm:$0xf] %vm5221, %v5351
    %5370 = vst.msk [vmem:[#allocation4 + $0x24] sm:$0xf] %vm5221, %v5352
    %5373 = vrot.lane.b32.xlu0 %v5353, 32
    %v5374 = vpop.permute.xlu0 %5373
    %5375 = vrot.lane.b32.xlu0 %v5354, 32
    %v5376 = vpop.permute.xlu0 %5375
    %5379 = vst.msk [vmem:[#allocation4 + $0x18] sm:$0xf] %vm5232, %v5374
    %5380 = vst.msk [vmem:[#allocation4 + $0x24] sm:$0xf] %vm5232, %v5376
    %5383 = vrot.lane.b32.xlu0 %v5355, 64
    %v5384 = vpop.permute.xlu0 %5383
    %5385 = vrot.lane.b32.xlu0 %v5356, 64
    %v5386 = vpop.permute.xlu0 %5385
    %5389 = vst.msk [vmem:[#allocation4 + $0x18] sm:$0xf] %vm5243, %v5384
    %5390 = vst.msk [vmem:[#allocation4 + $0x24] sm:$0xf] %vm5243, %v5386
    %5393 = vrot.lane.b32.xlu0 %v5357, 96
    %v5394 = vpop.permute.xlu0 %5393
    %5395 = vrot.lane.b32.xlu0 %v5358, 96
    %v5396 = vpop.permute.xlu0 %5395
    %5399 = vst.msk [vmem:[#allocation4 + $0x18] sm:$0xf] %vm5254, %v5394
    %5400 = vst.msk [vmem:[#allocation4 + $0x24] sm:$0xf] %vm5254, %v5396
    %5401 = vst.msk [vmem:[#allocation4 + $0x1c] sm:$0xf] %vm5221, %v5359
    %5402 = vst.msk [vmem:[#allocation4 + $0x28] sm:$0xf] %vm5221, %v5360
    %5405 = vrot.lane.b32.xlu0 %v5361, 32
    %v5406 = vpop.permute.xlu0 %5405
    %5407 = vrot.lane.b32.xlu0 %v5362, 32
    %v5408 = vpop.permute.xlu0 %5407
    %5411 = vst.msk [vmem:[#allocation4 + $0x1c] sm:$0xf] %vm5232, %v5406
    %5412 = vst.msk [vmem:[#allocation4 + $0x28] sm:$0xf] %vm5232, %v5408
    %5415 = vrot.lane.b32.xlu0 %v5363, 64
    %v5416 = vpop.permute.xlu0 %5415
    %5417 = vrot.lane.b32.xlu0 %v5364, 64
    %v5418 = vpop.permute.xlu0 %5417
    %5421 = vst.msk [vmem:[#allocation4 + $0x1c] sm:$0xf] %vm5243, %v5416
    %5422 = vst.msk [vmem:[#allocation4 + $0x28] sm:$0xf] %vm5243, %v5418
    %5425 = vrot.lane.b32.xlu0 %v5365, 96
    %v5426 = vpop.permute.xlu0 %5425
    %5427 = vrot.lane.b32.xlu0 %v5366, 96
    %v5428 = vpop.permute.xlu0 %5427
    %5431 = vst.msk [vmem:[#allocation4 + $0x1c] sm:$0xf] %vm5254, %v5426
    %5432 = vst.msk [vmem:[#allocation4 + $0x28] sm:$0xf] %vm5254, %v5428
    %5433 = vst.msk [vmem:[#allocation4 + $0x20] sm:$0xf] %vm5221, %v5367
    %5434 = vst.msk [vmem:[#allocation4 + $0x2c] sm:$0xf] %vm5221, %v5368
    %v5435 = vld [vmem:[#allocation4] sm:$0xff]
    %v5436 = vld [vmem:[#allocation4 + $0x8] sm:$0xf]
    %v5437 = vld [vmem:[#allocation4 + $0xc] sm:$0xff]
    %v5438 = vld [vmem:[#allocation4 + $0x14] sm:$0xf]
    %v5439 = vld [vmem:[#allocation4 + $0x18] sm:$0xff]
    %v5440 = vld [vmem:[#allocation4 + $0x20] sm:$0xf]
    %v5441 = vld [vmem:[#allocation4 + $0x24] sm:$0xff]
    %v5442 = vld [vmem:[#allocation4 + $0x2c] sm:$0xf]
    %v5443 = vld [vmem:[%s8] sm:$0xf]
    %v5444 = vld [vmem:[%s8 + $0x4] sm:$0xf]
    %v5445 = vld [vmem:[%s8 + $0x8] sm:$0xf]
    %v5446 = vld [vmem:[%s8 + $0xc] sm:$0xf]
    %v5447 = vld [vmem:[%s8 + $0x10] sm:$0xf]
    %v5448 = vld [vmem:[%s8 + $0x14] sm:$0xf]
    %v5449 = vld [vmem:[%s8 + $0x18] sm:$0xf]
    %v5450 = vld [vmem:[%s8 + $0x1c] sm:$0xf]
    %v5451 = vld [vmem:[%s8 + $0x20] sm:$0xf]
    %v5452 = vld [vmem:[%s8 + $0x24] sm:$0xf]
    %v5453 = vld [vmem:[%s8 + $0x28] sm:$0xf]
    %v5454 = vld [vmem:[%s8 + $0x2c] sm:$0xf]
    %v5455 = vld [vmem:[%s8 + $0x30] sm:$0xf]
    %v5456 = vld [vmem:[%s8 + $0x34] sm:$0xf]
    %v5457 = vld [vmem:[%s8 + $0x38] sm:$0xf]
    %v5458 = vld [vmem:[%s8 + $0x3c] sm:$0xf]
    %v5459 = vld [vmem:[%s8 + $0x40] sm:$0xf]
    %v5460 = vld [vmem:[%s8 + $0x44] sm:$0xf]
    %v5461 = vld [vmem:[%s8 + $0x48] sm:$0xf]
    %v5462 = vld [vmem:[%s8 + $0x4c] sm:$0xf]
    %v5463 = vld [vmem:[%s8 + $0x50] sm:$0xf]
    %v5464 = vld [vmem:[%s8 + $0x54] sm:$0xf]
    %v5465 = vld [vmem:[%s8 + $0x58] sm:$0xf]
    %v5466 = vld [vmem:[%s8 + $0x5c] sm:$0xf]
    %v5467 = vld [vmem:[%s8 + $0x60] sm:$0xf]
    %v5468 = vld [vmem:[%s8 + $0x64] sm:$0xf]
    %v5469 = vld [vmem:[%s8 + $0x68] sm:$0xf]
    %v5470 = vld [vmem:[%s8 + $0x6c] sm:$0xf]
    %v5471 = vld [vmem:[%s8 + $0x70] sm:$0xf]
    %v5472 = vld [vmem:[%s8 + $0x74] sm:$0xf]
    %v5473 = vld [vmem:[%s8 + $0x78] sm:$0xf]
    %v5474 = vld [vmem:[%s8 + $0x7c] sm:$0xf]
    %v5475 = vld [vmem:[%s8 + $0x80] sm:$0xf]
    %v5476 = vld [vmem:[%s8 + $0x84] sm:$0xf]
    %v5477 = vld [vmem:[%s8 + $0x88] sm:$0xf]
    %v5478 = vld [vmem:[%s8 + $0x8c] sm:$0xf]
    %v5479 = vld [vmem:[%s9] sm:$0x1]
    %v5481 = vperm.slane %v5479, 0
    %v5491 = vunpack.c.l.b16 %v5435
    %v5492 = vunpack.c.h.b16 %v5435
    %v5493 = vunpack.c.l.b16 %v5436
    %v5494 = vunpack.c.l.b16 %v5437
    %v5495 = vunpack.c.h.b16 %v5437
    %v5496 = vunpack.c.l.b16 %v5438
    %v5497 = vunpack.c.l.b16 %v5439
    %v5498 = vunpack.c.h.b16 %v5439
    %v5499 = vunpack.c.l.b16 %v5440
    %v5500 = vunpack.c.l.b16 %v5441
    %v5501 = vunpack.c.h.b16 %v5441
    %v5502 = vunpack.c.l.b16 %v5442
    %v5503 = vpack.c.b16 %v5494, %v5491
    %v5504 = vpack.c.b16 %v5495, %v5492
    %v5505 = vpack.c.b16 %v5496, %v5493
    %v5506 = vpack.c.b16 %v5500, %v5497
    %v5507 = vpack.c.b16 %v5501, %v5498
    %v5508 = vpack.c.b16 %v5502, %v5499
    %v5549 = vunpack.c.l.b16 %v5443
    %v5550 = vunpack.c.l.b16 %v5444
    %v5551 = vunpack.c.l.b16 %v5445
    %v5552 = vunpack.c.l.b16 %v5446
    %v5553 = vunpack.c.l.b16 %v5447
    %v5554 = vunpack.c.l.b16 %v5448
    %v5555 = vunpack.c.l.b16 %v5449
    %v5556 = vunpack.c.l.b16 %v5450
    %v5557 = vunpack.c.l.b16 %v5451
    %v5558 = vunpack.c.l.b16 %v5452
    %v5559 = vunpack.c.l.b16 %v5453
    %v5560 = vunpack.c.l.b16 %v5454
    %v5561 = vunpack.c.l.b16 %v5455
    %v5562 = vunpack.c.l.b16 %v5456
    %v5563 = vunpack.c.l.b16 %v5457
    %v5564 = vunpack.c.l.b16 %v5458
    %v5565 = vunpack.c.l.b16 %v5459
    %v5566 = vunpack.c.l.b16 %v5460
    %v5567 = vunpack.c.l.b16 %v5461
    %v5568 = vunpack.c.l.b16 %v5462
    %v5569 = vunpack.c.l.b16 %v5463
    %v5570 = vunpack.c.l.b16 %v5464
    %v5571 = vunpack.c.l.b16 %v5465
    %v5572 = vunpack.c.l.b16 %v5466
    %v5573 = vunpack.c.l.b16 %v5467
    %v5574 = vunpack.c.l.b16 %v5468
    %v5575 = vunpack.c.l.b16 %v5469
    %v5576 = vunpack.c.l.b16 %v5470
    %v5577 = vunpack.c.l.b16 %v5471
    %v5578 = vunpack.c.l.b16 %v5472
    %v5579 = vunpack.c.l.b16 %v5473
    %v5580 = vunpack.c.l.b16 %v5474
    %v5581 = vunpack.c.l.b16 %v5475
    %v5582 = vunpack.c.l.b16 %v5476
    %v5583 = vunpack.c.l.b16 %v5477
    %v5584 = vunpack.c.l.b16 %v5478
    %v5585 = vpack.c.b16 %v5550, %v5549
    %v5586 = vpack.c.b16 %v5552, %v5551
    %v5587 = vpack.c.b16 %v5554, %v5553
    %v5588 = vpack.c.b16 %v5556, %v5555
    %v5589 = vpack.c.b16 %v5558, %v5557
    %v5590 = vpack.c.b16 %v5560, %v5559
    %v5591 = vpack.c.b16 %v5562, %v5561
    %v5592 = vpack.c.b16 %v5564, %v5563
    %v5593 = vpack.c.b16 %v5566, %v5565
    %v5594 = vpack.c.b16 %v5568, %v5567
    %v5595 = vpack.c.b16 %v5570, %v5569
    %v5596 = vpack.c.b16 %v5572, %v5571
    %v5597 = vpack.c.b16 %v5574, %v5573
    %v5598 = vpack.c.b16 %v5576, %v5575
    %v5599 = vpack.c.b16 %v5578, %v5577
    %v5600 = vpack.c.b16 %v5580, %v5579
    %v5601 = vpack.c.b16 %v5582, %v5581
    %v5602 = vpack.c.b16 %v5584, %v5583
    %vm5621 = vcmask 261120
    %v5623 = vsel %vm5621, %v5505, 0
    %v5626 = vsel %vm5621, %v5508, 0
    %5628 = vmatpush.bf16.msra.mxu0 %v5592
    %5629 = vmatpush.bf16.msra.mxu0 %v5591
    %5630 = vmatpush.bf16.msra.mxu0 %v5590
    %5631 = vmatpush.bf16.msra.mxu0 %v5589
    %5632 = vmatpush.bf16.msra.mxu0 %v5588
    %5633 = vmatpush.bf16.msra.mxu0 %v5587
    %5634 = vmatpush.bf16.msra.mxu0 %v5586
    %5635 = vmatpush.bf16.msra.mxu0 %v5585
    %5636 = vmatmul.bf16.gmra.mxu0 %v5503
    %v5637 = vpop.f32.mrf.mxu0
    %v5638 = vadd.f32 %v5481, %v5637
    %v5639 = vpop.f32.mrf.mxu0
    %v5640 = vadd.f32 %v5481, %v5639
    %5641 = vmatmul.bf16.gmra.mxu0 %v5506
    %v5642 = vpop.f32.mrf.mxu0
    %v5643 = vadd.f32 %v5481, %v5642
    %v5644 = vpop.f32.mrf.mxu0
    %v5645 = vadd.f32 %v5481, %v5644
    %5646 = vdwg.mxu0
    %5647 = vmatpush.bf16.msra.mxu0 %v5600
    %5648 = vmatpush.bf16.msra.mxu0 %v5599
    %5649 = vmatpush.bf16.msra.mxu0 %v5598
    %5650 = vmatpush.bf16.msra.mxu0 %v5597
    %5651 = vmatpush.bf16.msra.mxu0 %v5596
    %5652 = vmatpush.bf16.msra.mxu0 %v5595
    %5653 = vmatpush.bf16.msra.mxu0 %v5594
    %5654 = vmatpush.bf16.msra.mxu0 %v5593
    %5655 = vmatmul.bf16.gmra.mxu0 %v5504
    %v5656 = vpop.f32.mrf.mxu0
    %v5657 = vadd.f32 %v5638, %v5656
    %v5658 = vpop.f32.mrf.mxu0
    %v5659 = vadd.f32 %v5640, %v5658
    %5660 = vmatmul.bf16.gmra.mxu0 %v5507
    %v5661 = vpop.f32.mrf.mxu0
    %v5662 = vadd.f32 %v5643, %v5661
    %v5663 = vpop.f32.mrf.mxu0
    %v5664 = vadd.f32 %v5645, %v5663
    %5665 = vdwg.mxu0
    %5666 = vmatpush.bf16.msra.mxu0 0
    %5667 = vmatpush.bf16.msra.mxu0 0
    %5668 = vmatpush.bf16.msra.mxu0 0
    %5669 = vmatpush.bf16.msra.mxu0 0
    %5670 = vmatpush.bf16.msra.mxu0 0
    %5671 = vmatpush.bf16.msra.mxu0 0
    %5672 = vmatpush.bf16.msra.mxu0 %v5602
    %5673 = vmatpush.bf16.msra.mxu0 %v5601
    %5674 = vmatmul.bf16.gmra.mxu0 %v5623
    %v5675 = vpop.f32.mrf.mxu0
    %v5676 = vadd.f32 %v5657, %v5675
    %v5677 = vpop.f32.mrf.mxu0
    %v5678 = vadd.f32 %v5659, %v5677
    %5679 = vmatmul.bf16.gmra.mxu0 %v5626
    %v5680 = vpop.f32.mrf.mxu0
    %v5681 = vadd.f32 %v5662, %v5680
    %v5682 = vpop.f32.mrf.mxu0
    %v5683 = vadd.f32 %v5664, %v5682
    %5684 = vdwg.mxu0
    %v5685 = vmax.f32 %v5676, 0.0
    %v5686 = vmax.f32 %v5678, 0.0
    %v5687 = vmax.f32 %v5681, 0.0
    %v5688 = vmax.f32 %v5683, 0.0
    %v5689 = vpack.c.bf16 %v5685, %v5685
    %v5690 = vpack.c.bf16 %v5686, %v5686
    %v5691 = vpack.c.bf16 %v5687, %v5687
    %v5692 = vpack.c.bf16 %v5688, %v5688
    %v5693 = vld [vmem:[%s7] sm:$0xf]
    %v5694 = vld [vmem:[%s7 + $0x4] sm:$0xf]
    %v5695 = vld [vmem:[%s7 + $0x8] sm:$0xf]
    %v5696 = vld [vmem:[%s7 + $0xc] sm:$0xf]
    %v5697 = vld [vmem:[%s7 + $0x10] sm:$0xf]
    %v5698 = vld [vmem:[%s7 + $0x14] sm:$0xf]
    %v5699 = vld [vmem:[%s7 + $0x18] sm:$0xf]
    %v5700 = vld [vmem:[%s7 + $0x1c] sm:$0xf]
    %v5701 = vld [vmem:[%s7 + $0x20] sm:$0xf]
    %v5702 = vld [vmem:[%s7 + $0x24] sm:$0xf]
    %v5703 = vld [vmem:[%s7 + $0x28] sm:$0xf]
    %v5704 = vld [vmem:[%s7 + $0x2c] sm:$0xf]
    %v5705 = vld [vmem:[%s7 + $0x30] sm:$0xf]
    %v5706 = vld [vmem:[%s7 + $0x34] sm:$0xf]
    %v5707 = vld [vmem:[%s7 + $0x38] sm:$0xf]
    %v5708 = vld [vmem:[%s7 + $0x3c] sm:$0xf]
    %v5709 = vld [vmem:[%s7 + $0x40] sm:$0xf]
    %v5710 = vld [vmem:[%s7 + $0x44] sm:$0xf]
    %v5729 = vunpack.c.l.b16 %v5693
    %v5730 = vunpack.c.l.b16 %v5694
    %v5731 = vunpack.c.l.b16 %v5695
    %v5732 = vunpack.c.l.b16 %v5696
    %v5733 = vunpack.c.l.b16 %v5697
    %v5734 = vunpack.c.l.b16 %v5698
    %v5735 = vunpack.c.l.b16 %v5699
    %v5736 = vunpack.c.l.b16 %v5700
    %v5737 = vunpack.c.l.b16 %v5701
    %v5738 = vunpack.c.l.b16 %v5702
    %v5739 = vunpack.c.l.b16 %v5703
    %v5740 = vunpack.c.l.b16 %v5704
    %v5741 = vunpack.c.l.b16 %v5705
    %v5742 = vunpack.c.l.b16 %v5706
    %v5743 = vunpack.c.l.b16 %v5707
    %v5744 = vunpack.c.l.b16 %v5708
    %v5745 = vunpack.c.l.b16 %v5709
    %v5746 = vunpack.c.l.b16 %v5710
    %v5747 = vpack.c.b16 %v5730, %v5729
    %v5748 = vpack.c.b16 %v5732, %v5731
    %v5749 = vpack.c.b16 %v5734, %v5733
    %v5750 = vpack.c.b16 %v5736, %v5735
    %v5751 = vpack.c.b16 %v5738, %v5737
    %v5752 = vpack.c.b16 %v5740, %v5739
    %v5753 = vpack.c.b16 %v5742, %v5741
    %v5754 = vpack.c.b16 %v5744, %v5743
    %v5755 = vpack.c.b16 %v5746, %v5745
    %v5758 = vunpack.c.l.b16 %v5689
    %v5759 = vunpack.c.l.b16 %v5690
    %v5760 = vpack.c.b16 %v5759, %v5758
    %v5763 = vsel %vm5121, %v5747, 0
    %v5766 = vsel %vm5121, %v5748, 0
    %v5769 = vsel %vm5121, %v5749, 0
    %v5772 = vsel %vm5121, %v5750, 0
    %v5775 = vsel %vm5121, %v5751, 0
    %v5778 = vsel %vm5121, %v5752, 0
    %v5781 = vsel %vm5121, %v5753, 0
    %v5784 = vsel %vm5121, %v5754, 0
    %v5787 = vsel %vm5121, %v5755, 0
    %5789 = vmatpush.bf16.msra.mxu0 0
    %5790 = vmatpush.bf16.msra.mxu0 0
    %5791 = vmatpush.bf16.msra.mxu0 0
    %5792 = vmatpush.bf16.msra.mxu0 0
    %5793 = vmatpush.bf16.msra.mxu0 0
    %5794 = vmatpush.bf16.msra.mxu0 0
    %5795 = vmatpush.bf16.msra.mxu0 0
    %5796 = vmatpush.bf16.msra.mxu0 %v5760
    %5797 = vmatmul.bf16.gmra.mxu0 %v5763
    %v5798 = vpop.f32.mrf.mxu0
    %v5799 = vadd.f32 0.0, %v5798
    %v5800 = vpop.f32.mrf.mxu0
    %v5801 = vadd.f32 0.0, %v5800
    %5802 = vmatmul.bf16.gmra.mxu0 %v5766
    %v5803 = vpop.f32.mrf.mxu0
    %v5804 = vadd.f32 0.0, %v5803
    %v5805 = vpop.f32.mrf.mxu0
    %v5806 = vadd.f32 0.0, %v5805
    %5807 = vmatmul.bf16.gmra.mxu0 %v5769
    %v5808 = vpop.f32.mrf.mxu0
    %v5809 = vadd.f32 0.0, %v5808
    %v5810 = vpop.f32.mrf.mxu0
    %v5811 = vadd.f32 0.0, %v5810
    %5812 = vmatmul.bf16.gmra.mxu0 %v5772
    %v5813 = vpop.f32.mrf.mxu0
    %v5814 = vadd.f32 0.0, %v5813
    %v5815 = vpop.f32.mrf.mxu0
    %v5816 = vadd.f32 0.0, %v5815
    %5817 = vmatmul.bf16.gmra.mxu0 %v5775
    %v5818 = vpop.f32.mrf.mxu0
    %v5819 = vadd.f32 0.0, %v5818
    %v5820 = vpop.f32.mrf.mxu0
    %v5821 = vadd.f32 0.0, %v5820
    %5822 = vmatmul.bf16.gmra.mxu0 %v5778
    %v5823 = vpop.f32.mrf.mxu0
    %v5824 = vadd.f32 0.0, %v5823
    %v5825 = vpop.f32.mrf.mxu0
    %v5826 = vadd.f32 0.0, %v5825
    %5827 = vmatmul.bf16.gmra.mxu0 %v5781
    %v5828 = vpop.f32.mrf.mxu0
    %v5829 = vadd.f32 0.0, %v5828
    %v5830 = vpop.f32.mrf.mxu0
    %v5831 = vadd.f32 0.0, %v5830
    %5832 = vmatmul.bf16.gmra.mxu0 %v5784
    %v5833 = vpop.f32.mrf.mxu0
    %v5834 = vadd.f32 0.0, %v5833
    %v5835 = vpop.f32.mrf.mxu0
    %v5836 = vadd.f32 0.0, %v5835
    %5837 = vmatmul.bf16.gmra.mxu0 %v5787
    %v5838 = vpop.f32.mrf.mxu0
    %v5839 = vadd.f32 0.0, %v5838
    %v5840 = vpop.f32.mrf.mxu0
    %v5841 = vadd.f32 0.0, %v5840
    %5842 = vdwg.mxu0
    %v5843 = vpack.c.bf16 %v5799, %v5799
    %v5844 = vpack.c.bf16 %v5801, %v5801
    %v5845 = vpack.c.bf16 %v5804, %v5804
    %v5846 = vpack.c.bf16 %v5806, %v5806
    %v5847 = vpack.c.bf16 %v5809, %v5809
    %v5848 = vpack.c.bf16 %v5811, %v5811
    %v5849 = vpack.c.bf16 %v5814, %v5814
    %v5850 = vpack.c.bf16 %v5816, %v5816
    %v5851 = vpack.c.bf16 %v5819, %v5819
    %v5852 = vpack.c.bf16 %v5821, %v5821
    %v5853 = vpack.c.bf16 %v5824, %v5824
    %v5854 = vpack.c.bf16 %v5826, %v5826
    %v5855 = vpack.c.bf16 %v5829, %v5829
    %v5856 = vpack.c.bf16 %v5831, %v5831
    %v5857 = vpack.c.bf16 %v5834, %v5834
    %v5858 = vpack.c.bf16 %v5836, %v5836
    %v5859 = vpack.c.bf16 %v5839, %v5839
    %v5860 = vpack.c.bf16 %v5841, %v5841
    %5861 = vst.msk [vmem:[#allocation4] sm:$0xf] %vm5221, %v5843
    %5862 = vst.msk [vmem:[#allocation4 + $0xc] sm:$0xf] %vm5221, %v5844
    %5865 = vrot.lane.b32.xlu0 %v5845, 32
    %v5866 = vpop.permute.xlu0 %5865
    %5867 = vrot.lane.b32.xlu0 %v5846, 32
    %v5868 = vpop.permute.xlu0 %5867
    %5871 = vst.msk [vmem:[#allocation4] sm:$0xf] %vm5232, %v5866
    %5872 = vst.msk [vmem:[#allocation4 + $0xc] sm:$0xf] %vm5232, %v5868
    %5875 = vrot.lane.b32.xlu0 %v5847, 64
    %v5876 = vpop.permute.xlu0 %5875
    %5877 = vrot.lane.b32.xlu0 %v5848, 64
    %v5878 = vpop.permute.xlu0 %5877
    %5881 = vst.msk [vmem:[#allocation4] sm:$0xf] %vm5243, %v5876
    %5882 = vst.msk [vmem:[#allocation4 + $0xc] sm:$0xf] %vm5243, %v5878
    %5885 = vrot.lane.b32.xlu0 %v5849, 96
    %v5886 = vpop.permute.xlu0 %5885
    %5887 = vrot.lane.b32.xlu0 %v5850, 96
    %v5888 = vpop.permute.xlu0 %5887
    %5891 = vst.msk [vmem:[#allocation4] sm:$0xf] %vm5254, %v5886
    %5892 = vst.msk [vmem:[#allocation4 + $0xc] sm:$0xf] %vm5254, %v5888
    %5893 = vst.msk [vmem:[#allocation4 + $0x4] sm:$0xf] %vm5221, %v5851
    %5894 = vst.msk [vmem:[#allocation4 + $0x10] sm:$0xf] %vm5221, %v5852
    %5897 = vrot.lane.b32.xlu0 %v5853, 32
    %v5898 = vpop.permute.xlu0 %5897
    %5899 = vrot.lane.b32.xlu0 %v5854, 32
    %v5900 = vpop.permute.xlu0 %5899
    %5903 = vst.msk [vmem:[#allocation4 + $0x4] sm:$0xf] %vm5232, %v5898
    %5904 = vst.msk [vmem:[#allocation4 + $0x10] sm:$0xf] %vm5232, %v5900
    %5907 = vrot.lane.b32.xlu0 %v5855, 64
    %v5908 = vpop.permute.xlu0 %5907
    %5909 = vrot.lane.b32.xlu0 %v5856, 64
    %v5910 = vpop.permute.xlu0 %5909
    %5913 = vst.msk [vmem:[#allocation4 + $0x4] sm:$0xf] %vm5243, %v5908
    %5914 = vst.msk [vmem:[#allocation4 + $0x10] sm:$0xf] %vm5243, %v5910
    %5917 = vrot.lane.b32.xlu0 %v5857, 96
    %v5918 = vpop.permute.xlu0 %5917
    %5919 = vrot.lane.b32.xlu0 %v5858, 96
    %v5920 = vpop.permute.xlu0 %5919
    %5923 = vst.msk [vmem:[#allocation4 + $0x4] sm:$0xf] %vm5254, %v5918
    %5924 = vst.msk [vmem:[#allocation4 + $0x10] sm:$0xf] %vm5254, %v5920
    %5925 = vst.msk [vmem:[#allocation4 + $0x8] sm:$0xf] %vm5221, %v5859
    %5926 = vst.msk [vmem:[#allocation4 + $0x14] sm:$0xf] %vm5221, %v5860
    %v5929 = vunpack.c.l.b16 %v5691
    %v5930 = vunpack.c.l.b16 %v5692
    %v5931 = vpack.c.b16 %v5930, %v5929
    %5933 = vmatpush.bf16.msra.mxu0 0
    %5934 = vmatpush.bf16.msra.mxu0 0
    %5935 = vmatpush.bf16.msra.mxu0 0
    %5936 = vmatpush.bf16.msra.mxu0 0
    %5937 = vmatpush.bf16.msra.mxu0 0
    %5938 = vmatpush.bf16.msra.mxu0 0
    %5939 = vmatpush.bf16.msra.mxu0 0
    %5940 = vmatpush.bf16.msra.mxu0 %v5931
    %5941 = vmatmul.bf16.gmra.mxu0 %v5763
    %v5942 = vpop.f32.mrf.mxu0
    %v5943 = vadd.f32 0.0, %v5942
    %v5944 = vpop.f32.mrf.mxu0
    %v5945 = vadd.f32 0.0, %v5944
    %5946 = vmatmul.bf16.gmra.mxu0 %v5766
    %v5947 = vpop.f32.mrf.mxu0
    %v5948 = vadd.f32 0.0, %v5947
    %v5949 = vpop.f32.mrf.mxu0
    %v5950 = vadd.f32 0.0, %v5949
    %5951 = vmatmul.bf16.gmra.mxu0 %v5769
    %v5952 = vpop.f32.mrf.mxu0
    %v5953 = vadd.f32 0.0, %v5952
    %v5954 = vpop.f32.mrf.mxu0
    %v5955 = vadd.f32 0.0, %v5954
    %5956 = vmatmul.bf16.gmra.mxu0 %v5772
    %v5957 = vpop.f32.mrf.mxu0
    %v5958 = vadd.f32 0.0, %v5957
    %v5959 = vpop.f32.mrf.mxu0
    %v5960 = vadd.f32 0.0, %v5959
    %5961 = vmatmul.bf16.gmra.mxu0 %v5775
    %v5962 = vpop.f32.mrf.mxu0
    %v5963 = vadd.f32 0.0, %v5962
    %v5964 = vpop.f32.mrf.mxu0
    %v5965 = vadd.f32 0.0, %v5964
    %5966 = vmatmul.bf16.gmra.mxu0 %v5778
    %v5967 = vpop.f32.mrf.mxu0
    %v5968 = vadd.f32 0.0, %v5967
    %v5969 = vpop.f32.mrf.mxu0
    %v5970 = vadd.f32 0.0, %v5969
    %5971 = vmatmul.bf16.gmra.mxu0 %v5781
    %v5972 = vpop.f32.mrf.mxu0
    %v5973 = vadd.f32 0.0, %v5972
    %v5974 = vpop.f32.mrf.mxu0
    %v5975 = vadd.f32 0.0, %v5974
    %5976 = vmatmul.bf16.gmra.mxu0 %v5784
    %v5977 = vpop.f32.mrf.mxu0
    %v5978 = vadd.f32 0.0, %v5977
    %v5979 = vpop.f32.mrf.mxu0
    %v5980 = vadd.f32 0.0, %v5979
    %5981 = vmatmul.bf16.gmra.mxu0 %v5787
    %v5982 = vpop.f32.mrf.mxu0
    %v5983 = vadd.f32 0.0, %v5982
    %v5984 = vpop.f32.mrf.mxu0
    %v5985 = vadd.f32 0.0, %v5984
    %5986 = vdwg.mxu0
    %v5987 = vpack.c.bf16 %v5943, %v5943
    %v5988 = vpack.c.bf16 %v5945, %v5945
    %v5989 = vpack.c.bf16 %v5948, %v5948
    %v5990 = vpack.c.bf16 %v5950, %v5950
    %v5991 = vpack.c.bf16 %v5953, %v5953
    %v5992 = vpack.c.bf16 %v5955, %v5955
    %v5993 = vpack.c.bf16 %v5958, %v5958
    %v5994 = vpack.c.bf16 %v5960, %v5960
    %v5995 = vpack.c.bf16 %v5963, %v5963
    %v5996 = vpack.c.bf16 %v5965, %v5965
    %v5997 = vpack.c.bf16 %v5968, %v5968
    %v5998 = vpack.c.bf16 %v5970, %v5970
    %v5999 = vpack.c.bf16 %v5973, %v5973
    %v6000 = vpack.c.bf16 %v5975, %v5975
    %v6001 = vpack.c.bf16 %v5978, %v5978
    %v6002 = vpack.c.bf16 %v5980, %v5980
    %v6003 = vpack.c.bf16 %v5983, %v5983
    %v6004 = vpack.c.bf16 %v5985, %v5985
    %6005 = vst.msk [vmem:[#allocation4 + $0x18] sm:$0xf] %vm5221, %v5987
    %6006 = vst.msk [vmem:[#allocation4 + $0x24] sm:$0xf] %vm5221, %v5988
    %6009 = vrot.lane.b32.xlu0 %v5989, 32
    %v6010 = vpop.permute.xlu0 %6009
    %6011 = vrot.lane.b32.xlu0 %v5990, 32
    %v6012 = vpop.permute.xlu0 %6011
    %6015 = vst.msk [vmem:[#allocation4 + $0x18] sm:$0xf] %vm5232, %v6010
    %6016 = vst.msk [vmem:[#allocation4 + $0x24] sm:$0xf] %vm5232, %v6012
    %6019 = vrot.lane.b32.xlu0 %v5991, 64
    %v6020 = vpop.permute.xlu0 %6019
    %6021 = vrot.lane.b32.xlu0 %v5992, 64
    %v6022 = vpop.permute.xlu0 %6021
    %6025 = vst.msk [vmem:[#allocation4 + $0x18] sm:$0xf] %vm5243, %v6020
    %6026 = vst.msk [vmem:[#allocation4 + $0x24] sm:$0xf] %vm5243, %v6022
    %6029 = vrot.lane.b32.xlu0 %v5993, 96
    %v6030 = vpop.permute.xlu0 %6029
    %6031 = vrot.lane.b32.xlu0 %v5994, 96
    %v6032 = vpop.permute.xlu0 %6031
    %6035 = vst.msk [vmem:[#allocation4 + $0x18] sm:$0xf] %vm5254, %v6030
    %6036 = vst.msk [vmem:[#allocation4 + $0x24] sm:$0xf] %vm5254, %v6032
    %6037 = vst.msk [vmem:[#allocation4 + $0x1c] sm:$0xf] %vm5221, %v5995
    %6038 = vst.msk [vmem:[#allocation4 + $0x28] sm:$0xf] %vm5221, %v5996
    %6041 = vrot.lane.b32.xlu0 %v5997, 32
    %v6042 = vpop.permute.xlu0 %6041
    %6043 = vrot.lane.b32.xlu0 %v5998, 32
    %v6044 = vpop.permute.xlu0 %6043
    %6047 = vst.msk [vmem:[#allocation4 + $0x1c] sm:$0xf] %vm5232, %v6042
    %6048 = vst.msk [vmem:[#allocation4 + $0x28] sm:$0xf] %vm5232, %v6044
    %6051 = vrot.lane.b32.xlu0 %v5999, 64
    %v6052 = vpop.permute.xlu0 %6051
    %6053 = vrot.lane.b32.xlu0 %v6000, 64
    %v6054 = vpop.permute.xlu0 %6053
    %6057 = vst.msk [vmem:[#allocation4 + $0x1c] sm:$0xf] %vm5243, %v6052
    %6058 = vst.msk [vmem:[#allocation4 + $0x28] sm:$0xf] %vm5243, %v6054
    %6061 = vrot.lane.b32.xlu0 %v6001, 96
    %v6062 = vpop.permute.xlu0 %6061
    %6063 = vrot.lane.b32.xlu0 %v6002, 96
    %v6064 = vpop.permute.xlu0 %6063
    %6067 = vst.msk [vmem:[#allocation4 + $0x1c] sm:$0xf] %vm5254, %v6062
    %6068 = vst.msk [vmem:[#allocation4 + $0x28] sm:$0xf] %vm5254, %v6064
    %6069 = vst.msk [vmem:[#allocation4 + $0x20] sm:$0xf] %vm5221, %v6003
    %6070 = vst.msk [vmem:[#allocation4 + $0x2c] sm:$0xf] %vm5221, %v6004
    %v6071 = vld [vmem:[#allocation4] sm:$0xff]
    %v6072 = vld [vmem:[#allocation4 + $0x8] sm:$0xf]
    %v6073 = vld [vmem:[#allocation4 + $0xc] sm:$0xff]
    %v6074 = vld [vmem:[#allocation4 + $0x14] sm:$0xf]
    %v6075 = vld [vmem:[#allocation4 + $0x18] sm:$0xff]
    %v6076 = vld [vmem:[#allocation4 + $0x20] sm:$0xf]
    %v6077 = vld [vmem:[#allocation4 + $0x24] sm:$0xff]
    %v6078 = vld [vmem:[#allocation4 + $0x2c] sm:$0xf]
    %v6079 = vld [vmem:[%s10] sm:$0xf]
    %v6080 = vld [vmem:[%s10 + $0x4] sm:$0xf]
    %v6081 = vld [vmem:[%s10 + $0x8] sm:$0xf]
    %v6082 = vld [vmem:[%s10 + $0xc] sm:$0xf]
    %v6083 = vld [vmem:[%s10 + $0x10] sm:$0xf]
    %v6084 = vld [vmem:[%s10 + $0x14] sm:$0xf]
    %v6085 = vld [vmem:[%s10 + $0x18] sm:$0xf]
    %v6086 = vld [vmem:[%s10 + $0x1c] sm:$0xf]
    %v6087 = vld [vmem:[%s10 + $0x20] sm:$0xf]
    %v6088 = vld [vmem:[%s10 + $0x24] sm:$0xf]
    %v6089 = vld [vmem:[%s10 + $0x28] sm:$0xf]
    %v6090 = vld [vmem:[%s10 + $0x2c] sm:$0xf]
    %v6091 = vld [vmem:[%s10 + $0x30] sm:$0xf]
    %v6092 = vld [vmem:[%s10 + $0x34] sm:$0xf]
    %v6093 = vld [vmem:[%s10 + $0x38] sm:$0xf]
    %v6094 = vld [vmem:[%s10 + $0x3c] sm:$0xf]
    %v6095 = vld [vmem:[%s10 + $0x40] sm:$0xf]
    %v6096 = vld [vmem:[%s10 + $0x44] sm:$0xf]
    %v6097 = vld [vmem:[%s10 + $0x48] sm:$0xf]
    %v6098 = vld [vmem:[%s10 + $0x4c] sm:$0xf]
    %v6099 = vld [vmem:[%s10 + $0x50] sm:$0xf]
    %v6100 = vld [vmem:[%s10 + $0x54] sm:$0xf]
    %v6101 = vld [vmem:[%s10 + $0x58] sm:$0xf]
    %v6102 = vld [vmem:[%s10 + $0x5c] sm:$0xf]
    %v6103 = vld [vmem:[%s10 + $0x60] sm:$0xf]
    %v6104 = vld [vmem:[%s10 + $0x64] sm:$0xf]
    %v6105 = vld [vmem:[%s10 + $0x68] sm:$0xf]
    %v6106 = vld [vmem:[%s10 + $0x6c] sm:$0xf]
    %v6107 = vld [vmem:[%s10 + $0x70] sm:$0xf]
    %v6108 = vld [vmem:[%s10 + $0x74] sm:$0xf]
    %v6109 = vld [vmem:[%s10 + $0x78] sm:$0xf]
    %v6110 = vld [vmem:[%s10 + $0x7c] sm:$0xf]
    %v6111 = vld [vmem:[%s10 + $0x80] sm:$0xf]
    %v6112 = vld [vmem:[%s10 + $0x84] sm:$0xf]
    %v6113 = vld [vmem:[%s10 + $0x88] sm:$0xf]
    %v6114 = vld [vmem:[%s10 + $0x8c] sm:$0xf]
    %v6115 = vld [vmem:[%s11] sm:$0x1]
    %v6117 = vperm.slane %v6115, 0
    %v6127 = vunpack.c.l.b16 %v6071
    %v6128 = vunpack.c.h.b16 %v6071
    %v6129 = vunpack.c.l.b16 %v6072
    %v6130 = vunpack.c.l.b16 %v6073
    %v6131 = vunpack.c.h.b16 %v6073
    %v6132 = vunpack.c.l.b16 %v6074
    %v6133 = vunpack.c.l.b16 %v6075
    %v6134 = vunpack.c.h.b16 %v6075
    %v6135 = vunpack.c.l.b16 %v6076
    %v6136 = vunpack.c.l.b16 %v6077
    %v6137 = vunpack.c.h.b16 %v6077
    %v6138 = vunpack.c.l.b16 %v6078
    %v6139 = vpack.c.b16 %v6130, %v6127
    %v6140 = vpack.c.b16 %v6131, %v6128
    %v6141 = vpack.c.b16 %v6132, %v6129
    %v6142 = vpack.c.b16 %v6136, %v6133
    %v6143 = vpack.c.b16 %v6137, %v6134
    %v6144 = vpack.c.b16 %v6138, %v6135
    %v6185 = vunpack.c.l.b16 %v6079
    %v6186 = vunpack.c.l.b16 %v6080
    %v6187 = vunpack.c.l.b16 %v6081
    %v6188 = vunpack.c.l.b16 %v6082
    %v6189 = vunpack.c.l.b16 %v6083
    %v6190 = vunpack.c.l.b16 %v6084
    %v6191 = vunpack.c.l.b16 %v6085
    %v6192 = vunpack.c.l.b16 %v6086
    %v6193 = vunpack.c.l.b16 %v6087
    %v6194 = vunpack.c.l.b16 %v6088
    %v6195 = vunpack.c.l.b16 %v6089
    %v6196 = vunpack.c.l.b16 %v6090
    %v6197 = vunpack.c.l.b16 %v6091
    %v6198 = vunpack.c.l.b16 %v6092
    %v6199 = vunpack.c.l.b16 %v6093
    %v6200 = vunpack.c.l.b16 %v6094
    %v6201 = vunpack.c.l.b16 %v6095
    %v6202 = vunpack.c.l.b16 %v6096
    %v6203 = vunpack.c.l.b16 %v6097
    %v6204 = vunpack.c.l.b16 %v6098
    %v6205 = vunpack.c.l.b16 %v6099
    %v6206 = vunpack.c.l.b16 %v6100
    %v6207 = vunpack.c.l.b16 %v6101
    %v6208 = vunpack.c.l.b16 %v6102
    %v6209 = vunpack.c.l.b16 %v6103
    %v6210 = vunpack.c.l.b16 %v6104
    %v6211 = vunpack.c.l.b16 %v6105
    %v6212 = vunpack.c.l.b16 %v6106
    %v6213 = vunpack.c.l.b16 %v6107
    %v6214 = vunpack.c.l.b16 %v6108
    %v6215 = vunpack.c.l.b16 %v6109
    %v6216 = vunpack.c.l.b16 %v6110
    %v6217 = vunpack.c.l.b16 %v6111
    %v6218 = vunpack.c.l.b16 %v6112
    %v6219 = vunpack.c.l.b16 %v6113
    %v6220 = vunpack.c.l.b16 %v6114
    %v6221 = vpack.c.b16 %v6186, %v6185
    %v6222 = vpack.c.b16 %v6188, %v6187
    %v6223 = vpack.c.b16 %v6190, %v6189
    %v6224 = vpack.c.b16 %v6192, %v6191
    %v6225 = vpack.c.b16 %v6194, %v6193
    %v6226 = vpack.c.b16 %v6196, %v6195
    %v6227 = vpack.c.b16 %v6198, %v6197
    %v6228 = vpack.c.b16 %v6200, %v6199
    %v6229 = vpack.c.b16 %v6202, %v6201
    %v6230 = vpack.c.b16 %v6204, %v6203
    %v6231 = vpack.c.b16 %v6206, %v6205
    %v6232 = vpack.c.b16 %v6208, %v6207
    %v6233 = vpack.c.b16 %v6210, %v6209
    %v6234 = vpack.c.b16 %v6212, %v6211
    %v6235 = vpack.c.b16 %v6214, %v6213
    %v6236 = vpack.c.b16 %v6216, %v6215
    %v6237 = vpack.c.b16 %v6218, %v6217
    %v6238 = vpack.c.b16 %v6220, %v6219
    %v6258 = vsel %vm5621, %v6141, 0
    %v6261 = vsel %vm5621, %v6144, 0
    %6263 = vmatpush.bf16.msra.mxu0 %v6228
    %6264 = vmatpush.bf16.msra.mxu0 %v6227
    %6265 = vmatpush.bf16.msra.mxu0 %v6226
    %6266 = vmatpush.bf16.msra.mxu0 %v6225
    %6267 = vmatpush.bf16.msra.mxu0 %v6224
    %6268 = vmatpush.bf16.msra.mxu0 %v6223
    %6269 = vmatpush.bf16.msra.mxu0 %v6222
    %6270 = vmatpush.bf16.msra.mxu0 %v6221
    %6271 = vmatmul.bf16.gmra.mxu0 %v6139
    %v6272 = vpop.f32.mrf.mxu0
    %v6273 = vadd.f32 %v6117, %v6272
    %v6274 = vpop.f32.mrf.mxu0
    %v6275 = vadd.f32 %v6117, %v6274
    %6276 = vmatmul.bf16.gmra.mxu0 %v6142
    %v6277 = vpop.f32.mrf.mxu0
    %v6278 = vadd.f32 %v6117, %v6277
    %v6279 = vpop.f32.mrf.mxu0
    %v6280 = vadd.f32 %v6117, %v6279
    %6281 = vdwg.mxu0
    %6282 = vmatpush.bf16.msra.mxu0 %v6236
    %6283 = vmatpush.bf16.msra.mxu0 %v6235
    %6284 = vmatpush.bf16.msra.mxu0 %v6234
    %6285 = vmatpush.bf16.msra.mxu0 %v6233
    %6286 = vmatpush.bf16.msra.mxu0 %v6232
    %6287 = vmatpush.bf16.msra.mxu0 %v6231
    %6288 = vmatpush.bf16.msra.mxu0 %v6230
    %6289 = vmatpush.bf16.msra.mxu0 %v6229
    %6290 = vmatmul.bf16.gmra.mxu0 %v6140
    %v6291 = vpop.f32.mrf.mxu0
    %v6292 = vadd.f32 %v6273, %v6291
    %v6293 = vpop.f32.mrf.mxu0
    %v6294 = vadd.f32 %v6275, %v6293
    %6295 = vmatmul.bf16.gmra.mxu0 %v6143
    %v6296 = vpop.f32.mrf.mxu0
    %v6297 = vadd.f32 %v6278, %v6296
    %v6298 = vpop.f32.mrf.mxu0
    %v6299 = vadd.f32 %v6280, %v6298
    %6300 = vdwg.mxu0
    %6301 = vmatpush.bf16.msra.mxu0 0
    %6302 = vmatpush.bf16.msra.mxu0 0
    %6303 = vmatpush.bf16.msra.mxu0 0
    %6304 = vmatpush.bf16.msra.mxu0 0
    %6305 = vmatpush.bf16.msra.mxu0 0
    %6306 = vmatpush.bf16.msra.mxu0 0
    %6307 = vmatpush.bf16.msra.mxu0 %v6238
    %6308 = vmatpush.bf16.msra.mxu0 %v6237
    %6309 = vmatmul.bf16.gmra.mxu0 %v6258
    %v6310 = vpop.f32.mrf.mxu0
    %v6311 = vadd.f32 %v6292, %v6310
    %v6312 = vpop.f32.mrf.mxu0
    %v6313 = vadd.f32 %v6294, %v6312
    %6314 = vmatmul.bf16.gmra.mxu0 %v6261
    %v6315 = vpop.f32.mrf.mxu0
    %v6316 = vadd.f32 %v6297, %v6315
    %v6317 = vpop.f32.mrf.mxu0
    %v6318 = vadd.f32 %v6299, %v6317
    %6319 = vdwg.mxu0
    %v6320 = vmax.f32 %v6311, 0.0
    %v6321 = vmax.f32 %v6313, 0.0
    %v6322 = vmax.f32 %v6316, 0.0
    %v6323 = vmax.f32 %v6318, 0.0
    %v6324 = vpack.c.bf16 %v6321, %v6320
    %v6325 = vpack.c.bf16 %v6323, %v6322
    %v6326 = vld [vmem:[%s12] sm:$0xf]
    %v6327 = vld [vmem:[%s12 + $0x4] sm:$0xf]
    %v6328 = vld [vmem:[%s12 + $0x8] sm:$0xf]
    %v6329 = vld [vmem:[%s12 + $0xc] sm:$0xf]
    %v6330 = vld [vmem:[%s13] sm:$0x1]
    %v6332 = vperm.slane %v6330, 0
    %v6338 = vunpack.c.l.b16 %v6326
    %v6339 = vunpack.c.l.b16 %v6327
    %v6340 = vunpack.c.l.b16 %v6328
    %v6341 = vunpack.c.l.b16 %v6329
    %v6342 = vpack.c.b16 %v6339, %v6338
    %v6343 = vpack.c.b16 %v6341, %v6340
    %v6347 = vsel %vm5621, %v6324, 0
    %v6350 = vsel %vm5621, %v6325, 0
    %6352 = vmatpush.bf16.msra.mxu0 0
    %6353 = vmatpush.bf16.msra.mxu0 0
    %6354 = vmatpush.bf16.msra.mxu0 0
    %6355 = vmatpush.bf16.msra.mxu0 0
    %6356 = vmatpush.bf16.msra.mxu0 0
    %6357 = vmatpush.bf16.msra.mxu0 0
    %6358 = vmatpush.bf16.msra.mxu0 %v6343
    %6359 = vmatpush.bf16.msra.mxu0 %v6342
    %6360 = vmatmul.bf16.gmra.mxu0 %v6347
    %v6361 = vpop.f32.mrf.mxu0
    %v6362 = vadd.f32 %v6332, %v6361
    %v6363 = vpop.f32.mrf.mxu0
    %v6364 = vadd.f32 %v6332, %v6363
    %6365 = vmatmul.bf16.gmra.mxu0 %v6350
    %v6366 = vpop.f32.mrf.mxu0
    %v6367 = vadd.f32 %v6332, %v6366
    %v6368 = vpop.f32.mrf.mxu0
    %v6369 = vadd.f32 %v6332, %v6368
    %6370 = vdwg.mxu0
    %v6371 = vadd.f32 %v6362, %v5676
    %v6372 = vadd.f32 %v6364, %v5678
    %v6373 = vadd.f32 %v6367, %v5681
    %v6374 = vadd.f32 %v6369, %v5683
    %v6375 = vmax.f32 %v6371, 0.0
    %v6376 = vmax.f32 %v6372, 0.0
    %v6377 = vmax.f32 %v6373, 0.0
    %v6378 = vmax.f32 %v6374, 0.0
    %v6379 = vpack.c.bf16 %v6375, %v6375
    %v6380 = vpack.c.bf16 %v6376, %v6376
    %v6381 = vpack.c.bf16 %v6377, %v6377
    %v6382 = vpack.c.bf16 %v6378, %v6378
    %v6383 = vld [vmem:[%s7] sm:$0xf]
    %v6384 = vld [vmem:[%s7 + $0x4] sm:$0xf]
    %v6385 = vld [vmem:[%s7 + $0x8] sm:$0xf]
    %v6386 = vld [vmem:[%s7 + $0xc] sm:$0xf]
    %v6387 = vld [vmem:[%s7 + $0x10] sm:$0xf]
    %v6388 = vld [vmem:[%s7 + $0x14] sm:$0xf]
    %v6389 = vld [vmem:[%s7 + $0x18] sm:$0xf]
    %v6390 = vld [vmem:[%s7 + $0x1c] sm:$0xf]
    %v6391 = vld [vmem:[%s7 + $0x20] sm:$0xf]
    %v6392 = vld [vmem:[%s7 + $0x24] sm:$0xf]
    %v6393 = vld [vmem:[%s7 + $0x28] sm:$0xf]
    %v6394 = vld [vmem:[%s7 + $0x2c] sm:$0xf]
    %v6395 = vld [vmem:[%s7 + $0x30] sm:$0xf]
    %v6396 = vld [vmem:[%s7 + $0x34] sm:$0xf]
    %v6397 = vld [vmem:[%s7 + $0x38] sm:$0xf]
    %v6398 = vld [vmem:[%s7 + $0x3c] sm:$0xf]
    %v6399 = vld [vmem:[%s7 + $0x40] sm:$0xf]
    %v6400 = vld [vmem:[%s7 + $0x44] sm:$0xf]
    %v6419 = vunpack.c.l.b16 %v6383
    %v6420 = vunpack.c.l.b16 %v6384
    %v6421 = vunpack.c.l.b16 %v6385
    %v6422 = vunpack.c.l.b16 %v6386
    %v6423 = vunpack.c.l.b16 %v6387
    %v6424 = vunpack.c.l.b16 %v6388
    %v6425 = vunpack.c.l.b16 %v6389
    %v6426 = vunpack.c.l.b16 %v6390
    %v6427 = vunpack.c.l.b16 %v6391
    %v6428 = vunpack.c.l.b16 %v6392
    %v6429 = vunpack.c.l.b16 %v6393
    %v6430 = vunpack.c.l.b16 %v6394
    %v6431 = vunpack.c.l.b16 %v6395
    %v6432 = vunpack.c.l.b16 %v6396
    %v6433 = vunpack.c.l.b16 %v6397
    %v6434 = vunpack.c.l.b16 %v6398
    %v6435 = vunpack.c.l.b16 %v6399
    %v6436 = vunpack.c.l.b16 %v6400
    %v6437 = vpack.c.b16 %v6420, %v6419
    %v6438 = vpack.c.b16 %v6422, %v6421
    %v6439 = vpack.c.b16 %v6424, %v6423
    %v6440 = vpack.c.b16 %v6426, %v6425
    %v6441 = vpack.c.b16 %v6428, %v6427
    %v6442 = vpack.c.b16 %v6430, %v6429
    %v6443 = vpack.c.b16 %v6432, %v6431
    %v6444 = vpack.c.b16 %v6434, %v6433
    %v6445 = vpack.c.b16 %v6436, %v6435
    %v6448 = vunpack.c.l.b16 %v6379
    %v6449 = vunpack.c.l.b16 %v6380
    %v6450 = vpack.c.b16 %v6449, %v6448
    %v6453 = vsel %vm5121, %v6437, 0
    %v6456 = vsel %vm5121, %v6438, 0
    %v6459 = vsel %vm5121, %v6439, 0
    %v6462 = vsel %vm5121, %v6440, 0
    %v6465 = vsel %vm5121, %v6441, 0
    %v6468 = vsel %vm5121, %v6442, 0
    %v6471 = vsel %vm5121, %v6443, 0
    %v6474 = vsel %vm5121, %v6444, 0
    %v6477 = vsel %vm5121, %v6445, 0
    %6479 = vmatpush.bf16.msra.mxu0 0
    %6480 = vmatpush.bf16.msra.mxu0 0
    %6481 = vmatpush.bf16.msra.mxu0 0
    %6482 = vmatpush.bf16.msra.mxu0 0
    %6483 = vmatpush.bf16.msra.mxu0 0
    %6484 = vmatpush.bf16.msra.mxu0 0
    %6485 = vmatpush.bf16.msra.mxu0 0
    %6486 = vmatpush.bf16.msra.mxu0 %v6450
    %6487 = vmatmul.bf16.gmra.mxu0 %v6453
    %v6488 = vpop.f32.mrf.mxu0
    %v6489 = vadd.f32 0.0, %v6488
    %v6490 = vpop.f32.mrf.mxu0
    %v6491 = vadd.f32 0.0, %v6490
    %6492 = vmatmul.bf16.gmra.mxu0 %v6456
    %v6493 = vpop.f32.mrf.mxu0
    %v6494 = vadd.f32 0.0, %v6493
    %v6495 = vpop.f32.mrf.mxu0
    %v6496 = vadd.f32 0.0, %v6495
    %6497 = vmatmul.bf16.gmra.mxu0 %v6459
    %v6498 = vpop.f32.mrf.mxu0
    %v6499 = vadd.f32 0.0, %v6498
    %v6500 = vpop.f32.mrf.mxu0
    %v6501 = vadd.f32 0.0, %v6500
    %6502 = vmatmul.bf16.gmra.mxu0 %v6462
    %v6503 = vpop.f32.mrf.mxu0
    %v6504 = vadd.f32 0.0, %v6503
    %v6505 = vpop.f32.mrf.mxu0
    %v6506 = vadd.f32 0.0, %v6505
    %6507 = vmatmul.bf16.gmra.mxu0 %v6465
    %v6508 = vpop.f32.mrf.mxu0
    %v6509 = vadd.f32 0.0, %v6508
    %v6510 = vpop.f32.mrf.mxu0
    %v6511 = vadd.f32 0.0, %v6510
    %6512 = vmatmul.bf16.gmra.mxu0 %v6468
    %v6513 = vpop.f32.mrf.mxu0
    %v6514 = vadd.f32 0.0, %v6513
    %v6515 = vpop.f32.mrf.mxu0
    %v6516 = vadd.f32 0.0, %v6515
    %6517 = vmatmul.bf16.gmra.mxu0 %v6471
    %v6518 = vpop.f32.mrf.mxu0
    %v6519 = vadd.f32 0.0, %v6518
    %v6520 = vpop.f32.mrf.mxu0
    %v6521 = vadd.f32 0.0, %v6520
    %6522 = vmatmul.bf16.gmra.mxu0 %v6474
    %v6523 = vpop.f32.mrf.mxu0
    %v6524 = vadd.f32 0.0, %v6523
    %v6525 = vpop.f32.mrf.mxu0
    %v6526 = vadd.f32 0.0, %v6525
    %6527 = vmatmul.bf16.gmra.mxu0 %v6477
    %v6528 = vpop.f32.mrf.mxu0
    %v6529 = vadd.f32 0.0, %v6528
    %v6530 = vpop.f32.mrf.mxu0
    %v6531 = vadd.f32 0.0, %v6530
    %6532 = vdwg.mxu0
    %v6533 = vpack.c.bf16 %v6489, %v6489
    %v6534 = vpack.c.bf16 %v6491, %v6491
    %v6535 = vpack.c.bf16 %v6494, %v6494
    %v6536 = vpack.c.bf16 %v6496, %v6496
    %v6537 = vpack.c.bf16 %v6499, %v6499
    %v6538 = vpack.c.bf16 %v6501, %v6501
    %v6539 = vpack.c.bf16 %v6504, %v6504
    %v6540 = vpack.c.bf16 %v6506, %v6506
    %v6541 = vpack.c.bf16 %v6509, %v6509
    %v6542 = vpack.c.bf16 %v6511, %v6511
    %v6543 = vpack.c.bf16 %v6514, %v6514
    %v6544 = vpack.c.bf16 %v6516, %v6516
    %v6545 = vpack.c.bf16 %v6519, %v6519
    %v6546 = vpack.c.bf16 %v6521, %v6521
    %v6547 = vpack.c.bf16 %v6524, %v6524
    %v6548 = vpack.c.bf16 %v6526, %v6526
    %v6549 = vpack.c.bf16 %v6529, %v6529
    %v6550 = vpack.c.bf16 %v6531, %v6531
    %6551 = vst.msk [vmem:[#allocation4] sm:$0xf] %vm5221, %v6533
    %6552 = vst.msk [vmem:[#allocation4 + $0xc] sm:$0xf] %vm5221, %v6534
    %6555 = vrot.lane.b32.xlu0 %v6535, 32
    %v6556 = vpop.permute.xlu0 %6555
    %6557 = vrot.lane.b32.xlu0 %v6536, 32
    %v6558 = vpop.permute.xlu0 %6557
    %6561 = vst.msk [vmem:[#allocation4] sm:$0xf] %vm5232, %v6556
    %6562 = vst.msk [vmem:[#allocation4 + $0xc] sm:$0xf] %vm5232, %v6558
    %6565 = vrot.lane.b32.xlu0 %v6537, 64
    %v6566 = vpop.permute.xlu0 %6565
    %6567 = vrot.lane.b32.xlu0 %v6538, 64
    %v6568 = vpop.permute.xlu0 %6567
    %6571 = vst.msk [vmem:[#allocation4] sm:$0xf] %vm5243, %v6566
    %6572 = vst.msk [vmem:[#allocation4 + $0xc] sm:$0xf] %vm5243, %v6568
    %6575 = vrot.lane.b32.xlu0 %v6539, 96
    %v6576 = vpop.permute.xlu0 %6575
    %6577 = vrot.lane.b32.xlu0 %v6540, 96
    %v6578 = vpop.permute.xlu0 %6577
    %6581 = vst.msk [vmem:[#allocation4] sm:$0xf] %vm5254, %v6576
    %6582 = vst.msk [vmem:[#allocation4 + $0xc] sm:$0xf] %vm5254, %v6578
    %6583 = vst.msk [vmem:[#allocation4 + $0x4] sm:$0xf] %vm5221, %v6541
    %6584 = vst.msk [vmem:[#allocation4 + $0x10] sm:$0xf] %vm5221, %v6542
    %6587 = vrot.lane.b32.xlu0 %v6543, 32
    %v6588 = vpop.permute.xlu0 %6587
    %6589 = vrot.lane.b32.xlu0 %v6544, 32
    %v6590 = vpop.permute.xlu0 %6589
    %6593 = vst.msk [vmem:[#allocation4 + $0x4] sm:$0xf] %vm5232, %v6588
    %6594 = vst.msk [vmem:[#allocation4 + $0x10] sm:$0xf] %vm5232, %v6590
    %6597 = vrot.lane.b32.xlu0 %v6545, 64
    %v6598 = vpop.permute.xlu0 %6597
    %6599 = vrot.lane.b32.xlu0 %v6546, 64
    %v6600 = vpop.permute.xlu0 %6599
    %6603 = vst.msk [vmem:[#allocation4 + $0x4] sm:$0xf] %vm5243, %v6598
    %6604 = vst.msk [vmem:[#allocation4 + $0x10] sm:$0xf] %vm5243, %v6600
    %6607 = vrot.lane.b32.xlu0 %v6547, 96
    %v6608 = vpop.permute.xlu0 %6607
    %6609 = vrot.lane.b32.xlu0 %v6548, 96
    %v6610 = vpop.permute.xlu0 %6609
    %6613 = vst.msk [vmem:[#allocation4 + $0x4] sm:$0xf] %vm5254, %v6608
    %6614 = vst.msk [vmem:[#allocation4 + $0x10] sm:$0xf] %vm5254, %v6610
    %6615 = vst.msk [vmem:[#allocation4 + $0x8] sm:$0xf] %vm5221, %v6549
    %6616 = vst.msk [vmem:[#allocation4 + $0x14] sm:$0xf] %vm5221, %v6550
    %v6619 = vunpack.c.l.b16 %v6381
    %v6620 = vunpack.c.l.b16 %v6382
    %v6621 = vpack.c.b16 %v6620, %v6619
    %6623 = vmatpush.bf16.msra.mxu0 0
    %6624 = vmatpush.bf16.msra.mxu0 0
    %6625 = vmatpush.bf16.msra.mxu0 0
    %6626 = vmatpush.bf16.msra.mxu0 0
    %6627 = vmatpush.bf16.msra.mxu0 0
    %6628 = vmatpush.bf16.msra.mxu0 0
    %6629 = vmatpush.bf16.msra.mxu0 0
    %6630 = vmatpush.bf16.msra.mxu0 %v6621
    %6631 = vmatmul.bf16.gmra.mxu0 %v6453
    %v6632 = vpop.f32.mrf.mxu0
    %v6633 = vadd.f32 0.0, %v6632
    %v6634 = vpop.f32.mrf.mxu0
    %v6635 = vadd.f32 0.0, %v6634
    %6636 = vmatmul.bf16.gmra.mxu0 %v6456
    %v6637 = vpop.f32.mrf.mxu0
    %v6638 = vadd.f32 0.0, %v6637
    %v6639 = vpop.f32.mrf.mxu0
    %v6640 = vadd.f32 0.0, %v6639
    %6641 = vmatmul.bf16.gmra.mxu0 %v6459
    %v6642 = vpop.f32.mrf.mxu0
    %v6643 = vadd.f32 0.0, %v6642
    %v6644 = vpop.f32.mrf.mxu0
    %v6645 = vadd.f32 0.0, %v6644
    %6646 = vmatmul.bf16.gmra.mxu0 %v6462
    %v6647 = vpop.f32.mrf.mxu0
    %v6648 = vadd.f32 0.0, %v6647
    %v6649 = vpop.f32.mrf.mxu0
    %v6650 = vadd.f32 0.0, %v6649
    %6651 = vmatmul.bf16.gmra.mxu0 %v6465
    %v6652 = vpop.f32.mrf.mxu0
    %v6653 = vadd.f32 0.0, %v6652
    %v6654 = vpop.f32.mrf.mxu0
    %v6655 = vadd.f32 0.0, %v6654
    %6656 = vmatmul.bf16.gmra.mxu0 %v6468
    %v6657 = vpop.f32.mrf.mxu0
    %v6658 = vadd.f32 0.0, %v6657
    %v6659 = vpop.f32.mrf.mxu0
    %v6660 = vadd.f32 0.0, %v6659
    %6661 = vmatmul.bf16.gmra.mxu0 %v6471
    %v6662 = vpop.f32.mrf.mxu0
    %v6663 = vadd.f32 0.0, %v6662
    %v6664 = vpop.f32.mrf.mxu0
    %v6665 = vadd.f32 0.0, %v6664
    %6666 = vmatmul.bf16.gmra.mxu0 %v6474
    %v6667 = vpop.f32.mrf.mxu0
    %v6668 = vadd.f32 0.0, %v6667
    %v6669 = vpop.f32.mrf.mxu0
    %v6670 = vadd.f32 0.0, %v6669
    %6671 = vmatmul.bf16.gmra.mxu0 %v6477
    %v6672 = vpop.f32.mrf.mxu0
    %v6673 = vadd.f32 0.0, %v6672
    %v6674 = vpop.f32.mrf.mxu0
    %v6675 = vadd.f32 0.0, %v6674
    %6676 = vdwg.mxu0
    %v6677 = vpack.c.bf16 %v6633, %v6633
    %v6678 = vpack.c.bf16 %v6635, %v6635
    %v6679 = vpack.c.bf16 %v6638, %v6638
    %v6680 = vpack.c.bf16 %v6640, %v6640
    %v6681 = vpack.c.bf16 %v6643, %v6643
    %v6682 = vpack.c.bf16 %v6645, %v6645
    %v6683 = vpack.c.bf16 %v6648, %v6648
    %v6684 = vpack.c.bf16 %v6650, %v6650
    %v6685 = vpack.c.bf16 %v6653, %v6653
    %v6686 = vpack.c.bf16 %v6655, %v6655
    %v6687 = vpack.c.bf16 %v6658, %v6658
    %v6688 = vpack.c.bf16 %v6660, %v6660
    %v6689 = vpack.c.bf16 %v6663, %v6663
    %v6690 = vpack.c.bf16 %v6665, %v6665
    %v6691 = vpack.c.bf16 %v6668, %v6668
    %v6692 = vpack.c.bf16 %v6670, %v6670
    %v6693 = vpack.c.bf16 %v6673, %v6673
    %v6694 = vpack.c.bf16 %v6675, %v6675
    %6695 = vst.msk [vmem:[#allocation4 + $0x18] sm:$0xf] %vm5221, %v6677
    %6696 = vst.msk [vmem:[#allocation4 + $0x24] sm:$0xf] %vm5221, %v6678
    %6699 = vrot.lane.b32.xlu0 %v6679, 32
    %v6700 = vpop.permute.xlu0 %6699
    %6701 = vrot.lane.b32.xlu0 %v6680, 32
    %v6702 = vpop.permute.xlu0 %6701
    %6705 = vst.msk [vmem:[#allocation4 + $0x18] sm:$0xf] %vm5232, %v6700
    %6706 = vst.msk [vmem:[#allocation4 + $0x24] sm:$0xf] %vm5232, %v6702
    %6709 = vrot.lane.b32.xlu0 %v6681, 64
    %v6710 = vpop.permute.xlu0 %6709
    %6711 = vrot.lane.b32.xlu0 %v6682, 64
    %v6712 = vpop.permute.xlu0 %6711
    %6715 = vst.msk [vmem:[#allocation4 + $0x18] sm:$0xf] %vm5243, %v6710
    %6716 = vst.msk [vmem:[#allocation4 + $0x24] sm:$0xf] %vm5243, %v6712
    %6719 = vrot.lane.b32.xlu0 %v6683, 96
    %v6720 = vpop.permute.xlu0 %6719
    %6721 = vrot.lane.b32.xlu0 %v6684, 96
    %v6722 = vpop.permute.xlu0 %6721
    %6725 = vst.msk [vmem:[#allocation4 + $0x18] sm:$0xf] %vm5254, %v6720
    %6726 = vst.msk [vmem:[#allocation4 + $0x24] sm:$0xf] %vm5254, %v6722
    %6727 = vst.msk [vmem:[#allocation4 + $0x1c] sm:$0xf] %vm5221, %v6685
    %6728 = vst.msk [vmem:[#allocation4 + $0x28] sm:$0xf] %vm5221, %v6686
    %6731 = vrot.lane.b32.xlu0 %v6687, 32
    %v6732 = vpop.permute.xlu0 %6731
    %6733 = vrot.lane.b32.xlu0 %v6688, 32
    %v6734 = vpop.permute.xlu0 %6733
    %6737 = vst.msk [vmem:[#allocation4 + $0x1c] sm:$0xf] %vm5232, %v6732
    %6738 = vst.msk [vmem:[#allocation4 + $0x28] sm:$0xf] %vm5232, %v6734
    %6741 = vrot.lane.b32.xlu0 %v6689, 64
    %v6742 = vpop.permute.xlu0 %6741
    %6743 = vrot.lane.b32.xlu0 %v6690, 64
    %v6744 = vpop.permute.xlu0 %6743
    %6747 = vst.msk [vmem:[#allocation4 + $0x1c] sm:$0xf] %vm5243, %v6742
    %6748 = vst.msk [vmem:[#allocation4 + $0x28] sm:$0xf] %vm5243, %v6744
    %6751 = vrot.lane.b32.xlu0 %v6691, 96
    %v6752 = vpop.permute.xlu0 %6751
    %6753 = vrot.lane.b32.xlu0 %v6692, 96
    %v6754 = vpop.permute.xlu0 %6753
    %6757 = vst.msk [vmem:[#allocation4 + $0x1c] sm:$0xf] %vm5254, %v6752
    %6758 = vst.msk [vmem:[#allocation4 + $0x28] sm:$0xf] %vm5254, %v6754
    %6759 = vst.msk [vmem:[#allocation4 + $0x20] sm:$0xf] %vm5221, %v6693
    %6760 = vst.msk [vmem:[#allocation4 + $0x2c] sm:$0xf] %vm5221, %v6694
    %v6761 = vld [vmem:[#allocation4] sm:$0xff]
    %v6762 = vld [vmem:[#allocation4 + $0x8] sm:$0xf]
    %v6763 = vld [vmem:[#allocation4 + $0xc] sm:$0xff]
    %v6764 = vld [vmem:[#allocation4 + $0x14] sm:$0xf]
    %v6765 = vld [vmem:[#allocation4 + $0x18] sm:$0xff]
    %v6766 = vld [vmem:[#allocation4 + $0x20] sm:$0xf]
    %v6767 = vld [vmem:[#allocation4 + $0x24] sm:$0xff]
    %v6768 = vld [vmem:[#allocation4 + $0x2c] sm:$0xf]
    %v6769 = vld [vmem:[%s14] sm:$0xf]
    %v6770 = vld [vmem:[%s14 + $0x4] sm:$0xf]
    %v6771 = vld [vmem:[%s14 + $0x8] sm:$0xf]
    %v6772 = vld [vmem:[%s14 + $0xc] sm:$0xf]
    %v6773 = vld [vmem:[%s14 + $0x10] sm:$0xf]
    %v6774 = vld [vmem:[%s14 + $0x14] sm:$0xf]
    %v6775 = vld [vmem:[%s14 + $0x18] sm:$0xf]
    %v6776 = vld [vmem:[%s14 + $0x1c] sm:$0xf]
    %v6777 = vld [vmem:[%s14 + $0x20] sm:$0xf]
    %v6778 = vld [vmem:[%s14 + $0x24] sm:$0xf]
    %v6779 = vld [vmem:[%s14 + $0x28] sm:$0xf]
    %v6780 = vld [vmem:[%s14 + $0x2c] sm:$0xf]
    %v6781 = vld [vmem:[%s14 + $0x30] sm:$0xf]
    %v6782 = vld [vmem:[%s14 + $0x34] sm:$0xf]
    %v6783 = vld [vmem:[%s14 + $0x38] sm:$0xf]
    %v6784 = vld [vmem:[%s14 + $0x3c] sm:$0xf]
    %v6785 = vld [vmem:[%s14 + $0x40] sm:$0xf]
    %v6786 = vld [vmem:[%s14 + $0x44] sm:$0xf]
    %v6787 = vld [vmem:[%s14 + $0x48] sm:$0xf]
    %v6788 = vld [vmem:[%s14 + $0x4c] sm:$0xf]
    %v6789 = vld [vmem:[%s14 + $0x50] sm:$0xf]
    %v6790 = vld [vmem:[%s14 + $0x54] sm:$0xf]
    %v6791 = vld [vmem:[%s14 + $0x58] sm:$0xf]
    %v6792 = vld [vmem:[%s14 + $0x5c] sm:$0xf]
    %v6793 = vld [vmem:[%s14 + $0x60] sm:$0xf]
    %v6794 = vld [vmem:[%s14 + $0x64] sm:$0xf]
    %v6795 = vld [vmem:[%s14 + $0x68] sm:$0xf]
    %v6796 = vld [vmem:[%s14 + $0x6c] sm:$0xf]
    %v6797 = vld [vmem:[%s14 + $0x70] sm:$0xf]
    %v6798 = vld [vmem:[%s14 + $0x74] sm:$0xf]
    %v6799 = vld [vmem:[%s14 + $0x78] sm:$0xf]
    %v6800 = vld [vmem:[%s14 + $0x7c] sm:$0xf]
    %v6801 = vld [vmem:[%s14 + $0x80] sm:$0xf]
    %v6802 = vld [vmem:[%s14 + $0x84] sm:$0xf]
    %v6803 = vld [vmem:[%s14 + $0x88] sm:$0xf]
    %v6804 = vld [vmem:[%s14 + $0x8c] sm:$0xf]
    %v6805 = vld [vmem:[%s15] sm:$0x1]
    %v6807 = vperm.slane %v6805, 0
    %v6817 = vunpack.c.l.b16 %v6761
    %v6818 = vunpack.c.h.b16 %v6761
    %v6819 = vunpack.c.l.b16 %v6762
    %v6820 = vunpack.c.l.b16 %v6763
    %v6821 = vunpack.c.h.b16 %v6763
    %v6822 = vunpack.c.l.b16 %v6764
    %v6823 = vunpack.c.l.b16 %v6765
    %v6824 = vunpack.c.h.b16 %v6765
    %v6825 = vunpack.c.l.b16 %v6766
    %v6826 = vunpack.c.l.b16 %v6767
    %v6827 = vunpack.c.h.b16 %v6767
    %v6828 = vunpack.c.l.b16 %v6768
    %v6829 = vpack.c.b16 %v6820, %v6817
    %v6830 = vpack.c.b16 %v6821, %v6818
    %v6831 = vpack.c.b16 %v6822, %v6819
    %v6832 = vpack.c.b16 %v6826, %v6823
    %v6833 = vpack.c.b16 %v6827, %v6824
    %v6834 = vpack.c.b16 %v6828, %v6825
    %v6875 = vunpack.c.l.b16 %v6769
    %v6876 = vunpack.c.l.b16 %v6770
    %v6877 = vunpack.c.l.b16 %v6771
    %v6878 = vunpack.c.l.b16 %v6772
    %v6879 = vunpack.c.l.b16 %v6773
    %v6880 = vunpack.c.l.b16 %v6774
    %v6881 = vunpack.c.l.b16 %v6775
    %v6882 = vunpack.c.l.b16 %v6776
    %v6883 = vunpack.c.l.b16 %v6777
    %v6884 = vunpack.c.l.b16 %v6778
    %v6885 = vunpack.c.l.b16 %v6779
    %v6886 = vunpack.c.l.b16 %v6780
    %v6887 = vunpack.c.l.b16 %v6781
    %v6888 = vunpack.c.l.b16 %v6782
    %v6889 = vunpack.c.l.b16 %v6783
    %v6890 = vunpack.c.l.b16 %v6784
    %v6891 = vunpack.c.l.b16 %v6785
    %v6892 = vunpack.c.l.b16 %v6786
    %v6893 = vunpack.c.l.b16 %v6787
    %v6894 = vunpack.c.l.b16 %v6788
    %v6895 = vunpack.c.l.b16 %v6789
    %v6896 = vunpack.c.l.b16 %v6790
    %v6897 = vunpack.c.l.b16 %v6791
    %v6898 = vunpack.c.l.b16 %v6792
    %v6899 = vunpack.c.l.b16 %v6793
    %v6900 = vunpack.c.l.b16 %v6794
    %v6901 = vunpack.c.l.b16 %v6795
    %v6902 = vunpack.c.l.b16 %v6796
    %v6903 = vunpack.c.l.b16 %v6797
    %v6904 = vunpack.c.l.b16 %v6798
    %v6905 = vunpack.c.l.b16 %v6799
    %v6906 = vunpack.c.l.b16 %v6800
    %v6907 = vunpack.c.l.b16 %v6801
    %v6908 = vunpack.c.l.b16 %v6802
    %v6909 = vunpack.c.l.b16 %v6803
    %v6910 = vunpack.c.l.b16 %v6804
    %v6911 = vpack.c.b16 %v6876, %v6875
    %v6912 = vpack.c.b16 %v6878, %v6877
    %v6913 = vpack.c.b16 %v6880, %v6879
    %v6914 = vpack.c.b16 %v6882, %v6881
    %v6915 = vpack.c.b16 %v6884, %v6883
    %v6916 = vpack.c.b16 %v6886, %v6885
    %v6917 = vpack.c.b16 %v6888, %v6887
    %v6918 = vpack.c.b16 %v6890, %v6889
    %v6919 = vpack.c.b16 %v6892, %v6891
    %v6920 = vpack.c.b16 %v6894, %v6893
    %v6921 = vpack.c.b16 %v6896, %v6895
    %v6922 = vpack.c.b16 %v6898, %v6897
    %v6923 = vpack.c.b16 %v6900, %v6899
    %v6924 = vpack.c.b16 %v6902, %v6901
    %v6925 = vpack.c.b16 %v6904, %v6903
    %v6926 = vpack.c.b16 %v6906, %v6905
    %v6927 = vpack.c.b16 %v6908, %v6907
    %v6928 = vpack.c.b16 %v6910, %v6909
    %v6948 = vsel %vm5621, %v6831, 0
    %v6951 = vsel %vm5621, %v6834, 0
    %6953 = vmatpush.bf16.msra.mxu0 %v6918
    %6954 = vmatpush.bf16.msra.mxu0 %v6917
    %6955 = vmatpush.bf16.msra.mxu0 %v6916
    %6956 = vmatpush.bf16.msra.mxu0 %v6915
    %6957 = vmatpush.bf16.msra.mxu0 %v6914
    %6958 = vmatpush.bf16.msra.mxu0 %v6913
    %6959 = vmatpush.bf16.msra.mxu0 %v6912
    %6960 = vmatpush.bf16.msra.mxu0 %v6911
    %6961 = vmatmul.bf16.gmra.mxu0 %v6829
    %v6962 = vpop.f32.mrf.mxu0
    %v6963 = vadd.f32 %v6807, %v6962
    %v6964 = vpop.f32.mrf.mxu0
    %v6965 = vadd.f32 %v6807, %v6964
    %6966 = vmatmul.bf16.gmra.mxu0 %v6832
    %v6967 = vpop.f32.mrf.mxu0
    %v6968 = vadd.f32 %v6807, %v6967
    %v6969 = vpop.f32.mrf.mxu0
    %v6970 = vadd.f32 %v6807, %v6969
    %6971 = vdwg.mxu0
    %6972 = vmatpush.bf16.msra.mxu0 %v6926
    %6973 = vmatpush.bf16.msra.mxu0 %v6925
    %6974 = vmatpush.bf16.msra.mxu0 %v6924
    %6975 = vmatpush.bf16.msra.mxu0 %v6923
    %6976 = vmatpush.bf16.msra.mxu0 %v6922
    %6977 = vmatpush.bf16.msra.mxu0 %v6921
    %6978 = vmatpush.bf16.msra.mxu0 %v6920
    %6979 = vmatpush.bf16.msra.mxu0 %v6919
    %6980 = vmatmul.bf16.gmra.mxu0 %v6830
    %v6981 = vpop.f32.mrf.mxu0
    %v6982 = vadd.f32 %v6963, %v6981
    %v6983 = vpop.f32.mrf.mxu0
    %v6984 = vadd.f32 %v6965, %v6983
    %6985 = vmatmul.bf16.gmra.mxu0 %v6833
    %v6986 = vpop.f32.mrf.mxu0
    %v6987 = vadd.f32 %v6968, %v6986
    %v6988 = vpop.f32.mrf.mxu0
    %v6989 = vadd.f32 %v6970, %v6988
    %6990 = vdwg.mxu0
    %6991 = vmatpush.bf16.msra.mxu0 0
    %6992 = vmatpush.bf16.msra.mxu0 0
    %6993 = vmatpush.bf16.msra.mxu0 0
    %6994 = vmatpush.bf16.msra.mxu0 0
    %6995 = vmatpush.bf16.msra.mxu0 0
    %6996 = vmatpush.bf16.msra.mxu0 0
    %6997 = vmatpush.bf16.msra.mxu0 %v6928
    %6998 = vmatpush.bf16.msra.mxu0 %v6927
    %6999 = vmatmul.bf16.gmra.mxu0 %v6948
    %v7000 = vpop.f32.mrf.mxu0
    %v7001 = vadd.f32 %v6982, %v7000
    %v7002 = vpop.f32.mrf.mxu0
    %v7003 = vadd.f32 %v6984, %v7002
    %7004 = vmatmul.bf16.gmra.mxu0 %v6951
    %v7005 = vpop.f32.mrf.mxu0
    %v7006 = vadd.f32 %v6987, %v7005
    %v7007 = vpop.f32.mrf.mxu0
    %v7008 = vadd.f32 %v6989, %v7007
    %7009 = vdwg.mxu0
    %v7010 = vmax.f32 %v7001, 0.0
    %v7011 = vmax.f32 %v7003, 0.0
    %v7012 = vmax.f32 %v7006, 0.0
    %v7013 = vmax.f32 %v7008, 0.0
    %v7014 = vpack.c.bf16 %v7011, %v7010
    %v7015 = vpack.c.bf16 %v7013, %v7012
    %v7016 = vld [vmem:[%s16] sm:$0xf]
    %v7017 = vld [vmem:[%s16 + $0x4] sm:$0xf]
    %v7018 = vld [vmem:[%s16 + $0x8] sm:$0xf]
    %v7019 = vld [vmem:[%s16 + $0xc] sm:$0xf]
    %v7020 = vld [vmem:[%s17] sm:$0x1]
    %v7022 = vperm.slane %v7020, 0
    %v7028 = vunpack.c.l.b16 %v7016
    %v7029 = vunpack.c.l.b16 %v7017
    %v7030 = vunpack.c.l.b16 %v7018
    %v7031 = vunpack.c.l.b16 %v7019
    %v7032 = vpack.c.b16 %v7029, %v7028
    %v7033 = vpack.c.b16 %v7031, %v7030
    %v7037 = vsel %vm5621, %v7014, 0
    %v7040 = vsel %vm5621, %v7015, 0
    %7042 = vmatpush.bf16.msra.mxu0 0
    %7043 = vmatpush.bf16.msra.mxu0 0
    %7044 = vmatpush.bf16.msra.mxu0 0
    %7045 = vmatpush.bf16.msra.mxu0 0
    %7046 = vmatpush.bf16.msra.mxu0 0
    %7047 = vmatpush.bf16.msra.mxu0 0
    %7048 = vmatpush.bf16.msra.mxu0 %v7033
    %7049 = vmatpush.bf16.msra.mxu0 %v7032
    %7050 = vmatmul.bf16.gmra.mxu0 %v7037
    %v7051 = vpop.f32.mrf.mxu0
    %v7052 = vadd.f32 %v7022, %v7051
    %v7053 = vpop.f32.mrf.mxu0
    %v7054 = vadd.f32 %v7022, %v7053
    %7055 = vmatmul.bf16.gmra.mxu0 %v7040
    %v7056 = vpop.f32.mrf.mxu0
    %v7057 = vadd.f32 %v7022, %v7056
    %v7058 = vpop.f32.mrf.mxu0
    %v7059 = vadd.f32 %v7022, %v7058
    %7060 = vdwg.mxu0
    %v7061 = vadd.f32 %v7052, %v6371
    %v7062 = vadd.f32 %v7054, %v6372
    %v7063 = vadd.f32 %v7057, %v6373
    %v7064 = vadd.f32 %v7059, %v6374
    %v7065 = vmax.f32 %v7061, 0.0
    %v7066 = vmax.f32 %v7062, 0.0
    %v7067 = vmax.f32 %v7063, 0.0
    %v7068 = vmax.f32 %v7064, 0.0
    %7069 = vst.msk [vmem:[#allocation8] sm:$0xff] %vm5621, %v7065
    %7070 = vst.msk [vmem:[#allocation8 + $0x8] sm:$0xff] %vm5621, %v7066
    %7071 = vst.msk [vmem:[#allocation8 + $0x10] sm:$0xff] %vm5621, %v7067
    %7072 = vst.msk [vmem:[#allocation8 + $0x18] sm:$0xff] %vm5621, %v7068
    // Predicated region
    $region78: #{forward.1} parent=1 // pred_check
      _
    $region79: #{forward.1} parent=1 // pred_check_branch
      %7074 = sbr.rel (0) target = $region81
    $region80: #{forward.1} parent=1 // pred_region
      %7076 = vsyncadd [#allocation7], 0
      %s7077 = sshll.u32 [#allocation8], 4
      %s7078 = int_to_ptr.vmem [resolvable:$true] %s7077
      %s7079 = sshll.u32 %s18, 4
      %s7080 = int_to_ptr.hbm [resolvable:$true] %s7079
      %7085 = dma.vmem_to_hbm [thread:$0]  %s7078, 512, %s7080, [#allocation7], 128, 128, 8
    $region81: #{forward.1} parent=1 // pred_fallthru
      _
    // Predicated region
    $region82: #{forward.1} parent=1 // pred_check
      _
    $region83: #{forward.1} parent=1 // pred_check_branch
      %7087 = sbr.rel (0) target = $region85
    $region84: #{forward.1} parent=1 // pred_region
      %7089 = dma.done [#allocation7], 512
    $region85: #{forward.1} parent=1 // pred_fallthru
      _
    %7090 = vsyncpa [#allocation6], 1
    %7091 = vsyncpa [#allocation7], 1

</llo_original>
